<compile_context>
chip_gen: v5e
topology: v5e:2x2
jax: 0.10.0
libtpu: 0.0.40
codegen_flags: <defaults>
</compile_context>

<pallas_src>
import numpy as np
import jax
import jax.numpy as jnp
from jax.experimental import pallas as pl
from jax.experimental.pallas import tpu as pltpu


def make_haar_filters():
    """Recreate IDWT_2D.__init__('haar') buffers as a (4, 2, 2) float32 array."""
    rec_lo = np.array([1.0, 1.0], dtype=np.float32) / np.sqrt(2.0)
    rec_hi = np.array([1.0, -1.0], dtype=np.float32) / np.sqrt(2.0)
    # filters[sb, p, q]: w_xy[p, q] = rec_y[p] * rec_x[q]  (matches the torch code)
    w_ll = rec_lo[:, None] * rec_lo[None, :]
    w_lh = rec_hi[:, None] * rec_lo[None, :]
    w_hl = rec_lo[:, None] * rec_hi[None, :]
    w_hh = rec_hi[:, None] * rec_hi[None, :]
    return np.stack([w_ll, w_lh, w_hl, w_hh], axis=0).astype(np.float32)


def _make_plane_fn(filters):
    """(ll, lh, hl, hh) -> (plane00, plane01, plane10, plane11), weights baked in.

    plane_pq[...] = out[..., 2i+p, 2j+q].  Haar sign structure is specialised to
    a 4-point Hadamard butterfly (8 add + 4 mul / position) on the VPU.
    """
    w = np.asarray(filters, dtype=np.float64).reshape(4, 2, 2)
    a = float(abs(w[0, 0, 0]))
    sgn = np.array([1.0, -1.0])
    haar_pattern = a * np.stack([
        np.ones((2, 2)),                   # w_ll[p,q] =  a
        sgn[:, None] * np.ones((1, 2)),    # w_lh[p,q] =  a*sgn[p]
        np.ones((2, 1)) * sgn[None, :],    # w_hl[p,q] =  a*sgn[q]
        sgn[:, None] * sgn[None, :],       # w_hh[p,q] =  a*sgn[p]*sgn[q]
    ])

    if a > 0.0 and np.allclose(w, haar_pattern, rtol=1e-5, atol=1e-7):
        def planes(ll, lh, hl, hh):
            s0, d0 = ll + lh, ll - lh
            s1, d1 = hl + hh, hl - hh
            return (a * (s0 + s1), a * (s0 - s1),
                    a * (d0 + d1), a * (d0 - d1))
    else:
        def planes(ll, lh, hl, hh):   # generic 2x2 filter, constant weights
            sub = (ll, lh, hl, hh)
            outs = []
            for p in range(2):
                for q in range(2):
                    acc = sub[0] * float(w[0, p, q])
                    for sb in range(1, 4):
                        acc = acc + sub[sb] * float(w[sb, p, q])
                    outs.append(acc)
            return tuple(outs)
    return planes


def _make_fused_kernel(filters):
    """Kernel writing the final pixel-shuffled output tile directly.

    x_ref: (1, 4, Cb, Ht, W)  VMEM  -- [LL, LH, HL, HH] slabs
    o_ref: (1, Cb, 2*Ht, 2*W) VMEM  -- interleaved output tile
    """
    plane_fn = _make_plane_fn(filters)

    def kernel(x_ref, o_ref):
        cb, ht, wt = x_ref.shape[2], x_ref.shape[3], x_ref.shape[4]
        ll = x_ref[0, 0].astype(jnp.float32)
        lh = x_ref[0, 1].astype(jnp.float32)
        hl = x_ref[0, 2].astype(jnp.float32)
        hh = x_ref[0, 3].astype(jnp.float32)
        p00, p01, p10, p11 = plane_fn(ll, lh, hl, hh)
        # column (q) interleave: lane-level (..., W) x2 -> (..., 2W)
        r0 = jnp.stack([p00, p01], axis=-1).reshape(cb, ht, 2 * wt)
        r1 = jnp.stack([p10, p11], axis=-1).reshape(cb, ht, 2 * wt)
        # row (p) interleave: sublane-level (..., Ht, 2W) x2 -> (..., 2Ht, 2W)
        out = jnp.stack([r0, r1], axis=-2).reshape(cb, 2 * ht, 2 * wt)
        o_ref[0] = out.astype(o_ref.dtype)

    return kernel


def _make_planar_kernel(filters):
    """Fallback kernel: writes the 4 planes planar; pixel-shuffle done by XLA.

    x_ref: (1, 4, Cb, Ht, W)     VMEM
    o_ref: (1, 2, 2, Cb, Ht, W)  VMEM  -- plane (p, q) holds out[2i+p, 2j+q]
    """
    plane_fn = _make_plane_fn(filters)

    def kernel(x_ref, o_ref):
        ll = x_ref[0, 0].astype(jnp.float32)
        lh = x_ref[0, 1].astype(jnp.float32)
        hl = x_ref[0, 2].astype(jnp.float32)
        hh = x_ref[0, 3].astype(jnp.float32)
        p00, p01, p10, p11 = plane_fn(ll, lh, hl, hh)
        o_ref[0, 0, 0] = p00.astype(o_ref.dtype)
        o_ref[0, 0, 1] = p01.astype(o_ref.dtype)
        o_ref[0, 1, 0] = p10.astype(o_ref.dtype)
        o_ref[0, 1, 1] = p11.astype(o_ref.dtype)

    return kernel


def _choose_tiles(C, H, W, itemsize, max_block_bytes):
    """Pick (channel tile Cb, row tile Ht) keeping one input block under budget.

    Ht is the sublane dim: either the full H ("equal full dim" -> always legal)
    or a multiple of 8 with a cdiv grid (Pallas masks the ragged edge).  W is
    always kept full as the lane dim, so any H/W shape is legal.
    """
    row_bytes = 4 * W * itemsize                       # one spatial row x 4 subbands
    max_rows = max(int(max_block_bytes // row_bytes), 1)
    if H <= max_rows:
        Ht = H
        Cb = max(min(C, max_rows // max(H, 1)), 1)
    else:
        Cb = 1
        Ht = min(max((max_rows // 8) * 8, 8), H)
    return Cb, Ht


def idwt_2d(x, filters, *, fused=True, max_block_bytes=2 * 1024 * 1024):
    """x: (B, 4C, H, W) subband-major; filters: (4, 2, 2) numpy -> (B, C, 2H, 2W)."""
    B, C4, H, W = x.shape
    assert C4 % 4 == 0, "channel dim must be a multiple of 4 (LL, LH, HL, HH)"
    C = C4 // 4

    # Free, contiguous view; relies on the subband-major packing contract above.
    x5 = x.reshape(B, 4, C, H, W)

    itemsize = np.dtype(x.dtype).itemsize
    Cb, Ht = _choose_tiles(C, H, W, itemsize, max_block_bytes)
    grid = (B, pl.cdiv(C, Cb), pl.cdiv(H, Ht))

    in_spec = pl.BlockSpec((1, 4, Cb, Ht, W), lambda b, ci, hi: (b, 0, ci, hi, 0))
    cparams = pltpu.CompilerParams(
        dimension_semantics=("parallel", "parallel", "parallel"),
        vmem_limit_bytes=48 * 1024 * 1024,
    )

    if fused:
        # Pixel-shuffle fused in-kernel: no post-pass at all.
        out = pl.pallas_call(
            _make_fused_kernel(filters),
            out_shape=jax.ShapeDtypeStruct((B, C, 2 * H, 2 * W), x.dtype),
            grid=grid,
            in_specs=[in_spec],
            out_specs=pl.BlockSpec((1, Cb, 2 * Ht, 2 * W),
                                   lambda b, ci, hi: (b, ci, hi, 0)),
            compiler_params=cparams,
        )(x5)
        return out

    # Fallback: planar planes + one fused XLA transpose pass (pixel shuffle).
    planes = pl.pallas_call(
        _make_planar_kernel(filters),
        out_shape=jax.ShapeDtypeStruct((B, 2, 2, C, H, W), x.dtype),
        grid=grid,
        in_specs=[in_spec],
        out_specs=pl.BlockSpec((1, 2, 2, Cb, Ht, W),
                               lambda b, ci, hi: (b, 0, 0, ci, hi, 0)),
        compiler_params=cparams,
    )(x5)
    out = planes.transpose(0, 3, 4, 1, 5, 2)           # (B, C, H, 2, W, 2)
    return out.reshape(B, C, 2 * H, 2 * W)


def _reference_idwt(x_np, w_np):
    """Independent numpy reference of F.conv_transpose2d(stride=2, groups=C)."""
    B, C4, H, W = x_np.shape
    C = C4 // 4
    xr = x_np.reshape(B, 4, C, H, W).astype(np.float64)
    w = np.asarray(w_np, dtype=np.float64).reshape(4, 2, 2)
    # out[b, c, 2i+p, 2j+q] = sum_sb x[b, sb, c, i, j] * w[sb, p, q]
    ref = np.einsum("bscij,spq->bcipjq", xr, w)
    return ref.reshape(B, C, 2 * H, 2 * W).astype(np.float32)


if __name__ == "__main__":
    key = jax.random.PRNGKey(0)
    B, C, H, W = 2, 2, 16, 16                          # input channels = 4*C = 8
    x = jax.random.normal(key, (B, 4 * C, H, W), dtype=jnp.float32)
    filters = make_haar_filters()                      # deterministic 'haar' buffers
    ref = _reference_idwt(np.asarray(x), filters)

    y = None
    # Primary: fully fused pixel-shuffle kernel.  If this Mosaic build rejects
    # (or mis-lowers) the minor-dim-merging reshape, fall back to the planar
    # kernel + one XLA transpose pass so the script still runs everywhere.
    try:
        run_fused = jax.jit(lambda t: idwt_2d(t, filters, fused=True))
        y_fused = jax.block_until_ready(run_fused(x))
        if np.allclose(np.asarray(y_fused), ref, atol=1e-5, rtol=1e-5):
            y = y_fused
    except Exception:
        y = None

    if y is None:
        run_planar = jax.jit(lambda t: idwt_2d(t, filters, fused=False))
        y = jax.block_until_ready(run_planar(x))
        assert np.allclose(np.asarray(y), ref, atol=1e-5, rtol=1e-5)

    assert y.shape == (B, C, 2 * H, 2 * W), y.shape
    print("KERNEL_OK")
</pallas_src>

<mosaic_0001>
module attributes {stable_mosaic.version = 11 : i64} {
  func.func @kernel(%arg0: i32, %arg1: i32, %arg2: i32, %arg3: memref<1x4x2x16x16xf32, #tpu.memory_space<vmem>>, %arg4: memref<1x2x32x32xf32, #tpu.memory_space<vmem>>) attributes {dimension_semantics = [#tpu.dimension_semantics<parallel>, #tpu.dimension_semantics<parallel>, #tpu.dimension_semantics<parallel>], iteration_bounds = array<i64: 2, 1, 1>, scalar_prefetch = 0 : i64, scratch_operands = 0 : i64, tpu.core_type = #tpu.core_type<tc>, window_params = [{transform_indices = @transform_0, window_bounds = array<i64: 1, 4, 2, 16, 16>}, {transform_indices = @transform_1, window_bounds = array<i64: 1, 2, 32, 32>}]} {
    %c0 = arith.constant 0 : index
    %c0_0 = arith.constant 0 : index
    %c0_1 = arith.constant 0 : index
    %c0_2 = arith.constant 0 : index
    %c0_3 = arith.constant 0 : index
    %0 = vector.load %arg3[%c0, %c0_0, %c0_1, %c0_2, %c0_3] : memref<1x4x2x16x16xf32, #tpu.memory_space<vmem>>, vector<1x1x2x16x16xf32>
    %1 = vector.shape_cast %0 : vector<1x1x2x16x16xf32> to vector<2x16x16xf32>
    %c0_4 = arith.constant 0 : index
    %c1 = arith.constant 1 : index
    %c0_5 = arith.constant 0 : index
    %c0_6 = arith.constant 0 : index
    %c0_7 = arith.constant 0 : index
    %2 = vector.load %arg3[%c0_4, %c1, %c0_5, %c0_6, %c0_7] : memref<1x4x2x16x16xf32, #tpu.memory_space<vmem>>, vector<1x1x2x16x16xf32>
    %3 = vector.shape_cast %2 : vector<1x1x2x16x16xf32> to vector<2x16x16xf32>
    %c0_8 = arith.constant 0 : index
    %c2 = arith.constant 2 : index
    %c0_9 = arith.constant 0 : index
    %c0_10 = arith.constant 0 : index
    %c0_11 = arith.constant 0 : index
    %4 = vector.load %arg3[%c0_8, %c2, %c0_9, %c0_10, %c0_11] : memref<1x4x2x16x16xf32, #tpu.memory_space<vmem>>, vector<1x1x2x16x16xf32>
    %5 = vector.shape_cast %4 : vector<1x1x2x16x16xf32> to vector<2x16x16xf32>
    %c0_12 = arith.constant 0 : index
    %c3 = arith.constant 3 : index
    %c0_13 = arith.constant 0 : index
    %c0_14 = arith.constant 0 : index
    %c0_15 = arith.constant 0 : index
    %6 = vector.load %arg3[%c0_12, %c3, %c0_13, %c0_14, %c0_15] : memref<1x4x2x16x16xf32, #tpu.memory_space<vmem>>, vector<1x1x2x16x16xf32>
    %7 = vector.shape_cast %6 : vector<1x1x2x16x16xf32> to vector<2x16x16xf32>
    %8 = arith.addf %1, %3 : vector<2x16x16xf32>
    %9 = arith.subf %1, %3 : vector<2x16x16xf32>
    %10 = arith.addf %5, %7 : vector<2x16x16xf32>
    %11 = arith.subf %5, %7 : vector<2x16x16xf32>
    %12 = arith.addf %8, %10 : vector<2x16x16xf32>
    %cst = arith.constant 5.000000e-01 : f32
    %13 = vector.broadcast %cst : f32 to vector<2x16x16xf32>
    %14 = arith.mulf %13, %12 : vector<2x16x16xf32>
    %15 = arith.subf %8, %10 : vector<2x16x16xf32>
    %cst_16 = arith.constant 5.000000e-01 : f32
    %16 = vector.broadcast %cst_16 : f32 to vector<2x16x16xf32>
    %17 = arith.mulf %16, %15 : vector<2x16x16xf32>
    %18 = arith.addf %9, %11 : vector<2x16x16xf32>
    %cst_17 = arith.constant 5.000000e-01 : f32
    %19 = vector.broadcast %cst_17 : f32 to vector<2x16x16xf32>
    %20 = arith.mulf %19, %18 : vector<2x16x16xf32>
    %21 = arith.subf %9, %11 : vector<2x16x16xf32>
    %cst_18 = arith.constant 5.000000e-01 : f32
    %22 = vector.broadcast %cst_18 : f32 to vector<2x16x16xf32>
    %23 = arith.mulf %22, %21 : vector<2x16x16xf32>
    %24 = vector.shape_cast %14 : vector<2x16x16xf32> to vector<2x16x16x1xf32>
    %25 = vector.shape_cast %17 : vector<2x16x16xf32> to vector<2x16x16x1xf32>
    %26 = tpu.concatenate %24, %25 in 3 : vector<2x16x16x1xf32>, vector<2x16x16x1xf32> -> vector<2x16x16x2xf32>
    %27 = vector.shape_cast %26 : vector<2x16x16x2xf32> to vector<2x16x32xf32>
    %28 = vector.shape_cast %20 : vector<2x16x16xf32> to vector<2x16x16x1xf32>
    %29 = vector.shape_cast %23 : vector<2x16x16xf32> to vector<2x16x16x1xf32>
    %30 = tpu.concatenate %28, %29 in 3 : vector<2x16x16x1xf32>, vector<2x16x16x1xf32> -> vector<2x16x16x2xf32>
    %31 = vector.shape_cast %30 : vector<2x16x16x2xf32> to vector<2x16x32xf32>
    %32 = vector.shape_cast %27 : vector<2x16x32xf32> to vector<2x16x1x32xf32>
    %33 = vector.shape_cast %31 : vector<2x16x32xf32> to vector<2x16x1x32xf32>
    %34 = tpu.concatenate %32, %33 in 2 : vector<2x16x1x32xf32>, vector<2x16x1x32xf32> -> vector<2x16x2x32xf32>
    %35 = vector.shape_cast %34 : vector<2x16x2x32xf32> to vector<2x32x32xf32>
    %c0_19 = arith.constant 0 : index
    %c0_20 = arith.constant 0 : index
    %c0_21 = arith.constant 0 : index
    %c0_22 = arith.constant 0 : index
    %36 = vector.load %arg4[%c0_19, %c0_20, %c0_21, %c0_22] : memref<1x2x32x32xf32, #tpu.memory_space<vmem>>, vector<1x2x32x32xf32>
    %37 = vector.shape_cast %36 : vector<1x2x32x32xf32> to vector<2x32x32xf32>
    %38 = vector.shape_cast %35 : vector<2x32x32xf32> to vector<1x2x32x32xf32>
    tpu.vector_store %arg4[%c0_19, %c0_20, %c0_21, %c0_22], %38 {strides = array<i32>} : memref<1x2x32x32xf32, #tpu.memory_space<vmem>>, vector<1x2x32x32xf32>,
    return
  }
  func.func @transform_0(%arg0: i32, %arg1: i32, %arg2: i32) -> (i32, i32, i32, i32, i32) {
    %c0_i32 = arith.constant 0 : i32
    %c0_i32_0 = arith.constant 0 : i32
    %c0_i32_1 = arith.constant 0 : i32
    return %arg0, %c0_i32, %arg1, %arg2, %c0_i32_0 : i32, i32, i32, i32, i32
  }
  func.func @transform_1(%arg0: i32, %arg1: i32, %arg2: i32) -> (i32, i32, i32, i32) {
    %c0_i32 = arith.constant 0 : i32
    %c0_i32_0 = arith.constant 0 : i32
    return %arg0, %arg1, %arg2, %c0_i32 : i32, i32, i32, i32
  }
}

module attributes {stable_mosaic.version = 11 : i64} {
  func.func @kernel(%arg0: i32, %arg1: i32, %arg2: i32, %arg3: memref<1x4x2x16x16xf32, #tpu.memory_space<vmem>>, %arg4: memref<1x2x2x2x16x16xf32, #tpu.memory_space<vmem>>) attributes {dimension_semantics = [#tpu.dimension_semantics<parallel>, #tpu.dimension_semantics<parallel>, #tpu.dimension_semantics<parallel>], iteration_bounds = array<i64: 2, 1, 1>, scalar_prefetch = 0 : i64, scratch_operands = 0 : i64, tpu.core_type = #tpu.core_type<tc>, window_params = [{transform_indices = @transform_0, window_bounds = array<i64: 1, 4, 2, 16, 16>}, {transform_indices = @transform_1, window_bounds = array<i64: 1, 2, 2, 2, 16, 16>}]} {
    %c0 = arith.constant 0 : index
    %c0_0 = arith.constant 0 : index
    %c0_1 = arith.constant 0 : index
    %c0_2 = arith.constant 0 : index
    %c0_3 = arith.constant 0 : index
    %0 = vector.load %arg3[%c0, %c0_0, %c0_1, %c0_2, %c0_3] : memref<1x4x2x16x16xf32, #tpu.memory_space<vmem>>, vector<1x1x2x16x16xf32>
    %1 = vector.shape_cast %0 : vector<1x1x2x16x16xf32> to vector<2x16x16xf32>
    %c0_4 = arith.constant 0 : index
    %c1 = arith.constant 1 : index
    %c0_5 = arith.constant 0 : index
    %c0_6 = arith.constant 0 : index
    %c0_7 = arith.constant 0 : index
    %2 = vector.load %arg3[%c0_4, %c1, %c0_5, %c0_6, %c0_7] : memref<1x4x2x16x16xf32, #tpu.memory_space<vmem>>, vector<1x1x2x16x16xf32>
    %3 = vector.shape_cast %2 : vector<1x1x2x16x16xf32> to vector<2x16x16xf32>
    %c0_8 = arith.constant 0 : index
    %c2 = arith.constant 2 : index
    %c0_9 = arith.constant 0 : index
    %c0_10 = arith.constant 0 : index
    %c0_11 = arith.constant 0 : index
    %4 = vector.load %arg3[%c0_8, %c2, %c0_9, %c0_10, %c0_11] : memref<1x4x2x16x16xf32, #tpu.memory_space<vmem>>, vector<1x1x2x16x16xf32>
    %5 = vector.shape_cast %4 : vector<1x1x2x16x16xf32> to vector<2x16x16xf32>
    %c0_12 = arith.constant 0 : index
    %c3 = arith.constant 3 : index
    %c0_13 = arith.constant 0 : index
    %c0_14 = arith.constant 0 : index
    %c0_15 = arith.constant 0 : index
    %6 = vector.load %arg3[%c0_12, %c3, %c0_13, %c0_14, %c0_15] : memref<1x4x2x16x16xf32, #tpu.memory_space<vmem>>, vector<1x1x2x16x16xf32>
    %7 = vector.shape_cast %6 : vector<1x1x2x16x16xf32> to vector<2x16x16xf32>
    %8 = arith.addf %1, %3 : vector<2x16x16xf32>
    %9 = arith.subf %1, %3 : vector<2x16x16xf32>
    %10 = arith.addf %5, %7 : vector<2x16x16xf32>
    %11 = arith.subf %5, %7 : vector<2x16x16xf32>
    %12 = arith.addf %8, %10 : vector<2x16x16xf32>
    %cst = arith.constant 5.000000e-01 : f32
    %13 = vector.broadcast %cst : f32 to vector<2x16x16xf32>
    %14 = arith.mulf %13, %12 : vector<2x16x16xf32>
    %15 = arith.subf %8, %10 : vector<2x16x16xf32>
    %cst_16 = arith.constant 5.000000e-01 : f32
    %16 = vector.broadcast %cst_16 : f32 to vector<2x16x16xf32>
    %17 = arith.mulf %16, %15 : vector<2x16x16xf32>
    %18 = arith.addf %9, %11 : vector<2x16x16xf32>
    %cst_17 = arith.constant 5.000000e-01 : f32
    %19 = vector.broadcast %cst_17 : f32 to vector<2x16x16xf32>
    %20 = arith.mulf %19, %18 : vector<2x16x16xf32>
    %21 = arith.subf %9, %11 : vector<2x16x16xf32>
    %cst_18 = arith.constant 5.000000e-01 : f32
    %22 = vector.broadcast %cst_18 : f32 to vector<2x16x16xf32>
    %23 = arith.mulf %22, %21 : vector<2x16x16xf32>
    %c0_19 = arith.constant 0 : index
    %c0_20 = arith.constant 0 : index
    %c0_21 = arith.constant 0 : index
    %c0_22 = arith.constant 0 : index
    %c0_23 = arith.constant 0 : index
    %c0_24 = arith.constant 0 : index
    %24 = vector.load %arg4[%c0_19, %c0_20, %c0_21, %c0_22, %c0_23, %c0_24] : memref<1x2x2x2x16x16xf32, #tpu.memory_space<vmem>>, vector<1x1x1x2x16x16xf32>
    %25 = vector.shape_cast %24 : vector<1x1x1x2x16x16xf32> to vector<2x16x16xf32>
    %26 = vector.shape_cast %14 : vector<2x16x16xf32> to vector<1x1x1x2x16x16xf32>
    tpu.vector_store %arg4[%c0_19, %c0_20, %c0_21, %c0_22, %c0_23, %c0_24], %26 {strides = array<i32>} : memref<1x2x2x2x16x16xf32, #tpu.memory_space<vmem>>, vector<1x1x1x2x16x16xf32>,
    %c0_25 = arith.constant 0 : index
    %c0_26 = arith.constant 0 : index
    %c1_27 = arith.constant 1 : index
    %c0_28 = arith.constant 0 : index
    %c0_29 = arith.constant 0 : index
    %c0_30 = arith.constant 0 : index
    %27 = vector.load %arg4[%c0_25, %c0_26, %c1_27, %c0_28, %c0_29, %c0_30] : memref<1x2x2x2x16x16xf32, #tpu.memory_space<vmem>>, vector<1x1x1x2x16x16xf32>
    %28 = vector.shape_cast %27 : vector<1x1x1x2x16x16xf32> to vector<2x16x16xf32>
    %29 = vector.shape_cast %17 : vector<2x16x16xf32> to vector<1x1x1x2x16x16xf32>
    tpu.vector_store %arg4[%c0_25, %c0_26, %c1_27, %c0_28, %c0_29, %c0_30], %29 {strides = array<i32>} : memref<1x2x2x2x16x16xf32, #tpu.memory_space<vmem>>, vector<1x1x1x2x16x16xf32>,
    %c0_31 = arith.constant 0 : index
    %c1_32 = arith.constant 1 : index
    %c0_33 = arith.constant 0 : index
    %c0_34 = arith.constant 0 : index
    %c0_35 = arith.constant 0 : index
    %c0_36 = arith.constant 0 : index
    %30 = vector.load %arg4[%c0_31, %c1_32, %c0_33, %c0_34, %c0_35, %c0_36] : memref<1x2x2x2x16x16xf32, #tpu.memory_space<vmem>>, vector<1x1x1x2x16x16xf32>
    %31 = vector.shape_cast %30 : vector<1x1x1x2x16x16xf32> to vector<2x16x16xf32>
    %32 = vector.shape_cast %20 : vector<2x16x16xf32> to vector<1x1x1x2x16x16xf32>
    tpu.vector_store %arg4[%c0_31, %c1_32, %c0_33, %c0_34, %c0_35, %c0_36], %32 {strides = array<i32>} : memref<1x2x2x2x16x16xf32, #tpu.memory_space<vmem>>, vector<1x1x1x2x16x16xf32>,
    %c0_37 = arith.constant 0 : index
    %c1_38 = arith.constant 1 : index
    %c1_39 = arith.constant 1 : index
    %c0_40 = arith.constant 0 : index
    %c0_41 = arith.constant 0 : index
    %c0_42 = arith.constant 0 : index
    %33 = vector.load %arg4[%c0_37, %c1_38, %c1_39, %c0_40, %c0_41, %c0_42] : memref<1x2x2x2x16x16xf32, #tpu.memory_space<vmem>>, vector<1x1x1x2x16x16xf32>
    %34 = vector.shape_cast %33 : vector<1x1x1x2x16x16xf32> to vector<2x16x16xf32>
    %35 = vector.shape_cast %23 : vector<2x16x16xf32> to vector<1x1x1x2x16x16xf32>
    tpu.vector_store %arg4[%c0_37, %c1_38, %c1_39, %c0_40, %c0_41, %c0_42], %35 {strides = array<i32>} : memref<1x2x2x2x16x16xf32, #tpu.memory_space<vmem>>, vector<1x1x1x2x16x16xf32>,
    return
  }
  func.func @transform_0(%arg0: i32, %arg1: i32, %arg2: i32) -> (i32, i32, i32, i32, i32) {
    %c0_i32 = arith.constant 0 : i32
    %c0_i32_0 = arith.constant 0 : i32
    %c0_i32_1 = arith.constant 0 : i32
    return %arg0, %c0_i32, %arg1, %arg2, %c0_i32_0 : i32, i32, i32, i32, i32
  }
  func.func @transform_1(%arg0: i32, %arg1: i32, %arg2: i32) -> (i32, i32, i32, i32, i32, i32) {
    %c0_i32 = arith.constant 0 : i32
    %c0_i32_0 = arith.constant 0 : i32
    %c0_i32_1 = arith.constant 0 : i32
    %c0_i32_2 = arith.constant 0 : i32
    return %arg0, %c0_i32, %c0_i32_0, %arg1, %arg2, %c0_i32_1 : i32, i32, i32, i32, i32, i32
  }
}

</mosaic_0001>

<llo_original>
// kernel: _lambda_.1
$region0: #{_lambda_.1}
  #allocation0 [shape = 'u32[]', space=smem, size = 0x4, offset = 0x4, fixed_abs, tag = 'smem constant byte address 0x4 - core index']
  #allocation1 [shape = 'u32[72,128]{1,0:T(1,128)}', space=vmem, size = 0x9000, scoped, tag = 'internal scratch']
  %s0 = inlined_call_operand.hbm [shape: f32[2,4,2,16,16], index: 0, kind: input, shape index: {}]
  %s1 = inlined_call_operand.hbm [shape: f32[2,2,32,32], index: 1, kind: output, shape index: {}]
  %s2 = sld [smem:[#allocation0]]
  $region41: #{_lambda_.1} parent=0
    _
  %s4 = ssub.s32 1, %s2
  %s5 = scalar_select 0, %s4, %s2
  $region1: #{_lambda_.1} parent=0
    #allocation2 [shape = 'u8[131072]{0}', space=vmem, size = 0x20000, scoped, tag = 'input window, operand 0']
    #allocation3 [shape = 's32[2]{0}', space=sflag, size = 0x8, scoped, tag = 'scoped memory for _lambda_.1']
    #allocation4 [shape = 's32[2]{0}', space=sflag, size = 0x8, scoped, tag = 'scoped memory for _lambda_.1']
    #allocation5 [shape = 'u8[65536]{0}', space=vmem, size = 0x10000, scoped, tag = 'output window, operand 0']
    %6 = vsyncpa [#allocation3], 0
    %s7 = scalar_lea.sflag [#allocation3], 1
    %8 = vsyncpa %s7, 0
    %9 = vsyncpa [#allocation4], 0
    %s10 = scalar_lea.sflag [#allocation4], 1
    %11 = vsyncpa %s10, 0
    loop: start=0, step=1, limit=4
    $region2: #{_lambda_.1} parent=1 // loop_pre_header
      _
    $region3: #{_lambda_.1} parent=1 // loop_header
      %s13 = sphi 0, %s17
      %p14 = scmp.ge.s32.totalorder %s13, 4
      %s20 = sphi 0, %s39
      %s21 = sphi 0, %s35
      %s22 = sphi 0, %s31
      %s23 = sphi 0, %s20
      %s24 = sphi 0, %s21
      %s25 = sphi 0, %s22
      %s26 = sphi 0, %s23
      %s27 = sphi 0, %s24
      %s28 = sphi 0, %s25
      %s46 = sphi 0, %s48
      %s49 = sphi 0, %s46
      %s50 = sphi 0, %s49
      %s66 = sphi 0, %s50
      %s76 = sphi 0, %s78
      %s79 = sphi 0, %s76
      %s80 = sphi 0, %s79
      %s96 = sphi 0, %s80
    $region4: #{_lambda_.1} parent=1 // loop_header_branch
      %16 = sbr.rel (%p14) target = $region8
    $region5: #{_lambda_.1} parent=1 // loop_body
      %s18 = ssub.s32 %s13, 1
      %s19 = ssub.s32 %s13, 2
      %s29 = sadd.s32 1, %s22
      %p30 = scmp.ge.s32.totalorder %s29, 1
      %s31 = scalar_select %p30, 0, %s29
      %s32 = sadd.s32 1, %s21
      %s33 = scalar_select %p30, %s32, %s21
      %p34 = scmp.ge.s32.totalorder %s33, 1
      %s35 = scalar_select %p34, 0, %s33
      %s36 = sadd.s32 1, %s20
      %s37 = scalar_select %p34, %s36, %s20
      %p38 = scmp.ge.s32.totalorder %s37, 2
      %s39 = scalar_select %p38, 0, %s37
      %s40 = ssub.s32 %s20, %s39
      %s41 = ssub.s32 %s21, %s35
      %s42 = sor.u32 %s40, %s41
      %s43 = ssub.s32 %s22, %s31
      %s44 = sor.u32 %s42, %s43
      %p45 = scmp.eq.s32.totalorder %s44, 0
      %s47 = sadd.s32 %s46, 1
      %s48 = scalar_select %p45, %s46, %s47
      %p51 = pneg %p45
      %p52 = scmp.eq.s32.totalorder %s13, 1
      %p53 = por %p51, %p52
      %p54 = scmp.ne.s32.totalorder %s46, %s49
      %p55 = scmp.eq.s32.totalorder %s13, 0
      %p56 = por %p54, %p55
      %p57 = scmp.ne.s32.totalorder %s46, %s49
      %p58 = scmp.eq.s32.totalorder %s18, 1
      %p59 = por %p57, %p58
      %p60 = scmp.ne.s32.totalorder %s49, %s50
      %p61 = scmp.eq.s32.totalorder %s18, 0
      %p62 = por %p60, %p61
      %p63 = scmp.ne.s32.totalorder %s49, %s50
      %p64 = scmp.eq.s32.totalorder %s19, 1
      %p65 = por %p63, %p64
      %p67 = scmp.ne.s32.totalorder %s50, %s66
      %p68 = scmp.eq.s32.totalorder %s19, 0
      %p69 = por %p67, %p68
      %s70 = ssub.s32 %s20, %s39
      %s71 = ssub.s32 %s21, %s35
      %s72 = sor.u32 %s70, %s71
      %s73 = ssub.s32 %s22, %s31
      %s74 = sor.u32 %s72, %s73
      %p75 = scmp.eq.s32.totalorder %s74, 0
      %s77 = sadd.s32 %s76, 1
      %s78 = scalar_select %p75, %s76, %s77
      %p81 = pneg %p75
      %p82 = scmp.eq.s32.totalorder %s13, 1
      %p83 = por %p81, %p82
      %p84 = scmp.ne.s32.totalorder %s76, %s79
      %p85 = scmp.eq.s32.totalorder %s13, 0
      %p86 = por %p84, %p85
      %p87 = scmp.ne.s32.totalorder %s76, %s79
      %p88 = scmp.eq.s32.totalorder %s18, 1
      %p89 = por %p87, %p88
      %p90 = scmp.ne.s32.totalorder %s79, %s80
      %p91 = scmp.eq.s32.totalorder %s18, 0
      %p92 = por %p90, %p91
      %p93 = scmp.ne.s32.totalorder %s79, %s80
      %p94 = scmp.eq.s32.totalorder %s19, 1
      %p95 = por %p93, %p94
      %p97 = scmp.ne.s32.totalorder %s80, %s96
      %p98 = scmp.eq.s32.totalorder %s19, 0
      %p99 = por %p97, %p98
      %p100 = scmp.le.s32.totalorder 1, %s13
      %p101 = scmp.lt.s32.totalorder %s13, 3
      %p102 = pnand %p100, %p101
      %p103 = pneg %p102
      // Predicated region
      $region9: #{_lambda_.1} parent=5 // pred_check
        _
      $region10: #{_lambda_.1} parent=5 // pred_check_branch
        %105 = sbr.rel (%p102) target = $region12
      $region11: #{_lambda_.1} parent=5 // pred_region
        %s106 = ssub.s32 %s13, 1
      $region12: #{_lambda_.1} parent=5 // pred_fallthru
        _
      %p107 = scmp.lt.s32.totalorder %s13, 2
      // Predicated region
      $region13: #{_lambda_.1} parent=5 // pred_check
        %p108 = pneg %p107
      $region14: #{_lambda_.1} parent=5 // pred_check_branch
        %110 = sbr.rel (%p108) target = $region16
      $region15: #{_lambda_.1} parent=5 // pred_region
        // Predicated region
        $region17: #{_lambda_.1} parent=15 // pred_check
          %p111 = pneg %p56
        $region18: #{_lambda_.1} parent=15 // pred_check_branch
          %113 = sbr.rel (%p111) target = $region20
        $region19: #{_lambda_.1} parent=15 // pred_region
          %s114 = sand.u32 %s46, 1
          %s115 = scalar_lea.sflag [#allocation3], %s114
          %s116 = sand.u32 %s46, 1
          %s117 = smul.addr %s116, 128
          %s118 = scalar_lea.vmem [#allocation2], %s117
          %s119 = smul.u32 2, %s21
          %s120 = smul.u32 2, %s22
          %122 = vsyncadd %s115, 0
          %s123 = smul.addr %s119, 2
          %s124 = sadd.s32 %s120, %s123
          %s125 = smul.addr %s20, 16
          %s126 = sadd.s32 %s124, %s125
          %s127 = smul.addr %s126, 8
          %s128 = scalar_lea.hbm %s0, %s127
          %s129 = sshll.u32 %s128, 4
          %s130 = int_to_ptr.hbm [resolvable:$true] %s129
          %s131 = sshll.u32 %s118, 4
          %s132 = int_to_ptr.vmem [resolvable:$true] %s131
          %137 = dma.hbm_to_vmem [thread:$0]  %s130, 2048, %s132, %s115, 128, 128, 8
        $region20: #{_lambda_.1} parent=15 // pred_fallthru
          _
      $region16: #{_lambda_.1} parent=5 // pred_fallthru
        _
      %p138 = scmp.le.s32.totalorder 1, %s13
      %p139 = scmp.lt.s32.totalorder %s13, 3
      %p140 = pnand %p138, %p139
      %p141 = pneg %p140
      // Predicated region
      $region21: #{_lambda_.1} parent=5 // pred_check
        _
      $region22: #{_lambda_.1} parent=5 // pred_check_branch
        %143 = sbr.rel (%p140) target = $region24
      $region23: #{_lambda_.1} parent=5 // pred_region
        %s144 = ssub.s32 %s13, 1
        %s145 = sand.u32 %s49, 1
        %s146 = scalar_lea.sflag [#allocation3], %s145
        %s147 = sand.u32 %s49, 1
        %s148 = smul.addr %s147, 128
        %s149 = scalar_lea.vmem [#allocation2], %s148
        // Predicated region
        $region25: #{_lambda_.1} parent=23 // pred_check
          %p150 = pneg %p62
        $region26: #{_lambda_.1} parent=23 // pred_check_branch
          %152 = sbr.rel (%p150) target = $region28
        $region27: #{_lambda_.1} parent=23 // pred_region
          %154 = dma.done %s146, 2048
        $region28: #{_lambda_.1} parent=23 // pred_fallthru
          _
        %s155 = sand.u32 %s49, 1
        %s156 = scalar_lea.sflag [#allocation3], %s155
        %s157 = sand.u32 %s49, 1
        %s158 = smul.addr %s157, 128
        %s159 = scalar_lea.vmem [#allocation2], %s158
        %p160 = pneg %p62
        %p161 = pneg %p59
        %p162 = pneg %p92
        %p163 = pneg %p89
        %s164 = sand.u32 %s79, 1
        %s165 = scalar_lea.sflag [#allocation4], %s164
        %s166 = sand.u32 %s79, 1
        %s167 = smul.addr %s166, 64
        %s168 = scalar_lea.vmem [#allocation5], %s167
        %s169 = smul.u32 2, %s24
        %s170 = smul.u32 2, %s25
        %s171 = smul.u32 2, %s24
        %s172 = smul.u32 4, %s25
        %v173 = vld [vmem:[%s149] sm:$0xff]
        %v174 = vld [vmem:[%s149 + $0x8] sm:$0xff]
        %v175 = vld [vmem:[%s149 + $0x10] sm:$0xff]
        %v176 = vld [vmem:[%s149 + $0x18] sm:$0xff]
        %s177 = scalar_lea.vmem %s149, 32 [#allocation2]
        %v178 = vld [vmem:[%s177] sm:$0xff]
        %v179 = vld [vmem:[%s177 + $0x8] sm:$0xff]
        %v180 = vld [vmem:[%s177 + $0x10] sm:$0xff]
        %v181 = vld [vmem:[%s177 + $0x18] sm:$0xff]
        %s182 = scalar_lea.vmem %s149, 64 [#allocation2]
        %v183 = vld [vmem:[%s182] sm:$0xff]
        %v184 = vld [vmem:[%s182 + $0x8] sm:$0xff]
        %v185 = vld [vmem:[%s182 + $0x10] sm:$0xff]
        %v186 = vld [vmem:[%s182 + $0x18] sm:$0xff]
        %s187 = scalar_lea.vmem %s149, 96 [#allocation2]
        %v188 = vld [vmem:[%s187] sm:$0xff]
        %v189 = vld [vmem:[%s187 + $0x8] sm:$0xff]
        %v190 = vld [vmem:[%s187 + $0x10] sm:$0xff]
        %v191 = vld [vmem:[%s187 + $0x18] sm:$0xff]
        %v192 = vadd.f32 %v173, %v178
        %v193 = vadd.f32 %v174, %v179
        %v194 = vadd.f32 %v175, %v180
        %v195 = vadd.f32 %v176, %v181
        %v196 = vsub.f32 %v173, %v178
        %v197 = vsub.f32 %v174, %v179
        %v198 = vsub.f32 %v175, %v180
        %v199 = vsub.f32 %v176, %v181
        %v200 = vadd.f32 %v183, %v188
        %v201 = vadd.f32 %v184, %v189
        %v202 = vadd.f32 %v185, %v190
        %v203 = vadd.f32 %v186, %v191
        %v204 = vsub.f32 %v183, %v188
        %v205 = vsub.f32 %v184, %v189
        %v206 = vsub.f32 %v185, %v190
        %v207 = vsub.f32 %v186, %v191
        %v208 = vadd.f32 %v192, %v200
        %v209 = vadd.f32 %v193, %v201
        %v210 = vadd.f32 %v194, %v202
        %v211 = vadd.f32 %v195, %v203
        %v212 = vmul.f32 %v208, 0.5
        %v213 = vmul.f32 %v209, 0.5
        %v214 = vmul.f32 %v210, 0.5
        %v215 = vmul.f32 %v211, 0.5
        %v216 = vsub.f32 %v192, %v200
        %v217 = vsub.f32 %v193, %v201
        %v218 = vsub.f32 %v194, %v202
        %v219 = vsub.f32 %v195, %v203
        %v220 = vmul.f32 %v216, 0.5
        %v221 = vmul.f32 %v217, 0.5
        %v222 = vmul.f32 %v218, 0.5
        %v223 = vmul.f32 %v219, 0.5
        %v224 = vadd.f32 %v196, %v204
        %v225 = vadd.f32 %v197, %v205
        %v226 = vadd.f32 %v198, %v206
        %v227 = vadd.f32 %v199, %v207
        %v228 = vmul.f32 %v224, 0.5
        %v229 = vmul.f32 %v225, 0.5
        %v230 = vmul.f32 %v226, 0.5
        %v231 = vmul.f32 %v227, 0.5
        %v232 = vsub.f32 %v196, %v204
        %v233 = vsub.f32 %v197, %v205
        %v234 = vsub.f32 %v198, %v206
        %v235 = vsub.f32 %v199, %v207
        %v236 = vmul.f32 %v232, 0.5
        %v237 = vmul.f32 %v233, 0.5
        %v238 = vmul.f32 %v234, 0.5
        %v239 = vmul.f32 %v235, 0.5
        %v240 = vperm.slane %v212, 0
        %v241 = vlaneseq
        %v242 = vshrl.u32 %v241, 7
        %244 = vset.pattern.permute.xlu0 %v242
        %245 = vperm.xlu0 %244, %v240
        %v246 = vpop.permute.xlu0 %245
        %v247 = vlaneseq
        %v248 = vshrl.u32 %v247, 7
        %v249 = vadd.s32 %v248, 8
        %250 = vset.pattern.permute.xlu0 %v249
        %251 = vperm.xlu0 %250, %v240
        %v252 = vpop.permute.xlu0 %251
        %v253 = vperm.slane %v212, 1
        %v254 = vlaneseq
        %v255 = vshrl.u32 %v254, 7
        %257 = vset.pattern.permute.xlu0 %v255
        %258 = vperm.xlu0 %257, %v253
        %v259 = vpop.permute.xlu0 %258
        %v260 = vlaneseq
        %v261 = vshrl.u32 %v260, 7
        %v262 = vadd.s32 %v261, 8
        %263 = vset.pattern.permute.xlu0 %v262
        %264 = vperm.xlu0 %263, %v253
        %v265 = vpop.permute.xlu0 %264
        %v266 = vperm.slane %v212, 2
        %v267 = vlaneseq
        %v268 = vshrl.u32 %v267, 7
        %270 = vset.pattern.permute.xlu0 %v268
        %271 = vperm.xlu0 %270, %v266
        %v272 = vpop.permute.xlu0 %271
        %v273 = vlaneseq
        %v274 = vshrl.u32 %v273, 7
        %v275 = vadd.s32 %v274, 8
        %276 = vset.pattern.permute.xlu0 %v275
        %277 = vperm.xlu0 %276, %v266
        %v278 = vpop.permute.xlu0 %277
        %v279 = vperm.slane %v212, 3
        %v280 = vlaneseq
        %v281 = vshrl.u32 %v280, 7
        %283 = vset.pattern.permute.xlu0 %v281
        %284 = vperm.xlu0 %283, %v279
        %v285 = vpop.permute.xlu0 %284
        %v286 = vlaneseq
        %v287 = vshrl.u32 %v286, 7
        %v288 = vadd.s32 %v287, 8
        %289 = vset.pattern.permute.xlu0 %v288
        %290 = vperm.xlu0 %289, %v279
        %v291 = vpop.permute.xlu0 %290
        %v292 = vperm.slane %v212, 4
        %v293 = vlaneseq
        %v294 = vshrl.u32 %v293, 7
        %296 = vset.pattern.permute.xlu0 %v294
        %297 = vperm.xlu0 %296, %v292
        %v298 = vpop.permute.xlu0 %297
        %v299 = vlaneseq
        %v300 = vshrl.u32 %v299, 7
        %v301 = vadd.s32 %v300, 8
        %302 = vset.pattern.permute.xlu0 %v301
        %303 = vperm.xlu0 %302, %v292
        %v304 = vpop.permute.xlu0 %303
        %v305 = vperm.slane %v212, 5
        %v306 = vlaneseq
        %v307 = vshrl.u32 %v306, 7
        %309 = vset.pattern.permute.xlu0 %v307
        %310 = vperm.xlu0 %309, %v305
        %v311 = vpop.permute.xlu0 %310
        %v312 = vlaneseq
        %v313 = vshrl.u32 %v312, 7
        %v314 = vadd.s32 %v313, 8
        %315 = vset.pattern.permute.xlu0 %v314
        %316 = vperm.xlu0 %315, %v305
        %v317 = vpop.permute.xlu0 %316
        %v318 = vperm.slane %v212, 6
        %v319 = vlaneseq
        %v320 = vshrl.u32 %v319, 7
        %322 = vset.pattern.permute.xlu0 %v320
        %323 = vperm.xlu0 %322, %v318
        %v324 = vpop.permute.xlu0 %323
        %v325 = vlaneseq
        %v326 = vshrl.u32 %v325, 7
        %v327 = vadd.s32 %v326, 8
        %328 = vset.pattern.permute.xlu0 %v327
        %329 = vperm.xlu0 %328, %v318
        %v330 = vpop.permute.xlu0 %329
        %v331 = vperm.slane %v212, 7
        %v332 = vlaneseq
        %v333 = vshrl.u32 %v332, 7
        %335 = vset.pattern.permute.xlu0 %v333
        %336 = vperm.xlu0 %335, %v331
        %v337 = vpop.permute.xlu0 %336
        %v338 = vlaneseq
        %v339 = vshrl.u32 %v338, 7
        %v340 = vadd.s32 %v339, 8
        %341 = vset.pattern.permute.xlu0 %v340
        %342 = vperm.xlu0 %341, %v331
        %v343 = vpop.permute.xlu0 %342
        %v344 = vperm.slane %v213, 0
        %v345 = vlaneseq
        %v346 = vshrl.u32 %v345, 7
        %348 = vset.pattern.permute.xlu0 %v346
        %349 = vperm.xlu0 %348, %v344
        %v350 = vpop.permute.xlu0 %349
        %v351 = vlaneseq
        %v352 = vshrl.u32 %v351, 7
        %v353 = vadd.s32 %v352, 8
        %354 = vset.pattern.permute.xlu0 %v353
        %355 = vperm.xlu0 %354, %v344
        %v356 = vpop.permute.xlu0 %355
        %v357 = vperm.slane %v213, 1
        %v358 = vlaneseq
        %v359 = vshrl.u32 %v358, 7
        %361 = vset.pattern.permute.xlu0 %v359
        %362 = vperm.xlu0 %361, %v357
        %v363 = vpop.permute.xlu0 %362
        %v364 = vlaneseq
        %v365 = vshrl.u32 %v364, 7
        %v366 = vadd.s32 %v365, 8
        %367 = vset.pattern.permute.xlu0 %v366
        %368 = vperm.xlu0 %367, %v357
        %v369 = vpop.permute.xlu0 %368
        %v370 = vperm.slane %v213, 2
        %v371 = vlaneseq
        %v372 = vshrl.u32 %v371, 7
        %374 = vset.pattern.permute.xlu0 %v372
        %375 = vperm.xlu0 %374, %v370
        %v376 = vpop.permute.xlu0 %375
        %v377 = vlaneseq
        %v378 = vshrl.u32 %v377, 7
        %v379 = vadd.s32 %v378, 8
        %380 = vset.pattern.permute.xlu0 %v379
        %381 = vperm.xlu0 %380, %v370
        %v382 = vpop.permute.xlu0 %381
        %v383 = vperm.slane %v213, 3
        %v384 = vlaneseq
        %v385 = vshrl.u32 %v384, 7
        %387 = vset.pattern.permute.xlu0 %v385
        %388 = vperm.xlu0 %387, %v383
        %v389 = vpop.permute.xlu0 %388
        %v390 = vlaneseq
        %v391 = vshrl.u32 %v390, 7
        %v392 = vadd.s32 %v391, 8
        %393 = vset.pattern.permute.xlu0 %v392
        %394 = vperm.xlu0 %393, %v383
        %v395 = vpop.permute.xlu0 %394
        %v396 = vperm.slane %v213, 4
        %v397 = vlaneseq
        %v398 = vshrl.u32 %v397, 7
        %400 = vset.pattern.permute.xlu0 %v398
        %401 = vperm.xlu0 %400, %v396
        %v402 = vpop.permute.xlu0 %401
        %v403 = vlaneseq
        %v404 = vshrl.u32 %v403, 7
        %v405 = vadd.s32 %v404, 8
        %406 = vset.pattern.permute.xlu0 %v405
        %407 = vperm.xlu0 %406, %v396
        %v408 = vpop.permute.xlu0 %407
        %v409 = vperm.slane %v213, 5
        %v410 = vlaneseq
        %v411 = vshrl.u32 %v410, 7
        %413 = vset.pattern.permute.xlu0 %v411
        %414 = vperm.xlu0 %413, %v409
        %v415 = vpop.permute.xlu0 %414
        %v416 = vlaneseq
        %v417 = vshrl.u32 %v416, 7
        %v418 = vadd.s32 %v417, 8
        %419 = vset.pattern.permute.xlu0 %v418
        %420 = vperm.xlu0 %419, %v409
        %v421 = vpop.permute.xlu0 %420
        %v422 = vperm.slane %v213, 6
        %v423 = vlaneseq
        %v424 = vshrl.u32 %v423, 7
        %426 = vset.pattern.permute.xlu0 %v424
        %427 = vperm.xlu0 %426, %v422
        %v428 = vpop.permute.xlu0 %427
        %v429 = vlaneseq
        %v430 = vshrl.u32 %v429, 7
        %v431 = vadd.s32 %v430, 8
        %432 = vset.pattern.permute.xlu0 %v431
        %433 = vperm.xlu0 %432, %v422
        %v434 = vpop.permute.xlu0 %433
        %v435 = vperm.slane %v213, 7
        %v436 = vlaneseq
        %v437 = vshrl.u32 %v436, 7
        %439 = vset.pattern.permute.xlu0 %v437
        %440 = vperm.xlu0 %439, %v435
        %v441 = vpop.permute.xlu0 %440
        %v442 = vlaneseq
        %v443 = vshrl.u32 %v442, 7
        %v444 = vadd.s32 %v443, 8
        %445 = vset.pattern.permute.xlu0 %v444
        %446 = vperm.xlu0 %445, %v435
        %v447 = vpop.permute.xlu0 %446
        %v448 = vperm.slane %v214, 0
        %v449 = vlaneseq
        %v450 = vshrl.u32 %v449, 7
        %452 = vset.pattern.permute.xlu0 %v450
        %453 = vperm.xlu0 %452, %v448
        %v454 = vpop.permute.xlu0 %453
        %v455 = vlaneseq
        %v456 = vshrl.u32 %v455, 7
        %v457 = vadd.s32 %v456, 8
        %458 = vset.pattern.permute.xlu0 %v457
        %459 = vperm.xlu0 %458, %v448
        %v460 = vpop.permute.xlu0 %459
        %v461 = vperm.slane %v214, 1
        %v462 = vlaneseq
        %v463 = vshrl.u32 %v462, 7
        %465 = vset.pattern.permute.xlu0 %v463
        %466 = vperm.xlu0 %465, %v461
        %v467 = vpop.permute.xlu0 %466
        %v468 = vlaneseq
        %v469 = vshrl.u32 %v468, 7
        %v470 = vadd.s32 %v469, 8
        %471 = vset.pattern.permute.xlu0 %v470
        %472 = vperm.xlu0 %471, %v461
        %v473 = vpop.permute.xlu0 %472
        %v474 = vperm.slane %v214, 2
        %v475 = vlaneseq
        %v476 = vshrl.u32 %v475, 7
        %478 = vset.pattern.permute.xlu0 %v476
        %479 = vperm.xlu0 %478, %v474
        %v480 = vpop.permute.xlu0 %479
        %v481 = vlaneseq
        %v482 = vshrl.u32 %v481, 7
        %v483 = vadd.s32 %v482, 8
        %484 = vset.pattern.permute.xlu0 %v483
        %485 = vperm.xlu0 %484, %v474
        %v486 = vpop.permute.xlu0 %485
        %v487 = vperm.slane %v214, 3
        %v488 = vlaneseq
        %v489 = vshrl.u32 %v488, 7
        %491 = vset.pattern.permute.xlu0 %v489
        %492 = vperm.xlu0 %491, %v487
        %v493 = vpop.permute.xlu0 %492
        %v494 = vlaneseq
        %v495 = vshrl.u32 %v494, 7
        %v496 = vadd.s32 %v495, 8
        %497 = vset.pattern.permute.xlu0 %v496
        %498 = vperm.xlu0 %497, %v487
        %v499 = vpop.permute.xlu0 %498
        %v500 = vperm.slane %v214, 4
        %v501 = vlaneseq
        %v502 = vshrl.u32 %v501, 7
        %504 = vset.pattern.permute.xlu0 %v502
        %505 = vperm.xlu0 %504, %v500
        %v506 = vpop.permute.xlu0 %505
        %v507 = vlaneseq
        %v508 = vshrl.u32 %v507, 7
        %v509 = vadd.s32 %v508, 8
        %510 = vset.pattern.permute.xlu0 %v509
        %511 = vperm.xlu0 %510, %v500
        %v512 = vpop.permute.xlu0 %511
        %v513 = vperm.slane %v214, 5
        %v514 = vlaneseq
        %v515 = vshrl.u32 %v514, 7
        %517 = vset.pattern.permute.xlu0 %v515
        %518 = vperm.xlu0 %517, %v513
        %v519 = vpop.permute.xlu0 %518
        %v520 = vlaneseq
        %v521 = vshrl.u32 %v520, 7
        %v522 = vadd.s32 %v521, 8
        %523 = vset.pattern.permute.xlu0 %v522
        %524 = vperm.xlu0 %523, %v513
        %v525 = vpop.permute.xlu0 %524
        %v526 = vperm.slane %v214, 6
        %v527 = vlaneseq
        %v528 = vshrl.u32 %v527, 7
        %530 = vset.pattern.permute.xlu0 %v528
        %531 = vperm.xlu0 %530, %v526
        %v532 = vpop.permute.xlu0 %531
        %v533 = vlaneseq
        %v534 = vshrl.u32 %v533, 7
        %v535 = vadd.s32 %v534, 8
        %536 = vset.pattern.permute.xlu0 %v535
        %537 = vperm.xlu0 %536, %v526
        %v538 = vpop.permute.xlu0 %537
        %v539 = vperm.slane %v214, 7
        %v540 = vlaneseq
        %v541 = vshrl.u32 %v540, 7
        %543 = vset.pattern.permute.xlu0 %v541
        %544 = vperm.xlu0 %543, %v539
        %v545 = vpop.permute.xlu0 %544
        %v546 = vlaneseq
        %v547 = vshrl.u32 %v546, 7
        %v548 = vadd.s32 %v547, 8
        %549 = vset.pattern.permute.xlu0 %v548
        %550 = vperm.xlu0 %549, %v539
        %v551 = vpop.permute.xlu0 %550
        %v552 = vperm.slane %v215, 0
        %v553 = vlaneseq
        %v554 = vshrl.u32 %v553, 7
        %556 = vset.pattern.permute.xlu0 %v554
        %557 = vperm.xlu0 %556, %v552
        %v558 = vpop.permute.xlu0 %557
        %v559 = vlaneseq
        %v560 = vshrl.u32 %v559, 7
        %v561 = vadd.s32 %v560, 8
        %562 = vset.pattern.permute.xlu0 %v561
        %563 = vperm.xlu0 %562, %v552
        %v564 = vpop.permute.xlu0 %563
        %v565 = vperm.slane %v215, 1
        %v566 = vlaneseq
        %v567 = vshrl.u32 %v566, 7
        %569 = vset.pattern.permute.xlu0 %v567
        %570 = vperm.xlu0 %569, %v565
        %v571 = vpop.permute.xlu0 %570
        %v572 = vlaneseq
        %v573 = vshrl.u32 %v572, 7
        %v574 = vadd.s32 %v573, 8
        %575 = vset.pattern.permute.xlu0 %v574
        %576 = vperm.xlu0 %575, %v565
        %v577 = vpop.permute.xlu0 %576
        %v578 = vperm.slane %v215, 2
        %v579 = vlaneseq
        %v580 = vshrl.u32 %v579, 7
        %582 = vset.pattern.permute.xlu0 %v580
        %583 = vperm.xlu0 %582, %v578
        %v584 = vpop.permute.xlu0 %583
        %v585 = vlaneseq
        %v586 = vshrl.u32 %v585, 7
        %v587 = vadd.s32 %v586, 8
        %588 = vset.pattern.permute.xlu0 %v587
        %589 = vperm.xlu0 %588, %v578
        %v590 = vpop.permute.xlu0 %589
        %v591 = vperm.slane %v215, 3
        %v592 = vlaneseq
        %v593 = vshrl.u32 %v592, 7
        %595 = vset.pattern.permute.xlu0 %v593
        %596 = vperm.xlu0 %595, %v591
        %v597 = vpop.permute.xlu0 %596
        %v598 = vlaneseq
        %v599 = vshrl.u32 %v598, 7
        %v600 = vadd.s32 %v599, 8
        %601 = vset.pattern.permute.xlu0 %v600
        %602 = vperm.xlu0 %601, %v591
        %v603 = vpop.permute.xlu0 %602
        %v604 = vperm.slane %v215, 4
        %v605 = vlaneseq
        %v606 = vshrl.u32 %v605, 7
        %608 = vset.pattern.permute.xlu0 %v606
        %609 = vperm.xlu0 %608, %v604
        %v610 = vpop.permute.xlu0 %609
        %v611 = vlaneseq
        %v612 = vshrl.u32 %v611, 7
        %v613 = vadd.s32 %v612, 8
        %614 = vset.pattern.permute.xlu0 %v613
        %615 = vperm.xlu0 %614, %v604
        %v616 = vpop.permute.xlu0 %615
        %v617 = vperm.slane %v215, 5
        %v618 = vlaneseq
        %v619 = vshrl.u32 %v618, 7
        %621 = vset.pattern.permute.xlu0 %v619
        %622 = vperm.xlu0 %621, %v617
        %v623 = vpop.permute.xlu0 %622
        %v624 = vlaneseq
        %v625 = vshrl.u32 %v624, 7
        %v626 = vadd.s32 %v625, 8
        %627 = vset.pattern.permute.xlu0 %v626
        %628 = vperm.xlu0 %627, %v617
        %v629 = vpop.permute.xlu0 %628
        %v630 = vperm.slane %v215, 6
        %v631 = vlaneseq
        %v632 = vshrl.u32 %v631, 7
        %634 = vset.pattern.permute.xlu0 %v632
        %635 = vperm.xlu0 %634, %v630
        %v636 = vpop.permute.xlu0 %635
        %v637 = vlaneseq
        %v638 = vshrl.u32 %v637, 7
        %v639 = vadd.s32 %v638, 8
        %640 = vset.pattern.permute.xlu0 %v639
        %641 = vperm.xlu0 %640, %v630
        %v642 = vpop.permute.xlu0 %641
        %v643 = vperm.slane %v215, 7
        %v644 = vlaneseq
        %v645 = vshrl.u32 %v644, 7
        %647 = vset.pattern.permute.xlu0 %v645
        %648 = vperm.xlu0 %647, %v643
        %v649 = vpop.permute.xlu0 %648
        %v650 = vlaneseq
        %v651 = vshrl.u32 %v650, 7
        %v652 = vadd.s32 %v651, 8
        %653 = vset.pattern.permute.xlu0 %v652
        %654 = vperm.xlu0 %653, %v643
        %v655 = vpop.permute.xlu0 %654
        %v656 = vperm.slane %v220, 0
        %v657 = vlaneseq
        %v658 = vshrl.u32 %v657, 7
        %660 = vset.pattern.permute.xlu0 %v658
        %661 = vperm.xlu0 %660, %v656
        %v662 = vpop.permute.xlu0 %661
        %v663 = vlaneseq
        %v664 = vshrl.u32 %v663, 7
        %v665 = vadd.s32 %v664, 8
        %666 = vset.pattern.permute.xlu0 %v665
        %667 = vperm.xlu0 %666, %v656
        %v668 = vpop.permute.xlu0 %667
        %v669 = vperm.slane %v220, 1
        %v670 = vlaneseq
        %v671 = vshrl.u32 %v670, 7
        %673 = vset.pattern.permute.xlu0 %v671
        %674 = vperm.xlu0 %673, %v669
        %v675 = vpop.permute.xlu0 %674
        %v676 = vlaneseq
        %v677 = vshrl.u32 %v676, 7
        %v678 = vadd.s32 %v677, 8
        %679 = vset.pattern.permute.xlu0 %v678
        %680 = vperm.xlu0 %679, %v669
        %v681 = vpop.permute.xlu0 %680
        %v682 = vperm.slane %v220, 2
        %v683 = vlaneseq
        %v684 = vshrl.u32 %v683, 7
        %686 = vset.pattern.permute.xlu0 %v684
        %687 = vperm.xlu0 %686, %v682
        %v688 = vpop.permute.xlu0 %687
        %v689 = vlaneseq
        %v690 = vshrl.u32 %v689, 7
        %v691 = vadd.s32 %v690, 8
        %692 = vset.pattern.permute.xlu0 %v691
        %693 = vperm.xlu0 %692, %v682
        %v694 = vpop.permute.xlu0 %693
        %v695 = vperm.slane %v220, 3
        %v696 = vlaneseq
        %v697 = vshrl.u32 %v696, 7
        %699 = vset.pattern.permute.xlu0 %v697
        %700 = vperm.xlu0 %699, %v695
        %v701 = vpop.permute.xlu0 %700
        %v702 = vlaneseq
        %v703 = vshrl.u32 %v702, 7
        %v704 = vadd.s32 %v703, 8
        %705 = vset.pattern.permute.xlu0 %v704
        %706 = vperm.xlu0 %705, %v695
        %v707 = vpop.permute.xlu0 %706
        %v708 = vperm.slane %v220, 4
        %v709 = vlaneseq
        %v710 = vshrl.u32 %v709, 7
        %712 = vset.pattern.permute.xlu0 %v710
        %713 = vperm.xlu0 %712, %v708
        %v714 = vpop.permute.xlu0 %713
        %v715 = vlaneseq
        %v716 = vshrl.u32 %v715, 7
        %v717 = vadd.s32 %v716, 8
        %718 = vset.pattern.permute.xlu0 %v717
        %719 = vperm.xlu0 %718, %v708
        %v720 = vpop.permute.xlu0 %719
        %v721 = vperm.slane %v220, 5
        %v722 = vlaneseq
        %v723 = vshrl.u32 %v722, 7
        %725 = vset.pattern.permute.xlu0 %v723
        %726 = vperm.xlu0 %725, %v721
        %v727 = vpop.permute.xlu0 %726
        %v728 = vlaneseq
        %v729 = vshrl.u32 %v728, 7
        %v730 = vadd.s32 %v729, 8
        %731 = vset.pattern.permute.xlu0 %v730
        %732 = vperm.xlu0 %731, %v721
        %v733 = vpop.permute.xlu0 %732
        %v734 = vperm.slane %v220, 6
        %v735 = vlaneseq
        %v736 = vshrl.u32 %v735, 7
        %738 = vset.pattern.permute.xlu0 %v736
        %739 = vperm.xlu0 %738, %v734
        %v740 = vpop.permute.xlu0 %739
        %v741 = vlaneseq
        %v742 = vshrl.u32 %v741, 7
        %v743 = vadd.s32 %v742, 8
        %744 = vset.pattern.permute.xlu0 %v743
        %745 = vperm.xlu0 %744, %v734
        %v746 = vpop.permute.xlu0 %745
        %v747 = vperm.slane %v220, 7
        %v748 = vlaneseq
        %v749 = vshrl.u32 %v748, 7
        %751 = vset.pattern.permute.xlu0 %v749
        %752 = vperm.xlu0 %751, %v747
        %v753 = vpop.permute.xlu0 %752
        %v754 = vlaneseq
        %v755 = vshrl.u32 %v754, 7
        %v756 = vadd.s32 %v755, 8
        %757 = vset.pattern.permute.xlu0 %v756
        %758 = vperm.xlu0 %757, %v747
        %v759 = vpop.permute.xlu0 %758
        %v760 = vperm.slane %v221, 0
        %v761 = vlaneseq
        %v762 = vshrl.u32 %v761, 7
        %764 = vset.pattern.permute.xlu0 %v762
        %765 = vperm.xlu0 %764, %v760
        %v766 = vpop.permute.xlu0 %765
        %v767 = vlaneseq
        %v768 = vshrl.u32 %v767, 7
        %v769 = vadd.s32 %v768, 8
        %770 = vset.pattern.permute.xlu0 %v769
        %771 = vperm.xlu0 %770, %v760
        %v772 = vpop.permute.xlu0 %771
        %v773 = vperm.slane %v221, 1
        %v774 = vlaneseq
        %v775 = vshrl.u32 %v774, 7
        %777 = vset.pattern.permute.xlu0 %v775
        %778 = vperm.xlu0 %777, %v773
        %v779 = vpop.permute.xlu0 %778
        %v780 = vlaneseq
        %v781 = vshrl.u32 %v780, 7
        %v782 = vadd.s32 %v781, 8
        %783 = vset.pattern.permute.xlu0 %v782
        %784 = vperm.xlu0 %783, %v773
        %v785 = vpop.permute.xlu0 %784
        %v786 = vperm.slane %v221, 2
        %v787 = vlaneseq
        %v788 = vshrl.u32 %v787, 7
        %790 = vset.pattern.permute.xlu0 %v788
        %791 = vperm.xlu0 %790, %v786
        %v792 = vpop.permute.xlu0 %791
        %v793 = vlaneseq
        %v794 = vshrl.u32 %v793, 7
        %v795 = vadd.s32 %v794, 8
        %796 = vset.pattern.permute.xlu0 %v795
        %797 = vperm.xlu0 %796, %v786
        %v798 = vpop.permute.xlu0 %797
        %v799 = vperm.slane %v221, 3
        %v800 = vlaneseq
        %v801 = vshrl.u32 %v800, 7
        %803 = vset.pattern.permute.xlu0 %v801
        %804 = vperm.xlu0 %803, %v799
        %v805 = vpop.permute.xlu0 %804
        %v806 = vlaneseq
        %v807 = vshrl.u32 %v806, 7
        %v808 = vadd.s32 %v807, 8
        %809 = vset.pattern.permute.xlu0 %v808
        %810 = vperm.xlu0 %809, %v799
        %v811 = vpop.permute.xlu0 %810
        %v812 = vperm.slane %v221, 4
        %v813 = vlaneseq
        %v814 = vshrl.u32 %v813, 7
        %816 = vset.pattern.permute.xlu0 %v814
        %817 = vperm.xlu0 %816, %v812
        %v818 = vpop.permute.xlu0 %817
        %v819 = vlaneseq
        %v820 = vshrl.u32 %v819, 7
        %v821 = vadd.s32 %v820, 8
        %822 = vset.pattern.permute.xlu0 %v821
        %823 = vperm.xlu0 %822, %v812
        %v824 = vpop.permute.xlu0 %823
        %v825 = vperm.slane %v221, 5
        %v826 = vlaneseq
        %v827 = vshrl.u32 %v826, 7
        %829 = vset.pattern.permute.xlu0 %v827
        %830 = vperm.xlu0 %829, %v825
        %v831 = vpop.permute.xlu0 %830
        %v832 = vlaneseq
        %v833 = vshrl.u32 %v832, 7
        %v834 = vadd.s32 %v833, 8
        %835 = vset.pattern.permute.xlu0 %v834
        %836 = vperm.xlu0 %835, %v825
        %v837 = vpop.permute.xlu0 %836
        %v838 = vperm.slane %v221, 6
        %v839 = vlaneseq
        %v840 = vshrl.u32 %v839, 7
        %842 = vset.pattern.permute.xlu0 %v840
        %843 = vperm.xlu0 %842, %v838
        %v844 = vpop.permute.xlu0 %843
        %v845 = vlaneseq
        %v846 = vshrl.u32 %v845, 7
        %v847 = vadd.s32 %v846, 8
        %848 = vset.pattern.permute.xlu0 %v847
        %849 = vperm.xlu0 %848, %v838
        %v850 = vpop.permute.xlu0 %849
        %v851 = vperm.slane %v221, 7
        %v852 = vlaneseq
        %v853 = vshrl.u32 %v852, 7
        %855 = vset.pattern.permute.xlu0 %v853
        %856 = vperm.xlu0 %855, %v851
        %v857 = vpop.permute.xlu0 %856
        %v858 = vlaneseq
        %v859 = vshrl.u32 %v858, 7
        %v860 = vadd.s32 %v859, 8
        %861 = vset.pattern.permute.xlu0 %v860
        %862 = vperm.xlu0 %861, %v851
        %v863 = vpop.permute.xlu0 %862
        %v864 = vperm.slane %v222, 0
        %v865 = vlaneseq
        %v866 = vshrl.u32 %v865, 7
        %868 = vset.pattern.permute.xlu0 %v866
        %869 = vperm.xlu0 %868, %v864
        %v870 = vpop.permute.xlu0 %869
        %v871 = vlaneseq
        %v872 = vshrl.u32 %v871, 7
        %v873 = vadd.s32 %v872, 8
        %874 = vset.pattern.permute.xlu0 %v873
        %875 = vperm.xlu0 %874, %v864
        %v876 = vpop.permute.xlu0 %875
        %v877 = vperm.slane %v222, 1
        %v878 = vlaneseq
        %v879 = vshrl.u32 %v878, 7
        %881 = vset.pattern.permute.xlu0 %v879
        %882 = vperm.xlu0 %881, %v877
        %v883 = vpop.permute.xlu0 %882
        %v884 = vlaneseq
        %v885 = vshrl.u32 %v884, 7
        %v886 = vadd.s32 %v885, 8
        %887 = vset.pattern.permute.xlu0 %v886
        %888 = vperm.xlu0 %887, %v877
        %v889 = vpop.permute.xlu0 %888
        %v890 = vperm.slane %v222, 2
        %v891 = vlaneseq
        %v892 = vshrl.u32 %v891, 7
        %894 = vset.pattern.permute.xlu0 %v892
        %895 = vperm.xlu0 %894, %v890
        %v896 = vpop.permute.xlu0 %895
        %v897 = vlaneseq
        %v898 = vshrl.u32 %v897, 7
        %v899 = vadd.s32 %v898, 8
        %900 = vset.pattern.permute.xlu0 %v899
        %901 = vperm.xlu0 %900, %v890
        %v902 = vpop.permute.xlu0 %901
        %v903 = vperm.slane %v222, 3
        %v904 = vlaneseq
        %v905 = vshrl.u32 %v904, 7
        %907 = vset.pattern.permute.xlu0 %v905
        %908 = vperm.xlu0 %907, %v903
        %v909 = vpop.permute.xlu0 %908
        %v910 = vlaneseq
        %v911 = vshrl.u32 %v910, 7
        %v912 = vadd.s32 %v911, 8
        %913 = vset.pattern.permute.xlu0 %v912
        %914 = vperm.xlu0 %913, %v903
        %v915 = vpop.permute.xlu0 %914
        %v916 = vperm.slane %v222, 4
        %v917 = vlaneseq
        %v918 = vshrl.u32 %v917, 7
        %920 = vset.pattern.permute.xlu0 %v918
        %921 = vperm.xlu0 %920, %v916
        %v922 = vpop.permute.xlu0 %921
        %v923 = vlaneseq
        %v924 = vshrl.u32 %v923, 7
        %v925 = vadd.s32 %v924, 8
        %926 = vset.pattern.permute.xlu0 %v925
        %927 = vperm.xlu0 %926, %v916
        %v928 = vpop.permute.xlu0 %927
        %v929 = vperm.slane %v222, 5
        %v930 = vlaneseq
        %v931 = vshrl.u32 %v930, 7
        %933 = vset.pattern.permute.xlu0 %v931
        %934 = vperm.xlu0 %933, %v929
        %v935 = vpop.permute.xlu0 %934
        %v936 = vlaneseq
        %v937 = vshrl.u32 %v936, 7
        %v938 = vadd.s32 %v937, 8
        %939 = vset.pattern.permute.xlu0 %v938
        %940 = vperm.xlu0 %939, %v929
        %v941 = vpop.permute.xlu0 %940
        %v942 = vperm.slane %v222, 6
        %v943 = vlaneseq
        %v944 = vshrl.u32 %v943, 7
        %946 = vset.pattern.permute.xlu0 %v944
        %947 = vperm.xlu0 %946, %v942
        %v948 = vpop.permute.xlu0 %947
        %v949 = vlaneseq
        %v950 = vshrl.u32 %v949, 7
        %v951 = vadd.s32 %v950, 8
        %952 = vset.pattern.permute.xlu0 %v951
        %953 = vperm.xlu0 %952, %v942
        %v954 = vpop.permute.xlu0 %953
        %v955 = vperm.slane %v222, 7
        %v956 = vlaneseq
        %v957 = vshrl.u32 %v956, 7
        %959 = vset.pattern.permute.xlu0 %v957
        %960 = vperm.xlu0 %959, %v955
        %v961 = vpop.permute.xlu0 %960
        %v962 = vlaneseq
        %v963 = vshrl.u32 %v962, 7
        %v964 = vadd.s32 %v963, 8
        %965 = vset.pattern.permute.xlu0 %v964
        %966 = vperm.xlu0 %965, %v955
        %v967 = vpop.permute.xlu0 %966
        %v968 = vperm.slane %v223, 0
        %v969 = vlaneseq
        %v970 = vshrl.u32 %v969, 7
        %972 = vset.pattern.permute.xlu0 %v970
        %973 = vperm.xlu0 %972, %v968
        %v974 = vpop.permute.xlu0 %973
        %v975 = vlaneseq
        %v976 = vshrl.u32 %v975, 7
        %v977 = vadd.s32 %v976, 8
        %978 = vset.pattern.permute.xlu0 %v977
        %979 = vperm.xlu0 %978, %v968
        %v980 = vpop.permute.xlu0 %979
        %v981 = vperm.slane %v223, 1
        %v982 = vlaneseq
        %v983 = vshrl.u32 %v982, 7
        %985 = vset.pattern.permute.xlu0 %v983
        %986 = vperm.xlu0 %985, %v981
        %v987 = vpop.permute.xlu0 %986
        %v988 = vlaneseq
        %v989 = vshrl.u32 %v988, 7
        %v990 = vadd.s32 %v989, 8
        %991 = vset.pattern.permute.xlu0 %v990
        %992 = vperm.xlu0 %991, %v981
        %v993 = vpop.permute.xlu0 %992
        %v994 = vperm.slane %v223, 2
        %v995 = vlaneseq
        %v996 = vshrl.u32 %v995, 7
        %998 = vset.pattern.permute.xlu0 %v996
        %999 = vperm.xlu0 %998, %v994
        %v1000 = vpop.permute.xlu0 %999
        %v1001 = vlaneseq
        %v1002 = vshrl.u32 %v1001, 7
        %v1003 = vadd.s32 %v1002, 8
        %1004 = vset.pattern.permute.xlu0 %v1003
        %1005 = vperm.xlu0 %1004, %v994
        %v1006 = vpop.permute.xlu0 %1005
        %v1007 = vperm.slane %v223, 3
        %v1008 = vlaneseq
        %v1009 = vshrl.u32 %v1008, 7
        %1011 = vset.pattern.permute.xlu0 %v1009
        %1012 = vperm.xlu0 %1011, %v1007
        %v1013 = vpop.permute.xlu0 %1012
        %v1014 = vlaneseq
        %v1015 = vshrl.u32 %v1014, 7
        %v1016 = vadd.s32 %v1015, 8
        %1017 = vset.pattern.permute.xlu0 %v1016
        %1018 = vperm.xlu0 %1017, %v1007
        %v1019 = vpop.permute.xlu0 %1018
        %v1020 = vperm.slane %v223, 4
        %v1021 = vlaneseq
        %v1022 = vshrl.u32 %v1021, 7
        %1024 = vset.pattern.permute.xlu0 %v1022
        %1025 = vperm.xlu0 %1024, %v1020
        %v1026 = vpop.permute.xlu0 %1025
        %v1027 = vlaneseq
        %v1028 = vshrl.u32 %v1027, 7
        %v1029 = vadd.s32 %v1028, 8
        %1030 = vset.pattern.permute.xlu0 %v1029
        %1031 = vperm.xlu0 %1030, %v1020
        %v1032 = vpop.permute.xlu0 %1031
        %v1033 = vperm.slane %v223, 5
        %v1034 = vlaneseq
        %v1035 = vshrl.u32 %v1034, 7
        %1037 = vset.pattern.permute.xlu0 %v1035
        %1038 = vperm.xlu0 %1037, %v1033
        %v1039 = vpop.permute.xlu0 %1038
        %v1040 = vlaneseq
        %v1041 = vshrl.u32 %v1040, 7
        %v1042 = vadd.s32 %v1041, 8
        %1043 = vset.pattern.permute.xlu0 %v1042
        %1044 = vperm.xlu0 %1043, %v1033
        %v1045 = vpop.permute.xlu0 %1044
        %v1046 = vperm.slane %v223, 6
        %v1047 = vlaneseq
        %v1048 = vshrl.u32 %v1047, 7
        %1050 = vset.pattern.permute.xlu0 %v1048
        %1051 = vperm.xlu0 %1050, %v1046
        %v1052 = vpop.permute.xlu0 %1051
        %v1053 = vlaneseq
        %v1054 = vshrl.u32 %v1053, 7
        %v1055 = vadd.s32 %v1054, 8
        %1056 = vset.pattern.permute.xlu0 %v1055
        %1057 = vperm.xlu0 %1056, %v1046
        %v1058 = vpop.permute.xlu0 %1057
        %v1059 = vperm.slane %v223, 7
        %v1060 = vlaneseq
        %v1061 = vshrl.u32 %v1060, 7
        %1063 = vset.pattern.permute.xlu0 %v1061
        %1064 = vperm.xlu0 %1063, %v1059
        %v1065 = vpop.permute.xlu0 %1064
        %v1066 = vlaneseq
        %v1067 = vshrl.u32 %v1066, 7
        %v1068 = vadd.s32 %v1067, 8
        %1069 = vset.pattern.permute.xlu0 %v1068
        %1070 = vperm.xlu0 %1069, %v1059
        %v1071 = vpop.permute.xlu0 %1070
        %vm1072 = vcmask 7168
        %v1073 = vsel %vm1072, %v246, %v662
        %v1074 = vsel %vm1072, %v252, %v668
        %v1075 = vsel %vm1072, %v259, %v675
        %v1076 = vsel %vm1072, %v265, %v681
        %v1077 = vsel %vm1072, %v272, %v688
        %v1078 = vsel %vm1072, %v278, %v694
        %v1079 = vsel %vm1072, %v285, %v701
        %v1080 = vsel %vm1072, %v291, %v707
        %v1081 = vsel %vm1072, %v298, %v714
        %v1082 = vsel %vm1072, %v304, %v720
        %v1083 = vsel %vm1072, %v311, %v727
        %v1084 = vsel %vm1072, %v317, %v733
        %v1085 = vsel %vm1072, %v324, %v740
        %v1086 = vsel %vm1072, %v330, %v746
        %v1087 = vsel %vm1072, %v337, %v753
        %v1088 = vsel %vm1072, %v343, %v759
        %v1089 = vsel %vm1072, %v350, %v766
        %v1090 = vsel %vm1072, %v356, %v772
        %v1091 = vsel %vm1072, %v363, %v779
        %v1092 = vsel %vm1072, %v369, %v785
        %v1093 = vsel %vm1072, %v376, %v792
        %v1094 = vsel %vm1072, %v382, %v798
        %v1095 = vsel %vm1072, %v389, %v805
        %v1096 = vsel %vm1072, %v395, %v811
        %v1097 = vsel %vm1072, %v402, %v818
        %v1098 = vsel %vm1072, %v408, %v824
        %v1099 = vsel %vm1072, %v415, %v831
        %v1100 = vsel %vm1072, %v421, %v837
        %v1101 = vsel %vm1072, %v428, %v844
        %v1102 = vsel %vm1072, %v434, %v850
        %v1103 = vsel %vm1072, %v441, %v857
        %v1104 = vsel %vm1072, %v447, %v863
        %v1105 = vsel %vm1072, %v454, %v870
        %v1106 = vsel %vm1072, %v460, %v876
        %v1107 = vsel %vm1072, %v467, %v883
        %v1108 = vsel %vm1072, %v473, %v889
        %v1109 = vsel %vm1072, %v480, %v896
        %v1110 = vsel %vm1072, %v486, %v902
        %v1111 = vsel %vm1072, %v493, %v909
        %v1112 = vsel %vm1072, %v499, %v915
        %v1113 = vsel %vm1072, %v506, %v922
        %v1114 = vsel %vm1072, %v512, %v928
        %v1115 = vsel %vm1072, %v519, %v935
        %v1116 = vsel %vm1072, %v525, %v941
        %v1117 = vsel %vm1072, %v532, %v948
        %v1118 = vsel %vm1072, %v538, %v954
        %v1119 = vsel %vm1072, %v545, %v961
        %v1120 = vsel %vm1072, %v551, %v967
        %v1121 = vsel %vm1072, %v558, %v974
        %v1122 = vsel %vm1072, %v564, %v980
        %v1123 = vsel %vm1072, %v571, %v987
        %v1124 = vsel %vm1072, %v577, %v993
        %v1125 = vsel %vm1072, %v584, %v1000
        %v1126 = vsel %vm1072, %v590, %v1006
        %v1127 = vsel %vm1072, %v597, %v1013
        %v1128 = vsel %vm1072, %v603, %v1019
        %v1129 = vsel %vm1072, %v610, %v1026
        %v1130 = vsel %vm1072, %v616, %v1032
        %v1131 = vsel %vm1072, %v623, %v1039
        %v1132 = vsel %vm1072, %v629, %v1045
        %v1133 = vsel %vm1072, %v636, %v1052
        %v1134 = vsel %vm1072, %v642, %v1058
        %v1135 = vsel %vm1072, %v649, %v1065
        %v1136 = vsel %vm1072, %v655, %v1071
        %v1137 = vperm.slane %v228, 0
        %v1138 = vlaneseq
        %v1139 = vshrl.u32 %v1138, 7
        %1141 = vset.pattern.permute.xlu0 %v1139
        %1142 = vperm.xlu0 %1141, %v1137
        %v1143 = vpop.permute.xlu0 %1142
        %v1144 = vlaneseq
        %v1145 = vshrl.u32 %v1144, 7
        %v1146 = vadd.s32 %v1145, 8
        %1147 = vset.pattern.permute.xlu0 %v1146
        %1148 = vperm.xlu0 %1147, %v1137
        %v1149 = vpop.permute.xlu0 %1148
        %v1150 = vperm.slane %v228, 1
        %v1151 = vlaneseq
        %v1152 = vshrl.u32 %v1151, 7
        %1154 = vset.pattern.permute.xlu0 %v1152
        %1155 = vperm.xlu0 %1154, %v1150
        %v1156 = vpop.permute.xlu0 %1155
        %v1157 = vlaneseq
        %v1158 = vshrl.u32 %v1157, 7
        %v1159 = vadd.s32 %v1158, 8
        %1160 = vset.pattern.permute.xlu0 %v1159
        %1161 = vperm.xlu0 %1160, %v1150
        %v1162 = vpop.permute.xlu0 %1161
        %v1163 = vperm.slane %v228, 2
        %v1164 = vlaneseq
        %v1165 = vshrl.u32 %v1164, 7
        %1167 = vset.pattern.permute.xlu0 %v1165
        %1168 = vperm.xlu0 %1167, %v1163
        %v1169 = vpop.permute.xlu0 %1168
        %v1170 = vlaneseq
        %v1171 = vshrl.u32 %v1170, 7
        %v1172 = vadd.s32 %v1171, 8
        %1173 = vset.pattern.permute.xlu0 %v1172
        %1174 = vperm.xlu0 %1173, %v1163
        %v1175 = vpop.permute.xlu0 %1174
        %v1176 = vperm.slane %v228, 3
        %v1177 = vlaneseq
        %v1178 = vshrl.u32 %v1177, 7
        %1180 = vset.pattern.permute.xlu0 %v1178
        %1181 = vperm.xlu0 %1180, %v1176
        %v1182 = vpop.permute.xlu0 %1181
        %v1183 = vlaneseq
        %v1184 = vshrl.u32 %v1183, 7
        %v1185 = vadd.s32 %v1184, 8
        %1186 = vset.pattern.permute.xlu0 %v1185
        %1187 = vperm.xlu0 %1186, %v1176
        %v1188 = vpop.permute.xlu0 %1187
        %v1189 = vperm.slane %v228, 4
        %v1190 = vlaneseq
        %v1191 = vshrl.u32 %v1190, 7
        %1193 = vset.pattern.permute.xlu0 %v1191
        %1194 = vperm.xlu0 %1193, %v1189
        %v1195 = vpop.permute.xlu0 %1194
        %v1196 = vlaneseq
        %v1197 = vshrl.u32 %v1196, 7
        %v1198 = vadd.s32 %v1197, 8
        %1199 = vset.pattern.permute.xlu0 %v1198
        %1200 = vperm.xlu0 %1199, %v1189
        %v1201 = vpop.permute.xlu0 %1200
        %v1202 = vperm.slane %v228, 5
        %v1203 = vlaneseq
        %v1204 = vshrl.u32 %v1203, 7
        %1206 = vset.pattern.permute.xlu0 %v1204
        %1207 = vperm.xlu0 %1206, %v1202
        %v1208 = vpop.permute.xlu0 %1207
        %v1209 = vlaneseq
        %v1210 = vshrl.u32 %v1209, 7
        %v1211 = vadd.s32 %v1210, 8
        %1212 = vset.pattern.permute.xlu0 %v1211
        %1213 = vperm.xlu0 %1212, %v1202
        %v1214 = vpop.permute.xlu0 %1213
        %v1215 = vperm.slane %v228, 6
        %v1216 = vlaneseq
        %v1217 = vshrl.u32 %v1216, 7
        %1219 = vset.pattern.permute.xlu0 %v1217
        %1220 = vperm.xlu0 %1219, %v1215
        %v1221 = vpop.permute.xlu0 %1220
        %v1222 = vlaneseq
        %v1223 = vshrl.u32 %v1222, 7
        %v1224 = vadd.s32 %v1223, 8
        %1225 = vset.pattern.permute.xlu0 %v1224
        %1226 = vperm.xlu0 %1225, %v1215
        %v1227 = vpop.permute.xlu0 %1226
        %v1228 = vperm.slane %v228, 7
        %v1229 = vlaneseq
        %v1230 = vshrl.u32 %v1229, 7
        %1232 = vset.pattern.permute.xlu0 %v1230
        %1233 = vperm.xlu0 %1232, %v1228
        %v1234 = vpop.permute.xlu0 %1233
        %v1235 = vlaneseq
        %v1236 = vshrl.u32 %v1235, 7
        %v1237 = vadd.s32 %v1236, 8
        %1238 = vset.pattern.permute.xlu0 %v1237
        %1239 = vperm.xlu0 %1238, %v1228
        %v1240 = vpop.permute.xlu0 %1239
        %v1241 = vperm.slane %v229, 0
        %v1242 = vlaneseq
        %v1243 = vshrl.u32 %v1242, 7
        %1245 = vset.pattern.permute.xlu0 %v1243
        %1246 = vperm.xlu0 %1245, %v1241
        %v1247 = vpop.permute.xlu0 %1246
        %v1248 = vlaneseq
        %v1249 = vshrl.u32 %v1248, 7
        %v1250 = vadd.s32 %v1249, 8
        %1251 = vset.pattern.permute.xlu0 %v1250
        %1252 = vperm.xlu0 %1251, %v1241
        %v1253 = vpop.permute.xlu0 %1252
        %v1254 = vperm.slane %v229, 1
        %v1255 = vlaneseq
        %v1256 = vshrl.u32 %v1255, 7
        %1258 = vset.pattern.permute.xlu0 %v1256
        %1259 = vperm.xlu0 %1258, %v1254
        %v1260 = vpop.permute.xlu0 %1259
        %v1261 = vlaneseq
        %v1262 = vshrl.u32 %v1261, 7
        %v1263 = vadd.s32 %v1262, 8
        %1264 = vset.pattern.permute.xlu0 %v1263
        %1265 = vperm.xlu0 %1264, %v1254
        %v1266 = vpop.permute.xlu0 %1265
        %v1267 = vperm.slane %v229, 2
        %v1268 = vlaneseq
        %v1269 = vshrl.u32 %v1268, 7
        %1271 = vset.pattern.permute.xlu0 %v1269
        %1272 = vperm.xlu0 %1271, %v1267
        %v1273 = vpop.permute.xlu0 %1272
        %v1274 = vlaneseq
        %v1275 = vshrl.u32 %v1274, 7
        %v1276 = vadd.s32 %v1275, 8
        %1277 = vset.pattern.permute.xlu0 %v1276
        %1278 = vperm.xlu0 %1277, %v1267
        %v1279 = vpop.permute.xlu0 %1278
        %v1280 = vperm.slane %v229, 3
        %v1281 = vlaneseq
        %v1282 = vshrl.u32 %v1281, 7
        %1284 = vset.pattern.permute.xlu0 %v1282
        %1285 = vperm.xlu0 %1284, %v1280
        %v1286 = vpop.permute.xlu0 %1285
        %v1287 = vlaneseq
        %v1288 = vshrl.u32 %v1287, 7
        %v1289 = vadd.s32 %v1288, 8
        %1290 = vset.pattern.permute.xlu0 %v1289
        %1291 = vperm.xlu0 %1290, %v1280
        %v1292 = vpop.permute.xlu0 %1291
        %v1293 = vperm.slane %v229, 4
        %v1294 = vlaneseq
        %v1295 = vshrl.u32 %v1294, 7
        %1297 = vset.pattern.permute.xlu0 %v1295
        %1298 = vperm.xlu0 %1297, %v1293
        %v1299 = vpop.permute.xlu0 %1298
        %v1300 = vlaneseq
        %v1301 = vshrl.u32 %v1300, 7
        %v1302 = vadd.s32 %v1301, 8
        %1303 = vset.pattern.permute.xlu0 %v1302
        %1304 = vperm.xlu0 %1303, %v1293
        %v1305 = vpop.permute.xlu0 %1304
        %v1306 = vperm.slane %v229, 5
        %v1307 = vlaneseq
        %v1308 = vshrl.u32 %v1307, 7
        %1310 = vset.pattern.permute.xlu0 %v1308
        %1311 = vperm.xlu0 %1310, %v1306
        %v1312 = vpop.permute.xlu0 %1311
        %v1313 = vlaneseq
        %v1314 = vshrl.u32 %v1313, 7
        %v1315 = vadd.s32 %v1314, 8
        %1316 = vset.pattern.permute.xlu0 %v1315
        %1317 = vperm.xlu0 %1316, %v1306
        %v1318 = vpop.permute.xlu0 %1317
        %v1319 = vperm.slane %v229, 6
        %v1320 = vlaneseq
        %v1321 = vshrl.u32 %v1320, 7
        %1323 = vset.pattern.permute.xlu0 %v1321
        %1324 = vperm.xlu0 %1323, %v1319
        %v1325 = vpop.permute.xlu0 %1324
        %v1326 = vlaneseq
        %v1327 = vshrl.u32 %v1326, 7
        %v1328 = vadd.s32 %v1327, 8
        %1329 = vset.pattern.permute.xlu0 %v1328
        %1330 = vperm.xlu0 %1329, %v1319
        %v1331 = vpop.permute.xlu0 %1330
        %v1332 = vperm.slane %v229, 7
        %v1333 = vlaneseq
        %v1334 = vshrl.u32 %v1333, 7
        %1336 = vset.pattern.permute.xlu0 %v1334
        %1337 = vperm.xlu0 %1336, %v1332
        %v1338 = vpop.permute.xlu0 %1337
        %v1339 = vlaneseq
        %v1340 = vshrl.u32 %v1339, 7
        %v1341 = vadd.s32 %v1340, 8
        %1342 = vset.pattern.permute.xlu0 %v1341
        %1343 = vperm.xlu0 %1342, %v1332
        %v1344 = vpop.permute.xlu0 %1343
        %v1345 = vperm.slane %v230, 0
        %v1346 = vlaneseq
        %v1347 = vshrl.u32 %v1346, 7
        %1349 = vset.pattern.permute.xlu0 %v1347
        %1350 = vperm.xlu0 %1349, %v1345
        %v1351 = vpop.permute.xlu0 %1350
        %v1352 = vlaneseq
        %v1353 = vshrl.u32 %v1352, 7
        %v1354 = vadd.s32 %v1353, 8
        %1355 = vset.pattern.permute.xlu0 %v1354
        %1356 = vperm.xlu0 %1355, %v1345
        %v1357 = vpop.permute.xlu0 %1356
        %v1358 = vperm.slane %v230, 1
        %v1359 = vlaneseq
        %v1360 = vshrl.u32 %v1359, 7
        %1362 = vset.pattern.permute.xlu0 %v1360
        %1363 = vperm.xlu0 %1362, %v1358
        %v1364 = vpop.permute.xlu0 %1363
        %v1365 = vlaneseq
        %v1366 = vshrl.u32 %v1365, 7
        %v1367 = vadd.s32 %v1366, 8
        %1368 = vset.pattern.permute.xlu0 %v1367
        %1369 = vperm.xlu0 %1368, %v1358
        %v1370 = vpop.permute.xlu0 %1369
        %v1371 = vperm.slane %v230, 2
        %v1372 = vlaneseq
        %v1373 = vshrl.u32 %v1372, 7
        %1375 = vset.pattern.permute.xlu0 %v1373
        %1376 = vperm.xlu0 %1375, %v1371
        %v1377 = vpop.permute.xlu0 %1376
        %v1378 = vlaneseq
        %v1379 = vshrl.u32 %v1378, 7
        %v1380 = vadd.s32 %v1379, 8
        %1381 = vset.pattern.permute.xlu0 %v1380
        %1382 = vperm.xlu0 %1381, %v1371
        %v1383 = vpop.permute.xlu0 %1382
        %v1384 = vperm.slane %v230, 3
        %v1385 = vlaneseq
        %v1386 = vshrl.u32 %v1385, 7
        %1388 = vset.pattern.permute.xlu0 %v1386
        %1389 = vperm.xlu0 %1388, %v1384
        %v1390 = vpop.permute.xlu0 %1389
        %v1391 = vlaneseq
        %v1392 = vshrl.u32 %v1391, 7
        %v1393 = vadd.s32 %v1392, 8
        %1394 = vset.pattern.permute.xlu0 %v1393
        %1395 = vperm.xlu0 %1394, %v1384
        %v1396 = vpop.permute.xlu0 %1395
        %v1397 = vperm.slane %v230, 4
        %v1398 = vlaneseq
        %v1399 = vshrl.u32 %v1398, 7
        %1401 = vset.pattern.permute.xlu0 %v1399
        %1402 = vperm.xlu0 %1401, %v1397
        %v1403 = vpop.permute.xlu0 %1402
        %v1404 = vlaneseq
        %v1405 = vshrl.u32 %v1404, 7
        %v1406 = vadd.s32 %v1405, 8
        %1407 = vset.pattern.permute.xlu0 %v1406
        %1408 = vperm.xlu0 %1407, %v1397
        %v1409 = vpop.permute.xlu0 %1408
        %v1410 = vperm.slane %v230, 5
        %v1411 = vlaneseq
        %v1412 = vshrl.u32 %v1411, 7
        %1414 = vset.pattern.permute.xlu0 %v1412
        %1415 = vperm.xlu0 %1414, %v1410
        %v1416 = vpop.permute.xlu0 %1415
        %v1417 = vlaneseq
        %v1418 = vshrl.u32 %v1417, 7
        %v1419 = vadd.s32 %v1418, 8
        %1420 = vset.pattern.permute.xlu0 %v1419
        %1421 = vperm.xlu0 %1420, %v1410
        %v1422 = vpop.permute.xlu0 %1421
        %v1423 = vperm.slane %v230, 6
        %v1424 = vlaneseq
        %v1425 = vshrl.u32 %v1424, 7
        %1427 = vset.pattern.permute.xlu0 %v1425
        %1428 = vperm.xlu0 %1427, %v1423
        %v1429 = vpop.permute.xlu0 %1428
        %v1430 = vlaneseq
        %v1431 = vshrl.u32 %v1430, 7
        %v1432 = vadd.s32 %v1431, 8
        %1433 = vset.pattern.permute.xlu0 %v1432
        %1434 = vperm.xlu0 %1433, %v1423
        %v1435 = vpop.permute.xlu0 %1434
        %v1436 = vperm.slane %v230, 7
        %v1437 = vlaneseq
        %v1438 = vshrl.u32 %v1437, 7
        %1440 = vset.pattern.permute.xlu0 %v1438
        %1441 = vperm.xlu0 %1440, %v1436
        %v1442 = vpop.permute.xlu0 %1441
        %v1443 = vlaneseq
        %v1444 = vshrl.u32 %v1443, 7
        %v1445 = vadd.s32 %v1444, 8
        %1446 = vset.pattern.permute.xlu0 %v1445
        %1447 = vperm.xlu0 %1446, %v1436
        %v1448 = vpop.permute.xlu0 %1447
        %v1449 = vperm.slane %v231, 0
        %v1450 = vlaneseq
        %v1451 = vshrl.u32 %v1450, 7
        %1453 = vset.pattern.permute.xlu0 %v1451
        %1454 = vperm.xlu0 %1453, %v1449
        %v1455 = vpop.permute.xlu0 %1454
        %v1456 = vlaneseq
        %v1457 = vshrl.u32 %v1456, 7
        %v1458 = vadd.s32 %v1457, 8
        %1459 = vset.pattern.permute.xlu0 %v1458
        %1460 = vperm.xlu0 %1459, %v1449
        %v1461 = vpop.permute.xlu0 %1460
        %v1462 = vperm.slane %v231, 1
        %v1463 = vlaneseq
        %v1464 = vshrl.u32 %v1463, 7
        %1466 = vset.pattern.permute.xlu0 %v1464
        %1467 = vperm.xlu0 %1466, %v1462
        %v1468 = vpop.permute.xlu0 %1467
        %v1469 = vlaneseq
        %v1470 = vshrl.u32 %v1469, 7
        %v1471 = vadd.s32 %v1470, 8
        %1472 = vset.pattern.permute.xlu0 %v1471
        %1473 = vperm.xlu0 %1472, %v1462
        %v1474 = vpop.permute.xlu0 %1473
        %v1475 = vperm.slane %v231, 2
        %v1476 = vlaneseq
        %v1477 = vshrl.u32 %v1476, 7
        %1479 = vset.pattern.permute.xlu0 %v1477
        %1480 = vperm.xlu0 %1479, %v1475
        %v1481 = vpop.permute.xlu0 %1480
        %v1482 = vlaneseq
        %v1483 = vshrl.u32 %v1482, 7
        %v1484 = vadd.s32 %v1483, 8
        %1485 = vset.pattern.permute.xlu0 %v1484
        %1486 = vperm.xlu0 %1485, %v1475
        %v1487 = vpop.permute.xlu0 %1486
        %v1488 = vperm.slane %v231, 3
        %v1489 = vlaneseq
        %v1490 = vshrl.u32 %v1489, 7
        %1492 = vset.pattern.permute.xlu0 %v1490
        %1493 = vperm.xlu0 %1492, %v1488
        %v1494 = vpop.permute.xlu0 %1493
        %v1495 = vlaneseq
        %v1496 = vshrl.u32 %v1495, 7
        %v1497 = vadd.s32 %v1496, 8
        %1498 = vset.pattern.permute.xlu0 %v1497
        %1499 = vperm.xlu0 %1498, %v1488
        %v1500 = vpop.permute.xlu0 %1499
        %v1501 = vperm.slane %v231, 4
        %v1502 = vlaneseq
        %v1503 = vshrl.u32 %v1502, 7
        %1505 = vset.pattern.permute.xlu0 %v1503
        %1506 = vperm.xlu0 %1505, %v1501
        %v1507 = vpop.permute.xlu0 %1506
        %v1508 = vlaneseq
        %v1509 = vshrl.u32 %v1508, 7
        %v1510 = vadd.s32 %v1509, 8
        %1511 = vset.pattern.permute.xlu0 %v1510
        %1512 = vperm.xlu0 %1511, %v1501
        %v1513 = vpop.permute.xlu0 %1512
        %v1514 = vperm.slane %v231, 5
        %v1515 = vlaneseq
        %v1516 = vshrl.u32 %v1515, 7
        %1518 = vset.pattern.permute.xlu0 %v1516
        %1519 = vperm.xlu0 %1518, %v1514
        %v1520 = vpop.permute.xlu0 %1519
        %v1521 = vlaneseq
        %v1522 = vshrl.u32 %v1521, 7
        %v1523 = vadd.s32 %v1522, 8
        %1524 = vset.pattern.permute.xlu0 %v1523
        %1525 = vperm.xlu0 %1524, %v1514
        %v1526 = vpop.permute.xlu0 %1525
        %v1527 = vperm.slane %v231, 6
        %v1528 = vlaneseq
        %v1529 = vshrl.u32 %v1528, 7
        %1531 = vset.pattern.permute.xlu0 %v1529
        %1532 = vperm.xlu0 %1531, %v1527
        %v1533 = vpop.permute.xlu0 %1532
        %v1534 = vlaneseq
        %v1535 = vshrl.u32 %v1534, 7
        %v1536 = vadd.s32 %v1535, 8
        %1537 = vset.pattern.permute.xlu0 %v1536
        %1538 = vperm.xlu0 %1537, %v1527
        %v1539 = vpop.permute.xlu0 %1538
        %v1540 = vperm.slane %v231, 7
        %v1541 = vlaneseq
        %v1542 = vshrl.u32 %v1541, 7
        %1544 = vset.pattern.permute.xlu0 %v1542
        %1545 = vperm.xlu0 %1544, %v1540
        %v1546 = vpop.permute.xlu0 %1545
        %v1547 = vlaneseq
        %v1548 = vshrl.u32 %v1547, 7
        %v1549 = vadd.s32 %v1548, 8
        %1550 = vset.pattern.permute.xlu0 %v1549
        %1551 = vperm.xlu0 %1550, %v1540
        %v1552 = vpop.permute.xlu0 %1551
        %v1553 = vperm.slane %v236, 0
        %v1554 = vlaneseq
        %v1555 = vshrl.u32 %v1554, 7
        %1557 = vset.pattern.permute.xlu0 %v1555
        %1558 = vperm.xlu0 %1557, %v1553
        %v1559 = vpop.permute.xlu0 %1558
        %v1560 = vlaneseq
        %v1561 = vshrl.u32 %v1560, 7
        %v1562 = vadd.s32 %v1561, 8
        %1563 = vset.pattern.permute.xlu0 %v1562
        %1564 = vperm.xlu0 %1563, %v1553
        %v1565 = vpop.permute.xlu0 %1564
        %v1566 = vperm.slane %v236, 1
        %v1567 = vlaneseq
        %v1568 = vshrl.u32 %v1567, 7
        %1570 = vset.pattern.permute.xlu0 %v1568
        %1571 = vperm.xlu0 %1570, %v1566
        %v1572 = vpop.permute.xlu0 %1571
        %v1573 = vlaneseq
        %v1574 = vshrl.u32 %v1573, 7
        %v1575 = vadd.s32 %v1574, 8
        %1576 = vset.pattern.permute.xlu0 %v1575
        %1577 = vperm.xlu0 %1576, %v1566
        %v1578 = vpop.permute.xlu0 %1577
        %v1579 = vperm.slane %v236, 2
        %v1580 = vlaneseq
        %v1581 = vshrl.u32 %v1580, 7
        %1583 = vset.pattern.permute.xlu0 %v1581
        %1584 = vperm.xlu0 %1583, %v1579
        %v1585 = vpop.permute.xlu0 %1584
        %v1586 = vlaneseq
        %v1587 = vshrl.u32 %v1586, 7
        %v1588 = vadd.s32 %v1587, 8
        %1589 = vset.pattern.permute.xlu0 %v1588
        %1590 = vperm.xlu0 %1589, %v1579
        %v1591 = vpop.permute.xlu0 %1590
        %v1592 = vperm.slane %v236, 3
        %v1593 = vlaneseq
        %v1594 = vshrl.u32 %v1593, 7
        %1596 = vset.pattern.permute.xlu0 %v1594
        %1597 = vperm.xlu0 %1596, %v1592
        %v1598 = vpop.permute.xlu0 %1597
        %v1599 = vlaneseq
        %v1600 = vshrl.u32 %v1599, 7
        %v1601 = vadd.s32 %v1600, 8
        %1602 = vset.pattern.permute.xlu0 %v1601
        %1603 = vperm.xlu0 %1602, %v1592
        %v1604 = vpop.permute.xlu0 %1603
        %v1605 = vperm.slane %v236, 4
        %v1606 = vlaneseq
        %v1607 = vshrl.u32 %v1606, 7
        %1609 = vset.pattern.permute.xlu0 %v1607
        %1610 = vperm.xlu0 %1609, %v1605
        %v1611 = vpop.permute.xlu0 %1610
        %v1612 = vlaneseq
        %v1613 = vshrl.u32 %v1612, 7
        %v1614 = vadd.s32 %v1613, 8
        %1615 = vset.pattern.permute.xlu0 %v1614
        %1616 = vperm.xlu0 %1615, %v1605
        %v1617 = vpop.permute.xlu0 %1616
        %v1618 = vperm.slane %v236, 5
        %v1619 = vlaneseq
        %v1620 = vshrl.u32 %v1619, 7
        %1622 = vset.pattern.permute.xlu0 %v1620
        %1623 = vperm.xlu0 %1622, %v1618
        %v1624 = vpop.permute.xlu0 %1623
        %v1625 = vlaneseq
        %v1626 = vshrl.u32 %v1625, 7
        %v1627 = vadd.s32 %v1626, 8
        %1628 = vset.pattern.permute.xlu0 %v1627
        %1629 = vperm.xlu0 %1628, %v1618
        %v1630 = vpop.permute.xlu0 %1629
        %v1631 = vperm.slane %v236, 6
        %v1632 = vlaneseq
        %v1633 = vshrl.u32 %v1632, 7
        %1635 = vset.pattern.permute.xlu0 %v1633
        %1636 = vperm.xlu0 %1635, %v1631
        %v1637 = vpop.permute.xlu0 %1636
        %v1638 = vlaneseq
        %v1639 = vshrl.u32 %v1638, 7
        %v1640 = vadd.s32 %v1639, 8
        %1641 = vset.pattern.permute.xlu0 %v1640
        %1642 = vperm.xlu0 %1641, %v1631
        %v1643 = vpop.permute.xlu0 %1642
        %v1644 = vperm.slane %v236, 7
        %v1645 = vlaneseq
        %v1646 = vshrl.u32 %v1645, 7
        %1648 = vset.pattern.permute.xlu0 %v1646
        %1649 = vperm.xlu0 %1648, %v1644
        %v1650 = vpop.permute.xlu0 %1649
        %v1651 = vlaneseq
        %v1652 = vshrl.u32 %v1651, 7
        %v1653 = vadd.s32 %v1652, 8
        %1654 = vset.pattern.permute.xlu0 %v1653
        %1655 = vperm.xlu0 %1654, %v1644
        %v1656 = vpop.permute.xlu0 %1655
        %v1657 = vperm.slane %v237, 0
        %v1658 = vlaneseq
        %v1659 = vshrl.u32 %v1658, 7
        %1661 = vset.pattern.permute.xlu0 %v1659
        %1662 = vperm.xlu0 %1661, %v1657
        %v1663 = vpop.permute.xlu0 %1662
        %v1664 = vlaneseq
        %v1665 = vshrl.u32 %v1664, 7
        %v1666 = vadd.s32 %v1665, 8
        %1667 = vset.pattern.permute.xlu0 %v1666
        %1668 = vperm.xlu0 %1667, %v1657
        %v1669 = vpop.permute.xlu0 %1668
        %v1670 = vperm.slane %v237, 1
        %v1671 = vlaneseq
        %v1672 = vshrl.u32 %v1671, 7
        %1674 = vset.pattern.permute.xlu0 %v1672
        %1675 = vperm.xlu0 %1674, %v1670
        %v1676 = vpop.permute.xlu0 %1675
        %v1677 = vlaneseq
        %v1678 = vshrl.u32 %v1677, 7
        %v1679 = vadd.s32 %v1678, 8
        %1680 = vset.pattern.permute.xlu0 %v1679
        %1681 = vperm.xlu0 %1680, %v1670
        %v1682 = vpop.permute.xlu0 %1681
        %v1683 = vperm.slane %v237, 2
        %v1684 = vlaneseq
        %v1685 = vshrl.u32 %v1684, 7
        %1687 = vset.pattern.permute.xlu0 %v1685
        %1688 = vperm.xlu0 %1687, %v1683
        %v1689 = vpop.permute.xlu0 %1688
        %v1690 = vlaneseq
        %v1691 = vshrl.u32 %v1690, 7
        %v1692 = vadd.s32 %v1691, 8
        %1693 = vset.pattern.permute.xlu0 %v1692
        %1694 = vperm.xlu0 %1693, %v1683
        %v1695 = vpop.permute.xlu0 %1694
        %v1696 = vperm.slane %v237, 3
        %v1697 = vlaneseq
        %v1698 = vshrl.u32 %v1697, 7
        %1700 = vset.pattern.permute.xlu0 %v1698
        %1701 = vperm.xlu0 %1700, %v1696
        %v1702 = vpop.permute.xlu0 %1701
        %v1703 = vlaneseq
        %v1704 = vshrl.u32 %v1703, 7
        %v1705 = vadd.s32 %v1704, 8
        %1706 = vset.pattern.permute.xlu0 %v1705
        %1707 = vperm.xlu0 %1706, %v1696
        %v1708 = vpop.permute.xlu0 %1707
        %v1709 = vperm.slane %v237, 4
        %v1710 = vlaneseq
        %v1711 = vshrl.u32 %v1710, 7
        %1713 = vset.pattern.permute.xlu0 %v1711
        %1714 = vperm.xlu0 %1713, %v1709
        %v1715 = vpop.permute.xlu0 %1714
        %v1716 = vlaneseq
        %v1717 = vshrl.u32 %v1716, 7
        %v1718 = vadd.s32 %v1717, 8
        %1719 = vset.pattern.permute.xlu0 %v1718
        %1720 = vperm.xlu0 %1719, %v1709
        %v1721 = vpop.permute.xlu0 %1720
        %v1722 = vperm.slane %v237, 5
        %v1723 = vlaneseq
        %v1724 = vshrl.u32 %v1723, 7
        %1726 = vset.pattern.permute.xlu0 %v1724
        %1727 = vperm.xlu0 %1726, %v1722
        %v1728 = vpop.permute.xlu0 %1727
        %v1729 = vlaneseq
        %v1730 = vshrl.u32 %v1729, 7
        %v1731 = vadd.s32 %v1730, 8
        %1732 = vset.pattern.permute.xlu0 %v1731
        %1733 = vperm.xlu0 %1732, %v1722
        %v1734 = vpop.permute.xlu0 %1733
        %v1735 = vperm.slane %v237, 6
        %v1736 = vlaneseq
        %v1737 = vshrl.u32 %v1736, 7
        %1739 = vset.pattern.permute.xlu0 %v1737
        %1740 = vperm.xlu0 %1739, %v1735
        %v1741 = vpop.permute.xlu0 %1740
        %v1742 = vlaneseq
        %v1743 = vshrl.u32 %v1742, 7
        %v1744 = vadd.s32 %v1743, 8
        %1745 = vset.pattern.permute.xlu0 %v1744
        %1746 = vperm.xlu0 %1745, %v1735
        %v1747 = vpop.permute.xlu0 %1746
        %v1748 = vperm.slane %v237, 7
        %v1749 = vlaneseq
        %v1750 = vshrl.u32 %v1749, 7
        %1752 = vset.pattern.permute.xlu0 %v1750
        %1753 = vperm.xlu0 %1752, %v1748
        %v1754 = vpop.permute.xlu0 %1753
        %v1755 = vlaneseq
        %v1756 = vshrl.u32 %v1755, 7
        %v1757 = vadd.s32 %v1756, 8
        %1758 = vset.pattern.permute.xlu0 %v1757
        %1759 = vperm.xlu0 %1758, %v1748
        %v1760 = vpop.permute.xlu0 %1759
        %v1761 = vperm.slane %v238, 0
        %v1762 = vlaneseq
        %v1763 = vshrl.u32 %v1762, 7
        %1765 = vset.pattern.permute.xlu0 %v1763
        %1766 = vperm.xlu0 %1765, %v1761
        %v1767 = vpop.permute.xlu0 %1766
        %v1768 = vlaneseq
        %v1769 = vshrl.u32 %v1768, 7
        %v1770 = vadd.s32 %v1769, 8
        %1771 = vset.pattern.permute.xlu0 %v1770
        %1772 = vperm.xlu0 %1771, %v1761
        %v1773 = vpop.permute.xlu0 %1772
        %v1774 = vperm.slane %v238, 1
        %v1775 = vlaneseq
        %v1776 = vshrl.u32 %v1775, 7
        %1778 = vset.pattern.permute.xlu0 %v1776
        %1779 = vperm.xlu0 %1778, %v1774
        %v1780 = vpop.permute.xlu0 %1779
        %v1781 = vlaneseq
        %v1782 = vshrl.u32 %v1781, 7
        %v1783 = vadd.s32 %v1782, 8
        %1784 = vset.pattern.permute.xlu0 %v1783
        %1785 = vperm.xlu0 %1784, %v1774
        %v1786 = vpop.permute.xlu0 %1785
        %v1787 = vperm.slane %v238, 2
        %v1788 = vlaneseq
        %v1789 = vshrl.u32 %v1788, 7
        %1791 = vset.pattern.permute.xlu0 %v1789
        %1792 = vperm.xlu0 %1791, %v1787
        %v1793 = vpop.permute.xlu0 %1792
        %v1794 = vlaneseq
        %v1795 = vshrl.u32 %v1794, 7
        %v1796 = vadd.s32 %v1795, 8
        %1797 = vset.pattern.permute.xlu0 %v1796
        %1798 = vperm.xlu0 %1797, %v1787
        %v1799 = vpop.permute.xlu0 %1798
        %v1800 = vperm.slane %v238, 3
        %v1801 = vlaneseq
        %v1802 = vshrl.u32 %v1801, 7
        %1804 = vset.pattern.permute.xlu0 %v1802
        %1805 = vperm.xlu0 %1804, %v1800
        %v1806 = vpop.permute.xlu0 %1805
        %v1807 = vlaneseq
        %v1808 = vshrl.u32 %v1807, 7
        %v1809 = vadd.s32 %v1808, 8
        %1810 = vset.pattern.permute.xlu0 %v1809
        %1811 = vperm.xlu0 %1810, %v1800
        %v1812 = vpop.permute.xlu0 %1811
        %v1813 = vperm.slane %v238, 4
        %v1814 = vlaneseq
        %v1815 = vshrl.u32 %v1814, 7
        %1817 = vset.pattern.permute.xlu0 %v1815
        %1818 = vperm.xlu0 %1817, %v1813
        %v1819 = vpop.permute.xlu0 %1818
        %v1820 = vlaneseq
        %v1821 = vshrl.u32 %v1820, 7
        %v1822 = vadd.s32 %v1821, 8
        %1823 = vset.pattern.permute.xlu0 %v1822
        %1824 = vperm.xlu0 %1823, %v1813
        %v1825 = vpop.permute.xlu0 %1824
        %v1826 = vperm.slane %v238, 5
        %v1827 = vlaneseq
        %v1828 = vshrl.u32 %v1827, 7
        %1830 = vset.pattern.permute.xlu0 %v1828
        %1831 = vperm.xlu0 %1830, %v1826
        %v1832 = vpop.permute.xlu0 %1831
        %v1833 = vlaneseq
        %v1834 = vshrl.u32 %v1833, 7
        %v1835 = vadd.s32 %v1834, 8
        %1836 = vset.pattern.permute.xlu0 %v1835
        %1837 = vperm.xlu0 %1836, %v1826
        %v1838 = vpop.permute.xlu0 %1837
        %v1839 = vperm.slane %v238, 6
        %v1840 = vlaneseq
        %v1841 = vshrl.u32 %v1840, 7
        %1843 = vset.pattern.permute.xlu0 %v1841
        %1844 = vperm.xlu0 %1843, %v1839
        %v1845 = vpop.permute.xlu0 %1844
        %v1846 = vlaneseq
        %v1847 = vshrl.u32 %v1846, 7
        %v1848 = vadd.s32 %v1847, 8
        %1849 = vset.pattern.permute.xlu0 %v1848
        %1850 = vperm.xlu0 %1849, %v1839
        %v1851 = vpop.permute.xlu0 %1850
        %v1852 = vperm.slane %v238, 7
        %v1853 = vlaneseq
        %v1854 = vshrl.u32 %v1853, 7
        %1856 = vset.pattern.permute.xlu0 %v1854
        %1857 = vperm.xlu0 %1856, %v1852
        %v1858 = vpop.permute.xlu0 %1857
        %v1859 = vlaneseq
        %v1860 = vshrl.u32 %v1859, 7
        %v1861 = vadd.s32 %v1860, 8
        %1862 = vset.pattern.permute.xlu0 %v1861
        %1863 = vperm.xlu0 %1862, %v1852
        %v1864 = vpop.permute.xlu0 %1863
        %v1865 = vperm.slane %v239, 0
        %v1866 = vlaneseq
        %v1867 = vshrl.u32 %v1866, 7
        %1869 = vset.pattern.permute.xlu0 %v1867
        %1870 = vperm.xlu0 %1869, %v1865
        %v1871 = vpop.permute.xlu0 %1870
        %v1872 = vlaneseq
        %v1873 = vshrl.u32 %v1872, 7
        %v1874 = vadd.s32 %v1873, 8
        %1875 = vset.pattern.permute.xlu0 %v1874
        %1876 = vperm.xlu0 %1875, %v1865
        %v1877 = vpop.permute.xlu0 %1876
        %v1878 = vperm.slane %v239, 1
        %v1879 = vlaneseq
        %v1880 = vshrl.u32 %v1879, 7
        %1882 = vset.pattern.permute.xlu0 %v1880
        %1883 = vperm.xlu0 %1882, %v1878
        %v1884 = vpop.permute.xlu0 %1883
        %v1885 = vlaneseq
        %v1886 = vshrl.u32 %v1885, 7
        %v1887 = vadd.s32 %v1886, 8
        %1888 = vset.pattern.permute.xlu0 %v1887
        %1889 = vperm.xlu0 %1888, %v1878
        %v1890 = vpop.permute.xlu0 %1889
        %v1891 = vperm.slane %v239, 2
        %v1892 = vlaneseq
        %v1893 = vshrl.u32 %v1892, 7
        %1895 = vset.pattern.permute.xlu0 %v1893
        %1896 = vperm.xlu0 %1895, %v1891
        %v1897 = vpop.permute.xlu0 %1896
        %v1898 = vlaneseq
        %v1899 = vshrl.u32 %v1898, 7
        %v1900 = vadd.s32 %v1899, 8
        %1901 = vset.pattern.permute.xlu0 %v1900
        %1902 = vperm.xlu0 %1901, %v1891
        %v1903 = vpop.permute.xlu0 %1902
        %v1904 = vperm.slane %v239, 3
        %v1905 = vlaneseq
        %v1906 = vshrl.u32 %v1905, 7
        %1908 = vset.pattern.permute.xlu0 %v1906
        %1909 = vperm.xlu0 %1908, %v1904
        %v1910 = vpop.permute.xlu0 %1909
        %v1911 = vlaneseq
        %v1912 = vshrl.u32 %v1911, 7
        %v1913 = vadd.s32 %v1912, 8
        %1914 = vset.pattern.permute.xlu0 %v1913
        %1915 = vperm.xlu0 %1914, %v1904
        %v1916 = vpop.permute.xlu0 %1915
        %v1917 = vperm.slane %v239, 4
        %v1918 = vlaneseq
        %v1919 = vshrl.u32 %v1918, 7
        %1921 = vset.pattern.permute.xlu0 %v1919
        %1922 = vperm.xlu0 %1921, %v1917
        %v1923 = vpop.permute.xlu0 %1922
        %v1924 = vlaneseq
        %v1925 = vshrl.u32 %v1924, 7
        %v1926 = vadd.s32 %v1925, 8
        %1927 = vset.pattern.permute.xlu0 %v1926
        %1928 = vperm.xlu0 %1927, %v1917
        %v1929 = vpop.permute.xlu0 %1928
        %v1930 = vperm.slane %v239, 5
        %v1931 = vlaneseq
        %v1932 = vshrl.u32 %v1931, 7
        %1934 = vset.pattern.permute.xlu0 %v1932
        %1935 = vperm.xlu0 %1934, %v1930
        %v1936 = vpop.permute.xlu0 %1935
        %v1937 = vlaneseq
        %v1938 = vshrl.u32 %v1937, 7
        %v1939 = vadd.s32 %v1938, 8
        %1940 = vset.pattern.permute.xlu0 %v1939
        %1941 = vperm.xlu0 %1940, %v1930
        %v1942 = vpop.permute.xlu0 %1941
        %v1943 = vperm.slane %v239, 6
        %v1944 = vlaneseq
        %v1945 = vshrl.u32 %v1944, 7
        %1947 = vset.pattern.permute.xlu0 %v1945
        %1948 = vperm.xlu0 %1947, %v1943
        %v1949 = vpop.permute.xlu0 %1948
        %v1950 = vlaneseq
        %v1951 = vshrl.u32 %v1950, 7
        %v1952 = vadd.s32 %v1951, 8
        %1953 = vset.pattern.permute.xlu0 %v1952
        %1954 = vperm.xlu0 %1953, %v1943
        %v1955 = vpop.permute.xlu0 %1954
        %v1956 = vperm.slane %v239, 7
        %v1957 = vlaneseq
        %v1958 = vshrl.u32 %v1957, 7
        %1960 = vset.pattern.permute.xlu0 %v1958
        %1961 = vperm.xlu0 %1960, %v1956
        %v1962 = vpop.permute.xlu0 %1961
        %v1963 = vlaneseq
        %v1964 = vshrl.u32 %v1963, 7
        %v1965 = vadd.s32 %v1964, 8
        %1966 = vset.pattern.permute.xlu0 %v1965
        %1967 = vperm.xlu0 %1966, %v1956
        %v1968 = vpop.permute.xlu0 %1967
        %v1969 = vsel %vm1072, %v1143, %v1559
        %v1970 = vsel %vm1072, %v1149, %v1565
        %v1971 = vsel %vm1072, %v1156, %v1572
        %v1972 = vsel %vm1072, %v1162, %v1578
        %v1973 = vsel %vm1072, %v1169, %v1585
        %v1974 = vsel %vm1072, %v1175, %v1591
        %v1975 = vsel %vm1072, %v1182, %v1598
        %v1976 = vsel %vm1072, %v1188, %v1604
        %v1977 = vsel %vm1072, %v1195, %v1611
        %v1978 = vsel %vm1072, %v1201, %v1617
        %v1979 = vsel %vm1072, %v1208, %v1624
        %v1980 = vsel %vm1072, %v1214, %v1630
        %v1981 = vsel %vm1072, %v1221, %v1637
        %v1982 = vsel %vm1072, %v1227, %v1643
        %v1983 = vsel %vm1072, %v1234, %v1650
        %v1984 = vsel %vm1072, %v1240, %v1656
        %v1985 = vsel %vm1072, %v1247, %v1663
        %v1986 = vsel %vm1072, %v1253, %v1669
        %v1987 = vsel %vm1072, %v1260, %v1676
        %v1988 = vsel %vm1072, %v1266, %v1682
        %v1989 = vsel %vm1072, %v1273, %v1689
        %v1990 = vsel %vm1072, %v1279, %v1695
        %v1991 = vsel %vm1072, %v1286, %v1702
        %v1992 = vsel %vm1072, %v1292, %v1708
        %v1993 = vsel %vm1072, %v1299, %v1715
        %v1994 = vsel %vm1072, %v1305, %v1721
        %v1995 = vsel %vm1072, %v1312, %v1728
        %v1996 = vsel %vm1072, %v1318, %v1734
        %v1997 = vsel %vm1072, %v1325, %v1741
        %v1998 = vsel %vm1072, %v1331, %v1747
        %v1999 = vsel %vm1072, %v1338, %v1754
        %v2000 = vsel %vm1072, %v1344, %v1760
        %v2001 = vsel %vm1072, %v1351, %v1767
        %v2002 = vsel %vm1072, %v1357, %v1773
        %v2003 = vsel %vm1072, %v1364, %v1780
        %v2004 = vsel %vm1072, %v1370, %v1786
        %v2005 = vsel %vm1072, %v1377, %v1793
        %v2006 = vsel %vm1072, %v1383, %v1799
        %v2007 = vsel %vm1072, %v1390, %v1806
        %v2008 = vsel %vm1072, %v1396, %v1812
        %v2009 = vsel %vm1072, %v1403, %v1819
        %v2010 = vsel %vm1072, %v1409, %v1825
        %v2011 = vsel %vm1072, %v1416, %v1832
        %v2012 = vsel %vm1072, %v1422, %v1838
        %v2013 = vsel %vm1072, %v1429, %v1845
        %v2014 = vsel %vm1072, %v1435, %v1851
        %v2015 = vsel %vm1072, %v1442, %v1858
        %v2016 = vsel %vm1072, %v1448, %v1864
        %v2017 = vsel %vm1072, %v1455, %v1871
        %v2018 = vsel %vm1072, %v1461, %v1877
        %v2019 = vsel %vm1072, %v1468, %v1884
        %v2020 = vsel %vm1072, %v1474, %v1890
        %v2021 = vsel %vm1072, %v1481, %v1897
        %v2022 = vsel %vm1072, %v1487, %v1903
        %v2023 = vsel %vm1072, %v1494, %v1910
        %v2024 = vsel %vm1072, %v1500, %v1916
        %v2025 = vsel %vm1072, %v1507, %v1923
        %v2026 = vsel %vm1072, %v1513, %v1929
        %v2027 = vsel %vm1072, %v1520, %v1936
        %v2028 = vsel %vm1072, %v1526, %v1942
        %v2029 = vsel %vm1072, %v1533, %v1949
        %v2030 = vsel %vm1072, %v1539, %v1955
        %v2031 = vsel %vm1072, %v1546, %v1962
        %v2032 = vsel %vm1072, %v1552, %v1968
        %v2033 = vrot.slane %v1073, 4
        %vm2034 = vcmask 1047556
        %v2035 = vsel %vm2034, 0.0, %v2033
        %v2037 = vunpack.c.l.s4 1983009808
        %v2038 = vunpack.c.0.s8 %v2037
        %v2039 = vperm.slane %v1073, %v2038
        %v2041 = vunpack.c.l.s4 1983009808
        %v2042 = vunpack.c.0.s8 %v2041
        %v2043 = vperm.slane %v2035, %v2042
        %v2044 = vrot.slane %v2039, 4
        %v2045 = vsel %vm2034, 0.0, %v2044
        %v2047 = vunpack.c.l.s4 1934713408
        %v2048 = vunpack.c.0.s8 %v2047
        %v2049 = vperm.slane %v2039, %v2048
        %v2051 = vunpack.c.l.s4 1934713408
        %v2052 = vunpack.c.0.s8 %v2051
        %v2053 = vperm.slane %v2045, %v2052
        %v2054 = vrot.slane %v2043, 4
        %v2055 = vsel %vm2034, 0.0, %v2054
        %v2057 = vunpack.c.l.s4 1934713408
        %v2058 = vunpack.c.0.s8 %v2057
        %v2059 = vperm.slane %v2043, %v2058
        %v2061 = vunpack.c.l.s4 1934713408
        %v2062 = vunpack.c.0.s8 %v2061
        %v2063 = vperm.slane %v2055, %v2062
        %v2064 = vrot.slane %v2049, 4
        %v2065 = vsel %vm2034, 0.0, %v2064
        %v2066 = vrot.slane %v2053, 4
        %v2067 = vsel %vm2034, 0.0, %v2066
        %v2068 = vrot.slane %v2059, 4
        %v2069 = vsel %vm2034, 0.0, %v2068
        %v2070 = vrot.slane %v2063, 4
        %v2071 = vsel %vm2034, 0.0, %v2070
        %v2072 = vrot.slane %v1074, 4
        %v2073 = vsel %vm2034, 0.0, %v2072
        %v2075 = vunpack.c.l.s4 1983009808
        %v2076 = vunpack.c.0.s8 %v2075
        %v2077 = vperm.slane %v1074, %v2076
        %v2079 = vunpack.c.l.s4 1983009808
        %v2080 = vunpack.c.0.s8 %v2079
        %v2081 = vperm.slane %v2073, %v2080
        %v2082 = vrot.slane %v2077, 4
        %v2083 = vsel %vm2034, 0.0, %v2082
        %v2085 = vunpack.c.l.s4 1934713408
        %v2086 = vunpack.c.0.s8 %v2085
        %v2087 = vperm.slane %v2077, %v2086
        %v2089 = vunpack.c.l.s4 1934713408
        %v2090 = vunpack.c.0.s8 %v2089
        %v2091 = vperm.slane %v2083, %v2090
        %v2092 = vrot.slane %v2081, 4
        %v2093 = vsel %vm2034, 0.0, %v2092
        %v2095 = vunpack.c.l.s4 1934713408
        %v2096 = vunpack.c.0.s8 %v2095
        %v2097 = vperm.slane %v2081, %v2096
        %v2099 = vunpack.c.l.s4 1934713408
        %v2100 = vunpack.c.0.s8 %v2099
        %v2101 = vperm.slane %v2093, %v2100
        %v2102 = vrot.slane %v2087, 4
        %v2103 = vsel %vm2034, 0.0, %v2102
        %v2104 = vrot.slane %v2091, 4
        %v2105 = vsel %vm2034, 0.0, %v2104
        %v2106 = vrot.slane %v2097, 4
        %v2107 = vsel %vm2034, 0.0, %v2106
        %v2108 = vrot.slane %v2101, 4
        %v2109 = vsel %vm2034, 0.0, %v2108
        %v2110 = vrot.slane %v1075, 4
        %v2111 = vsel %vm2034, 0.0, %v2110
        %v2113 = vunpack.c.l.s4 1983009808
        %v2114 = vunpack.c.0.s8 %v2113
        %v2115 = vperm.slane %v1075, %v2114
        %v2117 = vunpack.c.l.s4 1983009808
        %v2118 = vunpack.c.0.s8 %v2117
        %v2119 = vperm.slane %v2111, %v2118
        %v2120 = vrot.slane %v2115, 4
        %v2121 = vsel %vm2034, 0.0, %v2120
        %v2123 = vunpack.c.l.s4 1934713408
        %v2124 = vunpack.c.0.s8 %v2123
        %v2125 = vperm.slane %v2115, %v2124
        %v2127 = vunpack.c.l.s4 1934713408
        %v2128 = vunpack.c.0.s8 %v2127
        %v2129 = vperm.slane %v2121, %v2128
        %v2130 = vrot.slane %v2119, 4
        %v2131 = vsel %vm2034, 0.0, %v2130
        %v2133 = vunpack.c.l.s4 1934713408
        %v2134 = vunpack.c.0.s8 %v2133
        %v2135 = vperm.slane %v2119, %v2134
        %v2137 = vunpack.c.l.s4 1934713408
        %v2138 = vunpack.c.0.s8 %v2137
        %v2139 = vperm.slane %v2131, %v2138
        %v2140 = vrot.slane %v2125, 4
        %v2141 = vsel %vm2034, 0.0, %v2140
        %v2142 = vrot.slane %v2129, 4
        %v2143 = vsel %vm2034, 0.0, %v2142
        %v2144 = vrot.slane %v2135, 4
        %v2145 = vsel %vm2034, 0.0, %v2144
        %v2146 = vrot.slane %v2139, 4
        %v2147 = vsel %vm2034, 0.0, %v2146
        %v2148 = vrot.slane %v1076, 4
        %v2149 = vsel %vm2034, 0.0, %v2148
        %v2151 = vunpack.c.l.s4 1983009808
        %v2152 = vunpack.c.0.s8 %v2151
        %v2153 = vperm.slane %v1076, %v2152
        %v2155 = vunpack.c.l.s4 1983009808
        %v2156 = vunpack.c.0.s8 %v2155
        %v2157 = vperm.slane %v2149, %v2156
        %v2158 = vrot.slane %v2153, 4
        %v2159 = vsel %vm2034, 0.0, %v2158
        %v2161 = vunpack.c.l.s4 1934713408
        %v2162 = vunpack.c.0.s8 %v2161
        %v2163 = vperm.slane %v2153, %v2162
        %v2165 = vunpack.c.l.s4 1934713408
        %v2166 = vunpack.c.0.s8 %v2165
        %v2167 = vperm.slane %v2159, %v2166
        %v2168 = vrot.slane %v2157, 4
        %v2169 = vsel %vm2034, 0.0, %v2168
        %v2171 = vunpack.c.l.s4 1934713408
        %v2172 = vunpack.c.0.s8 %v2171
        %v2173 = vperm.slane %v2157, %v2172
        %v2175 = vunpack.c.l.s4 1934713408
        %v2176 = vunpack.c.0.s8 %v2175
        %v2177 = vperm.slane %v2169, %v2176
        %v2178 = vrot.slane %v2163, 4
        %v2179 = vsel %vm2034, 0.0, %v2178
        %v2180 = vrot.slane %v2167, 4
        %v2181 = vsel %vm2034, 0.0, %v2180
        %v2182 = vrot.slane %v2173, 4
        %v2183 = vsel %vm2034, 0.0, %v2182
        %v2184 = vrot.slane %v2177, 4
        %v2185 = vsel %vm2034, 0.0, %v2184
        %v2186 = vrot.slane %v1077, 4
        %v2187 = vsel %vm2034, 0.0, %v2186
        %v2189 = vunpack.c.l.s4 1983009808
        %v2190 = vunpack.c.0.s8 %v2189
        %v2191 = vperm.slane %v1077, %v2190
        %v2193 = vunpack.c.l.s4 1983009808
        %v2194 = vunpack.c.0.s8 %v2193
        %v2195 = vperm.slane %v2187, %v2194
        %v2196 = vrot.slane %v2191, 4
        %v2197 = vsel %vm2034, 0.0, %v2196
        %v2199 = vunpack.c.l.s4 1934713408
        %v2200 = vunpack.c.0.s8 %v2199
        %v2201 = vperm.slane %v2191, %v2200
        %v2203 = vunpack.c.l.s4 1934713408
        %v2204 = vunpack.c.0.s8 %v2203
        %v2205 = vperm.slane %v2197, %v2204
        %v2206 = vrot.slane %v2195, 4
        %v2207 = vsel %vm2034, 0.0, %v2206
        %v2209 = vunpack.c.l.s4 1934713408
        %v2210 = vunpack.c.0.s8 %v2209
        %v2211 = vperm.slane %v2195, %v2210
        %v2213 = vunpack.c.l.s4 1934713408
        %v2214 = vunpack.c.0.s8 %v2213
        %v2215 = vperm.slane %v2207, %v2214
        %v2216 = vrot.slane %v2201, 4
        %v2217 = vsel %vm2034, 0.0, %v2216
        %v2218 = vrot.slane %v2205, 4
        %v2219 = vsel %vm2034, 0.0, %v2218
        %v2220 = vrot.slane %v2211, 4
        %v2221 = vsel %vm2034, 0.0, %v2220
        %v2222 = vrot.slane %v2215, 4
        %v2223 = vsel %vm2034, 0.0, %v2222
        %v2224 = vrot.slane %v1078, 4
        %v2225 = vsel %vm2034, 0.0, %v2224
        %v2227 = vunpack.c.l.s4 1983009808
        %v2228 = vunpack.c.0.s8 %v2227
        %v2229 = vperm.slane %v1078, %v2228
        %v2231 = vunpack.c.l.s4 1983009808
        %v2232 = vunpack.c.0.s8 %v2231
        %v2233 = vperm.slane %v2225, %v2232
        %v2234 = vrot.slane %v2229, 4
        %v2235 = vsel %vm2034, 0.0, %v2234
        %v2237 = vunpack.c.l.s4 1934713408
        %v2238 = vunpack.c.0.s8 %v2237
        %v2239 = vperm.slane %v2229, %v2238
        %v2241 = vunpack.c.l.s4 1934713408
        %v2242 = vunpack.c.0.s8 %v2241
        %v2243 = vperm.slane %v2235, %v2242
        %v2244 = vrot.slane %v2233, 4
        %v2245 = vsel %vm2034, 0.0, %v2244
        %v2247 = vunpack.c.l.s4 1934713408
        %v2248 = vunpack.c.0.s8 %v2247
        %v2249 = vperm.slane %v2233, %v2248
        %v2251 = vunpack.c.l.s4 1934713408
        %v2252 = vunpack.c.0.s8 %v2251
        %v2253 = vperm.slane %v2245, %v2252
        %v2254 = vrot.slane %v2239, 4
        %v2255 = vsel %vm2034, 0.0, %v2254
        %v2256 = vrot.slane %v2243, 4
        %v2257 = vsel %vm2034, 0.0, %v2256
        %v2258 = vrot.slane %v2249, 4
        %v2259 = vsel %vm2034, 0.0, %v2258
        %v2260 = vrot.slane %v2253, 4
        %v2261 = vsel %vm2034, 0.0, %v2260
        %v2262 = vrot.slane %v1079, 4
        %v2263 = vsel %vm2034, 0.0, %v2262
        %v2265 = vunpack.c.l.s4 1983009808
        %v2266 = vunpack.c.0.s8 %v2265
        %v2267 = vperm.slane %v1079, %v2266
        %v2269 = vunpack.c.l.s4 1983009808
        %v2270 = vunpack.c.0.s8 %v2269
        %v2271 = vperm.slane %v2263, %v2270
        %v2272 = vrot.slane %v2267, 4
        %v2273 = vsel %vm2034, 0.0, %v2272
        %v2275 = vunpack.c.l.s4 1934713408
        %v2276 = vunpack.c.0.s8 %v2275
        %v2277 = vperm.slane %v2267, %v2276
        %v2279 = vunpack.c.l.s4 1934713408
        %v2280 = vunpack.c.0.s8 %v2279
        %v2281 = vperm.slane %v2273, %v2280
        %v2282 = vrot.slane %v2271, 4
        %v2283 = vsel %vm2034, 0.0, %v2282
        %v2285 = vunpack.c.l.s4 1934713408
        %v2286 = vunpack.c.0.s8 %v2285
        %v2287 = vperm.slane %v2271, %v2286
        %v2289 = vunpack.c.l.s4 1934713408
        %v2290 = vunpack.c.0.s8 %v2289
        %v2291 = vperm.slane %v2283, %v2290
        %v2292 = vrot.slane %v2277, 4
        %v2293 = vsel %vm2034, 0.0, %v2292
        %v2294 = vrot.slane %v2281, 4
        %v2295 = vsel %vm2034, 0.0, %v2294
        %v2296 = vrot.slane %v2287, 4
        %v2297 = vsel %vm2034, 0.0, %v2296
        %v2298 = vrot.slane %v2291, 4
        %v2299 = vsel %vm2034, 0.0, %v2298
        %v2300 = vrot.slane %v1080, 4
        %v2301 = vsel %vm2034, 0.0, %v2300
        %v2303 = vunpack.c.l.s4 1983009808
        %v2304 = vunpack.c.0.s8 %v2303
        %v2305 = vperm.slane %v1080, %v2304
        %v2307 = vunpack.c.l.s4 1983009808
        %v2308 = vunpack.c.0.s8 %v2307
        %v2309 = vperm.slane %v2301, %v2308
        %v2310 = vrot.slane %v2305, 4
        %v2311 = vsel %vm2034, 0.0, %v2310
        %v2313 = vunpack.c.l.s4 1934713408
        %v2314 = vunpack.c.0.s8 %v2313
        %v2315 = vperm.slane %v2305, %v2314
        %v2317 = vunpack.c.l.s4 1934713408
        %v2318 = vunpack.c.0.s8 %v2317
        %v2319 = vperm.slane %v2311, %v2318
        %v2320 = vrot.slane %v2309, 4
        %v2321 = vsel %vm2034, 0.0, %v2320
        %v2323 = vunpack.c.l.s4 1934713408
        %v2324 = vunpack.c.0.s8 %v2323
        %v2325 = vperm.slane %v2309, %v2324
        %v2327 = vunpack.c.l.s4 1934713408
        %v2328 = vunpack.c.0.s8 %v2327
        %v2329 = vperm.slane %v2321, %v2328
        %v2330 = vrot.slane %v2315, 4
        %v2331 = vsel %vm2034, 0.0, %v2330
        %v2332 = vrot.slane %v2319, 4
        %v2333 = vsel %vm2034, 0.0, %v2332
        %v2334 = vrot.slane %v2325, 4
        %v2335 = vsel %vm2034, 0.0, %v2334
        %v2336 = vrot.slane %v2329, 4
        %v2337 = vsel %vm2034, 0.0, %v2336
        %v2338 = vrot.slane %v1081, 4
        %v2339 = vsel %vm2034, 0.0, %v2338
        %v2341 = vunpack.c.l.s4 1983009808
        %v2342 = vunpack.c.0.s8 %v2341
        %v2343 = vperm.slane %v1081, %v2342
        %v2345 = vunpack.c.l.s4 1983009808
        %v2346 = vunpack.c.0.s8 %v2345
        %v2347 = vperm.slane %v2339, %v2346
        %v2348 = vrot.slane %v2343, 4
        %v2349 = vsel %vm2034, 0.0, %v2348
        %v2351 = vunpack.c.l.s4 1934713408
        %v2352 = vunpack.c.0.s8 %v2351
        %v2353 = vperm.slane %v2343, %v2352
        %v2355 = vunpack.c.l.s4 1934713408
        %v2356 = vunpack.c.0.s8 %v2355
        %v2357 = vperm.slane %v2349, %v2356
        %v2358 = vrot.slane %v2347, 4
        %v2359 = vsel %vm2034, 0.0, %v2358
        %v2361 = vunpack.c.l.s4 1934713408
        %v2362 = vunpack.c.0.s8 %v2361
        %v2363 = vperm.slane %v2347, %v2362
        %v2365 = vunpack.c.l.s4 1934713408
        %v2366 = vunpack.c.0.s8 %v2365
        %v2367 = vperm.slane %v2359, %v2366
        %v2368 = vrot.slane %v2353, 4
        %v2369 = vsel %vm2034, 0.0, %v2368
        %v2370 = vrot.slane %v2357, 4
        %v2371 = vsel %vm2034, 0.0, %v2370
        %v2372 = vrot.slane %v2363, 4
        %v2373 = vsel %vm2034, 0.0, %v2372
        %v2374 = vrot.slane %v2367, 4
        %v2375 = vsel %vm2034, 0.0, %v2374
        %v2376 = vrot.slane %v1082, 4
        %v2377 = vsel %vm2034, 0.0, %v2376
        %v2379 = vunpack.c.l.s4 1983009808
        %v2380 = vunpack.c.0.s8 %v2379
        %v2381 = vperm.slane %v1082, %v2380
        %v2383 = vunpack.c.l.s4 1983009808
        %v2384 = vunpack.c.0.s8 %v2383
        %v2385 = vperm.slane %v2377, %v2384
        %v2386 = vrot.slane %v2381, 4
        %v2387 = vsel %vm2034, 0.0, %v2386
        %v2389 = vunpack.c.l.s4 1934713408
        %v2390 = vunpack.c.0.s8 %v2389
        %v2391 = vperm.slane %v2381, %v2390
        %v2393 = vunpack.c.l.s4 1934713408
        %v2394 = vunpack.c.0.s8 %v2393
        %v2395 = vperm.slane %v2387, %v2394
        %v2396 = vrot.slane %v2385, 4
        %v2397 = vsel %vm2034, 0.0, %v2396
        %v2399 = vunpack.c.l.s4 1934713408
        %v2400 = vunpack.c.0.s8 %v2399
        %v2401 = vperm.slane %v2385, %v2400
        %v2403 = vunpack.c.l.s4 1934713408
        %v2404 = vunpack.c.0.s8 %v2403
        %v2405 = vperm.slane %v2397, %v2404
        %v2406 = vrot.slane %v2391, 4
        %v2407 = vsel %vm2034, 0.0, %v2406
        %v2408 = vrot.slane %v2395, 4
        %v2409 = vsel %vm2034, 0.0, %v2408
        %v2410 = vrot.slane %v2401, 4
        %v2411 = vsel %vm2034, 0.0, %v2410
        %v2412 = vrot.slane %v2405, 4
        %v2413 = vsel %vm2034, 0.0, %v2412
        %v2414 = vrot.slane %v1083, 4
        %v2415 = vsel %vm2034, 0.0, %v2414
        %v2417 = vunpack.c.l.s4 1983009808
        %v2418 = vunpack.c.0.s8 %v2417
        %v2419 = vperm.slane %v1083, %v2418
        %v2421 = vunpack.c.l.s4 1983009808
        %v2422 = vunpack.c.0.s8 %v2421
        %v2423 = vperm.slane %v2415, %v2422
        %v2424 = vrot.slane %v2419, 4
        %v2425 = vsel %vm2034, 0.0, %v2424
        %v2427 = vunpack.c.l.s4 1934713408
        %v2428 = vunpack.c.0.s8 %v2427
        %v2429 = vperm.slane %v2419, %v2428
        %v2431 = vunpack.c.l.s4 1934713408
        %v2432 = vunpack.c.0.s8 %v2431
        %v2433 = vperm.slane %v2425, %v2432
        %v2434 = vrot.slane %v2423, 4
        %v2435 = vsel %vm2034, 0.0, %v2434
        %v2437 = vunpack.c.l.s4 1934713408
        %v2438 = vunpack.c.0.s8 %v2437
        %v2439 = vperm.slane %v2423, %v2438
        %v2441 = vunpack.c.l.s4 1934713408
        %v2442 = vunpack.c.0.s8 %v2441
        %v2443 = vperm.slane %v2435, %v2442
        %v2444 = vrot.slane %v2429, 4
        %v2445 = vsel %vm2034, 0.0, %v2444
        %v2446 = vrot.slane %v2433, 4
        %v2447 = vsel %vm2034, 0.0, %v2446
        %v2448 = vrot.slane %v2439, 4
        %v2449 = vsel %vm2034, 0.0, %v2448
        %v2450 = vrot.slane %v2443, 4
        %v2451 = vsel %vm2034, 0.0, %v2450
        %v2452 = vrot.slane %v1084, 4
        %v2453 = vsel %vm2034, 0.0, %v2452
        %v2455 = vunpack.c.l.s4 1983009808
        %v2456 = vunpack.c.0.s8 %v2455
        %v2457 = vperm.slane %v1084, %v2456
        %v2459 = vunpack.c.l.s4 1983009808
        %v2460 = vunpack.c.0.s8 %v2459
        %v2461 = vperm.slane %v2453, %v2460
        %v2462 = vrot.slane %v2457, 4
        %v2463 = vsel %vm2034, 0.0, %v2462
        %v2465 = vunpack.c.l.s4 1934713408
        %v2466 = vunpack.c.0.s8 %v2465
        %v2467 = vperm.slane %v2457, %v2466
        %v2469 = vunpack.c.l.s4 1934713408
        %v2470 = vunpack.c.0.s8 %v2469
        %v2471 = vperm.slane %v2463, %v2470
        %v2472 = vrot.slane %v2461, 4
        %v2473 = vsel %vm2034, 0.0, %v2472
        %v2475 = vunpack.c.l.s4 1934713408
        %v2476 = vunpack.c.0.s8 %v2475
        %v2477 = vperm.slane %v2461, %v2476
        %v2479 = vunpack.c.l.s4 1934713408
        %v2480 = vunpack.c.0.s8 %v2479
        %v2481 = vperm.slane %v2473, %v2480
        %v2482 = vrot.slane %v2467, 4
        %v2483 = vsel %vm2034, 0.0, %v2482
        %v2484 = vrot.slane %v2471, 4
        %v2485 = vsel %vm2034, 0.0, %v2484
        %v2486 = vrot.slane %v2477, 4
        %v2487 = vsel %vm2034, 0.0, %v2486
        %v2488 = vrot.slane %v2481, 4
        %v2489 = vsel %vm2034, 0.0, %v2488
        %v2490 = vrot.slane %v1085, 4
        %v2491 = vsel %vm2034, 0.0, %v2490
        %v2493 = vunpack.c.l.s4 1983009808
        %v2494 = vunpack.c.0.s8 %v2493
        %v2495 = vperm.slane %v1085, %v2494
        %v2497 = vunpack.c.l.s4 1983009808
        %v2498 = vunpack.c.0.s8 %v2497
        %v2499 = vperm.slane %v2491, %v2498
        %v2500 = vrot.slane %v2495, 4
        %v2501 = vsel %vm2034, 0.0, %v2500
        %v2503 = vunpack.c.l.s4 1934713408
        %v2504 = vunpack.c.0.s8 %v2503
        %v2505 = vperm.slane %v2495, %v2504
        %v2507 = vunpack.c.l.s4 1934713408
        %v2508 = vunpack.c.0.s8 %v2507
        %v2509 = vperm.slane %v2501, %v2508
        %v2510 = vrot.slane %v2499, 4
        %v2511 = vsel %vm2034, 0.0, %v2510
        %v2513 = vunpack.c.l.s4 1934713408
        %v2514 = vunpack.c.0.s8 %v2513
        %v2515 = vperm.slane %v2499, %v2514
        %v2517 = vunpack.c.l.s4 1934713408
        %v2518 = vunpack.c.0.s8 %v2517
        %v2519 = vperm.slane %v2511, %v2518
        %v2520 = vrot.slane %v2505, 4
        %v2521 = vsel %vm2034, 0.0, %v2520
        %v2522 = vrot.slane %v2509, 4
        %v2523 = vsel %vm2034, 0.0, %v2522
        %v2524 = vrot.slane %v2515, 4
        %v2525 = vsel %vm2034, 0.0, %v2524
        %v2526 = vrot.slane %v2519, 4
        %v2527 = vsel %vm2034, 0.0, %v2526
        %v2528 = vrot.slane %v1086, 4
        %v2529 = vsel %vm2034, 0.0, %v2528
        %v2531 = vunpack.c.l.s4 1983009808
        %v2532 = vunpack.c.0.s8 %v2531
        %v2533 = vperm.slane %v1086, %v2532
        %v2535 = vunpack.c.l.s4 1983009808
        %v2536 = vunpack.c.0.s8 %v2535
        %v2537 = vperm.slane %v2529, %v2536
        %v2538 = vrot.slane %v2533, 4
        %v2539 = vsel %vm2034, 0.0, %v2538
        %v2541 = vunpack.c.l.s4 1934713408
        %v2542 = vunpack.c.0.s8 %v2541
        %v2543 = vperm.slane %v2533, %v2542
        %v2545 = vunpack.c.l.s4 1934713408
        %v2546 = vunpack.c.0.s8 %v2545
        %v2547 = vperm.slane %v2539, %v2546
        %v2548 = vrot.slane %v2537, 4
        %v2549 = vsel %vm2034, 0.0, %v2548
        %v2551 = vunpack.c.l.s4 1934713408
        %v2552 = vunpack.c.0.s8 %v2551
        %v2553 = vperm.slane %v2537, %v2552
        %v2555 = vunpack.c.l.s4 1934713408
        %v2556 = vunpack.c.0.s8 %v2555
        %v2557 = vperm.slane %v2549, %v2556
        %v2558 = vrot.slane %v2543, 4
        %v2559 = vsel %vm2034, 0.0, %v2558
        %v2560 = vrot.slane %v2547, 4
        %v2561 = vsel %vm2034, 0.0, %v2560
        %v2562 = vrot.slane %v2553, 4
        %v2563 = vsel %vm2034, 0.0, %v2562
        %v2564 = vrot.slane %v2557, 4
        %v2565 = vsel %vm2034, 0.0, %v2564
        %v2566 = vrot.slane %v1087, 4
        %v2567 = vsel %vm2034, 0.0, %v2566
        %v2569 = vunpack.c.l.s4 1983009808
        %v2570 = vunpack.c.0.s8 %v2569
        %v2571 = vperm.slane %v1087, %v2570
        %v2573 = vunpack.c.l.s4 1983009808
        %v2574 = vunpack.c.0.s8 %v2573
        %v2575 = vperm.slane %v2567, %v2574
        %v2576 = vrot.slane %v2571, 4
        %v2577 = vsel %vm2034, 0.0, %v2576
        %v2579 = vunpack.c.l.s4 1934713408
        %v2580 = vunpack.c.0.s8 %v2579
        %v2581 = vperm.slane %v2571, %v2580
        %v2583 = vunpack.c.l.s4 1934713408
        %v2584 = vunpack.c.0.s8 %v2583
        %v2585 = vperm.slane %v2577, %v2584
        %v2586 = vrot.slane %v2575, 4
        %v2587 = vsel %vm2034, 0.0, %v2586
        %v2589 = vunpack.c.l.s4 1934713408
        %v2590 = vunpack.c.0.s8 %v2589
        %v2591 = vperm.slane %v2575, %v2590
        %v2593 = vunpack.c.l.s4 1934713408
        %v2594 = vunpack.c.0.s8 %v2593
        %v2595 = vperm.slane %v2587, %v2594
        %v2596 = vrot.slane %v2581, 4
        %v2597 = vsel %vm2034, 0.0, %v2596
        %v2598 = vrot.slane %v2585, 4
        %v2599 = vsel %vm2034, 0.0, %v2598
        %v2600 = vrot.slane %v2591, 4
        %v2601 = vsel %vm2034, 0.0, %v2600
        %v2602 = vrot.slane %v2595, 4
        %v2603 = vsel %vm2034, 0.0, %v2602
        %v2604 = vrot.slane %v1088, 4
        %v2605 = vsel %vm2034, 0.0, %v2604
        %v2607 = vunpack.c.l.s4 1983009808
        %v2608 = vunpack.c.0.s8 %v2607
        %v2609 = vperm.slane %v1088, %v2608
        %v2611 = vunpack.c.l.s4 1983009808
        %v2612 = vunpack.c.0.s8 %v2611
        %v2613 = vperm.slane %v2605, %v2612
        %v2614 = vrot.slane %v2609, 4
        %v2615 = vsel %vm2034, 0.0, %v2614
        %v2617 = vunpack.c.l.s4 1934713408
        %v2618 = vunpack.c.0.s8 %v2617
        %v2619 = vperm.slane %v2609, %v2618
        %v2621 = vunpack.c.l.s4 1934713408
        %v2622 = vunpack.c.0.s8 %v2621
        %v2623 = vperm.slane %v2615, %v2622
        %v2624 = vrot.slane %v2613, 4
        %v2625 = vsel %vm2034, 0.0, %v2624
        %v2627 = vunpack.c.l.s4 1934713408
        %v2628 = vunpack.c.0.s8 %v2627
        %v2629 = vperm.slane %v2613, %v2628
        %v2631 = vunpack.c.l.s4 1934713408
        %v2632 = vunpack.c.0.s8 %v2631
        %v2633 = vperm.slane %v2625, %v2632
        %v2634 = vrot.slane %v2619, 4
        %v2635 = vsel %vm2034, 0.0, %v2634
        %v2636 = vrot.slane %v2623, 4
        %v2637 = vsel %vm2034, 0.0, %v2636
        %v2638 = vrot.slane %v2629, 4
        %v2639 = vsel %vm2034, 0.0, %v2638
        %v2640 = vrot.slane %v2633, 4
        %v2641 = vsel %vm2034, 0.0, %v2640
        %v2642 = vrot.slane %v1089, 4
        %v2643 = vsel %vm2034, 0.0, %v2642
        %v2645 = vunpack.c.l.s4 1983009808
        %v2646 = vunpack.c.0.s8 %v2645
        %v2647 = vperm.slane %v1089, %v2646
        %v2649 = vunpack.c.l.s4 1983009808
        %v2650 = vunpack.c.0.s8 %v2649
        %v2651 = vperm.slane %v2643, %v2650
        %v2652 = vrot.slane %v2647, 4
        %v2653 = vsel %vm2034, 0.0, %v2652
        %v2655 = vunpack.c.l.s4 1934713408
        %v2656 = vunpack.c.0.s8 %v2655
        %v2657 = vperm.slane %v2647, %v2656
        %v2659 = vunpack.c.l.s4 1934713408
        %v2660 = vunpack.c.0.s8 %v2659
        %v2661 = vperm.slane %v2653, %v2660
        %v2662 = vrot.slane %v2651, 4
        %v2663 = vsel %vm2034, 0.0, %v2662
        %v2665 = vunpack.c.l.s4 1934713408
        %v2666 = vunpack.c.0.s8 %v2665
        %v2667 = vperm.slane %v2651, %v2666
        %v2669 = vunpack.c.l.s4 1934713408
        %v2670 = vunpack.c.0.s8 %v2669
        %v2671 = vperm.slane %v2663, %v2670
        %v2672 = vrot.slane %v2657, 4
        %v2673 = vsel %vm2034, 0.0, %v2672
        %v2674 = vrot.slane %v2661, 4
        %v2675 = vsel %vm2034, 0.0, %v2674
        %v2676 = vrot.slane %v2667, 4
        %v2677 = vsel %vm2034, 0.0, %v2676
        %v2678 = vrot.slane %v2671, 4
        %v2679 = vsel %vm2034, 0.0, %v2678
        %v2680 = vrot.slane %v1090, 4
        %v2681 = vsel %vm2034, 0.0, %v2680
        %v2683 = vunpack.c.l.s4 1983009808
        %v2684 = vunpack.c.0.s8 %v2683
        %v2685 = vperm.slane %v1090, %v2684
        %v2687 = vunpack.c.l.s4 1983009808
        %v2688 = vunpack.c.0.s8 %v2687
        %v2689 = vperm.slane %v2681, %v2688
        %v2690 = vrot.slane %v2685, 4
        %v2691 = vsel %vm2034, 0.0, %v2690
        %v2693 = vunpack.c.l.s4 1934713408
        %v2694 = vunpack.c.0.s8 %v2693
        %v2695 = vperm.slane %v2685, %v2694
        %v2697 = vunpack.c.l.s4 1934713408
        %v2698 = vunpack.c.0.s8 %v2697
        %v2699 = vperm.slane %v2691, %v2698
        %v2700 = vrot.slane %v2689, 4
        %v2701 = vsel %vm2034, 0.0, %v2700
        %v2703 = vunpack.c.l.s4 1934713408
        %v2704 = vunpack.c.0.s8 %v2703
        %v2705 = vperm.slane %v2689, %v2704
        %v2707 = vunpack.c.l.s4 1934713408
        %v2708 = vunpack.c.0.s8 %v2707
        %v2709 = vperm.slane %v2701, %v2708
        %v2710 = vrot.slane %v2695, 4
        %v2711 = vsel %vm2034, 0.0, %v2710
        %v2712 = vrot.slane %v2699, 4
        %v2713 = vsel %vm2034, 0.0, %v2712
        %v2714 = vrot.slane %v2705, 4
        %v2715 = vsel %vm2034, 0.0, %v2714
        %v2716 = vrot.slane %v2709, 4
        %v2717 = vsel %vm2034, 0.0, %v2716
        %v2718 = vrot.slane %v1091, 4
        %v2719 = vsel %vm2034, 0.0, %v2718
        %v2721 = vunpack.c.l.s4 1983009808
        %v2722 = vunpack.c.0.s8 %v2721
        %v2723 = vperm.slane %v1091, %v2722
        %v2725 = vunpack.c.l.s4 1983009808
        %v2726 = vunpack.c.0.s8 %v2725
        %v2727 = vperm.slane %v2719, %v2726
        %v2728 = vrot.slane %v2723, 4
        %v2729 = vsel %vm2034, 0.0, %v2728
        %v2731 = vunpack.c.l.s4 1934713408
        %v2732 = vunpack.c.0.s8 %v2731
        %v2733 = vperm.slane %v2723, %v2732
        %v2735 = vunpack.c.l.s4 1934713408
        %v2736 = vunpack.c.0.s8 %v2735
        %v2737 = vperm.slane %v2729, %v2736
        %v2738 = vrot.slane %v2727, 4
        %v2739 = vsel %vm2034, 0.0, %v2738
        %v2741 = vunpack.c.l.s4 1934713408
        %v2742 = vunpack.c.0.s8 %v2741
        %v2743 = vperm.slane %v2727, %v2742
        %v2745 = vunpack.c.l.s4 1934713408
        %v2746 = vunpack.c.0.s8 %v2745
        %v2747 = vperm.slane %v2739, %v2746
        %v2748 = vrot.slane %v2733, 4
        %v2749 = vsel %vm2034, 0.0, %v2748
        %v2750 = vrot.slane %v2737, 4
        %v2751 = vsel %vm2034, 0.0, %v2750
        %v2752 = vrot.slane %v2743, 4
        %v2753 = vsel %vm2034, 0.0, %v2752
        %v2754 = vrot.slane %v2747, 4
        %v2755 = vsel %vm2034, 0.0, %v2754
        %v2756 = vrot.slane %v1092, 4
        %v2757 = vsel %vm2034, 0.0, %v2756
        %v2759 = vunpack.c.l.s4 1983009808
        %v2760 = vunpack.c.0.s8 %v2759
        %v2761 = vperm.slane %v1092, %v2760
        %v2763 = vunpack.c.l.s4 1983009808
        %v2764 = vunpack.c.0.s8 %v2763
        %v2765 = vperm.slane %v2757, %v2764
        %v2766 = vrot.slane %v2761, 4
        %v2767 = vsel %vm2034, 0.0, %v2766
        %v2769 = vunpack.c.l.s4 1934713408
        %v2770 = vunpack.c.0.s8 %v2769
        %v2771 = vperm.slane %v2761, %v2770
        %v2773 = vunpack.c.l.s4 1934713408
        %v2774 = vunpack.c.0.s8 %v2773
        %v2775 = vperm.slane %v2767, %v2774
        %v2776 = vrot.slane %v2765, 4
        %v2777 = vsel %vm2034, 0.0, %v2776
        %v2779 = vunpack.c.l.s4 1934713408
        %v2780 = vunpack.c.0.s8 %v2779
        %v2781 = vperm.slane %v2765, %v2780
        %v2783 = vunpack.c.l.s4 1934713408
        %v2784 = vunpack.c.0.s8 %v2783
        %v2785 = vperm.slane %v2777, %v2784
        %v2786 = vrot.slane %v2771, 4
        %v2787 = vsel %vm2034, 0.0, %v2786
        %v2788 = vrot.slane %v2775, 4
        %v2789 = vsel %vm2034, 0.0, %v2788
        %v2790 = vrot.slane %v2781, 4
        %v2791 = vsel %vm2034, 0.0, %v2790
        %v2792 = vrot.slane %v2785, 4
        %v2793 = vsel %vm2034, 0.0, %v2792
        %v2794 = vrot.slane %v1093, 4
        %v2795 = vsel %vm2034, 0.0, %v2794
        %v2797 = vunpack.c.l.s4 1983009808
        %v2798 = vunpack.c.0.s8 %v2797
        %v2799 = vperm.slane %v1093, %v2798
        %v2801 = vunpack.c.l.s4 1983009808
        %v2802 = vunpack.c.0.s8 %v2801
        %v2803 = vperm.slane %v2795, %v2802
        %v2804 = vrot.slane %v2799, 4
        %v2805 = vsel %vm2034, 0.0, %v2804
        %v2807 = vunpack.c.l.s4 1934713408
        %v2808 = vunpack.c.0.s8 %v2807
        %v2809 = vperm.slane %v2799, %v2808
        %v2811 = vunpack.c.l.s4 1934713408
        %v2812 = vunpack.c.0.s8 %v2811
        %v2813 = vperm.slane %v2805, %v2812
        %v2814 = vrot.slane %v2803, 4
        %v2815 = vsel %vm2034, 0.0, %v2814
        %v2817 = vunpack.c.l.s4 1934713408
        %v2818 = vunpack.c.0.s8 %v2817
        %v2819 = vperm.slane %v2803, %v2818
        %v2821 = vunpack.c.l.s4 1934713408
        %v2822 = vunpack.c.0.s8 %v2821
        %v2823 = vperm.slane %v2815, %v2822
        %v2824 = vrot.slane %v2809, 4
        %v2825 = vsel %vm2034, 0.0, %v2824
        %v2826 = vrot.slane %v2813, 4
        %v2827 = vsel %vm2034, 0.0, %v2826
        %v2828 = vrot.slane %v2819, 4
        %v2829 = vsel %vm2034, 0.0, %v2828
        %v2830 = vrot.slane %v2823, 4
        %v2831 = vsel %vm2034, 0.0, %v2830
        %v2832 = vrot.slane %v1094, 4
        %v2833 = vsel %vm2034, 0.0, %v2832
        %v2835 = vunpack.c.l.s4 1983009808
        %v2836 = vunpack.c.0.s8 %v2835
        %v2837 = vperm.slane %v1094, %v2836
        %v2839 = vunpack.c.l.s4 1983009808
        %v2840 = vunpack.c.0.s8 %v2839
        %v2841 = vperm.slane %v2833, %v2840
        %v2842 = vrot.slane %v2837, 4
        %v2843 = vsel %vm2034, 0.0, %v2842
        %v2845 = vunpack.c.l.s4 1934713408
        %v2846 = vunpack.c.0.s8 %v2845
        %v2847 = vperm.slane %v2837, %v2846
        %v2849 = vunpack.c.l.s4 1934713408
        %v2850 = vunpack.c.0.s8 %v2849
        %v2851 = vperm.slane %v2843, %v2850
        %v2852 = vrot.slane %v2841, 4
        %v2853 = vsel %vm2034, 0.0, %v2852
        %v2855 = vunpack.c.l.s4 1934713408
        %v2856 = vunpack.c.0.s8 %v2855
        %v2857 = vperm.slane %v2841, %v2856
        %v2859 = vunpack.c.l.s4 1934713408
        %v2860 = vunpack.c.0.s8 %v2859
        %v2861 = vperm.slane %v2853, %v2860
        %v2862 = vrot.slane %v2847, 4
        %v2863 = vsel %vm2034, 0.0, %v2862
        %v2864 = vrot.slane %v2851, 4
        %v2865 = vsel %vm2034, 0.0, %v2864
        %v2866 = vrot.slane %v2857, 4
        %v2867 = vsel %vm2034, 0.0, %v2866
        %v2868 = vrot.slane %v2861, 4
        %v2869 = vsel %vm2034, 0.0, %v2868
        %v2870 = vrot.slane %v1095, 4
        %v2871 = vsel %vm2034, 0.0, %v2870
        %v2873 = vunpack.c.l.s4 1983009808
        %v2874 = vunpack.c.0.s8 %v2873
        %v2875 = vperm.slane %v1095, %v2874
        %v2877 = vunpack.c.l.s4 1983009808
        %v2878 = vunpack.c.0.s8 %v2877
        %v2879 = vperm.slane %v2871, %v2878
        %v2880 = vrot.slane %v2875, 4
        %v2881 = vsel %vm2034, 0.0, %v2880
        %v2883 = vunpack.c.l.s4 1934713408
        %v2884 = vunpack.c.0.s8 %v2883
        %v2885 = vperm.slane %v2875, %v2884
        %v2887 = vunpack.c.l.s4 1934713408
        %v2888 = vunpack.c.0.s8 %v2887
        %v2889 = vperm.slane %v2881, %v2888
        %v2890 = vrot.slane %v2879, 4
        %v2891 = vsel %vm2034, 0.0, %v2890
        %v2893 = vunpack.c.l.s4 1934713408
        %v2894 = vunpack.c.0.s8 %v2893
        %v2895 = vperm.slane %v2879, %v2894
        %v2897 = vunpack.c.l.s4 1934713408
        %v2898 = vunpack.c.0.s8 %v2897
        %v2899 = vperm.slane %v2891, %v2898
        %v2900 = vrot.slane %v2885, 4
        %v2901 = vsel %vm2034, 0.0, %v2900
        %v2902 = vrot.slane %v2889, 4
        %v2903 = vsel %vm2034, 0.0, %v2902
        %v2904 = vrot.slane %v2895, 4
        %v2905 = vsel %vm2034, 0.0, %v2904
        %v2906 = vrot.slane %v2899, 4
        %v2907 = vsel %vm2034, 0.0, %v2906
        %v2908 = vrot.slane %v1096, 4
        %v2909 = vsel %vm2034, 0.0, %v2908
        %v2911 = vunpack.c.l.s4 1983009808
        %v2912 = vunpack.c.0.s8 %v2911
        %v2913 = vperm.slane %v1096, %v2912
        %v2915 = vunpack.c.l.s4 1983009808
        %v2916 = vunpack.c.0.s8 %v2915
        %v2917 = vperm.slane %v2909, %v2916
        %v2918 = vrot.slane %v2913, 4
        %v2919 = vsel %vm2034, 0.0, %v2918
        %v2921 = vunpack.c.l.s4 1934713408
        %v2922 = vunpack.c.0.s8 %v2921
        %v2923 = vperm.slane %v2913, %v2922
        %v2925 = vunpack.c.l.s4 1934713408
        %v2926 = vunpack.c.0.s8 %v2925
        %v2927 = vperm.slane %v2919, %v2926
        %v2928 = vrot.slane %v2917, 4
        %v2929 = vsel %vm2034, 0.0, %v2928
        %v2931 = vunpack.c.l.s4 1934713408
        %v2932 = vunpack.c.0.s8 %v2931
        %v2933 = vperm.slane %v2917, %v2932
        %v2935 = vunpack.c.l.s4 1934713408
        %v2936 = vunpack.c.0.s8 %v2935
        %v2937 = vperm.slane %v2929, %v2936
        %v2938 = vrot.slane %v2923, 4
        %v2939 = vsel %vm2034, 0.0, %v2938
        %v2940 = vrot.slane %v2927, 4
        %v2941 = vsel %vm2034, 0.0, %v2940
        %v2942 = vrot.slane %v2933, 4
        %v2943 = vsel %vm2034, 0.0, %v2942
        %v2944 = vrot.slane %v2937, 4
        %v2945 = vsel %vm2034, 0.0, %v2944
        %v2946 = vrot.slane %v1097, 4
        %v2947 = vsel %vm2034, 0.0, %v2946
        %v2949 = vunpack.c.l.s4 1983009808
        %v2950 = vunpack.c.0.s8 %v2949
        %v2951 = vperm.slane %v1097, %v2950
        %v2953 = vunpack.c.l.s4 1983009808
        %v2954 = vunpack.c.0.s8 %v2953
        %v2955 = vperm.slane %v2947, %v2954
        %v2956 = vrot.slane %v2951, 4
        %v2957 = vsel %vm2034, 0.0, %v2956
        %v2959 = vunpack.c.l.s4 1934713408
        %v2960 = vunpack.c.0.s8 %v2959
        %v2961 = vperm.slane %v2951, %v2960
        %v2963 = vunpack.c.l.s4 1934713408
        %v2964 = vunpack.c.0.s8 %v2963
        %v2965 = vperm.slane %v2957, %v2964
        %v2966 = vrot.slane %v2955, 4
        %v2967 = vsel %vm2034, 0.0, %v2966
        %v2969 = vunpack.c.l.s4 1934713408
        %v2970 = vunpack.c.0.s8 %v2969
        %v2971 = vperm.slane %v2955, %v2970
        %v2973 = vunpack.c.l.s4 1934713408
        %v2974 = vunpack.c.0.s8 %v2973
        %v2975 = vperm.slane %v2967, %v2974
        %v2976 = vrot.slane %v2961, 4
        %v2977 = vsel %vm2034, 0.0, %v2976
        %v2978 = vrot.slane %v2965, 4
        %v2979 = vsel %vm2034, 0.0, %v2978
        %v2980 = vrot.slane %v2971, 4
        %v2981 = vsel %vm2034, 0.0, %v2980
        %v2982 = vrot.slane %v2975, 4
        %v2983 = vsel %vm2034, 0.0, %v2982
        %v2984 = vrot.slane %v1098, 4
        %v2985 = vsel %vm2034, 0.0, %v2984
        %v2987 = vunpack.c.l.s4 1983009808
        %v2988 = vunpack.c.0.s8 %v2987
        %v2989 = vperm.slane %v1098, %v2988
        %v2991 = vunpack.c.l.s4 1983009808
        %v2992 = vunpack.c.0.s8 %v2991
        %v2993 = vperm.slane %v2985, %v2992
        %v2994 = vrot.slane %v2989, 4
        %v2995 = vsel %vm2034, 0.0, %v2994
        %v2997 = vunpack.c.l.s4 1934713408
        %v2998 = vunpack.c.0.s8 %v2997
        %v2999 = vperm.slane %v2989, %v2998
        %v3001 = vunpack.c.l.s4 1934713408
        %v3002 = vunpack.c.0.s8 %v3001
        %v3003 = vperm.slane %v2995, %v3002
        %v3004 = vrot.slane %v2993, 4
        %v3005 = vsel %vm2034, 0.0, %v3004
        %v3007 = vunpack.c.l.s4 1934713408
        %v3008 = vunpack.c.0.s8 %v3007
        %v3009 = vperm.slane %v2993, %v3008
        %v3011 = vunpack.c.l.s4 1934713408
        %v3012 = vunpack.c.0.s8 %v3011
        %v3013 = vperm.slane %v3005, %v3012
        %v3014 = vrot.slane %v2999, 4
        %v3015 = vsel %vm2034, 0.0, %v3014
        %v3016 = vrot.slane %v3003, 4
        %v3017 = vsel %vm2034, 0.0, %v3016
        %v3018 = vrot.slane %v3009, 4
        %v3019 = vsel %vm2034, 0.0, %v3018
        %v3020 = vrot.slane %v3013, 4
        %v3021 = vsel %vm2034, 0.0, %v3020
        %v3022 = vrot.slane %v1099, 4
        %v3023 = vsel %vm2034, 0.0, %v3022
        %v3025 = vunpack.c.l.s4 1983009808
        %v3026 = vunpack.c.0.s8 %v3025
        %v3027 = vperm.slane %v1099, %v3026
        %v3029 = vunpack.c.l.s4 1983009808
        %v3030 = vunpack.c.0.s8 %v3029
        %v3031 = vperm.slane %v3023, %v3030
        %v3032 = vrot.slane %v3027, 4
        %v3033 = vsel %vm2034, 0.0, %v3032
        %v3035 = vunpack.c.l.s4 1934713408
        %v3036 = vunpack.c.0.s8 %v3035
        %v3037 = vperm.slane %v3027, %v3036
        %v3039 = vunpack.c.l.s4 1934713408
        %v3040 = vunpack.c.0.s8 %v3039
        %v3041 = vperm.slane %v3033, %v3040
        %v3042 = vrot.slane %v3031, 4
        %v3043 = vsel %vm2034, 0.0, %v3042
        %v3045 = vunpack.c.l.s4 1934713408
        %v3046 = vunpack.c.0.s8 %v3045
        %v3047 = vperm.slane %v3031, %v3046
        %v3049 = vunpack.c.l.s4 1934713408
        %v3050 = vunpack.c.0.s8 %v3049
        %v3051 = vperm.slane %v3043, %v3050
        %v3052 = vrot.slane %v3037, 4
        %v3053 = vsel %vm2034, 0.0, %v3052
        %v3054 = vrot.slane %v3041, 4
        %v3055 = vsel %vm2034, 0.0, %v3054
        %v3056 = vrot.slane %v3047, 4
        %v3057 = vsel %vm2034, 0.0, %v3056
        %v3058 = vrot.slane %v3051, 4
        %v3059 = vsel %vm2034, 0.0, %v3058
        %v3060 = vrot.slane %v1100, 4
        %v3061 = vsel %vm2034, 0.0, %v3060
        %v3063 = vunpack.c.l.s4 1983009808
        %v3064 = vunpack.c.0.s8 %v3063
        %v3065 = vperm.slane %v1100, %v3064
        %v3067 = vunpack.c.l.s4 1983009808
        %v3068 = vunpack.c.0.s8 %v3067
        %v3069 = vperm.slane %v3061, %v3068
        %v3070 = vrot.slane %v3065, 4
        %v3071 = vsel %vm2034, 0.0, %v3070
        %v3073 = vunpack.c.l.s4 1934713408
        %v3074 = vunpack.c.0.s8 %v3073
        %v3075 = vperm.slane %v3065, %v3074
        %v3077 = vunpack.c.l.s4 1934713408
        %v3078 = vunpack.c.0.s8 %v3077
        %v3079 = vperm.slane %v3071, %v3078
        %v3080 = vrot.slane %v3069, 4
        %v3081 = vsel %vm2034, 0.0, %v3080
        %v3083 = vunpack.c.l.s4 1934713408
        %v3084 = vunpack.c.0.s8 %v3083
        %v3085 = vperm.slane %v3069, %v3084
        %v3087 = vunpack.c.l.s4 1934713408
        %v3088 = vunpack.c.0.s8 %v3087
        %v3089 = vperm.slane %v3081, %v3088
        %v3090 = vrot.slane %v3075, 4
        %v3091 = vsel %vm2034, 0.0, %v3090
        %v3092 = vrot.slane %v3079, 4
        %v3093 = vsel %vm2034, 0.0, %v3092
        %v3094 = vrot.slane %v3085, 4
        %v3095 = vsel %vm2034, 0.0, %v3094
        %v3096 = vrot.slane %v3089, 4
        %v3097 = vsel %vm2034, 0.0, %v3096
        %v3098 = vrot.slane %v1101, 4
        %v3099 = vsel %vm2034, 0.0, %v3098
        %v3101 = vunpack.c.l.s4 1983009808
        %v3102 = vunpack.c.0.s8 %v3101
        %v3103 = vperm.slane %v1101, %v3102
        %v3105 = vunpack.c.l.s4 1983009808
        %v3106 = vunpack.c.0.s8 %v3105
        %v3107 = vperm.slane %v3099, %v3106
        %v3108 = vrot.slane %v3103, 4
        %v3109 = vsel %vm2034, 0.0, %v3108
        %v3111 = vunpack.c.l.s4 1934713408
        %v3112 = vunpack.c.0.s8 %v3111
        %v3113 = vperm.slane %v3103, %v3112
        %v3115 = vunpack.c.l.s4 1934713408
        %v3116 = vunpack.c.0.s8 %v3115
        %v3117 = vperm.slane %v3109, %v3116
        %v3118 = vrot.slane %v3107, 4
        %v3119 = vsel %vm2034, 0.0, %v3118
        %v3121 = vunpack.c.l.s4 1934713408
        %v3122 = vunpack.c.0.s8 %v3121
        %v3123 = vperm.slane %v3107, %v3122
        %v3125 = vunpack.c.l.s4 1934713408
        %v3126 = vunpack.c.0.s8 %v3125
        %v3127 = vperm.slane %v3119, %v3126
        %v3128 = vrot.slane %v3113, 4
        %v3129 = vsel %vm2034, 0.0, %v3128
        %v3130 = vrot.slane %v3117, 4
        %v3131 = vsel %vm2034, 0.0, %v3130
        %v3132 = vrot.slane %v3123, 4
        %v3133 = vsel %vm2034, 0.0, %v3132
        %v3134 = vrot.slane %v3127, 4
        %v3135 = vsel %vm2034, 0.0, %v3134
        %v3136 = vrot.slane %v1102, 4
        %v3137 = vsel %vm2034, 0.0, %v3136
        %v3139 = vunpack.c.l.s4 1983009808
        %v3140 = vunpack.c.0.s8 %v3139
        %v3141 = vperm.slane %v1102, %v3140
        %v3143 = vunpack.c.l.s4 1983009808
        %v3144 = vunpack.c.0.s8 %v3143
        %v3145 = vperm.slane %v3137, %v3144
        %v3146 = vrot.slane %v3141, 4
        %v3147 = vsel %vm2034, 0.0, %v3146
        %v3149 = vunpack.c.l.s4 1934713408
        %v3150 = vunpack.c.0.s8 %v3149
        %v3151 = vperm.slane %v3141, %v3150
        %v3153 = vunpack.c.l.s4 1934713408
        %v3154 = vunpack.c.0.s8 %v3153
        %v3155 = vperm.slane %v3147, %v3154
        %v3156 = vrot.slane %v3145, 4
        %v3157 = vsel %vm2034, 0.0, %v3156
        %v3159 = vunpack.c.l.s4 1934713408
        %v3160 = vunpack.c.0.s8 %v3159
        %v3161 = vperm.slane %v3145, %v3160
        %v3163 = vunpack.c.l.s4 1934713408
        %v3164 = vunpack.c.0.s8 %v3163
        %v3165 = vperm.slane %v3157, %v3164
        %v3166 = vrot.slane %v3151, 4
        %v3167 = vsel %vm2034, 0.0, %v3166
        %v3168 = vrot.slane %v3155, 4
        %v3169 = vsel %vm2034, 0.0, %v3168
        %v3170 = vrot.slane %v3161, 4
        %v3171 = vsel %vm2034, 0.0, %v3170
        %v3172 = vrot.slane %v3165, 4
        %v3173 = vsel %vm2034, 0.0, %v3172
        %v3174 = vrot.slane %v1103, 4
        %v3175 = vsel %vm2034, 0.0, %v3174
        %v3177 = vunpack.c.l.s4 1983009808
        %v3178 = vunpack.c.0.s8 %v3177
        %v3179 = vperm.slane %v1103, %v3178
        %v3181 = vunpack.c.l.s4 1983009808
        %v3182 = vunpack.c.0.s8 %v3181
        %v3183 = vperm.slane %v3175, %v3182
        %v3184 = vrot.slane %v3179, 4
        %v3185 = vsel %vm2034, 0.0, %v3184
        %v3187 = vunpack.c.l.s4 1934713408
        %v3188 = vunpack.c.0.s8 %v3187
        %v3189 = vperm.slane %v3179, %v3188
        %v3191 = vunpack.c.l.s4 1934713408
        %v3192 = vunpack.c.0.s8 %v3191
        %v3193 = vperm.slane %v3185, %v3192
        %v3194 = vrot.slane %v3183, 4
        %v3195 = vsel %vm2034, 0.0, %v3194
        %v3197 = vunpack.c.l.s4 1934713408
        %v3198 = vunpack.c.0.s8 %v3197
        %v3199 = vperm.slane %v3183, %v3198
        %v3201 = vunpack.c.l.s4 1934713408
        %v3202 = vunpack.c.0.s8 %v3201
        %v3203 = vperm.slane %v3195, %v3202
        %v3204 = vrot.slane %v3189, 4
        %v3205 = vsel %vm2034, 0.0, %v3204
        %v3206 = vrot.slane %v3193, 4
        %v3207 = vsel %vm2034, 0.0, %v3206
        %v3208 = vrot.slane %v3199, 4
        %v3209 = vsel %vm2034, 0.0, %v3208
        %v3210 = vrot.slane %v3203, 4
        %v3211 = vsel %vm2034, 0.0, %v3210
        %v3212 = vrot.slane %v1104, 4
        %v3213 = vsel %vm2034, 0.0, %v3212
        %v3215 = vunpack.c.l.s4 1983009808
        %v3216 = vunpack.c.0.s8 %v3215
        %v3217 = vperm.slane %v1104, %v3216
        %v3219 = vunpack.c.l.s4 1983009808
        %v3220 = vunpack.c.0.s8 %v3219
        %v3221 = vperm.slane %v3213, %v3220
        %v3222 = vrot.slane %v3217, 4
        %v3223 = vsel %vm2034, 0.0, %v3222
        %v3225 = vunpack.c.l.s4 1934713408
        %v3226 = vunpack.c.0.s8 %v3225
        %v3227 = vperm.slane %v3217, %v3226
        %v3229 = vunpack.c.l.s4 1934713408
        %v3230 = vunpack.c.0.s8 %v3229
        %v3231 = vperm.slane %v3223, %v3230
        %v3232 = vrot.slane %v3221, 4
        %v3233 = vsel %vm2034, 0.0, %v3232
        %v3235 = vunpack.c.l.s4 1934713408
        %v3236 = vunpack.c.0.s8 %v3235
        %v3237 = vperm.slane %v3221, %v3236
        %v3239 = vunpack.c.l.s4 1934713408
        %v3240 = vunpack.c.0.s8 %v3239
        %v3241 = vperm.slane %v3233, %v3240
        %v3242 = vrot.slane %v3227, 4
        %v3243 = vsel %vm2034, 0.0, %v3242
        %v3244 = vrot.slane %v3231, 4
        %v3245 = vsel %vm2034, 0.0, %v3244
        %v3246 = vrot.slane %v3237, 4
        %v3247 = vsel %vm2034, 0.0, %v3246
        %v3248 = vrot.slane %v3241, 4
        %v3249 = vsel %vm2034, 0.0, %v3248
        %v3250 = vrot.slane %v1105, 4
        %v3251 = vsel %vm2034, 0.0, %v3250
        %v3253 = vunpack.c.l.s4 1983009808
        %v3254 = vunpack.c.0.s8 %v3253
        %v3255 = vperm.slane %v1105, %v3254
        %v3257 = vunpack.c.l.s4 1983009808
        %v3258 = vunpack.c.0.s8 %v3257
        %v3259 = vperm.slane %v3251, %v3258
        %v3260 = vrot.slane %v3255, 4
        %v3261 = vsel %vm2034, 0.0, %v3260
        %v3263 = vunpack.c.l.s4 1934713408
        %v3264 = vunpack.c.0.s8 %v3263
        %v3265 = vperm.slane %v3255, %v3264
        %v3267 = vunpack.c.l.s4 1934713408
        %v3268 = vunpack.c.0.s8 %v3267
        %v3269 = vperm.slane %v3261, %v3268
        %v3270 = vrot.slane %v3259, 4
        %v3271 = vsel %vm2034, 0.0, %v3270
        %v3273 = vunpack.c.l.s4 1934713408
        %v3274 = vunpack.c.0.s8 %v3273
        %v3275 = vperm.slane %v3259, %v3274
        %v3277 = vunpack.c.l.s4 1934713408
        %v3278 = vunpack.c.0.s8 %v3277
        %v3279 = vperm.slane %v3271, %v3278
        %v3280 = vrot.slane %v3265, 4
        %v3281 = vsel %vm2034, 0.0, %v3280
        %v3282 = vrot.slane %v3269, 4
        %v3283 = vsel %vm2034, 0.0, %v3282
        %v3284 = vrot.slane %v3275, 4
        %v3285 = vsel %vm2034, 0.0, %v3284
        %v3286 = vrot.slane %v3279, 4
        %v3287 = vsel %vm2034, 0.0, %v3286
        %v3288 = vrot.slane %v1106, 4
        %v3289 = vsel %vm2034, 0.0, %v3288
        %v3291 = vunpack.c.l.s4 1983009808
        %v3292 = vunpack.c.0.s8 %v3291
        %v3293 = vperm.slane %v1106, %v3292
        %v3295 = vunpack.c.l.s4 1983009808
        %v3296 = vunpack.c.0.s8 %v3295
        %v3297 = vperm.slane %v3289, %v3296
        %v3298 = vrot.slane %v3293, 4
        %v3299 = vsel %vm2034, 0.0, %v3298
        %v3301 = vunpack.c.l.s4 1934713408
        %v3302 = vunpack.c.0.s8 %v3301
        %v3303 = vperm.slane %v3293, %v3302
        %v3305 = vunpack.c.l.s4 1934713408
        %v3306 = vunpack.c.0.s8 %v3305
        %v3307 = vperm.slane %v3299, %v3306
        %v3308 = vrot.slane %v3297, 4
        %v3309 = vsel %vm2034, 0.0, %v3308
        %v3311 = vunpack.c.l.s4 1934713408
        %v3312 = vunpack.c.0.s8 %v3311
        %v3313 = vperm.slane %v3297, %v3312
        %v3315 = vunpack.c.l.s4 1934713408
        %v3316 = vunpack.c.0.s8 %v3315
        %v3317 = vperm.slane %v3309, %v3316
        %v3318 = vrot.slane %v3303, 4
        %v3319 = vsel %vm2034, 0.0, %v3318
        %v3320 = vrot.slane %v3307, 4
        %v3321 = vsel %vm2034, 0.0, %v3320
        %v3322 = vrot.slane %v3313, 4
        %v3323 = vsel %vm2034, 0.0, %v3322
        %v3324 = vrot.slane %v3317, 4
        %v3325 = vsel %vm2034, 0.0, %v3324
        %v3326 = vrot.slane %v1107, 4
        %v3327 = vsel %vm2034, 0.0, %v3326
        %v3329 = vunpack.c.l.s4 1983009808
        %v3330 = vunpack.c.0.s8 %v3329
        %v3331 = vperm.slane %v1107, %v3330
        %v3333 = vunpack.c.l.s4 1983009808
        %v3334 = vunpack.c.0.s8 %v3333
        %v3335 = vperm.slane %v3327, %v3334
        %v3336 = vrot.slane %v3331, 4
        %v3337 = vsel %vm2034, 0.0, %v3336
        %v3339 = vunpack.c.l.s4 1934713408
        %v3340 = vunpack.c.0.s8 %v3339
        %v3341 = vperm.slane %v3331, %v3340
        %v3343 = vunpack.c.l.s4 1934713408
        %v3344 = vunpack.c.0.s8 %v3343
        %v3345 = vperm.slane %v3337, %v3344
        %v3346 = vrot.slane %v3335, 4
        %v3347 = vsel %vm2034, 0.0, %v3346
        %v3349 = vunpack.c.l.s4 1934713408
        %v3350 = vunpack.c.0.s8 %v3349
        %v3351 = vperm.slane %v3335, %v3350
        %v3353 = vunpack.c.l.s4 1934713408
        %v3354 = vunpack.c.0.s8 %v3353
        %v3355 = vperm.slane %v3347, %v3354
        %v3356 = vrot.slane %v3341, 4
        %v3357 = vsel %vm2034, 0.0, %v3356
        %v3358 = vrot.slane %v3345, 4
        %v3359 = vsel %vm2034, 0.0, %v3358
        %v3360 = vrot.slane %v3351, 4
        %v3361 = vsel %vm2034, 0.0, %v3360
        %v3362 = vrot.slane %v3355, 4
        %v3363 = vsel %vm2034, 0.0, %v3362
        %v3364 = vrot.slane %v1108, 4
        %v3365 = vsel %vm2034, 0.0, %v3364
        %v3367 = vunpack.c.l.s4 1983009808
        %v3368 = vunpack.c.0.s8 %v3367
        %v3369 = vperm.slane %v1108, %v3368
        %v3371 = vunpack.c.l.s4 1983009808
        %v3372 = vunpack.c.0.s8 %v3371
        %v3373 = vperm.slane %v3365, %v3372
        %v3374 = vrot.slane %v3369, 4
        %v3375 = vsel %vm2034, 0.0, %v3374
        %v3377 = vunpack.c.l.s4 1934713408
        %v3378 = vunpack.c.0.s8 %v3377
        %v3379 = vperm.slane %v3369, %v3378
        %v3381 = vunpack.c.l.s4 1934713408
        %v3382 = vunpack.c.0.s8 %v3381
        %v3383 = vperm.slane %v3375, %v3382
        %v3384 = vrot.slane %v3373, 4
        %v3385 = vsel %vm2034, 0.0, %v3384
        %v3387 = vunpack.c.l.s4 1934713408
        %v3388 = vunpack.c.0.s8 %v3387
        %v3389 = vperm.slane %v3373, %v3388
        %v3391 = vunpack.c.l.s4 1934713408
        %v3392 = vunpack.c.0.s8 %v3391
        %v3393 = vperm.slane %v3385, %v3392
        %v3394 = vrot.slane %v3379, 4
        %v3395 = vsel %vm2034, 0.0, %v3394
        %v3396 = vrot.slane %v3383, 4
        %v3397 = vsel %vm2034, 0.0, %v3396
        %v3398 = vrot.slane %v3389, 4
        %v3399 = vsel %vm2034, 0.0, %v3398
        %v3400 = vrot.slane %v3393, 4
        %v3401 = vsel %vm2034, 0.0, %v3400
        %v3402 = vrot.slane %v1109, 4
        %v3403 = vsel %vm2034, 0.0, %v3402
        %v3405 = vunpack.c.l.s4 1983009808
        %v3406 = vunpack.c.0.s8 %v3405
        %v3407 = vperm.slane %v1109, %v3406
        %v3409 = vunpack.c.l.s4 1983009808
        %v3410 = vunpack.c.0.s8 %v3409
        %v3411 = vperm.slane %v3403, %v3410
        %v3412 = vrot.slane %v3407, 4
        %v3413 = vsel %vm2034, 0.0, %v3412
        %v3415 = vunpack.c.l.s4 1934713408
        %v3416 = vunpack.c.0.s8 %v3415
        %v3417 = vperm.slane %v3407, %v3416
        %v3419 = vunpack.c.l.s4 1934713408
        %v3420 = vunpack.c.0.s8 %v3419
        %v3421 = vperm.slane %v3413, %v3420
        %v3422 = vrot.slane %v3411, 4
        %v3423 = vsel %vm2034, 0.0, %v3422
        %v3425 = vunpack.c.l.s4 1934713408
        %v3426 = vunpack.c.0.s8 %v3425
        %v3427 = vperm.slane %v3411, %v3426
        %v3429 = vunpack.c.l.s4 1934713408
        %v3430 = vunpack.c.0.s8 %v3429
        %v3431 = vperm.slane %v3423, %v3430
        %v3432 = vrot.slane %v3417, 4
        %v3433 = vsel %vm2034, 0.0, %v3432
        %v3434 = vrot.slane %v3421, 4
        %v3435 = vsel %vm2034, 0.0, %v3434
        %v3436 = vrot.slane %v3427, 4
        %v3437 = vsel %vm2034, 0.0, %v3436
        %v3438 = vrot.slane %v3431, 4
        %v3439 = vsel %vm2034, 0.0, %v3438
        %v3440 = vrot.slane %v1110, 4
        %v3441 = vsel %vm2034, 0.0, %v3440
        %v3443 = vunpack.c.l.s4 1983009808
        %v3444 = vunpack.c.0.s8 %v3443
        %v3445 = vperm.slane %v1110, %v3444
        %v3447 = vunpack.c.l.s4 1983009808
        %v3448 = vunpack.c.0.s8 %v3447
        %v3449 = vperm.slane %v3441, %v3448
        %v3450 = vrot.slane %v3445, 4
        %v3451 = vsel %vm2034, 0.0, %v3450
        %v3453 = vunpack.c.l.s4 1934713408
        %v3454 = vunpack.c.0.s8 %v3453
        %v3455 = vperm.slane %v3445, %v3454
        %v3457 = vunpack.c.l.s4 1934713408
        %v3458 = vunpack.c.0.s8 %v3457
        %v3459 = vperm.slane %v3451, %v3458
        %v3460 = vrot.slane %v3449, 4
        %v3461 = vsel %vm2034, 0.0, %v3460
        %v3463 = vunpack.c.l.s4 1934713408
        %v3464 = vunpack.c.0.s8 %v3463
        %v3465 = vperm.slane %v3449, %v3464
        %v3467 = vunpack.c.l.s4 1934713408
        %v3468 = vunpack.c.0.s8 %v3467
        %v3469 = vperm.slane %v3461, %v3468
        %v3470 = vrot.slane %v3455, 4
        %v3471 = vsel %vm2034, 0.0, %v3470
        %v3472 = vrot.slane %v3459, 4
        %v3473 = vsel %vm2034, 0.0, %v3472
        %v3474 = vrot.slane %v3465, 4
        %v3475 = vsel %vm2034, 0.0, %v3474
        %v3476 = vrot.slane %v3469, 4
        %v3477 = vsel %vm2034, 0.0, %v3476
        %v3478 = vrot.slane %v1111, 4
        %v3479 = vsel %vm2034, 0.0, %v3478
        %v3481 = vunpack.c.l.s4 1983009808
        %v3482 = vunpack.c.0.s8 %v3481
        %v3483 = vperm.slane %v1111, %v3482
        %v3485 = vunpack.c.l.s4 1983009808
        %v3486 = vunpack.c.0.s8 %v3485
        %v3487 = vperm.slane %v3479, %v3486
        %v3488 = vrot.slane %v3483, 4
        %v3489 = vsel %vm2034, 0.0, %v3488
        %v3491 = vunpack.c.l.s4 1934713408
        %v3492 = vunpack.c.0.s8 %v3491
        %v3493 = vperm.slane %v3483, %v3492
        %v3495 = vunpack.c.l.s4 1934713408
        %v3496 = vunpack.c.0.s8 %v3495
        %v3497 = vperm.slane %v3489, %v3496
        %v3498 = vrot.slane %v3487, 4
        %v3499 = vsel %vm2034, 0.0, %v3498
        %v3501 = vunpack.c.l.s4 1934713408
        %v3502 = vunpack.c.0.s8 %v3501
        %v3503 = vperm.slane %v3487, %v3502
        %v3505 = vunpack.c.l.s4 1934713408
        %v3506 = vunpack.c.0.s8 %v3505
        %v3507 = vperm.slane %v3499, %v3506
        %v3508 = vrot.slane %v3493, 4
        %v3509 = vsel %vm2034, 0.0, %v3508
        %v3510 = vrot.slane %v3497, 4
        %v3511 = vsel %vm2034, 0.0, %v3510
        %v3512 = vrot.slane %v3503, 4
        %v3513 = vsel %vm2034, 0.0, %v3512
        %v3514 = vrot.slane %v3507, 4
        %v3515 = vsel %vm2034, 0.0, %v3514
        %v3516 = vrot.slane %v1112, 4
        %v3517 = vsel %vm2034, 0.0, %v3516
        %v3519 = vunpack.c.l.s4 1983009808
        %v3520 = vunpack.c.0.s8 %v3519
        %v3521 = vperm.slane %v1112, %v3520
        %v3523 = vunpack.c.l.s4 1983009808
        %v3524 = vunpack.c.0.s8 %v3523
        %v3525 = vperm.slane %v3517, %v3524
        %v3526 = vrot.slane %v3521, 4
        %v3527 = vsel %vm2034, 0.0, %v3526
        %v3529 = vunpack.c.l.s4 1934713408
        %v3530 = vunpack.c.0.s8 %v3529
        %v3531 = vperm.slane %v3521, %v3530
        %v3533 = vunpack.c.l.s4 1934713408
        %v3534 = vunpack.c.0.s8 %v3533
        %v3535 = vperm.slane %v3527, %v3534
        %v3536 = vrot.slane %v3525, 4
        %v3537 = vsel %vm2034, 0.0, %v3536
        %v3539 = vunpack.c.l.s4 1934713408
        %v3540 = vunpack.c.0.s8 %v3539
        %v3541 = vperm.slane %v3525, %v3540
        %v3543 = vunpack.c.l.s4 1934713408
        %v3544 = vunpack.c.0.s8 %v3543
        %v3545 = vperm.slane %v3537, %v3544
        %v3546 = vrot.slane %v3531, 4
        %v3547 = vsel %vm2034, 0.0, %v3546
        %v3548 = vrot.slane %v3535, 4
        %v3549 = vsel %vm2034, 0.0, %v3548
        %v3550 = vrot.slane %v3541, 4
        %v3551 = vsel %vm2034, 0.0, %v3550
        %v3552 = vrot.slane %v3545, 4
        %v3553 = vsel %vm2034, 0.0, %v3552
        %v3554 = vrot.slane %v1113, 4
        %v3555 = vsel %vm2034, 0.0, %v3554
        %v3557 = vunpack.c.l.s4 1983009808
        %v3558 = vunpack.c.0.s8 %v3557
        %v3559 = vperm.slane %v1113, %v3558
        %v3561 = vunpack.c.l.s4 1983009808
        %v3562 = vunpack.c.0.s8 %v3561
        %v3563 = vperm.slane %v3555, %v3562
        %v3564 = vrot.slane %v3559, 4
        %v3565 = vsel %vm2034, 0.0, %v3564
        %v3567 = vunpack.c.l.s4 1934713408
        %v3568 = vunpack.c.0.s8 %v3567
        %v3569 = vperm.slane %v3559, %v3568
        %v3571 = vunpack.c.l.s4 1934713408
        %v3572 = vunpack.c.0.s8 %v3571
        %v3573 = vperm.slane %v3565, %v3572
        %v3574 = vrot.slane %v3563, 4
        %v3575 = vsel %vm2034, 0.0, %v3574
        %v3577 = vunpack.c.l.s4 1934713408
        %v3578 = vunpack.c.0.s8 %v3577
        %v3579 = vperm.slane %v3563, %v3578
        %v3581 = vunpack.c.l.s4 1934713408
        %v3582 = vunpack.c.0.s8 %v3581
        %v3583 = vperm.slane %v3575, %v3582
        %v3584 = vrot.slane %v3569, 4
        %v3585 = vsel %vm2034, 0.0, %v3584
        %v3586 = vrot.slane %v3573, 4
        %v3587 = vsel %vm2034, 0.0, %v3586
        %v3588 = vrot.slane %v3579, 4
        %v3589 = vsel %vm2034, 0.0, %v3588
        %v3590 = vrot.slane %v3583, 4
        %v3591 = vsel %vm2034, 0.0, %v3590
        %v3592 = vrot.slane %v1114, 4
        %v3593 = vsel %vm2034, 0.0, %v3592
        %v3595 = vunpack.c.l.s4 1983009808
        %v3596 = vunpack.c.0.s8 %v3595
        %v3597 = vperm.slane %v1114, %v3596
        %v3599 = vunpack.c.l.s4 1983009808
        %v3600 = vunpack.c.0.s8 %v3599
        %v3601 = vperm.slane %v3593, %v3600
        %v3602 = vrot.slane %v3597, 4
        %v3603 = vsel %vm2034, 0.0, %v3602
        %v3605 = vunpack.c.l.s4 1934713408
        %v3606 = vunpack.c.0.s8 %v3605
        %v3607 = vperm.slane %v3597, %v3606
        %v3609 = vunpack.c.l.s4 1934713408
        %v3610 = vunpack.c.0.s8 %v3609
        %v3611 = vperm.slane %v3603, %v3610
        %v3612 = vrot.slane %v3601, 4
        %v3613 = vsel %vm2034, 0.0, %v3612
        %v3615 = vunpack.c.l.s4 1934713408
        %v3616 = vunpack.c.0.s8 %v3615
        %v3617 = vperm.slane %v3601, %v3616
        %v3619 = vunpack.c.l.s4 1934713408
        %v3620 = vunpack.c.0.s8 %v3619
        %v3621 = vperm.slane %v3613, %v3620
        %v3622 = vrot.slane %v3607, 4
        %v3623 = vsel %vm2034, 0.0, %v3622
        %v3624 = vrot.slane %v3611, 4
        %v3625 = vsel %vm2034, 0.0, %v3624
        %v3626 = vrot.slane %v3617, 4
        %v3627 = vsel %vm2034, 0.0, %v3626
        %v3628 = vrot.slane %v3621, 4
        %v3629 = vsel %vm2034, 0.0, %v3628
        %v3630 = vrot.slane %v1115, 4
        %v3631 = vsel %vm2034, 0.0, %v3630
        %v3633 = vunpack.c.l.s4 1983009808
        %v3634 = vunpack.c.0.s8 %v3633
        %v3635 = vperm.slane %v1115, %v3634
        %v3637 = vunpack.c.l.s4 1983009808
        %v3638 = vunpack.c.0.s8 %v3637
        %v3639 = vperm.slane %v3631, %v3638
        %v3640 = vrot.slane %v3635, 4
        %v3641 = vsel %vm2034, 0.0, %v3640
        %v3643 = vunpack.c.l.s4 1934713408
        %v3644 = vunpack.c.0.s8 %v3643
        %v3645 = vperm.slane %v3635, %v3644
        %v3647 = vunpack.c.l.s4 1934713408
        %v3648 = vunpack.c.0.s8 %v3647
        %v3649 = vperm.slane %v3641, %v3648
        %v3650 = vrot.slane %v3639, 4
        %v3651 = vsel %vm2034, 0.0, %v3650
        %v3653 = vunpack.c.l.s4 1934713408
        %v3654 = vunpack.c.0.s8 %v3653
        %v3655 = vperm.slane %v3639, %v3654
        %v3657 = vunpack.c.l.s4 1934713408
        %v3658 = vunpack.c.0.s8 %v3657
        %v3659 = vperm.slane %v3651, %v3658
        %v3660 = vrot.slane %v3645, 4
        %v3661 = vsel %vm2034, 0.0, %v3660
        %v3662 = vrot.slane %v3649, 4
        %v3663 = vsel %vm2034, 0.0, %v3662
        %v3664 = vrot.slane %v3655, 4
        %v3665 = vsel %vm2034, 0.0, %v3664
        %v3666 = vrot.slane %v3659, 4
        %v3667 = vsel %vm2034, 0.0, %v3666
        %v3668 = vrot.slane %v1116, 4
        %v3669 = vsel %vm2034, 0.0, %v3668
        %v3671 = vunpack.c.l.s4 1983009808
        %v3672 = vunpack.c.0.s8 %v3671
        %v3673 = vperm.slane %v1116, %v3672
        %v3675 = vunpack.c.l.s4 1983009808
        %v3676 = vunpack.c.0.s8 %v3675
        %v3677 = vperm.slane %v3669, %v3676
        %v3678 = vrot.slane %v3673, 4
        %v3679 = vsel %vm2034, 0.0, %v3678
        %v3681 = vunpack.c.l.s4 1934713408
        %v3682 = vunpack.c.0.s8 %v3681
        %v3683 = vperm.slane %v3673, %v3682
        %v3685 = vunpack.c.l.s4 1934713408
        %v3686 = vunpack.c.0.s8 %v3685
        %v3687 = vperm.slane %v3679, %v3686
        %v3688 = vrot.slane %v3677, 4
        %v3689 = vsel %vm2034, 0.0, %v3688
        %v3691 = vunpack.c.l.s4 1934713408
        %v3692 = vunpack.c.0.s8 %v3691
        %v3693 = vperm.slane %v3677, %v3692
        %v3695 = vunpack.c.l.s4 1934713408
        %v3696 = vunpack.c.0.s8 %v3695
        %v3697 = vperm.slane %v3689, %v3696
        %v3698 = vrot.slane %v3683, 4
        %v3699 = vsel %vm2034, 0.0, %v3698
        %v3700 = vrot.slane %v3687, 4
        %v3701 = vsel %vm2034, 0.0, %v3700
        %v3702 = vrot.slane %v3693, 4
        %v3703 = vsel %vm2034, 0.0, %v3702
        %v3704 = vrot.slane %v3697, 4
        %v3705 = vsel %vm2034, 0.0, %v3704
        %v3706 = vrot.slane %v1117, 4
        %v3707 = vsel %vm2034, 0.0, %v3706
        %v3709 = vunpack.c.l.s4 1983009808
        %v3710 = vunpack.c.0.s8 %v3709
        %v3711 = vperm.slane %v1117, %v3710
        %v3713 = vunpack.c.l.s4 1983009808
        %v3714 = vunpack.c.0.s8 %v3713
        %v3715 = vperm.slane %v3707, %v3714
        %v3716 = vrot.slane %v3711, 4
        %v3717 = vsel %vm2034, 0.0, %v3716
        %v3719 = vunpack.c.l.s4 1934713408
        %v3720 = vunpack.c.0.s8 %v3719
        %v3721 = vperm.slane %v3711, %v3720
        %v3723 = vunpack.c.l.s4 1934713408
        %v3724 = vunpack.c.0.s8 %v3723
        %v3725 = vperm.slane %v3717, %v3724
        %v3726 = vrot.slane %v3715, 4
        %v3727 = vsel %vm2034, 0.0, %v3726
        %v3729 = vunpack.c.l.s4 1934713408
        %v3730 = vunpack.c.0.s8 %v3729
        %v3731 = vperm.slane %v3715, %v3730
        %v3733 = vunpack.c.l.s4 1934713408
        %v3734 = vunpack.c.0.s8 %v3733
        %v3735 = vperm.slane %v3727, %v3734
        %v3736 = vrot.slane %v3721, 4
        %v3737 = vsel %vm2034, 0.0, %v3736
        %v3738 = vrot.slane %v3725, 4
        %v3739 = vsel %vm2034, 0.0, %v3738
        %v3740 = vrot.slane %v3731, 4
        %v3741 = vsel %vm2034, 0.0, %v3740
        %v3742 = vrot.slane %v3735, 4
        %v3743 = vsel %vm2034, 0.0, %v3742
        %v3744 = vrot.slane %v1118, 4
        %v3745 = vsel %vm2034, 0.0, %v3744
        %v3747 = vunpack.c.l.s4 1983009808
        %v3748 = vunpack.c.0.s8 %v3747
        %v3749 = vperm.slane %v1118, %v3748
        %v3751 = vunpack.c.l.s4 1983009808
        %v3752 = vunpack.c.0.s8 %v3751
        %v3753 = vperm.slane %v3745, %v3752
        %v3754 = vrot.slane %v3749, 4
        %v3755 = vsel %vm2034, 0.0, %v3754
        %v3757 = vunpack.c.l.s4 1934713408
        %v3758 = vunpack.c.0.s8 %v3757
        %v3759 = vperm.slane %v3749, %v3758
        %v3761 = vunpack.c.l.s4 1934713408
        %v3762 = vunpack.c.0.s8 %v3761
        %v3763 = vperm.slane %v3755, %v3762
        %v3764 = vrot.slane %v3753, 4
        %v3765 = vsel %vm2034, 0.0, %v3764
        %v3767 = vunpack.c.l.s4 1934713408
        %v3768 = vunpack.c.0.s8 %v3767
        %v3769 = vperm.slane %v3753, %v3768
        %v3771 = vunpack.c.l.s4 1934713408
        %v3772 = vunpack.c.0.s8 %v3771
        %v3773 = vperm.slane %v3765, %v3772
        %v3774 = vrot.slane %v3759, 4
        %v3775 = vsel %vm2034, 0.0, %v3774
        %v3776 = vrot.slane %v3763, 4
        %v3777 = vsel %vm2034, 0.0, %v3776
        %v3778 = vrot.slane %v3769, 4
        %v3779 = vsel %vm2034, 0.0, %v3778
        %v3780 = vrot.slane %v3773, 4
        %v3781 = vsel %vm2034, 0.0, %v3780
        %v3782 = vrot.slane %v1119, 4
        %v3783 = vsel %vm2034, 0.0, %v3782
        %v3785 = vunpack.c.l.s4 1983009808
        %v3786 = vunpack.c.0.s8 %v3785
        %v3787 = vperm.slane %v1119, %v3786
        %v3789 = vunpack.c.l.s4 1983009808
        %v3790 = vunpack.c.0.s8 %v3789
        %v3791 = vperm.slane %v3783, %v3790
        %v3792 = vrot.slane %v3787, 4
        %v3793 = vsel %vm2034, 0.0, %v3792
        %v3795 = vunpack.c.l.s4 1934713408
        %v3796 = vunpack.c.0.s8 %v3795
        %v3797 = vperm.slane %v3787, %v3796
        %v3799 = vunpack.c.l.s4 1934713408
        %v3800 = vunpack.c.0.s8 %v3799
        %v3801 = vperm.slane %v3793, %v3800
        %v3802 = vrot.slane %v3791, 4
        %v3803 = vsel %vm2034, 0.0, %v3802
        %v3805 = vunpack.c.l.s4 1934713408
        %v3806 = vunpack.c.0.s8 %v3805
        %v3807 = vperm.slane %v3791, %v3806
        %v3809 = vunpack.c.l.s4 1934713408
        %v3810 = vunpack.c.0.s8 %v3809
        %v3811 = vperm.slane %v3803, %v3810
        %v3812 = vrot.slane %v3797, 4
        %v3813 = vsel %vm2034, 0.0, %v3812
        %v3814 = vrot.slane %v3801, 4
        %v3815 = vsel %vm2034, 0.0, %v3814
        %v3816 = vrot.slane %v3807, 4
        %v3817 = vsel %vm2034, 0.0, %v3816
        %v3818 = vrot.slane %v3811, 4
        %v3819 = vsel %vm2034, 0.0, %v3818
        %v3820 = vrot.slane %v1120, 4
        %v3821 = vsel %vm2034, 0.0, %v3820
        %v3823 = vunpack.c.l.s4 1983009808
        %v3824 = vunpack.c.0.s8 %v3823
        %v3825 = vperm.slane %v1120, %v3824
        %v3827 = vunpack.c.l.s4 1983009808
        %v3828 = vunpack.c.0.s8 %v3827
        %v3829 = vperm.slane %v3821, %v3828
        %v3830 = vrot.slane %v3825, 4
        %v3831 = vsel %vm2034, 0.0, %v3830
        %v3833 = vunpack.c.l.s4 1934713408
        %v3834 = vunpack.c.0.s8 %v3833
        %v3835 = vperm.slane %v3825, %v3834
        %v3837 = vunpack.c.l.s4 1934713408
        %v3838 = vunpack.c.0.s8 %v3837
        %v3839 = vperm.slane %v3831, %v3838
        %v3840 = vrot.slane %v3829, 4
        %v3841 = vsel %vm2034, 0.0, %v3840
        %v3843 = vunpack.c.l.s4 1934713408
        %v3844 = vunpack.c.0.s8 %v3843
        %v3845 = vperm.slane %v3829, %v3844
        %v3847 = vunpack.c.l.s4 1934713408
        %v3848 = vunpack.c.0.s8 %v3847
        %v3849 = vperm.slane %v3841, %v3848
        %v3850 = vrot.slane %v3835, 4
        %v3851 = vsel %vm2034, 0.0, %v3850
        %v3852 = vrot.slane %v3839, 4
        %v3853 = vsel %vm2034, 0.0, %v3852
        %v3854 = vrot.slane %v3845, 4
        %v3855 = vsel %vm2034, 0.0, %v3854
        %v3856 = vrot.slane %v3849, 4
        %v3857 = vsel %vm2034, 0.0, %v3856
        %v3858 = vrot.slane %v1121, 4
        %v3859 = vsel %vm2034, 0.0, %v3858
        %v3861 = vunpack.c.l.s4 1983009808
        %v3862 = vunpack.c.0.s8 %v3861
        %v3863 = vperm.slane %v1121, %v3862
        %v3865 = vunpack.c.l.s4 1983009808
        %v3866 = vunpack.c.0.s8 %v3865
        %v3867 = vperm.slane %v3859, %v3866
        %v3868 = vrot.slane %v3863, 4
        %v3869 = vsel %vm2034, 0.0, %v3868
        %v3871 = vunpack.c.l.s4 1934713408
        %v3872 = vunpack.c.0.s8 %v3871
        %v3873 = vperm.slane %v3863, %v3872
        %v3875 = vunpack.c.l.s4 1934713408
        %v3876 = vunpack.c.0.s8 %v3875
        %v3877 = vperm.slane %v3869, %v3876
        %v3878 = vrot.slane %v3867, 4
        %v3879 = vsel %vm2034, 0.0, %v3878
        %v3881 = vunpack.c.l.s4 1934713408
        %v3882 = vunpack.c.0.s8 %v3881
        %v3883 = vperm.slane %v3867, %v3882
        %v3885 = vunpack.c.l.s4 1934713408
        %v3886 = vunpack.c.0.s8 %v3885
        %v3887 = vperm.slane %v3879, %v3886
        %v3888 = vrot.slane %v3873, 4
        %v3889 = vsel %vm2034, 0.0, %v3888
        %v3890 = vrot.slane %v3877, 4
        %v3891 = vsel %vm2034, 0.0, %v3890
        %v3892 = vrot.slane %v3883, 4
        %v3893 = vsel %vm2034, 0.0, %v3892
        %v3894 = vrot.slane %v3887, 4
        %v3895 = vsel %vm2034, 0.0, %v3894
        %v3896 = vrot.slane %v1122, 4
        %v3897 = vsel %vm2034, 0.0, %v3896
        %v3899 = vunpack.c.l.s4 1983009808
        %v3900 = vunpack.c.0.s8 %v3899
        %v3901 = vperm.slane %v1122, %v3900
        %v3903 = vunpack.c.l.s4 1983009808
        %v3904 = vunpack.c.0.s8 %v3903
        %v3905 = vperm.slane %v3897, %v3904
        %v3906 = vrot.slane %v3901, 4
        %v3907 = vsel %vm2034, 0.0, %v3906
        %v3909 = vunpack.c.l.s4 1934713408
        %v3910 = vunpack.c.0.s8 %v3909
        %v3911 = vperm.slane %v3901, %v3910
        %v3913 = vunpack.c.l.s4 1934713408
        %v3914 = vunpack.c.0.s8 %v3913
        %v3915 = vperm.slane %v3907, %v3914
        %v3916 = vrot.slane %v3905, 4
        %v3917 = vsel %vm2034, 0.0, %v3916
        %v3919 = vunpack.c.l.s4 1934713408
        %v3920 = vunpack.c.0.s8 %v3919
        %v3921 = vperm.slane %v3905, %v3920
        %v3923 = vunpack.c.l.s4 1934713408
        %v3924 = vunpack.c.0.s8 %v3923
        %v3925 = vperm.slane %v3917, %v3924
        %v3926 = vrot.slane %v3911, 4
        %v3927 = vsel %vm2034, 0.0, %v3926
        %v3928 = vrot.slane %v3915, 4
        %v3929 = vsel %vm2034, 0.0, %v3928
        %v3930 = vrot.slane %v3921, 4
        %v3931 = vsel %vm2034, 0.0, %v3930
        %v3932 = vrot.slane %v3925, 4
        %v3933 = vsel %vm2034, 0.0, %v3932
        %v3934 = vrot.slane %v1123, 4
        %v3935 = vsel %vm2034, 0.0, %v3934
        %v3937 = vunpack.c.l.s4 1983009808
        %v3938 = vunpack.c.0.s8 %v3937
        %v3939 = vperm.slane %v1123, %v3938
        %v3941 = vunpack.c.l.s4 1983009808
        %v3942 = vunpack.c.0.s8 %v3941
        %v3943 = vperm.slane %v3935, %v3942
        %v3944 = vrot.slane %v3939, 4
        %v3945 = vsel %vm2034, 0.0, %v3944
        %v3947 = vunpack.c.l.s4 1934713408
        %v3948 = vunpack.c.0.s8 %v3947
        %v3949 = vperm.slane %v3939, %v3948
        %v3951 = vunpack.c.l.s4 1934713408
        %v3952 = vunpack.c.0.s8 %v3951
        %v3953 = vperm.slane %v3945, %v3952
        %v3954 = vrot.slane %v3943, 4
        %v3955 = vsel %vm2034, 0.0, %v3954
        %v3957 = vunpack.c.l.s4 1934713408
        %v3958 = vunpack.c.0.s8 %v3957
        %v3959 = vperm.slane %v3943, %v3958
        %v3961 = vunpack.c.l.s4 1934713408
        %v3962 = vunpack.c.0.s8 %v3961
        %v3963 = vperm.slane %v3955, %v3962
        %v3964 = vrot.slane %v3949, 4
        %v3965 = vsel %vm2034, 0.0, %v3964
        %v3966 = vrot.slane %v3953, 4
        %v3967 = vsel %vm2034, 0.0, %v3966
        %v3968 = vrot.slane %v3959, 4
        %v3969 = vsel %vm2034, 0.0, %v3968
        %v3970 = vrot.slane %v3963, 4
        %v3971 = vsel %vm2034, 0.0, %v3970
        %v3972 = vrot.slane %v1124, 4
        %v3973 = vsel %vm2034, 0.0, %v3972
        %v3975 = vunpack.c.l.s4 1983009808
        %v3976 = vunpack.c.0.s8 %v3975
        %v3977 = vperm.slane %v1124, %v3976
        %v3979 = vunpack.c.l.s4 1983009808
        %v3980 = vunpack.c.0.s8 %v3979
        %v3981 = vperm.slane %v3973, %v3980
        %v3982 = vrot.slane %v3977, 4
        %v3983 = vsel %vm2034, 0.0, %v3982
        %v3985 = vunpack.c.l.s4 1934713408
        %v3986 = vunpack.c.0.s8 %v3985
        %v3987 = vperm.slane %v3977, %v3986
        %v3989 = vunpack.c.l.s4 1934713408
        %v3990 = vunpack.c.0.s8 %v3989
        %v3991 = vperm.slane %v3983, %v3990
        %v3992 = vrot.slane %v3981, 4
        %v3993 = vsel %vm2034, 0.0, %v3992
        %v3995 = vunpack.c.l.s4 1934713408
        %v3996 = vunpack.c.0.s8 %v3995
        %v3997 = vperm.slane %v3981, %v3996
        %v3999 = vunpack.c.l.s4 1934713408
        %v4000 = vunpack.c.0.s8 %v3999
        %v4001 = vperm.slane %v3993, %v4000
        %v4002 = vrot.slane %v3987, 4
        %v4003 = vsel %vm2034, 0.0, %v4002
        %v4004 = vrot.slane %v3991, 4
        %v4005 = vsel %vm2034, 0.0, %v4004
        %v4006 = vrot.slane %v3997, 4
        %v4007 = vsel %vm2034, 0.0, %v4006
        %v4008 = vrot.slane %v4001, 4
        %v4009 = vsel %vm2034, 0.0, %v4008
        %v4010 = vrot.slane %v1125, 4
        %v4011 = vsel %vm2034, 0.0, %v4010
        %v4013 = vunpack.c.l.s4 1983009808
        %v4014 = vunpack.c.0.s8 %v4013
        %v4015 = vperm.slane %v1125, %v4014
        %v4017 = vunpack.c.l.s4 1983009808
        %v4018 = vunpack.c.0.s8 %v4017
        %v4019 = vperm.slane %v4011, %v4018
        %v4020 = vrot.slane %v4015, 4
        %v4021 = vsel %vm2034, 0.0, %v4020
        %v4023 = vunpack.c.l.s4 1934713408
        %v4024 = vunpack.c.0.s8 %v4023
        %v4025 = vperm.slane %v4015, %v4024
        %v4027 = vunpack.c.l.s4 1934713408
        %v4028 = vunpack.c.0.s8 %v4027
        %v4029 = vperm.slane %v4021, %v4028
        %v4030 = vrot.slane %v4019, 4
        %v4031 = vsel %vm2034, 0.0, %v4030
        %v4033 = vunpack.c.l.s4 1934713408
        %v4034 = vunpack.c.0.s8 %v4033
        %v4035 = vperm.slane %v4019, %v4034
        %v4037 = vunpack.c.l.s4 1934713408
        %v4038 = vunpack.c.0.s8 %v4037
        %v4039 = vperm.slane %v4031, %v4038
        %v4040 = vrot.slane %v4025, 4
        %v4041 = vsel %vm2034, 0.0, %v4040
        %v4042 = vrot.slane %v4029, 4
        %v4043 = vsel %vm2034, 0.0, %v4042
        %v4044 = vrot.slane %v4035, 4
        %v4045 = vsel %vm2034, 0.0, %v4044
        %v4046 = vrot.slane %v4039, 4
        %v4047 = vsel %vm2034, 0.0, %v4046
        %v4048 = vrot.slane %v1126, 4
        %v4049 = vsel %vm2034, 0.0, %v4048
        %v4051 = vunpack.c.l.s4 1983009808
        %v4052 = vunpack.c.0.s8 %v4051
        %v4053 = vperm.slane %v1126, %v4052
        %v4055 = vunpack.c.l.s4 1983009808
        %v4056 = vunpack.c.0.s8 %v4055
        %v4057 = vperm.slane %v4049, %v4056
        %v4058 = vrot.slane %v4053, 4
        %v4059 = vsel %vm2034, 0.0, %v4058
        %v4061 = vunpack.c.l.s4 1934713408
        %v4062 = vunpack.c.0.s8 %v4061
        %v4063 = vperm.slane %v4053, %v4062
        %v4065 = vunpack.c.l.s4 1934713408
        %v4066 = vunpack.c.0.s8 %v4065
        %v4067 = vperm.slane %v4059, %v4066
        %v4068 = vrot.slane %v4057, 4
        %v4069 = vsel %vm2034, 0.0, %v4068
        %v4071 = vunpack.c.l.s4 1934713408
        %v4072 = vunpack.c.0.s8 %v4071
        %v4073 = vperm.slane %v4057, %v4072
        %v4075 = vunpack.c.l.s4 1934713408
        %v4076 = vunpack.c.0.s8 %v4075
        %v4077 = vperm.slane %v4069, %v4076
        %v4078 = vrot.slane %v4063, 4
        %v4079 = vsel %vm2034, 0.0, %v4078
        %v4080 = vrot.slane %v4067, 4
        %v4081 = vsel %vm2034, 0.0, %v4080
        %v4082 = vrot.slane %v4073, 4
        %v4083 = vsel %vm2034, 0.0, %v4082
        %v4084 = vrot.slane %v4077, 4
        %v4085 = vsel %vm2034, 0.0, %v4084
        %v4086 = vrot.slane %v1127, 4
        %v4087 = vsel %vm2034, 0.0, %v4086
        %v4089 = vunpack.c.l.s4 1983009808
        %v4090 = vunpack.c.0.s8 %v4089
        %v4091 = vperm.slane %v1127, %v4090
        %v4093 = vunpack.c.l.s4 1983009808
        %v4094 = vunpack.c.0.s8 %v4093
        %v4095 = vperm.slane %v4087, %v4094
        %v4096 = vrot.slane %v4091, 4
        %v4097 = vsel %vm2034, 0.0, %v4096
        %v4099 = vunpack.c.l.s4 1934713408
        %v4100 = vunpack.c.0.s8 %v4099
        %v4101 = vperm.slane %v4091, %v4100
        %v4103 = vunpack.c.l.s4 1934713408
        %v4104 = vunpack.c.0.s8 %v4103
        %v4105 = vperm.slane %v4097, %v4104
        %v4106 = vrot.slane %v4095, 4
        %v4107 = vsel %vm2034, 0.0, %v4106
        %v4109 = vunpack.c.l.s4 1934713408
        %v4110 = vunpack.c.0.s8 %v4109
        %v4111 = vperm.slane %v4095, %v4110
        %v4113 = vunpack.c.l.s4 1934713408
        %v4114 = vunpack.c.0.s8 %v4113
        %v4115 = vperm.slane %v4107, %v4114
        %v4116 = vrot.slane %v4101, 4
        %v4117 = vsel %vm2034, 0.0, %v4116
        %v4118 = vrot.slane %v4105, 4
        %v4119 = vsel %vm2034, 0.0, %v4118
        %v4120 = vrot.slane %v4111, 4
        %v4121 = vsel %vm2034, 0.0, %v4120
        %v4122 = vrot.slane %v4115, 4
        %v4123 = vsel %vm2034, 0.0, %v4122
        %v4124 = vrot.slane %v1128, 4
        %v4125 = vsel %vm2034, 0.0, %v4124
        %v4127 = vunpack.c.l.s4 1983009808
        %v4128 = vunpack.c.0.s8 %v4127
        %v4129 = vperm.slane %v1128, %v4128
        %v4131 = vunpack.c.l.s4 1983009808
        %v4132 = vunpack.c.0.s8 %v4131
        %v4133 = vperm.slane %v4125, %v4132
        %v4134 = vrot.slane %v4129, 4
        %v4135 = vsel %vm2034, 0.0, %v4134
        %v4137 = vunpack.c.l.s4 1934713408
        %v4138 = vunpack.c.0.s8 %v4137
        %v4139 = vperm.slane %v4129, %v4138
        %v4141 = vunpack.c.l.s4 1934713408
        %v4142 = vunpack.c.0.s8 %v4141
        %v4143 = vperm.slane %v4135, %v4142
        %v4144 = vrot.slane %v4133, 4
        %v4145 = vsel %vm2034, 0.0, %v4144
        %v4147 = vunpack.c.l.s4 1934713408
        %v4148 = vunpack.c.0.s8 %v4147
        %v4149 = vperm.slane %v4133, %v4148
        %v4151 = vunpack.c.l.s4 1934713408
        %v4152 = vunpack.c.0.s8 %v4151
        %v4153 = vperm.slane %v4145, %v4152
        %v4154 = vrot.slane %v4139, 4
        %v4155 = vsel %vm2034, 0.0, %v4154
        %v4156 = vrot.slane %v4143, 4
        %v4157 = vsel %vm2034, 0.0, %v4156
        %v4158 = vrot.slane %v4149, 4
        %v4159 = vsel %vm2034, 0.0, %v4158
        %v4160 = vrot.slane %v4153, 4
        %v4161 = vsel %vm2034, 0.0, %v4160
        %v4162 = vrot.slane %v1129, 4
        %v4163 = vsel %vm2034, 0.0, %v4162
        %v4165 = vunpack.c.l.s4 1983009808
        %v4166 = vunpack.c.0.s8 %v4165
        %v4167 = vperm.slane %v1129, %v4166
        %v4169 = vunpack.c.l.s4 1983009808
        %v4170 = vunpack.c.0.s8 %v4169
        %v4171 = vperm.slane %v4163, %v4170
        %v4172 = vrot.slane %v4167, 4
        %v4173 = vsel %vm2034, 0.0, %v4172
        %v4175 = vunpack.c.l.s4 1934713408
        %v4176 = vunpack.c.0.s8 %v4175
        %v4177 = vperm.slane %v4167, %v4176
        %v4179 = vunpack.c.l.s4 1934713408
        %v4180 = vunpack.c.0.s8 %v4179
        %v4181 = vperm.slane %v4173, %v4180
        %v4182 = vrot.slane %v4171, 4
        %v4183 = vsel %vm2034, 0.0, %v4182
        %v4185 = vunpack.c.l.s4 1934713408
        %v4186 = vunpack.c.0.s8 %v4185
        %v4187 = vperm.slane %v4171, %v4186
        %v4189 = vunpack.c.l.s4 1934713408
        %v4190 = vunpack.c.0.s8 %v4189
        %v4191 = vperm.slane %v4183, %v4190
        %v4192 = vrot.slane %v4177, 4
        %v4193 = vsel %vm2034, 0.0, %v4192
        %v4194 = vrot.slane %v4181, 4
        %v4195 = vsel %vm2034, 0.0, %v4194
        %v4196 = vrot.slane %v4187, 4
        %v4197 = vsel %vm2034, 0.0, %v4196
        %v4198 = vrot.slane %v4191, 4
        %v4199 = vsel %vm2034, 0.0, %v4198
        %v4200 = vrot.slane %v1130, 4
        %v4201 = vsel %vm2034, 0.0, %v4200
        %v4203 = vunpack.c.l.s4 1983009808
        %v4204 = vunpack.c.0.s8 %v4203
        %v4205 = vperm.slane %v1130, %v4204
        %v4207 = vunpack.c.l.s4 1983009808
        %v4208 = vunpack.c.0.s8 %v4207
        %v4209 = vperm.slane %v4201, %v4208
        %v4210 = vrot.slane %v4205, 4
        %v4211 = vsel %vm2034, 0.0, %v4210
        %v4213 = vunpack.c.l.s4 1934713408
        %v4214 = vunpack.c.0.s8 %v4213
        %v4215 = vperm.slane %v4205, %v4214
        %v4217 = vunpack.c.l.s4 1934713408
        %v4218 = vunpack.c.0.s8 %v4217
        %v4219 = vperm.slane %v4211, %v4218
        %v4220 = vrot.slane %v4209, 4
        %v4221 = vsel %vm2034, 0.0, %v4220
        %v4223 = vunpack.c.l.s4 1934713408
        %v4224 = vunpack.c.0.s8 %v4223
        %v4225 = vperm.slane %v4209, %v4224
        %v4227 = vunpack.c.l.s4 1934713408
        %v4228 = vunpack.c.0.s8 %v4227
        %v4229 = vperm.slane %v4221, %v4228
        %v4230 = vrot.slane %v4215, 4
        %v4231 = vsel %vm2034, 0.0, %v4230
        %v4232 = vrot.slane %v4219, 4
        %v4233 = vsel %vm2034, 0.0, %v4232
        %v4234 = vrot.slane %v4225, 4
        %v4235 = vsel %vm2034, 0.0, %v4234
        %v4236 = vrot.slane %v4229, 4
        %v4237 = vsel %vm2034, 0.0, %v4236
        %v4238 = vrot.slane %v1131, 4
        %v4239 = vsel %vm2034, 0.0, %v4238
        %v4241 = vunpack.c.l.s4 1983009808
        %v4242 = vunpack.c.0.s8 %v4241
        %v4243 = vperm.slane %v1131, %v4242
        %v4245 = vunpack.c.l.s4 1983009808
        %v4246 = vunpack.c.0.s8 %v4245
        %v4247 = vperm.slane %v4239, %v4246
        %v4248 = vrot.slane %v4243, 4
        %v4249 = vsel %vm2034, 0.0, %v4248
        %v4251 = vunpack.c.l.s4 1934713408
        %v4252 = vunpack.c.0.s8 %v4251
        %v4253 = vperm.slane %v4243, %v4252
        %v4255 = vunpack.c.l.s4 1934713408
        %v4256 = vunpack.c.0.s8 %v4255
        %v4257 = vperm.slane %v4249, %v4256
        %v4258 = vrot.slane %v4247, 4
        %v4259 = vsel %vm2034, 0.0, %v4258
        %v4261 = vunpack.c.l.s4 1934713408
        %v4262 = vunpack.c.0.s8 %v4261
        %v4263 = vperm.slane %v4247, %v4262
        %v4265 = vunpack.c.l.s4 1934713408
        %v4266 = vunpack.c.0.s8 %v4265
        %v4267 = vperm.slane %v4259, %v4266
        %v4268 = vrot.slane %v4253, 4
        %v4269 = vsel %vm2034, 0.0, %v4268
        %v4270 = vrot.slane %v4257, 4
        %v4271 = vsel %vm2034, 0.0, %v4270
        %v4272 = vrot.slane %v4263, 4
        %v4273 = vsel %vm2034, 0.0, %v4272
        %v4274 = vrot.slane %v4267, 4
        %v4275 = vsel %vm2034, 0.0, %v4274
        %v4276 = vrot.slane %v1132, 4
        %v4277 = vsel %vm2034, 0.0, %v4276
        %v4279 = vunpack.c.l.s4 1983009808
        %v4280 = vunpack.c.0.s8 %v4279
        %v4281 = vperm.slane %v1132, %v4280
        %v4283 = vunpack.c.l.s4 1983009808
        %v4284 = vunpack.c.0.s8 %v4283
        %v4285 = vperm.slane %v4277, %v4284
        %v4286 = vrot.slane %v4281, 4
        %v4287 = vsel %vm2034, 0.0, %v4286
        %v4289 = vunpack.c.l.s4 1934713408
        %v4290 = vunpack.c.0.s8 %v4289
        %v4291 = vperm.slane %v4281, %v4290
        %v4293 = vunpack.c.l.s4 1934713408
        %v4294 = vunpack.c.0.s8 %v4293
        %v4295 = vperm.slane %v4287, %v4294
        %v4296 = vrot.slane %v4285, 4
        %v4297 = vsel %vm2034, 0.0, %v4296
        %v4299 = vunpack.c.l.s4 1934713408
        %v4300 = vunpack.c.0.s8 %v4299
        %v4301 = vperm.slane %v4285, %v4300
        %v4303 = vunpack.c.l.s4 1934713408
        %v4304 = vunpack.c.0.s8 %v4303
        %v4305 = vperm.slane %v4297, %v4304
        %v4306 = vrot.slane %v4291, 4
        %v4307 = vsel %vm2034, 0.0, %v4306
        %v4308 = vrot.slane %v4295, 4
        %v4309 = vsel %vm2034, 0.0, %v4308
        %v4310 = vrot.slane %v4301, 4
        %v4311 = vsel %vm2034, 0.0, %v4310
        %v4312 = vrot.slane %v4305, 4
        %v4313 = vsel %vm2034, 0.0, %v4312
        %v4314 = vrot.slane %v1133, 4
        %v4315 = vsel %vm2034, 0.0, %v4314
        %v4317 = vunpack.c.l.s4 1983009808
        %v4318 = vunpack.c.0.s8 %v4317
        %v4319 = vperm.slane %v1133, %v4318
        %v4321 = vunpack.c.l.s4 1983009808
        %v4322 = vunpack.c.0.s8 %v4321
        %v4323 = vperm.slane %v4315, %v4322
        %v4324 = vrot.slane %v4319, 4
        %v4325 = vsel %vm2034, 0.0, %v4324
        %v4327 = vunpack.c.l.s4 1934713408
        %v4328 = vunpack.c.0.s8 %v4327
        %v4329 = vperm.slane %v4319, %v4328
        %v4331 = vunpack.c.l.s4 1934713408
        %v4332 = vunpack.c.0.s8 %v4331
        %v4333 = vperm.slane %v4325, %v4332
        %v4334 = vrot.slane %v4323, 4
        %v4335 = vsel %vm2034, 0.0, %v4334
        %v4337 = vunpack.c.l.s4 1934713408
        %v4338 = vunpack.c.0.s8 %v4337
        %v4339 = vperm.slane %v4323, %v4338
        %v4341 = vunpack.c.l.s4 1934713408
        %v4342 = vunpack.c.0.s8 %v4341
        %v4343 = vperm.slane %v4335, %v4342
        %v4344 = vrot.slane %v4329, 4
        %v4345 = vsel %vm2034, 0.0, %v4344
        %v4346 = vrot.slane %v4333, 4
        %v4347 = vsel %vm2034, 0.0, %v4346
        %v4348 = vrot.slane %v4339, 4
        %v4349 = vsel %vm2034, 0.0, %v4348
        %v4350 = vrot.slane %v4343, 4
        %v4351 = vsel %vm2034, 0.0, %v4350
        %v4352 = vrot.slane %v1134, 4
        %v4353 = vsel %vm2034, 0.0, %v4352
        %v4355 = vunpack.c.l.s4 1983009808
        %v4356 = vunpack.c.0.s8 %v4355
        %v4357 = vperm.slane %v1134, %v4356
        %v4359 = vunpack.c.l.s4 1983009808
        %v4360 = vunpack.c.0.s8 %v4359
        %v4361 = vperm.slane %v4353, %v4360
        %v4362 = vrot.slane %v4357, 4
        %v4363 = vsel %vm2034, 0.0, %v4362
        %v4365 = vunpack.c.l.s4 1934713408
        %v4366 = vunpack.c.0.s8 %v4365
        %v4367 = vperm.slane %v4357, %v4366
        %v4369 = vunpack.c.l.s4 1934713408
        %v4370 = vunpack.c.0.s8 %v4369
        %v4371 = vperm.slane %v4363, %v4370
        %v4372 = vrot.slane %v4361, 4
        %v4373 = vsel %vm2034, 0.0, %v4372
        %v4375 = vunpack.c.l.s4 1934713408
        %v4376 = vunpack.c.0.s8 %v4375
        %v4377 = vperm.slane %v4361, %v4376
        %v4379 = vunpack.c.l.s4 1934713408
        %v4380 = vunpack.c.0.s8 %v4379
        %v4381 = vperm.slane %v4373, %v4380
        %v4382 = vrot.slane %v4367, 4
        %v4383 = vsel %vm2034, 0.0, %v4382
        %v4384 = vrot.slane %v4371, 4
        %v4385 = vsel %vm2034, 0.0, %v4384
        %v4386 = vrot.slane %v4377, 4
        %v4387 = vsel %vm2034, 0.0, %v4386
        %v4388 = vrot.slane %v4381, 4
        %v4389 = vsel %vm2034, 0.0, %v4388
        %v4390 = vrot.slane %v1135, 4
        %v4391 = vsel %vm2034, 0.0, %v4390
        %v4393 = vunpack.c.l.s4 1983009808
        %v4394 = vunpack.c.0.s8 %v4393
        %v4395 = vperm.slane %v1135, %v4394
        %v4397 = vunpack.c.l.s4 1983009808
        %v4398 = vunpack.c.0.s8 %v4397
        %v4399 = vperm.slane %v4391, %v4398
        %v4400 = vrot.slane %v4395, 4
        %v4401 = vsel %vm2034, 0.0, %v4400
        %v4403 = vunpack.c.l.s4 1934713408
        %v4404 = vunpack.c.0.s8 %v4403
        %v4405 = vperm.slane %v4395, %v4404
        %v4407 = vunpack.c.l.s4 1934713408
        %v4408 = vunpack.c.0.s8 %v4407
        %v4409 = vperm.slane %v4401, %v4408
        %v4410 = vrot.slane %v4399, 4
        %v4411 = vsel %vm2034, 0.0, %v4410
        %v4413 = vunpack.c.l.s4 1934713408
        %v4414 = vunpack.c.0.s8 %v4413
        %v4415 = vperm.slane %v4399, %v4414
        %v4417 = vunpack.c.l.s4 1934713408
        %v4418 = vunpack.c.0.s8 %v4417
        %v4419 = vperm.slane %v4411, %v4418
        %v4420 = vrot.slane %v4405, 4
        %v4421 = vsel %vm2034, 0.0, %v4420
        %v4422 = vrot.slane %v4409, 4
        %v4423 = vsel %vm2034, 0.0, %v4422
        %v4424 = vrot.slane %v4415, 4
        %v4425 = vsel %vm2034, 0.0, %v4424
        %v4426 = vrot.slane %v4419, 4
        %v4427 = vsel %vm2034, 0.0, %v4426
        %v4428 = vrot.slane %v1136, 4
        %v4429 = vsel %vm2034, 0.0, %v4428
        %v4431 = vunpack.c.l.s4 1983009808
        %v4432 = vunpack.c.0.s8 %v4431
        %v4433 = vperm.slane %v1136, %v4432
        %v4435 = vunpack.c.l.s4 1983009808
        %v4436 = vunpack.c.0.s8 %v4435
        %v4437 = vperm.slane %v4429, %v4436
        %v4438 = vrot.slane %v4433, 4
        %v4439 = vsel %vm2034, 0.0, %v4438
        %v4441 = vunpack.c.l.s4 1934713408
        %v4442 = vunpack.c.0.s8 %v4441
        %v4443 = vperm.slane %v4433, %v4442
        %v4445 = vunpack.c.l.s4 1934713408
        %v4446 = vunpack.c.0.s8 %v4445
        %v4447 = vperm.slane %v4439, %v4446
        %v4448 = vrot.slane %v4437, 4
        %v4449 = vsel %vm2034, 0.0, %v4448
        %v4451 = vunpack.c.l.s4 1934713408
        %v4452 = vunpack.c.0.s8 %v4451
        %v4453 = vperm.slane %v4437, %v4452
        %v4455 = vunpack.c.l.s4 1934713408
        %v4456 = vunpack.c.0.s8 %v4455
        %v4457 = vperm.slane %v4449, %v4456
        %v4458 = vrot.slane %v4443, 4
        %v4459 = vsel %vm2034, 0.0, %v4458
        %v4460 = vrot.slane %v4447, 4
        %v4461 = vsel %vm2034, 0.0, %v4460
        %v4462 = vrot.slane %v4453, 4
        %v4463 = vsel %vm2034, 0.0, %v4462
        %v4464 = vrot.slane %v4457, 4
        %v4465 = vsel %vm2034, 0.0, %v4464
        %4498 = vrot.lane.b32.xlu0 %v2065, 2
        %v4499 = vpop.permute.xlu0 %4498
        %4500 = vrot.lane.b32.xlu0 %v2141, 2
        %v4501 = vpop.permute.xlu0 %4500
        %4502 = vrot.lane.b32.xlu0 %v2217, 2
        %v4503 = vpop.permute.xlu0 %4502
        %4504 = vrot.lane.b32.xlu0 %v2293, 2
        %v4505 = vpop.permute.xlu0 %4504
        %4506 = vrot.lane.b32.xlu0 %v2369, 2
        %v4507 = vpop.permute.xlu0 %4506
        %4508 = vrot.lane.b32.xlu0 %v2445, 2
        %v4509 = vpop.permute.xlu0 %4508
        %4510 = vrot.lane.b32.xlu0 %v2521, 2
        %v4511 = vpop.permute.xlu0 %4510
        %4512 = vrot.lane.b32.xlu0 %v2597, 2
        %v4513 = vpop.permute.xlu0 %4512
        %4514 = vrot.lane.b32.xlu0 %v2673, 2
        %v4515 = vpop.permute.xlu0 %4514
        %4516 = vrot.lane.b32.xlu0 %v2749, 2
        %v4517 = vpop.permute.xlu0 %4516
        %4518 = vrot.lane.b32.xlu0 %v2825, 2
        %v4519 = vpop.permute.xlu0 %4518
        %4520 = vrot.lane.b32.xlu0 %v2901, 2
        %v4521 = vpop.permute.xlu0 %4520
        %4522 = vrot.lane.b32.xlu0 %v2977, 2
        %v4523 = vpop.permute.xlu0 %4522
        %4524 = vrot.lane.b32.xlu0 %v3053, 2
        %v4525 = vpop.permute.xlu0 %4524
        %4526 = vrot.lane.b32.xlu0 %v3129, 2
        %v4527 = vpop.permute.xlu0 %4526
        %4528 = vrot.lane.b32.xlu0 %v3205, 2
        %v4529 = vpop.permute.xlu0 %4528
        %4530 = vrot.lane.b32.xlu0 %v3281, 2
        %v4531 = vpop.permute.xlu0 %4530
        %4532 = vrot.lane.b32.xlu0 %v3357, 2
        %v4533 = vpop.permute.xlu0 %4532
        %4534 = vrot.lane.b32.xlu0 %v3433, 2
        %v4535 = vpop.permute.xlu0 %4534
        %4536 = vrot.lane.b32.xlu0 %v3509, 2
        %v4537 = vpop.permute.xlu0 %4536
        %4538 = vrot.lane.b32.xlu0 %v3585, 2
        %v4539 = vpop.permute.xlu0 %4538
        %4540 = vrot.lane.b32.xlu0 %v3661, 2
        %v4541 = vpop.permute.xlu0 %4540
        %4542 = vrot.lane.b32.xlu0 %v3737, 2
        %v4543 = vpop.permute.xlu0 %4542
        %4544 = vrot.lane.b32.xlu0 %v3813, 2
        %v4545 = vpop.permute.xlu0 %4544
        %4546 = vrot.lane.b32.xlu0 %v3889, 2
        %v4547 = vpop.permute.xlu0 %4546
        %4548 = vrot.lane.b32.xlu0 %v3965, 2
        %v4549 = vpop.permute.xlu0 %4548
        %4550 = vrot.lane.b32.xlu0 %v4041, 2
        %v4551 = vpop.permute.xlu0 %4550
        %4552 = vrot.lane.b32.xlu0 %v4117, 2
        %v4553 = vpop.permute.xlu0 %4552
        %4554 = vrot.lane.b32.xlu0 %v4193, 2
        %v4555 = vpop.permute.xlu0 %4554
        %4556 = vrot.lane.b32.xlu0 %v4269, 2
        %v4557 = vpop.permute.xlu0 %4556
        %4558 = vrot.lane.b32.xlu0 %v4345, 2
        %v4559 = vpop.permute.xlu0 %4558
        %4560 = vrot.lane.b32.xlu0 %v4421, 2
        %v4561 = vpop.permute.xlu0 %4560
        %4626 = vrot.lane.b32.xlu0 %v2053, 4
        %v4627 = vpop.permute.xlu0 %4626
        %4628 = vrot.lane.b32.xlu0 %v2129, 4
        %v4629 = vpop.permute.xlu0 %4628
        %4630 = vrot.lane.b32.xlu0 %v2205, 4
        %v4631 = vpop.permute.xlu0 %4630
        %4632 = vrot.lane.b32.xlu0 %v2281, 4
        %v4633 = vpop.permute.xlu0 %4632
        %4634 = vrot.lane.b32.xlu0 %v2357, 4
        %v4635 = vpop.permute.xlu0 %4634
        %4636 = vrot.lane.b32.xlu0 %v2433, 4
        %v4637 = vpop.permute.xlu0 %4636
        %4638 = vrot.lane.b32.xlu0 %v2509, 4
        %v4639 = vpop.permute.xlu0 %4638
        %4640 = vrot.lane.b32.xlu0 %v2585, 4
        %v4641 = vpop.permute.xlu0 %4640
        %4642 = vrot.lane.b32.xlu0 %v2661, 4
        %v4643 = vpop.permute.xlu0 %4642
        %4644 = vrot.lane.b32.xlu0 %v2737, 4
        %v4645 = vpop.permute.xlu0 %4644
        %4646 = vrot.lane.b32.xlu0 %v2813, 4
        %v4647 = vpop.permute.xlu0 %4646
        %4648 = vrot.lane.b32.xlu0 %v2889, 4
        %v4649 = vpop.permute.xlu0 %4648
        %4650 = vrot.lane.b32.xlu0 %v2965, 4
        %v4651 = vpop.permute.xlu0 %4650
        %4652 = vrot.lane.b32.xlu0 %v3041, 4
        %v4653 = vpop.permute.xlu0 %4652
        %4654 = vrot.lane.b32.xlu0 %v3117, 4
        %v4655 = vpop.permute.xlu0 %4654
        %4656 = vrot.lane.b32.xlu0 %v3193, 4
        %v4657 = vpop.permute.xlu0 %4656
        %4658 = vrot.lane.b32.xlu0 %v3269, 4
        %v4659 = vpop.permute.xlu0 %4658
        %4660 = vrot.lane.b32.xlu0 %v3345, 4
        %v4661 = vpop.permute.xlu0 %4660
        %4662 = vrot.lane.b32.xlu0 %v3421, 4
        %v4663 = vpop.permute.xlu0 %4662
        %4664 = vrot.lane.b32.xlu0 %v3497, 4
        %v4665 = vpop.permute.xlu0 %4664
        %4666 = vrot.lane.b32.xlu0 %v3573, 4
        %v4667 = vpop.permute.xlu0 %4666
        %4668 = vrot.lane.b32.xlu0 %v3649, 4
        %v4669 = vpop.permute.xlu0 %4668
        %4670 = vrot.lane.b32.xlu0 %v3725, 4
        %v4671 = vpop.permute.xlu0 %4670
        %4672 = vrot.lane.b32.xlu0 %v3801, 4
        %v4673 = vpop.permute.xlu0 %4672
        %4674 = vrot.lane.b32.xlu0 %v3877, 4
        %v4675 = vpop.permute.xlu0 %4674
        %4676 = vrot.lane.b32.xlu0 %v3953, 4
        %v4677 = vpop.permute.xlu0 %4676
        %4678 = vrot.lane.b32.xlu0 %v4029, 4
        %v4679 = vpop.permute.xlu0 %4678
        %4680 = vrot.lane.b32.xlu0 %v4105, 4
        %v4681 = vpop.permute.xlu0 %4680
        %4682 = vrot.lane.b32.xlu0 %v4181, 4
        %v4683 = vpop.permute.xlu0 %4682
        %4684 = vrot.lane.b32.xlu0 %v4257, 4
        %v4685 = vpop.permute.xlu0 %4684
        %4686 = vrot.lane.b32.xlu0 %v4333, 4
        %v4687 = vpop.permute.xlu0 %4686
        %4688 = vrot.lane.b32.xlu0 %v4409, 4
        %v4689 = vpop.permute.xlu0 %4688
        %4754 = vrot.lane.b32.xlu0 %v2067, 6
        %v4755 = vpop.permute.xlu0 %4754
        %4756 = vrot.lane.b32.xlu0 %v2143, 6
        %v4757 = vpop.permute.xlu0 %4756
        %4758 = vrot.lane.b32.xlu0 %v2219, 6
        %v4759 = vpop.permute.xlu0 %4758
        %4760 = vrot.lane.b32.xlu0 %v2295, 6
        %v4761 = vpop.permute.xlu0 %4760
        %4762 = vrot.lane.b32.xlu0 %v2371, 6
        %v4763 = vpop.permute.xlu0 %4762
        %4764 = vrot.lane.b32.xlu0 %v2447, 6
        %v4765 = vpop.permute.xlu0 %4764
        %4766 = vrot.lane.b32.xlu0 %v2523, 6
        %v4767 = vpop.permute.xlu0 %4766
        %4768 = vrot.lane.b32.xlu0 %v2599, 6
        %v4769 = vpop.permute.xlu0 %4768
        %4770 = vrot.lane.b32.xlu0 %v2675, 6
        %v4771 = vpop.permute.xlu0 %4770
        %4772 = vrot.lane.b32.xlu0 %v2751, 6
        %v4773 = vpop.permute.xlu0 %4772
        %4774 = vrot.lane.b32.xlu0 %v2827, 6
        %v4775 = vpop.permute.xlu0 %4774
        %4776 = vrot.lane.b32.xlu0 %v2903, 6
        %v4777 = vpop.permute.xlu0 %4776
        %4778 = vrot.lane.b32.xlu0 %v2979, 6
        %v4779 = vpop.permute.xlu0 %4778
        %4780 = vrot.lane.b32.xlu0 %v3055, 6
        %v4781 = vpop.permute.xlu0 %4780
        %4782 = vrot.lane.b32.xlu0 %v3131, 6
        %v4783 = vpop.permute.xlu0 %4782
        %4784 = vrot.lane.b32.xlu0 %v3207, 6
        %v4785 = vpop.permute.xlu0 %4784
        %4786 = vrot.lane.b32.xlu0 %v3283, 6
        %v4787 = vpop.permute.xlu0 %4786
        %4788 = vrot.lane.b32.xlu0 %v3359, 6
        %v4789 = vpop.permute.xlu0 %4788
        %4790 = vrot.lane.b32.xlu0 %v3435, 6
        %v4791 = vpop.permute.xlu0 %4790
        %4792 = vrot.lane.b32.xlu0 %v3511, 6
        %v4793 = vpop.permute.xlu0 %4792
        %4794 = vrot.lane.b32.xlu0 %v3587, 6
        %v4795 = vpop.permute.xlu0 %4794
        %4796 = vrot.lane.b32.xlu0 %v3663, 6
        %v4797 = vpop.permute.xlu0 %4796
        %4798 = vrot.lane.b32.xlu0 %v3739, 6
        %v4799 = vpop.permute.xlu0 %4798
        %4800 = vrot.lane.b32.xlu0 %v3815, 6
        %v4801 = vpop.permute.xlu0 %4800
        %4802 = vrot.lane.b32.xlu0 %v3891, 6
        %v4803 = vpop.permute.xlu0 %4802
        %4804 = vrot.lane.b32.xlu0 %v3967, 6
        %v4805 = vpop.permute.xlu0 %4804
        %4806 = vrot.lane.b32.xlu0 %v4043, 6
        %v4807 = vpop.permute.xlu0 %4806
        %4808 = vrot.lane.b32.xlu0 %v4119, 6
        %v4809 = vpop.permute.xlu0 %4808
        %4810 = vrot.lane.b32.xlu0 %v4195, 6
        %v4811 = vpop.permute.xlu0 %4810
        %4812 = vrot.lane.b32.xlu0 %v4271, 6
        %v4813 = vpop.permute.xlu0 %4812
        %4814 = vrot.lane.b32.xlu0 %v4347, 6
        %v4815 = vpop.permute.xlu0 %4814
        %4816 = vrot.lane.b32.xlu0 %v4423, 6
        %v4817 = vpop.permute.xlu0 %4816
        %4882 = vrot.lane.b32.xlu0 %v2059, 8
        %v4883 = vpop.permute.xlu0 %4882
        %4884 = vrot.lane.b32.xlu0 %v2135, 8
        %v4885 = vpop.permute.xlu0 %4884
        %4886 = vrot.lane.b32.xlu0 %v2211, 8
        %v4887 = vpop.permute.xlu0 %4886
        %4888 = vrot.lane.b32.xlu0 %v2287, 8
        %v4889 = vpop.permute.xlu0 %4888
        %4890 = vrot.lane.b32.xlu0 %v2363, 8
        %v4891 = vpop.permute.xlu0 %4890
        %4892 = vrot.lane.b32.xlu0 %v2439, 8
        %v4893 = vpop.permute.xlu0 %4892
        %4894 = vrot.lane.b32.xlu0 %v2515, 8
        %v4895 = vpop.permute.xlu0 %4894
        %4896 = vrot.lane.b32.xlu0 %v2591, 8
        %v4897 = vpop.permute.xlu0 %4896
        %4898 = vrot.lane.b32.xlu0 %v2667, 8
        %v4899 = vpop.permute.xlu0 %4898
        %4900 = vrot.lane.b32.xlu0 %v2743, 8
        %v4901 = vpop.permute.xlu0 %4900
        %4902 = vrot.lane.b32.xlu0 %v2819, 8
        %v4903 = vpop.permute.xlu0 %4902
        %4904 = vrot.lane.b32.xlu0 %v2895, 8
        %v4905 = vpop.permute.xlu0 %4904
        %4906 = vrot.lane.b32.xlu0 %v2971, 8
        %v4907 = vpop.permute.xlu0 %4906
        %4908 = vrot.lane.b32.xlu0 %v3047, 8
        %v4909 = vpop.permute.xlu0 %4908
        %4910 = vrot.lane.b32.xlu0 %v3123, 8
        %v4911 = vpop.permute.xlu0 %4910
        %4912 = vrot.lane.b32.xlu0 %v3199, 8
        %v4913 = vpop.permute.xlu0 %4912
        %4914 = vrot.lane.b32.xlu0 %v3275, 8
        %v4915 = vpop.permute.xlu0 %4914
        %4916 = vrot.lane.b32.xlu0 %v3351, 8
        %v4917 = vpop.permute.xlu0 %4916
        %4918 = vrot.lane.b32.xlu0 %v3427, 8
        %v4919 = vpop.permute.xlu0 %4918
        %4920 = vrot.lane.b32.xlu0 %v3503, 8
        %v4921 = vpop.permute.xlu0 %4920
        %4922 = vrot.lane.b32.xlu0 %v3579, 8
        %v4923 = vpop.permute.xlu0 %4922
        %4924 = vrot.lane.b32.xlu0 %v3655, 8
        %v4925 = vpop.permute.xlu0 %4924
        %4926 = vrot.lane.b32.xlu0 %v3731, 8
        %v4927 = vpop.permute.xlu0 %4926
        %4928 = vrot.lane.b32.xlu0 %v3807, 8
        %v4929 = vpop.permute.xlu0 %4928
        %4930 = vrot.lane.b32.xlu0 %v3883, 8
        %v4931 = vpop.permute.xlu0 %4930
        %4932 = vrot.lane.b32.xlu0 %v3959, 8
        %v4933 = vpop.permute.xlu0 %4932
        %4934 = vrot.lane.b32.xlu0 %v4035, 8
        %v4935 = vpop.permute.xlu0 %4934
        %4936 = vrot.lane.b32.xlu0 %v4111, 8
        %v4937 = vpop.permute.xlu0 %4936
        %4938 = vrot.lane.b32.xlu0 %v4187, 8
        %v4939 = vpop.permute.xlu0 %4938
        %4940 = vrot.lane.b32.xlu0 %v4263, 8
        %v4941 = vpop.permute.xlu0 %4940
        %4942 = vrot.lane.b32.xlu0 %v4339, 8
        %v4943 = vpop.permute.xlu0 %4942
        %4944 = vrot.lane.b32.xlu0 %v4415, 8
        %v4945 = vpop.permute.xlu0 %4944
        %5010 = vrot.lane.b32.xlu0 %v2069, 10
        %v5011 = vpop.permute.xlu0 %5010
        %5012 = vrot.lane.b32.xlu0 %v2145, 10
        %v5013 = vpop.permute.xlu0 %5012
        %5014 = vrot.lane.b32.xlu0 %v2221, 10
        %v5015 = vpop.permute.xlu0 %5014
        %5016 = vrot.lane.b32.xlu0 %v2297, 10
        %v5017 = vpop.permute.xlu0 %5016
        %5018 = vrot.lane.b32.xlu0 %v2373, 10
        %v5019 = vpop.permute.xlu0 %5018
        %5020 = vrot.lane.b32.xlu0 %v2449, 10
        %v5021 = vpop.permute.xlu0 %5020
        %5022 = vrot.lane.b32.xlu0 %v2525, 10
        %v5023 = vpop.permute.xlu0 %5022
        %5024 = vrot.lane.b32.xlu0 %v2601, 10
        %v5025 = vpop.permute.xlu0 %5024
        %5026 = vrot.lane.b32.xlu0 %v2677, 10
        %v5027 = vpop.permute.xlu0 %5026
        %5028 = vrot.lane.b32.xlu0 %v2753, 10
        %v5029 = vpop.permute.xlu0 %5028
        %5030 = vrot.lane.b32.xlu0 %v2829, 10
        %v5031 = vpop.permute.xlu0 %5030
        %5032 = vrot.lane.b32.xlu0 %v2905, 10
        %v5033 = vpop.permute.xlu0 %5032
        %5034 = vrot.lane.b32.xlu0 %v2981, 10
        %v5035 = vpop.permute.xlu0 %5034
        %5036 = vrot.lane.b32.xlu0 %v3057, 10
        %v5037 = vpop.permute.xlu0 %5036
        %5038 = vrot.lane.b32.xlu0 %v3133, 10
        %v5039 = vpop.permute.xlu0 %5038
        %5040 = vrot.lane.b32.xlu0 %v3209, 10
        %v5041 = vpop.permute.xlu0 %5040
        %5042 = vrot.lane.b32.xlu0 %v3285, 10
        %v5043 = vpop.permute.xlu0 %5042
        %5044 = vrot.lane.b32.xlu0 %v3361, 10
        %v5045 = vpop.permute.xlu0 %5044
        %5046 = vrot.lane.b32.xlu0 %v3437, 10
        %v5047 = vpop.permute.xlu0 %5046
        %5048 = vrot.lane.b32.xlu0 %v3513, 10
        %v5049 = vpop.permute.xlu0 %5048
        %5050 = vrot.lane.b32.xlu0 %v3589, 10
        %v5051 = vpop.permute.xlu0 %5050
        %5052 = vrot.lane.b32.xlu0 %v3665, 10
        %v5053 = vpop.permute.xlu0 %5052
        %5054 = vrot.lane.b32.xlu0 %v3741, 10
        %v5055 = vpop.permute.xlu0 %5054
        %5056 = vrot.lane.b32.xlu0 %v3817, 10
        %v5057 = vpop.permute.xlu0 %5056
        %5058 = vrot.lane.b32.xlu0 %v3893, 10
        %v5059 = vpop.permute.xlu0 %5058
        %5060 = vrot.lane.b32.xlu0 %v3969, 10
        %v5061 = vpop.permute.xlu0 %5060
        %5062 = vrot.lane.b32.xlu0 %v4045, 10
        %v5063 = vpop.permute.xlu0 %5062
        %5064 = vrot.lane.b32.xlu0 %v4121, 10
        %v5065 = vpop.permute.xlu0 %5064
        %5066 = vrot.lane.b32.xlu0 %v4197, 10
        %v5067 = vpop.permute.xlu0 %5066
        %5068 = vrot.lane.b32.xlu0 %v4273, 10
        %v5069 = vpop.permute.xlu0 %5068
        %5070 = vrot.lane.b32.xlu0 %v4349, 10
        %v5071 = vpop.permute.xlu0 %5070
        %5072 = vrot.lane.b32.xlu0 %v4425, 10
        %v5073 = vpop.permute.xlu0 %5072
        %5138 = vrot.lane.b32.xlu0 %v2063, 12
        %v5139 = vpop.permute.xlu0 %5138
        %5140 = vrot.lane.b32.xlu0 %v2139, 12
        %v5141 = vpop.permute.xlu0 %5140
        %5142 = vrot.lane.b32.xlu0 %v2215, 12
        %v5143 = vpop.permute.xlu0 %5142
        %5144 = vrot.lane.b32.xlu0 %v2291, 12
        %v5145 = vpop.permute.xlu0 %5144
        %5146 = vrot.lane.b32.xlu0 %v2367, 12
        %v5147 = vpop.permute.xlu0 %5146
        %5148 = vrot.lane.b32.xlu0 %v2443, 12
        %v5149 = vpop.permute.xlu0 %5148
        %5150 = vrot.lane.b32.xlu0 %v2519, 12
        %v5151 = vpop.permute.xlu0 %5150
        %5152 = vrot.lane.b32.xlu0 %v2595, 12
        %v5153 = vpop.permute.xlu0 %5152
        %5154 = vrot.lane.b32.xlu0 %v2671, 12
        %v5155 = vpop.permute.xlu0 %5154
        %5156 = vrot.lane.b32.xlu0 %v2747, 12
        %v5157 = vpop.permute.xlu0 %5156
        %5158 = vrot.lane.b32.xlu0 %v2823, 12
        %v5159 = vpop.permute.xlu0 %5158
        %5160 = vrot.lane.b32.xlu0 %v2899, 12
        %v5161 = vpop.permute.xlu0 %5160
        %5162 = vrot.lane.b32.xlu0 %v2975, 12
        %v5163 = vpop.permute.xlu0 %5162
        %5164 = vrot.lane.b32.xlu0 %v3051, 12
        %v5165 = vpop.permute.xlu0 %5164
        %5166 = vrot.lane.b32.xlu0 %v3127, 12
        %v5167 = vpop.permute.xlu0 %5166
        %5168 = vrot.lane.b32.xlu0 %v3203, 12
        %v5169 = vpop.permute.xlu0 %5168
        %5170 = vrot.lane.b32.xlu0 %v3279, 12
        %v5171 = vpop.permute.xlu0 %5170
        %5172 = vrot.lane.b32.xlu0 %v3355, 12
        %v5173 = vpop.permute.xlu0 %5172
        %5174 = vrot.lane.b32.xlu0 %v3431, 12
        %v5175 = vpop.permute.xlu0 %5174
        %5176 = vrot.lane.b32.xlu0 %v3507, 12
        %v5177 = vpop.permute.xlu0 %5176
        %5178 = vrot.lane.b32.xlu0 %v3583, 12
        %v5179 = vpop.permute.xlu0 %5178
        %5180 = vrot.lane.b32.xlu0 %v3659, 12
        %v5181 = vpop.permute.xlu0 %5180
        %5182 = vrot.lane.b32.xlu0 %v3735, 12
        %v5183 = vpop.permute.xlu0 %5182
        %5184 = vrot.lane.b32.xlu0 %v3811, 12
        %v5185 = vpop.permute.xlu0 %5184
        %5186 = vrot.lane.b32.xlu0 %v3887, 12
        %v5187 = vpop.permute.xlu0 %5186
        %5188 = vrot.lane.b32.xlu0 %v3963, 12
        %v5189 = vpop.permute.xlu0 %5188
        %5190 = vrot.lane.b32.xlu0 %v4039, 12
        %v5191 = vpop.permute.xlu0 %5190
        %5192 = vrot.lane.b32.xlu0 %v4115, 12
        %v5193 = vpop.permute.xlu0 %5192
        %5194 = vrot.lane.b32.xlu0 %v4191, 12
        %v5195 = vpop.permute.xlu0 %5194
        %5196 = vrot.lane.b32.xlu0 %v4267, 12
        %v5197 = vpop.permute.xlu0 %5196
        %5198 = vrot.lane.b32.xlu0 %v4343, 12
        %v5199 = vpop.permute.xlu0 %5198
        %5200 = vrot.lane.b32.xlu0 %v4419, 12
        %v5201 = vpop.permute.xlu0 %5200
        %5266 = vrot.lane.b32.xlu0 %v2071, 14
        %v5267 = vpop.permute.xlu0 %5266
        %5268 = vrot.lane.b32.xlu0 %v2147, 14
        %v5269 = vpop.permute.xlu0 %5268
        %5270 = vrot.lane.b32.xlu0 %v2223, 14
        %v5271 = vpop.permute.xlu0 %5270
        %5272 = vrot.lane.b32.xlu0 %v2299, 14
        %v5273 = vpop.permute.xlu0 %5272
        %5274 = vrot.lane.b32.xlu0 %v2375, 14
        %v5275 = vpop.permute.xlu0 %5274
        %5276 = vrot.lane.b32.xlu0 %v2451, 14
        %v5277 = vpop.permute.xlu0 %5276
        %5278 = vrot.lane.b32.xlu0 %v2527, 14
        %v5279 = vpop.permute.xlu0 %5278
        %5280 = vrot.lane.b32.xlu0 %v2603, 14
        %v5281 = vpop.permute.xlu0 %5280
        %5282 = vrot.lane.b32.xlu0 %v2679, 14
        %v5283 = vpop.permute.xlu0 %5282
        %5284 = vrot.lane.b32.xlu0 %v2755, 14
        %v5285 = vpop.permute.xlu0 %5284
        %5286 = vrot.lane.b32.xlu0 %v2831, 14
        %v5287 = vpop.permute.xlu0 %5286
        %5288 = vrot.lane.b32.xlu0 %v2907, 14
        %v5289 = vpop.permute.xlu0 %5288
        %5290 = vrot.lane.b32.xlu0 %v2983, 14
        %v5291 = vpop.permute.xlu0 %5290
        %5292 = vrot.lane.b32.xlu0 %v3059, 14
        %v5293 = vpop.permute.xlu0 %5292
        %5294 = vrot.lane.b32.xlu0 %v3135, 14
        %v5295 = vpop.permute.xlu0 %5294
        %5296 = vrot.lane.b32.xlu0 %v3211, 14
        %v5297 = vpop.permute.xlu0 %5296
        %5298 = vrot.lane.b32.xlu0 %v3287, 14
        %v5299 = vpop.permute.xlu0 %5298
        %5300 = vrot.lane.b32.xlu0 %v3363, 14
        %v5301 = vpop.permute.xlu0 %5300
        %5302 = vrot.lane.b32.xlu0 %v3439, 14
        %v5303 = vpop.permute.xlu0 %5302
        %5304 = vrot.lane.b32.xlu0 %v3515, 14
        %v5305 = vpop.permute.xlu0 %5304
        %5306 = vrot.lane.b32.xlu0 %v3591, 14
        %v5307 = vpop.permute.xlu0 %5306
        %5308 = vrot.lane.b32.xlu0 %v3667, 14
        %v5309 = vpop.permute.xlu0 %5308
        %5310 = vrot.lane.b32.xlu0 %v3743, 14
        %v5311 = vpop.permute.xlu0 %5310
        %5312 = vrot.lane.b32.xlu0 %v3819, 14
        %v5313 = vpop.permute.xlu0 %5312
        %5314 = vrot.lane.b32.xlu0 %v3895, 14
        %v5315 = vpop.permute.xlu0 %5314
        %5316 = vrot.lane.b32.xlu0 %v3971, 14
        %v5317 = vpop.permute.xlu0 %5316
        %5318 = vrot.lane.b32.xlu0 %v4047, 14
        %v5319 = vpop.permute.xlu0 %5318
        %5320 = vrot.lane.b32.xlu0 %v4123, 14
        %v5321 = vpop.permute.xlu0 %5320
        %5322 = vrot.lane.b32.xlu0 %v4199, 14
        %v5323 = vpop.permute.xlu0 %5322
        %5324 = vrot.lane.b32.xlu0 %v4275, 14
        %v5325 = vpop.permute.xlu0 %5324
        %5326 = vrot.lane.b32.xlu0 %v4351, 14
        %v5327 = vpop.permute.xlu0 %5326
        %5328 = vrot.lane.b32.xlu0 %v4427, 14
        %v5329 = vpop.permute.xlu0 %5328
        %5394 = vrot.lane.b32.xlu0 %v2087, 16
        %v5395 = vpop.permute.xlu0 %5394
        %5396 = vrot.lane.b32.xlu0 %v2163, 16
        %v5397 = vpop.permute.xlu0 %5396
        %5398 = vrot.lane.b32.xlu0 %v2239, 16
        %v5399 = vpop.permute.xlu0 %5398
        %5400 = vrot.lane.b32.xlu0 %v2315, 16
        %v5401 = vpop.permute.xlu0 %5400
        %5402 = vrot.lane.b32.xlu0 %v2391, 16
        %v5403 = vpop.permute.xlu0 %5402
        %5404 = vrot.lane.b32.xlu0 %v2467, 16
        %v5405 = vpop.permute.xlu0 %5404
        %5406 = vrot.lane.b32.xlu0 %v2543, 16
        %v5407 = vpop.permute.xlu0 %5406
        %5408 = vrot.lane.b32.xlu0 %v2619, 16
        %v5409 = vpop.permute.xlu0 %5408
        %5410 = vrot.lane.b32.xlu0 %v2695, 16
        %v5411 = vpop.permute.xlu0 %5410
        %5412 = vrot.lane.b32.xlu0 %v2771, 16
        %v5413 = vpop.permute.xlu0 %5412
        %5414 = vrot.lane.b32.xlu0 %v2847, 16
        %v5415 = vpop.permute.xlu0 %5414
        %5416 = vrot.lane.b32.xlu0 %v2923, 16
        %v5417 = vpop.permute.xlu0 %5416
        %5418 = vrot.lane.b32.xlu0 %v2999, 16
        %v5419 = vpop.permute.xlu0 %5418
        %5420 = vrot.lane.b32.xlu0 %v3075, 16
        %v5421 = vpop.permute.xlu0 %5420
        %5422 = vrot.lane.b32.xlu0 %v3151, 16
        %v5423 = vpop.permute.xlu0 %5422
        %5424 = vrot.lane.b32.xlu0 %v3227, 16
        %v5425 = vpop.permute.xlu0 %5424
        %5426 = vrot.lane.b32.xlu0 %v3303, 16
        %v5427 = vpop.permute.xlu0 %5426
        %5428 = vrot.lane.b32.xlu0 %v3379, 16
        %v5429 = vpop.permute.xlu0 %5428
        %5430 = vrot.lane.b32.xlu0 %v3455, 16
        %v5431 = vpop.permute.xlu0 %5430
        %5432 = vrot.lane.b32.xlu0 %v3531, 16
        %v5433 = vpop.permute.xlu0 %5432
        %5434 = vrot.lane.b32.xlu0 %v3607, 16
        %v5435 = vpop.permute.xlu0 %5434
        %5436 = vrot.lane.b32.xlu0 %v3683, 16
        %v5437 = vpop.permute.xlu0 %5436
        %5438 = vrot.lane.b32.xlu0 %v3759, 16
        %v5439 = vpop.permute.xlu0 %5438
        %5440 = vrot.lane.b32.xlu0 %v3835, 16
        %v5441 = vpop.permute.xlu0 %5440
        %5442 = vrot.lane.b32.xlu0 %v3911, 16
        %v5443 = vpop.permute.xlu0 %5442
        %5444 = vrot.lane.b32.xlu0 %v3987, 16
        %v5445 = vpop.permute.xlu0 %5444
        %5446 = vrot.lane.b32.xlu0 %v4063, 16
        %v5447 = vpop.permute.xlu0 %5446
        %5448 = vrot.lane.b32.xlu0 %v4139, 16
        %v5449 = vpop.permute.xlu0 %5448
        %5450 = vrot.lane.b32.xlu0 %v4215, 16
        %v5451 = vpop.permute.xlu0 %5450
        %5452 = vrot.lane.b32.xlu0 %v4291, 16
        %v5453 = vpop.permute.xlu0 %5452
        %5454 = vrot.lane.b32.xlu0 %v4367, 16
        %v5455 = vpop.permute.xlu0 %5454
        %5456 = vrot.lane.b32.xlu0 %v4443, 16
        %v5457 = vpop.permute.xlu0 %5456
        %5522 = vrot.lane.b32.xlu0 %v2103, 18
        %v5523 = vpop.permute.xlu0 %5522
        %5524 = vrot.lane.b32.xlu0 %v2179, 18
        %v5525 = vpop.permute.xlu0 %5524
        %5526 = vrot.lane.b32.xlu0 %v2255, 18
        %v5527 = vpop.permute.xlu0 %5526
        %5528 = vrot.lane.b32.xlu0 %v2331, 18
        %v5529 = vpop.permute.xlu0 %5528
        %5530 = vrot.lane.b32.xlu0 %v2407, 18
        %v5531 = vpop.permute.xlu0 %5530
        %5532 = vrot.lane.b32.xlu0 %v2483, 18
        %v5533 = vpop.permute.xlu0 %5532
        %5534 = vrot.lane.b32.xlu0 %v2559, 18
        %v5535 = vpop.permute.xlu0 %5534
        %5536 = vrot.lane.b32.xlu0 %v2635, 18
        %v5537 = vpop.permute.xlu0 %5536
        %5538 = vrot.lane.b32.xlu0 %v2711, 18
        %v5539 = vpop.permute.xlu0 %5538
        %5540 = vrot.lane.b32.xlu0 %v2787, 18
        %v5541 = vpop.permute.xlu0 %5540
        %5542 = vrot.lane.b32.xlu0 %v2863, 18
        %v5543 = vpop.permute.xlu0 %5542
        %5544 = vrot.lane.b32.xlu0 %v2939, 18
        %v5545 = vpop.permute.xlu0 %5544
        %5546 = vrot.lane.b32.xlu0 %v3015, 18
        %v5547 = vpop.permute.xlu0 %5546
        %5548 = vrot.lane.b32.xlu0 %v3091, 18
        %v5549 = vpop.permute.xlu0 %5548
        %5550 = vrot.lane.b32.xlu0 %v3167, 18
        %v5551 = vpop.permute.xlu0 %5550
        %5552 = vrot.lane.b32.xlu0 %v3243, 18
        %v5553 = vpop.permute.xlu0 %5552
        %5554 = vrot.lane.b32.xlu0 %v3319, 18
        %v5555 = vpop.permute.xlu0 %5554
        %5556 = vrot.lane.b32.xlu0 %v3395, 18
        %v5557 = vpop.permute.xlu0 %5556
        %5558 = vrot.lane.b32.xlu0 %v3471, 18
        %v5559 = vpop.permute.xlu0 %5558
        %5560 = vrot.lane.b32.xlu0 %v3547, 18
        %v5561 = vpop.permute.xlu0 %5560
        %5562 = vrot.lane.b32.xlu0 %v3623, 18
        %v5563 = vpop.permute.xlu0 %5562
        %5564 = vrot.lane.b32.xlu0 %v3699, 18
        %v5565 = vpop.permute.xlu0 %5564
        %5566 = vrot.lane.b32.xlu0 %v3775, 18
        %v5567 = vpop.permute.xlu0 %5566
        %5568 = vrot.lane.b32.xlu0 %v3851, 18
        %v5569 = vpop.permute.xlu0 %5568
        %5570 = vrot.lane.b32.xlu0 %v3927, 18
        %v5571 = vpop.permute.xlu0 %5570
        %5572 = vrot.lane.b32.xlu0 %v4003, 18
        %v5573 = vpop.permute.xlu0 %5572
        %5574 = vrot.lane.b32.xlu0 %v4079, 18
        %v5575 = vpop.permute.xlu0 %5574
        %5576 = vrot.lane.b32.xlu0 %v4155, 18
        %v5577 = vpop.permute.xlu0 %5576
        %5578 = vrot.lane.b32.xlu0 %v4231, 18
        %v5579 = vpop.permute.xlu0 %5578
        %5580 = vrot.lane.b32.xlu0 %v4307, 18
        %v5581 = vpop.permute.xlu0 %5580
        %5582 = vrot.lane.b32.xlu0 %v4383, 18
        %v5583 = vpop.permute.xlu0 %5582
        %5584 = vrot.lane.b32.xlu0 %v4459, 18
        %v5585 = vpop.permute.xlu0 %5584
        %5650 = vrot.lane.b32.xlu0 %v2091, 20
        %v5651 = vpop.permute.xlu0 %5650
        %5652 = vrot.lane.b32.xlu0 %v2167, 20
        %v5653 = vpop.permute.xlu0 %5652
        %5654 = vrot.lane.b32.xlu0 %v2243, 20
        %v5655 = vpop.permute.xlu0 %5654
        %5656 = vrot.lane.b32.xlu0 %v2319, 20
        %v5657 = vpop.permute.xlu0 %5656
        %5658 = vrot.lane.b32.xlu0 %v2395, 20
        %v5659 = vpop.permute.xlu0 %5658
        %5660 = vrot.lane.b32.xlu0 %v2471, 20
        %v5661 = vpop.permute.xlu0 %5660
        %5662 = vrot.lane.b32.xlu0 %v2547, 20
        %v5663 = vpop.permute.xlu0 %5662
        %5664 = vrot.lane.b32.xlu0 %v2623, 20
        %v5665 = vpop.permute.xlu0 %5664
        %5666 = vrot.lane.b32.xlu0 %v2699, 20
        %v5667 = vpop.permute.xlu0 %5666
        %5668 = vrot.lane.b32.xlu0 %v2775, 20
        %v5669 = vpop.permute.xlu0 %5668
        %5670 = vrot.lane.b32.xlu0 %v2851, 20
        %v5671 = vpop.permute.xlu0 %5670
        %5672 = vrot.lane.b32.xlu0 %v2927, 20
        %v5673 = vpop.permute.xlu0 %5672
        %5674 = vrot.lane.b32.xlu0 %v3003, 20
        %v5675 = vpop.permute.xlu0 %5674
        %5676 = vrot.lane.b32.xlu0 %v3079, 20
        %v5677 = vpop.permute.xlu0 %5676
        %5678 = vrot.lane.b32.xlu0 %v3155, 20
        %v5679 = vpop.permute.xlu0 %5678
        %5680 = vrot.lane.b32.xlu0 %v3231, 20
        %v5681 = vpop.permute.xlu0 %5680
        %5682 = vrot.lane.b32.xlu0 %v3307, 20
        %v5683 = vpop.permute.xlu0 %5682
        %5684 = vrot.lane.b32.xlu0 %v3383, 20
        %v5685 = vpop.permute.xlu0 %5684
        %5686 = vrot.lane.b32.xlu0 %v3459, 20
        %v5687 = vpop.permute.xlu0 %5686
        %5688 = vrot.lane.b32.xlu0 %v3535, 20
        %v5689 = vpop.permute.xlu0 %5688
        %5690 = vrot.lane.b32.xlu0 %v3611, 20
        %v5691 = vpop.permute.xlu0 %5690
        %5692 = vrot.lane.b32.xlu0 %v3687, 20
        %v5693 = vpop.permute.xlu0 %5692
        %5694 = vrot.lane.b32.xlu0 %v3763, 20
        %v5695 = vpop.permute.xlu0 %5694
        %5696 = vrot.lane.b32.xlu0 %v3839, 20
        %v5697 = vpop.permute.xlu0 %5696
        %5698 = vrot.lane.b32.xlu0 %v3915, 20
        %v5699 = vpop.permute.xlu0 %5698
        %5700 = vrot.lane.b32.xlu0 %v3991, 20
        %v5701 = vpop.permute.xlu0 %5700
        %5702 = vrot.lane.b32.xlu0 %v4067, 20
        %v5703 = vpop.permute.xlu0 %5702
        %5704 = vrot.lane.b32.xlu0 %v4143, 20
        %v5705 = vpop.permute.xlu0 %5704
        %5706 = vrot.lane.b32.xlu0 %v4219, 20
        %v5707 = vpop.permute.xlu0 %5706
        %5708 = vrot.lane.b32.xlu0 %v4295, 20
        %v5709 = vpop.permute.xlu0 %5708
        %5710 = vrot.lane.b32.xlu0 %v4371, 20
        %v5711 = vpop.permute.xlu0 %5710
        %5712 = vrot.lane.b32.xlu0 %v4447, 20
        %v5713 = vpop.permute.xlu0 %5712
        %5778 = vrot.lane.b32.xlu0 %v2105, 22
        %v5779 = vpop.permute.xlu0 %5778
        %5780 = vrot.lane.b32.xlu0 %v2181, 22
        %v5781 = vpop.permute.xlu0 %5780
        %5782 = vrot.lane.b32.xlu0 %v2257, 22
        %v5783 = vpop.permute.xlu0 %5782
        %5784 = vrot.lane.b32.xlu0 %v2333, 22
        %v5785 = vpop.permute.xlu0 %5784
        %5786 = vrot.lane.b32.xlu0 %v2409, 22
        %v5787 = vpop.permute.xlu0 %5786
        %5788 = vrot.lane.b32.xlu0 %v2485, 22
        %v5789 = vpop.permute.xlu0 %5788
        %5790 = vrot.lane.b32.xlu0 %v2561, 22
        %v5791 = vpop.permute.xlu0 %5790
        %5792 = vrot.lane.b32.xlu0 %v2637, 22
        %v5793 = vpop.permute.xlu0 %5792
        %5794 = vrot.lane.b32.xlu0 %v2713, 22
        %v5795 = vpop.permute.xlu0 %5794
        %5796 = vrot.lane.b32.xlu0 %v2789, 22
        %v5797 = vpop.permute.xlu0 %5796
        %5798 = vrot.lane.b32.xlu0 %v2865, 22
        %v5799 = vpop.permute.xlu0 %5798
        %5800 = vrot.lane.b32.xlu0 %v2941, 22
        %v5801 = vpop.permute.xlu0 %5800
        %5802 = vrot.lane.b32.xlu0 %v3017, 22
        %v5803 = vpop.permute.xlu0 %5802
        %5804 = vrot.lane.b32.xlu0 %v3093, 22
        %v5805 = vpop.permute.xlu0 %5804
        %5806 = vrot.lane.b32.xlu0 %v3169, 22
        %v5807 = vpop.permute.xlu0 %5806
        %5808 = vrot.lane.b32.xlu0 %v3245, 22
        %v5809 = vpop.permute.xlu0 %5808
        %5810 = vrot.lane.b32.xlu0 %v3321, 22
        %v5811 = vpop.permute.xlu0 %5810
        %5812 = vrot.lane.b32.xlu0 %v3397, 22
        %v5813 = vpop.permute.xlu0 %5812
        %5814 = vrot.lane.b32.xlu0 %v3473, 22
        %v5815 = vpop.permute.xlu0 %5814
        %5816 = vrot.lane.b32.xlu0 %v3549, 22
        %v5817 = vpop.permute.xlu0 %5816
        %5818 = vrot.lane.b32.xlu0 %v3625, 22
        %v5819 = vpop.permute.xlu0 %5818
        %5820 = vrot.lane.b32.xlu0 %v3701, 22
        %v5821 = vpop.permute.xlu0 %5820
        %5822 = vrot.lane.b32.xlu0 %v3777, 22
        %v5823 = vpop.permute.xlu0 %5822
        %5824 = vrot.lane.b32.xlu0 %v3853, 22
        %v5825 = vpop.permute.xlu0 %5824
        %5826 = vrot.lane.b32.xlu0 %v3929, 22
        %v5827 = vpop.permute.xlu0 %5826
        %5828 = vrot.lane.b32.xlu0 %v4005, 22
        %v5829 = vpop.permute.xlu0 %5828
        %5830 = vrot.lane.b32.xlu0 %v4081, 22
        %v5831 = vpop.permute.xlu0 %5830
        %5832 = vrot.lane.b32.xlu0 %v4157, 22
        %v5833 = vpop.permute.xlu0 %5832
        %5834 = vrot.lane.b32.xlu0 %v4233, 22
        %v5835 = vpop.permute.xlu0 %5834
        %5836 = vrot.lane.b32.xlu0 %v4309, 22
        %v5837 = vpop.permute.xlu0 %5836
        %5838 = vrot.lane.b32.xlu0 %v4385, 22
        %v5839 = vpop.permute.xlu0 %5838
        %5840 = vrot.lane.b32.xlu0 %v4461, 22
        %v5841 = vpop.permute.xlu0 %5840
        %5906 = vrot.lane.b32.xlu0 %v2097, 24
        %v5907 = vpop.permute.xlu0 %5906
        %5908 = vrot.lane.b32.xlu0 %v2173, 24
        %v5909 = vpop.permute.xlu0 %5908
        %5910 = vrot.lane.b32.xlu0 %v2249, 24
        %v5911 = vpop.permute.xlu0 %5910
        %5912 = vrot.lane.b32.xlu0 %v2325, 24
        %v5913 = vpop.permute.xlu0 %5912
        %5914 = vrot.lane.b32.xlu0 %v2401, 24
        %v5915 = vpop.permute.xlu0 %5914
        %5916 = vrot.lane.b32.xlu0 %v2477, 24
        %v5917 = vpop.permute.xlu0 %5916
        %5918 = vrot.lane.b32.xlu0 %v2553, 24
        %v5919 = vpop.permute.xlu0 %5918
        %5920 = vrot.lane.b32.xlu0 %v2629, 24
        %v5921 = vpop.permute.xlu0 %5920
        %5922 = vrot.lane.b32.xlu0 %v2705, 24
        %v5923 = vpop.permute.xlu0 %5922
        %5924 = vrot.lane.b32.xlu0 %v2781, 24
        %v5925 = vpop.permute.xlu0 %5924
        %5926 = vrot.lane.b32.xlu0 %v2857, 24
        %v5927 = vpop.permute.xlu0 %5926
        %5928 = vrot.lane.b32.xlu0 %v2933, 24
        %v5929 = vpop.permute.xlu0 %5928
        %5930 = vrot.lane.b32.xlu0 %v3009, 24
        %v5931 = vpop.permute.xlu0 %5930
        %5932 = vrot.lane.b32.xlu0 %v3085, 24
        %v5933 = vpop.permute.xlu0 %5932
        %5934 = vrot.lane.b32.xlu0 %v3161, 24
        %v5935 = vpop.permute.xlu0 %5934
        %5936 = vrot.lane.b32.xlu0 %v3237, 24
        %v5937 = vpop.permute.xlu0 %5936
        %5938 = vrot.lane.b32.xlu0 %v3313, 24
        %v5939 = vpop.permute.xlu0 %5938
        %5940 = vrot.lane.b32.xlu0 %v3389, 24
        %v5941 = vpop.permute.xlu0 %5940
        %5942 = vrot.lane.b32.xlu0 %v3465, 24
        %v5943 = vpop.permute.xlu0 %5942
        %5944 = vrot.lane.b32.xlu0 %v3541, 24
        %v5945 = vpop.permute.xlu0 %5944
        %5946 = vrot.lane.b32.xlu0 %v3617, 24
        %v5947 = vpop.permute.xlu0 %5946
        %5948 = vrot.lane.b32.xlu0 %v3693, 24
        %v5949 = vpop.permute.xlu0 %5948
        %5950 = vrot.lane.b32.xlu0 %v3769, 24
        %v5951 = vpop.permute.xlu0 %5950
        %5952 = vrot.lane.b32.xlu0 %v3845, 24
        %v5953 = vpop.permute.xlu0 %5952
        %5954 = vrot.lane.b32.xlu0 %v3921, 24
        %v5955 = vpop.permute.xlu0 %5954
        %5956 = vrot.lane.b32.xlu0 %v3997, 24
        %v5957 = vpop.permute.xlu0 %5956
        %5958 = vrot.lane.b32.xlu0 %v4073, 24
        %v5959 = vpop.permute.xlu0 %5958
        %5960 = vrot.lane.b32.xlu0 %v4149, 24
        %v5961 = vpop.permute.xlu0 %5960
        %5962 = vrot.lane.b32.xlu0 %v4225, 24
        %v5963 = vpop.permute.xlu0 %5962
        %5964 = vrot.lane.b32.xlu0 %v4301, 24
        %v5965 = vpop.permute.xlu0 %5964
        %5966 = vrot.lane.b32.xlu0 %v4377, 24
        %v5967 = vpop.permute.xlu0 %5966
        %5968 = vrot.lane.b32.xlu0 %v4453, 24
        %v5969 = vpop.permute.xlu0 %5968
        %6034 = vrot.lane.b32.xlu0 %v2107, 26
        %v6035 = vpop.permute.xlu0 %6034
        %6036 = vrot.lane.b32.xlu0 %v2183, 26
        %v6037 = vpop.permute.xlu0 %6036
        %6038 = vrot.lane.b32.xlu0 %v2259, 26
        %v6039 = vpop.permute.xlu0 %6038
        %6040 = vrot.lane.b32.xlu0 %v2335, 26
        %v6041 = vpop.permute.xlu0 %6040
        %6042 = vrot.lane.b32.xlu0 %v2411, 26
        %v6043 = vpop.permute.xlu0 %6042
        %6044 = vrot.lane.b32.xlu0 %v2487, 26
        %v6045 = vpop.permute.xlu0 %6044
        %6046 = vrot.lane.b32.xlu0 %v2563, 26
        %v6047 = vpop.permute.xlu0 %6046
        %6048 = vrot.lane.b32.xlu0 %v2639, 26
        %v6049 = vpop.permute.xlu0 %6048
        %6050 = vrot.lane.b32.xlu0 %v2715, 26
        %v6051 = vpop.permute.xlu0 %6050
        %6052 = vrot.lane.b32.xlu0 %v2791, 26
        %v6053 = vpop.permute.xlu0 %6052
        %6054 = vrot.lane.b32.xlu0 %v2867, 26
        %v6055 = vpop.permute.xlu0 %6054
        %6056 = vrot.lane.b32.xlu0 %v2943, 26
        %v6057 = vpop.permute.xlu0 %6056
        %6058 = vrot.lane.b32.xlu0 %v3019, 26
        %v6059 = vpop.permute.xlu0 %6058
        %6060 = vrot.lane.b32.xlu0 %v3095, 26
        %v6061 = vpop.permute.xlu0 %6060
        %6062 = vrot.lane.b32.xlu0 %v3171, 26
        %v6063 = vpop.permute.xlu0 %6062
        %6064 = vrot.lane.b32.xlu0 %v3247, 26
        %v6065 = vpop.permute.xlu0 %6064
        %6066 = vrot.lane.b32.xlu0 %v3323, 26
        %v6067 = vpop.permute.xlu0 %6066
        %6068 = vrot.lane.b32.xlu0 %v3399, 26
        %v6069 = vpop.permute.xlu0 %6068
        %6070 = vrot.lane.b32.xlu0 %v3475, 26
        %v6071 = vpop.permute.xlu0 %6070
        %6072 = vrot.lane.b32.xlu0 %v3551, 26
        %v6073 = vpop.permute.xlu0 %6072
        %6074 = vrot.lane.b32.xlu0 %v3627, 26
        %v6075 = vpop.permute.xlu0 %6074
        %6076 = vrot.lane.b32.xlu0 %v3703, 26
        %v6077 = vpop.permute.xlu0 %6076
        %6078 = vrot.lane.b32.xlu0 %v3779, 26
        %v6079 = vpop.permute.xlu0 %6078
        %6080 = vrot.lane.b32.xlu0 %v3855, 26
        %v6081 = vpop.permute.xlu0 %6080
        %6082 = vrot.lane.b32.xlu0 %v3931, 26
        %v6083 = vpop.permute.xlu0 %6082
        %6084 = vrot.lane.b32.xlu0 %v4007, 26
        %v6085 = vpop.permute.xlu0 %6084
        %6086 = vrot.lane.b32.xlu0 %v4083, 26
        %v6087 = vpop.permute.xlu0 %6086
        %6088 = vrot.lane.b32.xlu0 %v4159, 26
        %v6089 = vpop.permute.xlu0 %6088
        %6090 = vrot.lane.b32.xlu0 %v4235, 26
        %v6091 = vpop.permute.xlu0 %6090
        %6092 = vrot.lane.b32.xlu0 %v4311, 26
        %v6093 = vpop.permute.xlu0 %6092
        %6094 = vrot.lane.b32.xlu0 %v4387, 26
        %v6095 = vpop.permute.xlu0 %6094
        %6096 = vrot.lane.b32.xlu0 %v4463, 26
        %v6097 = vpop.permute.xlu0 %6096
        %6162 = vrot.lane.b32.xlu0 %v2101, 28
        %v6163 = vpop.permute.xlu0 %6162
        %6164 = vrot.lane.b32.xlu0 %v2177, 28
        %v6165 = vpop.permute.xlu0 %6164
        %6166 = vrot.lane.b32.xlu0 %v2253, 28
        %v6167 = vpop.permute.xlu0 %6166
        %6168 = vrot.lane.b32.xlu0 %v2329, 28
        %v6169 = vpop.permute.xlu0 %6168
        %6170 = vrot.lane.b32.xlu0 %v2405, 28
        %v6171 = vpop.permute.xlu0 %6170
        %6172 = vrot.lane.b32.xlu0 %v2481, 28
        %v6173 = vpop.permute.xlu0 %6172
        %6174 = vrot.lane.b32.xlu0 %v2557, 28
        %v6175 = vpop.permute.xlu0 %6174
        %6176 = vrot.lane.b32.xlu0 %v2633, 28
        %v6177 = vpop.permute.xlu0 %6176
        %6178 = vrot.lane.b32.xlu0 %v2709, 28
        %v6179 = vpop.permute.xlu0 %6178
        %6180 = vrot.lane.b32.xlu0 %v2785, 28
        %v6181 = vpop.permute.xlu0 %6180
        %6182 = vrot.lane.b32.xlu0 %v2861, 28
        %v6183 = vpop.permute.xlu0 %6182
        %6184 = vrot.lane.b32.xlu0 %v2937, 28
        %v6185 = vpop.permute.xlu0 %6184
        %6186 = vrot.lane.b32.xlu0 %v3013, 28
        %v6187 = vpop.permute.xlu0 %6186
        %6188 = vrot.lane.b32.xlu0 %v3089, 28
        %v6189 = vpop.permute.xlu0 %6188
        %6190 = vrot.lane.b32.xlu0 %v3165, 28
        %v6191 = vpop.permute.xlu0 %6190
        %6192 = vrot.lane.b32.xlu0 %v3241, 28
        %v6193 = vpop.permute.xlu0 %6192
        %6194 = vrot.lane.b32.xlu0 %v3317, 28
        %v6195 = vpop.permute.xlu0 %6194
        %6196 = vrot.lane.b32.xlu0 %v3393, 28
        %v6197 = vpop.permute.xlu0 %6196
        %6198 = vrot.lane.b32.xlu0 %v3469, 28
        %v6199 = vpop.permute.xlu0 %6198
        %6200 = vrot.lane.b32.xlu0 %v3545, 28
        %v6201 = vpop.permute.xlu0 %6200
        %6202 = vrot.lane.b32.xlu0 %v3621, 28
        %v6203 = vpop.permute.xlu0 %6202
        %6204 = vrot.lane.b32.xlu0 %v3697, 28
        %v6205 = vpop.permute.xlu0 %6204
        %6206 = vrot.lane.b32.xlu0 %v3773, 28
        %v6207 = vpop.permute.xlu0 %6206
        %6208 = vrot.lane.b32.xlu0 %v3849, 28
        %v6209 = vpop.permute.xlu0 %6208
        %6210 = vrot.lane.b32.xlu0 %v3925, 28
        %v6211 = vpop.permute.xlu0 %6210
        %6212 = vrot.lane.b32.xlu0 %v4001, 28
        %v6213 = vpop.permute.xlu0 %6212
        %6214 = vrot.lane.b32.xlu0 %v4077, 28
        %v6215 = vpop.permute.xlu0 %6214
        %6216 = vrot.lane.b32.xlu0 %v4153, 28
        %v6217 = vpop.permute.xlu0 %6216
        %6218 = vrot.lane.b32.xlu0 %v4229, 28
        %v6219 = vpop.permute.xlu0 %6218
        %6220 = vrot.lane.b32.xlu0 %v4305, 28
        %v6221 = vpop.permute.xlu0 %6220
        %6222 = vrot.lane.b32.xlu0 %v4381, 28
        %v6223 = vpop.permute.xlu0 %6222
        %6224 = vrot.lane.b32.xlu0 %v4457, 28
        %v6225 = vpop.permute.xlu0 %6224
        %6290 = vrot.lane.b32.xlu0 %v2109, 30
        %v6291 = vpop.permute.xlu0 %6290
        %6292 = vrot.lane.b32.xlu0 %v2185, 30
        %v6293 = vpop.permute.xlu0 %6292
        %6294 = vrot.lane.b32.xlu0 %v2261, 30
        %v6295 = vpop.permute.xlu0 %6294
        %6296 = vrot.lane.b32.xlu0 %v2337, 30
        %v6297 = vpop.permute.xlu0 %6296
        %6298 = vrot.lane.b32.xlu0 %v2413, 30
        %v6299 = vpop.permute.xlu0 %6298
        %6300 = vrot.lane.b32.xlu0 %v2489, 30
        %v6301 = vpop.permute.xlu0 %6300
        %6302 = vrot.lane.b32.xlu0 %v2565, 30
        %v6303 = vpop.permute.xlu0 %6302
        %6304 = vrot.lane.b32.xlu0 %v2641, 30
        %v6305 = vpop.permute.xlu0 %6304
        %6306 = vrot.lane.b32.xlu0 %v2717, 30
        %v6307 = vpop.permute.xlu0 %6306
        %6308 = vrot.lane.b32.xlu0 %v2793, 30
        %v6309 = vpop.permute.xlu0 %6308
        %6310 = vrot.lane.b32.xlu0 %v2869, 30
        %v6311 = vpop.permute.xlu0 %6310
        %6312 = vrot.lane.b32.xlu0 %v2945, 30
        %v6313 = vpop.permute.xlu0 %6312
        %6314 = vrot.lane.b32.xlu0 %v3021, 30
        %v6315 = vpop.permute.xlu0 %6314
        %6316 = vrot.lane.b32.xlu0 %v3097, 30
        %v6317 = vpop.permute.xlu0 %6316
        %6318 = vrot.lane.b32.xlu0 %v3173, 30
        %v6319 = vpop.permute.xlu0 %6318
        %6320 = vrot.lane.b32.xlu0 %v3249, 30
        %v6321 = vpop.permute.xlu0 %6320
        %6322 = vrot.lane.b32.xlu0 %v3325, 30
        %v6323 = vpop.permute.xlu0 %6322
        %6324 = vrot.lane.b32.xlu0 %v3401, 30
        %v6325 = vpop.permute.xlu0 %6324
        %6326 = vrot.lane.b32.xlu0 %v3477, 30
        %v6327 = vpop.permute.xlu0 %6326
        %6328 = vrot.lane.b32.xlu0 %v3553, 30
        %v6329 = vpop.permute.xlu0 %6328
        %6330 = vrot.lane.b32.xlu0 %v3629, 30
        %v6331 = vpop.permute.xlu0 %6330
        %6332 = vrot.lane.b32.xlu0 %v3705, 30
        %v6333 = vpop.permute.xlu0 %6332
        %6334 = vrot.lane.b32.xlu0 %v3781, 30
        %v6335 = vpop.permute.xlu0 %6334
        %6336 = vrot.lane.b32.xlu0 %v3857, 30
        %v6337 = vpop.permute.xlu0 %6336
        %6338 = vrot.lane.b32.xlu0 %v3933, 30
        %v6339 = vpop.permute.xlu0 %6338
        %6340 = vrot.lane.b32.xlu0 %v4009, 30
        %v6341 = vpop.permute.xlu0 %6340
        %6342 = vrot.lane.b32.xlu0 %v4085, 30
        %v6343 = vpop.permute.xlu0 %6342
        %6344 = vrot.lane.b32.xlu0 %v4161, 30
        %v6345 = vpop.permute.xlu0 %6344
        %6346 = vrot.lane.b32.xlu0 %v4237, 30
        %v6347 = vpop.permute.xlu0 %6346
        %6348 = vrot.lane.b32.xlu0 %v4313, 30
        %v6349 = vpop.permute.xlu0 %6348
        %6350 = vrot.lane.b32.xlu0 %v4389, 30
        %v6351 = vpop.permute.xlu0 %6350
        %6352 = vrot.lane.b32.xlu0 %v4465, 30
        %v6353 = vpop.permute.xlu0 %6352
        %vm6386 = vcmask 15360
        %v6387 = vsel %vm6386, %v2049, %v4499
        %v6388 = vsel %vm6386, %v2125, %v4501
        %v6389 = vsel %vm6386, %v2201, %v4503
        %v6390 = vsel %vm6386, %v2277, %v4505
        %v6391 = vsel %vm6386, %v2353, %v4507
        %v6392 = vsel %vm6386, %v2429, %v4509
        %v6393 = vsel %vm6386, %v2505, %v4511
        %v6394 = vsel %vm6386, %v2581, %v4513
        %v6395 = vsel %vm6386, %v2657, %v4515
        %v6396 = vsel %vm6386, %v2733, %v4517
        %v6397 = vsel %vm6386, %v2809, %v4519
        %v6398 = vsel %vm6386, %v2885, %v4521
        %v6399 = vsel %vm6386, %v2961, %v4523
        %v6400 = vsel %vm6386, %v3037, %v4525
        %v6401 = vsel %vm6386, %v3113, %v4527
        %v6402 = vsel %vm6386, %v3189, %v4529
        %v6403 = vsel %vm6386, %v3265, %v4531
        %v6404 = vsel %vm6386, %v3341, %v4533
        %v6405 = vsel %vm6386, %v3417, %v4535
        %v6406 = vsel %vm6386, %v3493, %v4537
        %v6407 = vsel %vm6386, %v3569, %v4539
        %v6408 = vsel %vm6386, %v3645, %v4541
        %v6409 = vsel %vm6386, %v3721, %v4543
        %v6410 = vsel %vm6386, %v3797, %v4545
        %v6411 = vsel %vm6386, %v3873, %v4547
        %v6412 = vsel %vm6386, %v3949, %v4549
        %v6413 = vsel %vm6386, %v4025, %v4551
        %v6414 = vsel %vm6386, %v4101, %v4553
        %v6415 = vsel %vm6386, %v4177, %v4555
        %v6416 = vsel %vm6386, %v4253, %v4557
        %v6417 = vsel %vm6386, %v4329, %v4559
        %v6418 = vsel %vm6386, %v4405, %v4561
        %vm6419 = vcmask 31744
        %v6420 = vsel %vm6419, %v6387, %v4627
        %v6421 = vsel %vm6419, %v6388, %v4629
        %v6422 = vsel %vm6419, %v6389, %v4631
        %v6423 = vsel %vm6419, %v6390, %v4633
        %v6424 = vsel %vm6419, %v6391, %v4635
        %v6425 = vsel %vm6419, %v6392, %v4637
        %v6426 = vsel %vm6419, %v6393, %v4639
        %v6427 = vsel %vm6419, %v6394, %v4641
        %v6428 = vsel %vm6419, %v6395, %v4643
        %v6429 = vsel %vm6419, %v6396, %v4645
        %v6430 = vsel %vm6419, %v6397, %v4647
        %v6431 = vsel %vm6419, %v6398, %v4649
        %v6432 = vsel %vm6419, %v6399, %v4651
        %v6433 = vsel %vm6419, %v6400, %v4653
        %v6434 = vsel %vm6419, %v6401, %v4655
        %v6435 = vsel %vm6419, %v6402, %v4657
        %v6436 = vsel %vm6419, %v6403, %v4659
        %v6437 = vsel %vm6419, %v6404, %v4661
        %v6438 = vsel %vm6419, %v6405, %v4663
        %v6439 = vsel %vm6419, %v6406, %v4665
        %v6440 = vsel %vm6419, %v6407, %v4667
        %v6441 = vsel %vm6419, %v6408, %v4669
        %v6442 = vsel %vm6419, %v6409, %v4671
        %v6443 = vsel %vm6419, %v6410, %v4673
        %v6444 = vsel %vm6419, %v6411, %v4675
        %v6445 = vsel %vm6419, %v6412, %v4677
        %v6446 = vsel %vm6419, %v6413, %v4679
        %v6447 = vsel %vm6419, %v6414, %v4681
        %v6448 = vsel %vm6419, %v6415, %v4683
        %v6449 = vsel %vm6419, %v6416, %v4685
        %v6450 = vsel %vm6419, %v6417, %v4687
        %v6451 = vsel %vm6419, %v6418, %v4689
        %vm6452 = vcmask 48128
        %v6453 = vsel %vm6452, %v6420, %v4755
        %v6454 = vsel %vm6452, %v6421, %v4757
        %v6455 = vsel %vm6452, %v6422, %v4759
        %v6456 = vsel %vm6452, %v6423, %v4761
        %v6457 = vsel %vm6452, %v6424, %v4763
        %v6458 = vsel %vm6452, %v6425, %v4765
        %v6459 = vsel %vm6452, %v6426, %v4767
        %v6460 = vsel %vm6452, %v6427, %v4769
        %v6461 = vsel %vm6452, %v6428, %v4771
        %v6462 = vsel %vm6452, %v6429, %v4773
        %v6463 = vsel %vm6452, %v6430, %v4775
        %v6464 = vsel %vm6452, %v6431, %v4777
        %v6465 = vsel %vm6452, %v6432, %v4779
        %v6466 = vsel %vm6452, %v6433, %v4781
        %v6467 = vsel %vm6452, %v6434, %v4783
        %v6468 = vsel %vm6452, %v6435, %v4785
        %v6469 = vsel %vm6452, %v6436, %v4787
        %v6470 = vsel %vm6452, %v6437, %v4789
        %v6471 = vsel %vm6452, %v6438, %v4791
        %v6472 = vsel %vm6452, %v6439, %v4793
        %v6473 = vsel %vm6452, %v6440, %v4795
        %v6474 = vsel %vm6452, %v6441, %v4797
        %v6475 = vsel %vm6452, %v6442, %v4799
        %v6476 = vsel %vm6452, %v6443, %v4801
        %v6477 = vsel %vm6452, %v6444, %v4803
        %v6478 = vsel %vm6452, %v6445, %v4805
        %v6479 = vsel %vm6452, %v6446, %v4807
        %v6480 = vsel %vm6452, %v6447, %v4809
        %v6481 = vsel %vm6452, %v6448, %v4811
        %v6482 = vsel %vm6452, %v6449, %v4813
        %v6483 = vsel %vm6452, %v6450, %v4815
        %v6484 = vsel %vm6452, %v6451, %v4817
        %vm6485 = vcmask 64512
        %v6486 = vsel %vm6485, %v6453, %v4883
        %v6487 = vsel %vm6485, %v6454, %v4885
        %v6488 = vsel %vm6485, %v6455, %v4887
        %v6489 = vsel %vm6485, %v6456, %v4889
        %v6490 = vsel %vm6485, %v6457, %v4891
        %v6491 = vsel %vm6485, %v6458, %v4893
        %v6492 = vsel %vm6485, %v6459, %v4895
        %v6493 = vsel %vm6485, %v6460, %v4897
        %v6494 = vsel %vm6485, %v6461, %v4899
        %v6495 = vsel %vm6485, %v6462, %v4901
        %v6496 = vsel %vm6485, %v6463, %v4903
        %v6497 = vsel %vm6485, %v6464, %v4905
        %v6498 = vsel %vm6485, %v6465, %v4907
        %v6499 = vsel %vm6485, %v6466, %v4909
        %v6500 = vsel %vm6485, %v6467, %v4911
        %v6501 = vsel %vm6485, %v6468, %v4913
        %v6502 = vsel %vm6485, %v6469, %v4915
        %v6503 = vsel %vm6485, %v6470, %v4917
        %v6504 = vsel %vm6485, %v6471, %v4919
        %v6505 = vsel %vm6485, %v6472, %v4921
        %v6506 = vsel %vm6485, %v6473, %v4923
        %v6507 = vsel %vm6485, %v6474, %v4925
        %v6508 = vsel %vm6485, %v6475, %v4927
        %v6509 = vsel %vm6485, %v6476, %v4929
        %v6510 = vsel %vm6485, %v6477, %v4931
        %v6511 = vsel %vm6485, %v6478, %v4933
        %v6512 = vsel %vm6485, %v6479, %v4935
        %v6513 = vsel %vm6485, %v6480, %v4937
        %v6514 = vsel %vm6485, %v6481, %v4939
        %v6515 = vsel %vm6485, %v6482, %v4941
        %v6516 = vsel %vm6485, %v6483, %v4943
        %v6517 = vsel %vm6485, %v6484, %v4945
        %vm6518 = vcmask 80896
        %v6519 = vsel %vm6518, %v6486, %v5011
        %v6520 = vsel %vm6518, %v6487, %v5013
        %v6521 = vsel %vm6518, %v6488, %v5015
        %v6522 = vsel %vm6518, %v6489, %v5017
        %v6523 = vsel %vm6518, %v6490, %v5019
        %v6524 = vsel %vm6518, %v6491, %v5021
        %v6525 = vsel %vm6518, %v6492, %v5023
        %v6526 = vsel %vm6518, %v6493, %v5025
        %v6527 = vsel %vm6518, %v6494, %v5027
        %v6528 = vsel %vm6518, %v6495, %v5029
        %v6529 = vsel %vm6518, %v6496, %v5031
        %v6530 = vsel %vm6518, %v6497, %v5033
        %v6531 = vsel %vm6518, %v6498, %v5035
        %v6532 = vsel %vm6518, %v6499, %v5037
        %v6533 = vsel %vm6518, %v6500, %v5039
        %v6534 = vsel %vm6518, %v6501, %v5041
        %v6535 = vsel %vm6518, %v6502, %v5043
        %v6536 = vsel %vm6518, %v6503, %v5045
        %v6537 = vsel %vm6518, %v6504, %v5047
        %v6538 = vsel %vm6518, %v6505, %v5049
        %v6539 = vsel %vm6518, %v6506, %v5051
        %v6540 = vsel %vm6518, %v6507, %v5053
        %v6541 = vsel %vm6518, %v6508, %v5055
        %v6542 = vsel %vm6518, %v6509, %v5057
        %v6543 = vsel %vm6518, %v6510, %v5059
        %v6544 = vsel %vm6518, %v6511, %v5061
        %v6545 = vsel %vm6518, %v6512, %v5063
        %v6546 = vsel %vm6518, %v6513, %v5065
        %v6547 = vsel %vm6518, %v6514, %v5067
        %v6548 = vsel %vm6518, %v6515, %v5069
        %v6549 = vsel %vm6518, %v6516, %v5071
        %v6550 = vsel %vm6518, %v6517, %v5073
        %vm6551 = vcmask 97280
        %v6552 = vsel %vm6551, %v6519, %v5139
        %v6553 = vsel %vm6551, %v6520, %v5141
        %v6554 = vsel %vm6551, %v6521, %v5143
        %v6555 = vsel %vm6551, %v6522, %v5145
        %v6556 = vsel %vm6551, %v6523, %v5147
        %v6557 = vsel %vm6551, %v6524, %v5149
        %v6558 = vsel %vm6551, %v6525, %v5151
        %v6559 = vsel %vm6551, %v6526, %v5153
        %v6560 = vsel %vm6551, %v6527, %v5155
        %v6561 = vsel %vm6551, %v6528, %v5157
        %v6562 = vsel %vm6551, %v6529, %v5159
        %v6563 = vsel %vm6551, %v6530, %v5161
        %v6564 = vsel %vm6551, %v6531, %v5163
        %v6565 = vsel %vm6551, %v6532, %v5165
        %v6566 = vsel %vm6551, %v6533, %v5167
        %v6567 = vsel %vm6551, %v6534, %v5169
        %v6568 = vsel %vm6551, %v6535, %v5171
        %v6569 = vsel %vm6551, %v6536, %v5173
        %v6570 = vsel %vm6551, %v6537, %v5175
        %v6571 = vsel %vm6551, %v6538, %v5177
        %v6572 = vsel %vm6551, %v6539, %v5179
        %v6573 = vsel %vm6551, %v6540, %v5181
        %v6574 = vsel %vm6551, %v6541, %v5183
        %v6575 = vsel %vm6551, %v6542, %v5185
        %v6576 = vsel %vm6551, %v6543, %v5187
        %v6577 = vsel %vm6551, %v6544, %v5189
        %v6578 = vsel %vm6551, %v6545, %v5191
        %v6579 = vsel %vm6551, %v6546, %v5193
        %v6580 = vsel %vm6551, %v6547, %v5195
        %v6581 = vsel %vm6551, %v6548, %v5197
        %v6582 = vsel %vm6551, %v6549, %v5199
        %v6583 = vsel %vm6551, %v6550, %v5201
        %vm6584 = vcmask 113664
        %v6585 = vsel %vm6584, %v6552, %v5267
        %v6586 = vsel %vm6584, %v6553, %v5269
        %v6587 = vsel %vm6584, %v6554, %v5271
        %v6588 = vsel %vm6584, %v6555, %v5273
        %v6589 = vsel %vm6584, %v6556, %v5275
        %v6590 = vsel %vm6584, %v6557, %v5277
        %v6591 = vsel %vm6584, %v6558, %v5279
        %v6592 = vsel %vm6584, %v6559, %v5281
        %v6593 = vsel %vm6584, %v6560, %v5283
        %v6594 = vsel %vm6584, %v6561, %v5285
        %v6595 = vsel %vm6584, %v6562, %v5287
        %v6596 = vsel %vm6584, %v6563, %v5289
        %v6597 = vsel %vm6584, %v6564, %v5291
        %v6598 = vsel %vm6584, %v6565, %v5293
        %v6599 = vsel %vm6584, %v6566, %v5295
        %v6600 = vsel %vm6584, %v6567, %v5297
        %v6601 = vsel %vm6584, %v6568, %v5299
        %v6602 = vsel %vm6584, %v6569, %v5301
        %v6603 = vsel %vm6584, %v6570, %v5303
        %v6604 = vsel %vm6584, %v6571, %v5305
        %v6605 = vsel %vm6584, %v6572, %v5307
        %v6606 = vsel %vm6584, %v6573, %v5309
        %v6607 = vsel %vm6584, %v6574, %v5311
        %v6608 = vsel %vm6584, %v6575, %v5313
        %v6609 = vsel %vm6584, %v6576, %v5315
        %v6610 = vsel %vm6584, %v6577, %v5317
        %v6611 = vsel %vm6584, %v6578, %v5319
        %v6612 = vsel %vm6584, %v6579, %v5321
        %v6613 = vsel %vm6584, %v6580, %v5323
        %v6614 = vsel %vm6584, %v6581, %v5325
        %v6615 = vsel %vm6584, %v6582, %v5327
        %v6616 = vsel %vm6584, %v6583, %v5329
        %vm6617 = vcmask 130048
        %v6618 = vsel %vm6617, %v6585, %v5395
        %v6619 = vsel %vm6617, %v6586, %v5397
        %v6620 = vsel %vm6617, %v6587, %v5399
        %v6621 = vsel %vm6617, %v6588, %v5401
        %v6622 = vsel %vm6617, %v6589, %v5403
        %v6623 = vsel %vm6617, %v6590, %v5405
        %v6624 = vsel %vm6617, %v6591, %v5407
        %v6625 = vsel %vm6617, %v6592, %v5409
        %v6626 = vsel %vm6617, %v6593, %v5411
        %v6627 = vsel %vm6617, %v6594, %v5413
        %v6628 = vsel %vm6617, %v6595, %v5415
        %v6629 = vsel %vm6617, %v6596, %v5417
        %v6630 = vsel %vm6617, %v6597, %v5419
        %v6631 = vsel %vm6617, %v6598, %v5421
        %v6632 = vsel %vm6617, %v6599, %v5423
        %v6633 = vsel %vm6617, %v6600, %v5425
        %v6634 = vsel %vm6617, %v6601, %v5427
        %v6635 = vsel %vm6617, %v6602, %v5429
        %v6636 = vsel %vm6617, %v6603, %v5431
        %v6637 = vsel %vm6617, %v6604, %v5433
        %v6638 = vsel %vm6617, %v6605, %v5435
        %v6639 = vsel %vm6617, %v6606, %v5437
        %v6640 = vsel %vm6617, %v6607, %v5439
        %v6641 = vsel %vm6617, %v6608, %v5441
        %v6642 = vsel %vm6617, %v6609, %v5443
        %v6643 = vsel %vm6617, %v6610, %v5445
        %v6644 = vsel %vm6617, %v6611, %v5447
        %v6645 = vsel %vm6617, %v6612, %v5449
        %v6646 = vsel %vm6617, %v6613, %v5451
        %v6647 = vsel %vm6617, %v6614, %v5453
        %v6648 = vsel %vm6617, %v6615, %v5455
        %v6649 = vsel %vm6617, %v6616, %v5457
        %vm6650 = vcmask 146432
        %v6651 = vsel %vm6650, %v6618, %v5523
        %v6652 = vsel %vm6650, %v6619, %v5525
        %v6653 = vsel %vm6650, %v6620, %v5527
        %v6654 = vsel %vm6650, %v6621, %v5529
        %v6655 = vsel %vm6650, %v6622, %v5531
        %v6656 = vsel %vm6650, %v6623, %v5533
        %v6657 = vsel %vm6650, %v6624, %v5535
        %v6658 = vsel %vm6650, %v6625, %v5537
        %v6659 = vsel %vm6650, %v6626, %v5539
        %v6660 = vsel %vm6650, %v6627, %v5541
        %v6661 = vsel %vm6650, %v6628, %v5543
        %v6662 = vsel %vm6650, %v6629, %v5545
        %v6663 = vsel %vm6650, %v6630, %v5547
        %v6664 = vsel %vm6650, %v6631, %v5549
        %v6665 = vsel %vm6650, %v6632, %v5551
        %v6666 = vsel %vm6650, %v6633, %v5553
        %v6667 = vsel %vm6650, %v6634, %v5555
        %v6668 = vsel %vm6650, %v6635, %v5557
        %v6669 = vsel %vm6650, %v6636, %v5559
        %v6670 = vsel %vm6650, %v6637, %v5561
        %v6671 = vsel %vm6650, %v6638, %v5563
        %v6672 = vsel %vm6650, %v6639, %v5565
        %v6673 = vsel %vm6650, %v6640, %v5567
        %v6674 = vsel %vm6650, %v6641, %v5569
        %v6675 = vsel %vm6650, %v6642, %v5571
        %v6676 = vsel %vm6650, %v6643, %v5573
        %v6677 = vsel %vm6650, %v6644, %v5575
        %v6678 = vsel %vm6650, %v6645, %v5577
        %v6679 = vsel %vm6650, %v6646, %v5579
        %v6680 = vsel %vm6650, %v6647, %v5581
        %v6681 = vsel %vm6650, %v6648, %v5583
        %v6682 = vsel %vm6650, %v6649, %v5585
        %vm6683 = vcmask 162816
        %v6684 = vsel %vm6683, %v6651, %v5651
        %v6685 = vsel %vm6683, %v6652, %v5653
        %v6686 = vsel %vm6683, %v6653, %v5655
        %v6687 = vsel %vm6683, %v6654, %v5657
        %v6688 = vsel %vm6683, %v6655, %v5659
        %v6689 = vsel %vm6683, %v6656, %v5661
        %v6690 = vsel %vm6683, %v6657, %v5663
        %v6691 = vsel %vm6683, %v6658, %v5665
        %v6692 = vsel %vm6683, %v6659, %v5667
        %v6693 = vsel %vm6683, %v6660, %v5669
        %v6694 = vsel %vm6683, %v6661, %v5671
        %v6695 = vsel %vm6683, %v6662, %v5673
        %v6696 = vsel %vm6683, %v6663, %v5675
        %v6697 = vsel %vm6683, %v6664, %v5677
        %v6698 = vsel %vm6683, %v6665, %v5679
        %v6699 = vsel %vm6683, %v6666, %v5681
        %v6700 = vsel %vm6683, %v6667, %v5683
        %v6701 = vsel %vm6683, %v6668, %v5685
        %v6702 = vsel %vm6683, %v6669, %v5687
        %v6703 = vsel %vm6683, %v6670, %v5689
        %v6704 = vsel %vm6683, %v6671, %v5691
        %v6705 = vsel %vm6683, %v6672, %v5693
        %v6706 = vsel %vm6683, %v6673, %v5695
        %v6707 = vsel %vm6683, %v6674, %v5697
        %v6708 = vsel %vm6683, %v6675, %v5699
        %v6709 = vsel %vm6683, %v6676, %v5701
        %v6710 = vsel %vm6683, %v6677, %v5703
        %v6711 = vsel %vm6683, %v6678, %v5705
        %v6712 = vsel %vm6683, %v6679, %v5707
        %v6713 = vsel %vm6683, %v6680, %v5709
        %v6714 = vsel %vm6683, %v6681, %v5711
        %v6715 = vsel %vm6683, %v6682, %v5713
        %vm6716 = vcmask 179200
        %v6717 = vsel %vm6716, %v6684, %v5779
        %v6718 = vsel %vm6716, %v6685, %v5781
        %v6719 = vsel %vm6716, %v6686, %v5783
        %v6720 = vsel %vm6716, %v6687, %v5785
        %v6721 = vsel %vm6716, %v6688, %v5787
        %v6722 = vsel %vm6716, %v6689, %v5789
        %v6723 = vsel %vm6716, %v6690, %v5791
        %v6724 = vsel %vm6716, %v6691, %v5793
        %v6725 = vsel %vm6716, %v6692, %v5795
        %v6726 = vsel %vm6716, %v6693, %v5797
        %v6727 = vsel %vm6716, %v6694, %v5799
        %v6728 = vsel %vm6716, %v6695, %v5801
        %v6729 = vsel %vm6716, %v6696, %v5803
        %v6730 = vsel %vm6716, %v6697, %v5805
        %v6731 = vsel %vm6716, %v6698, %v5807
        %v6732 = vsel %vm6716, %v6699, %v5809
        %v6733 = vsel %vm6716, %v6700, %v5811
        %v6734 = vsel %vm6716, %v6701, %v5813
        %v6735 = vsel %vm6716, %v6702, %v5815
        %v6736 = vsel %vm6716, %v6703, %v5817
        %v6737 = vsel %vm6716, %v6704, %v5819
        %v6738 = vsel %vm6716, %v6705, %v5821
        %v6739 = vsel %vm6716, %v6706, %v5823
        %v6740 = vsel %vm6716, %v6707, %v5825
        %v6741 = vsel %vm6716, %v6708, %v5827
        %v6742 = vsel %vm6716, %v6709, %v5829
        %v6743 = vsel %vm6716, %v6710, %v5831
        %v6744 = vsel %vm6716, %v6711, %v5833
        %v6745 = vsel %vm6716, %v6712, %v5835
        %v6746 = vsel %vm6716, %v6713, %v5837
        %v6747 = vsel %vm6716, %v6714, %v5839
        %v6748 = vsel %vm6716, %v6715, %v5841
        %vm6749 = vcmask 195584
        %v6750 = vsel %vm6749, %v6717, %v5907
        %v6751 = vsel %vm6749, %v6718, %v5909
        %v6752 = vsel %vm6749, %v6719, %v5911
        %v6753 = vsel %vm6749, %v6720, %v5913
        %v6754 = vsel %vm6749, %v6721, %v5915
        %v6755 = vsel %vm6749, %v6722, %v5917
        %v6756 = vsel %vm6749, %v6723, %v5919
        %v6757 = vsel %vm6749, %v6724, %v5921
        %v6758 = vsel %vm6749, %v6725, %v5923
        %v6759 = vsel %vm6749, %v6726, %v5925
        %v6760 = vsel %vm6749, %v6727, %v5927
        %v6761 = vsel %vm6749, %v6728, %v5929
        %v6762 = vsel %vm6749, %v6729, %v5931
        %v6763 = vsel %vm6749, %v6730, %v5933
        %v6764 = vsel %vm6749, %v6731, %v5935
        %v6765 = vsel %vm6749, %v6732, %v5937
        %v6766 = vsel %vm6749, %v6733, %v5939
        %v6767 = vsel %vm6749, %v6734, %v5941
        %v6768 = vsel %vm6749, %v6735, %v5943
        %v6769 = vsel %vm6749, %v6736, %v5945
        %v6770 = vsel %vm6749, %v6737, %v5947
        %v6771 = vsel %vm6749, %v6738, %v5949
        %v6772 = vsel %vm6749, %v6739, %v5951
        %v6773 = vsel %vm6749, %v6740, %v5953
        %v6774 = vsel %vm6749, %v6741, %v5955
        %v6775 = vsel %vm6749, %v6742, %v5957
        %v6776 = vsel %vm6749, %v6743, %v5959
        %v6777 = vsel %vm6749, %v6744, %v5961
        %v6778 = vsel %vm6749, %v6745, %v5963
        %v6779 = vsel %vm6749, %v6746, %v5965
        %v6780 = vsel %vm6749, %v6747, %v5967
        %v6781 = vsel %vm6749, %v6748, %v5969
        %vm6782 = vcmask 211968
        %v6783 = vsel %vm6782, %v6750, %v6035
        %v6784 = vsel %vm6782, %v6751, %v6037
        %v6785 = vsel %vm6782, %v6752, %v6039
        %v6786 = vsel %vm6782, %v6753, %v6041
        %v6787 = vsel %vm6782, %v6754, %v6043
        %v6788 = vsel %vm6782, %v6755, %v6045
        %v6789 = vsel %vm6782, %v6756, %v6047
        %v6790 = vsel %vm6782, %v6757, %v6049
        %v6791 = vsel %vm6782, %v6758, %v6051
        %v6792 = vsel %vm6782, %v6759, %v6053
        %v6793 = vsel %vm6782, %v6760, %v6055
        %v6794 = vsel %vm6782, %v6761, %v6057
        %v6795 = vsel %vm6782, %v6762, %v6059
        %v6796 = vsel %vm6782, %v6763, %v6061
        %v6797 = vsel %vm6782, %v6764, %v6063
        %v6798 = vsel %vm6782, %v6765, %v6065
        %v6799 = vsel %vm6782, %v6766, %v6067
        %v6800 = vsel %vm6782, %v6767, %v6069
        %v6801 = vsel %vm6782, %v6768, %v6071
        %v6802 = vsel %vm6782, %v6769, %v6073
        %v6803 = vsel %vm6782, %v6770, %v6075
        %v6804 = vsel %vm6782, %v6771, %v6077
        %v6805 = vsel %vm6782, %v6772, %v6079
        %v6806 = vsel %vm6782, %v6773, %v6081
        %v6807 = vsel %vm6782, %v6774, %v6083
        %v6808 = vsel %vm6782, %v6775, %v6085
        %v6809 = vsel %vm6782, %v6776, %v6087
        %v6810 = vsel %vm6782, %v6777, %v6089
        %v6811 = vsel %vm6782, %v6778, %v6091
        %v6812 = vsel %vm6782, %v6779, %v6093
        %v6813 = vsel %vm6782, %v6780, %v6095
        %v6814 = vsel %vm6782, %v6781, %v6097
        %vm6815 = vcmask 228352
        %v6816 = vsel %vm6815, %v6783, %v6163
        %v6817 = vsel %vm6815, %v6784, %v6165
        %v6818 = vsel %vm6815, %v6785, %v6167
        %v6819 = vsel %vm6815, %v6786, %v6169
        %v6820 = vsel %vm6815, %v6787, %v6171
        %v6821 = vsel %vm6815, %v6788, %v6173
        %v6822 = vsel %vm6815, %v6789, %v6175
        %v6823 = vsel %vm6815, %v6790, %v6177
        %v6824 = vsel %vm6815, %v6791, %v6179
        %v6825 = vsel %vm6815, %v6792, %v6181
        %v6826 = vsel %vm6815, %v6793, %v6183
        %v6827 = vsel %vm6815, %v6794, %v6185
        %v6828 = vsel %vm6815, %v6795, %v6187
        %v6829 = vsel %vm6815, %v6796, %v6189
        %v6830 = vsel %vm6815, %v6797, %v6191
        %v6831 = vsel %vm6815, %v6798, %v6193
        %v6832 = vsel %vm6815, %v6799, %v6195
        %v6833 = vsel %vm6815, %v6800, %v6197
        %v6834 = vsel %vm6815, %v6801, %v6199
        %v6835 = vsel %vm6815, %v6802, %v6201
        %v6836 = vsel %vm6815, %v6803, %v6203
        %v6837 = vsel %vm6815, %v6804, %v6205
        %v6838 = vsel %vm6815, %v6805, %v6207
        %v6839 = vsel %vm6815, %v6806, %v6209
        %v6840 = vsel %vm6815, %v6807, %v6211
        %v6841 = vsel %vm6815, %v6808, %v6213
        %v6842 = vsel %vm6815, %v6809, %v6215
        %v6843 = vsel %vm6815, %v6810, %v6217
        %v6844 = vsel %vm6815, %v6811, %v6219
        %v6845 = vsel %vm6815, %v6812, %v6221
        %v6846 = vsel %vm6815, %v6813, %v6223
        %v6847 = vsel %vm6815, %v6814, %v6225
        %vm6848 = vcmask 244736
        %v6849 = vsel %vm6848, %v6816, %v6291
        %v6850 = vsel %vm6848, %v6817, %v6293
        %v6851 = vsel %vm6848, %v6818, %v6295
        %v6852 = vsel %vm6848, %v6819, %v6297
        %v6853 = vsel %vm6848, %v6820, %v6299
        %v6854 = vsel %vm6848, %v6821, %v6301
        %v6855 = vsel %vm6848, %v6822, %v6303
        %v6856 = vsel %vm6848, %v6823, %v6305
        %v6857 = vsel %vm6848, %v6824, %v6307
        %v6858 = vsel %vm6848, %v6825, %v6309
        %v6859 = vsel %vm6848, %v6826, %v6311
        %v6860 = vsel %vm6848, %v6827, %v6313
        %v6861 = vsel %vm6848, %v6828, %v6315
        %v6862 = vsel %vm6848, %v6829, %v6317
        %v6863 = vsel %vm6848, %v6830, %v6319
        %v6864 = vsel %vm6848, %v6831, %v6321
        %v6865 = vsel %vm6848, %v6832, %v6323
        %v6866 = vsel %vm6848, %v6833, %v6325
        %v6867 = vsel %vm6848, %v6834, %v6327
        %v6868 = vsel %vm6848, %v6835, %v6329
        %v6869 = vsel %vm6848, %v6836, %v6331
        %v6870 = vsel %vm6848, %v6837, %v6333
        %v6871 = vsel %vm6848, %v6838, %v6335
        %v6872 = vsel %vm6848, %v6839, %v6337
        %v6873 = vsel %vm6848, %v6840, %v6339
        %v6874 = vsel %vm6848, %v6841, %v6341
        %v6875 = vsel %vm6848, %v6842, %v6343
        %v6876 = vsel %vm6848, %v6843, %v6345
        %v6877 = vsel %vm6848, %v6844, %v6347
        %v6878 = vsel %vm6848, %v6845, %v6349
        %v6879 = vsel %vm6848, %v6846, %v6351
        %v6880 = vsel %vm6848, %v6847, %v6353
        %v6881 = vrot.slane %v1969, 4
        %v6882 = vsel %vm2034, 0.0, %v6881
        %v6884 = vunpack.c.l.s4 1983009808
        %v6885 = vunpack.c.0.s8 %v6884
        %v6886 = vperm.slane %v1969, %v6885
        %v6888 = vunpack.c.l.s4 1983009808
        %v6889 = vunpack.c.0.s8 %v6888
        %v6890 = vperm.slane %v6882, %v6889
        %v6891 = vrot.slane %v6886, 4
        %v6892 = vsel %vm2034, 0.0, %v6891
        %v6894 = vunpack.c.l.s4 1934713408
        %v6895 = vunpack.c.0.s8 %v6894
        %v6896 = vperm.slane %v6886, %v6895
        %v6898 = vunpack.c.l.s4 1934713408
        %v6899 = vunpack.c.0.s8 %v6898
        %v6900 = vperm.slane %v6892, %v6899
        %v6901 = vrot.slane %v6890, 4
        %v6902 = vsel %vm2034, 0.0, %v6901
        %v6904 = vunpack.c.l.s4 1934713408
        %v6905 = vunpack.c.0.s8 %v6904
        %v6906 = vperm.slane %v6890, %v6905
        %v6908 = vunpack.c.l.s4 1934713408
        %v6909 = vunpack.c.0.s8 %v6908
        %v6910 = vperm.slane %v6902, %v6909
        %v6911 = vrot.slane %v6896, 4
        %v6912 = vsel %vm2034, 0.0, %v6911
        %v6913 = vrot.slane %v6900, 4
        %v6914 = vsel %vm2034, 0.0, %v6913
        %v6915 = vrot.slane %v6906, 4
        %v6916 = vsel %vm2034, 0.0, %v6915
        %v6917 = vrot.slane %v6910, 4
        %v6918 = vsel %vm2034, 0.0, %v6917
        %v6919 = vrot.slane %v1970, 4
        %v6920 = vsel %vm2034, 0.0, %v6919
        %v6922 = vunpack.c.l.s4 1983009808
        %v6923 = vunpack.c.0.s8 %v6922
        %v6924 = vperm.slane %v1970, %v6923
        %v6926 = vunpack.c.l.s4 1983009808
        %v6927 = vunpack.c.0.s8 %v6926
        %v6928 = vperm.slane %v6920, %v6927
        %v6929 = vrot.slane %v6924, 4
        %v6930 = vsel %vm2034, 0.0, %v6929
        %v6932 = vunpack.c.l.s4 1934713408
        %v6933 = vunpack.c.0.s8 %v6932
        %v6934 = vperm.slane %v6924, %v6933
        %v6936 = vunpack.c.l.s4 1934713408
        %v6937 = vunpack.c.0.s8 %v6936
        %v6938 = vperm.slane %v6930, %v6937
        %v6939 = vrot.slane %v6928, 4
        %v6940 = vsel %vm2034, 0.0, %v6939
        %v6942 = vunpack.c.l.s4 1934713408
        %v6943 = vunpack.c.0.s8 %v6942
        %v6944 = vperm.slane %v6928, %v6943
        %v6946 = vunpack.c.l.s4 1934713408
        %v6947 = vunpack.c.0.s8 %v6946
        %v6948 = vperm.slane %v6940, %v6947
        %v6949 = vrot.slane %v6934, 4
        %v6950 = vsel %vm2034, 0.0, %v6949
        %v6951 = vrot.slane %v6938, 4
        %v6952 = vsel %vm2034, 0.0, %v6951
        %v6953 = vrot.slane %v6944, 4
        %v6954 = vsel %vm2034, 0.0, %v6953
        %v6955 = vrot.slane %v6948, 4
        %v6956 = vsel %vm2034, 0.0, %v6955
        %v6957 = vrot.slane %v1971, 4
        %v6958 = vsel %vm2034, 0.0, %v6957
        %v6960 = vunpack.c.l.s4 1983009808
        %v6961 = vunpack.c.0.s8 %v6960
        %v6962 = vperm.slane %v1971, %v6961
        %v6964 = vunpack.c.l.s4 1983009808
        %v6965 = vunpack.c.0.s8 %v6964
        %v6966 = vperm.slane %v6958, %v6965
        %v6967 = vrot.slane %v6962, 4
        %v6968 = vsel %vm2034, 0.0, %v6967
        %v6970 = vunpack.c.l.s4 1934713408
        %v6971 = vunpack.c.0.s8 %v6970
        %v6972 = vperm.slane %v6962, %v6971
        %v6974 = vunpack.c.l.s4 1934713408
        %v6975 = vunpack.c.0.s8 %v6974
        %v6976 = vperm.slane %v6968, %v6975
        %v6977 = vrot.slane %v6966, 4
        %v6978 = vsel %vm2034, 0.0, %v6977
        %v6980 = vunpack.c.l.s4 1934713408
        %v6981 = vunpack.c.0.s8 %v6980
        %v6982 = vperm.slane %v6966, %v6981
        %v6984 = vunpack.c.l.s4 1934713408
        %v6985 = vunpack.c.0.s8 %v6984
        %v6986 = vperm.slane %v6978, %v6985
        %v6987 = vrot.slane %v6972, 4
        %v6988 = vsel %vm2034, 0.0, %v6987
        %v6989 = vrot.slane %v6976, 4
        %v6990 = vsel %vm2034, 0.0, %v6989
        %v6991 = vrot.slane %v6982, 4
        %v6992 = vsel %vm2034, 0.0, %v6991
        %v6993 = vrot.slane %v6986, 4
        %v6994 = vsel %vm2034, 0.0, %v6993
        %v6995 = vrot.slane %v1972, 4
        %v6996 = vsel %vm2034, 0.0, %v6995
        %v6998 = vunpack.c.l.s4 1983009808
        %v6999 = vunpack.c.0.s8 %v6998
        %v7000 = vperm.slane %v1972, %v6999
        %v7002 = vunpack.c.l.s4 1983009808
        %v7003 = vunpack.c.0.s8 %v7002
        %v7004 = vperm.slane %v6996, %v7003
        %v7005 = vrot.slane %v7000, 4
        %v7006 = vsel %vm2034, 0.0, %v7005
        %v7008 = vunpack.c.l.s4 1934713408
        %v7009 = vunpack.c.0.s8 %v7008
        %v7010 = vperm.slane %v7000, %v7009
        %v7012 = vunpack.c.l.s4 1934713408
        %v7013 = vunpack.c.0.s8 %v7012
        %v7014 = vperm.slane %v7006, %v7013
        %v7015 = vrot.slane %v7004, 4
        %v7016 = vsel %vm2034, 0.0, %v7015
        %v7018 = vunpack.c.l.s4 1934713408
        %v7019 = vunpack.c.0.s8 %v7018
        %v7020 = vperm.slane %v7004, %v7019
        %v7022 = vunpack.c.l.s4 1934713408
        %v7023 = vunpack.c.0.s8 %v7022
        %v7024 = vperm.slane %v7016, %v7023
        %v7025 = vrot.slane %v7010, 4
        %v7026 = vsel %vm2034, 0.0, %v7025
        %v7027 = vrot.slane %v7014, 4
        %v7028 = vsel %vm2034, 0.0, %v7027
        %v7029 = vrot.slane %v7020, 4
        %v7030 = vsel %vm2034, 0.0, %v7029
        %v7031 = vrot.slane %v7024, 4
        %v7032 = vsel %vm2034, 0.0, %v7031
        %v7033 = vrot.slane %v1973, 4
        %v7034 = vsel %vm2034, 0.0, %v7033
        %v7036 = vunpack.c.l.s4 1983009808
        %v7037 = vunpack.c.0.s8 %v7036
        %v7038 = vperm.slane %v1973, %v7037
        %v7040 = vunpack.c.l.s4 1983009808
        %v7041 = vunpack.c.0.s8 %v7040
        %v7042 = vperm.slane %v7034, %v7041
        %v7043 = vrot.slane %v7038, 4
        %v7044 = vsel %vm2034, 0.0, %v7043
        %v7046 = vunpack.c.l.s4 1934713408
        %v7047 = vunpack.c.0.s8 %v7046
        %v7048 = vperm.slane %v7038, %v7047
        %v7050 = vunpack.c.l.s4 1934713408
        %v7051 = vunpack.c.0.s8 %v7050
        %v7052 = vperm.slane %v7044, %v7051
        %v7053 = vrot.slane %v7042, 4
        %v7054 = vsel %vm2034, 0.0, %v7053
        %v7056 = vunpack.c.l.s4 1934713408
        %v7057 = vunpack.c.0.s8 %v7056
        %v7058 = vperm.slane %v7042, %v7057
        %v7060 = vunpack.c.l.s4 1934713408
        %v7061 = vunpack.c.0.s8 %v7060
        %v7062 = vperm.slane %v7054, %v7061
        %v7063 = vrot.slane %v7048, 4
        %v7064 = vsel %vm2034, 0.0, %v7063
        %v7065 = vrot.slane %v7052, 4
        %v7066 = vsel %vm2034, 0.0, %v7065
        %v7067 = vrot.slane %v7058, 4
        %v7068 = vsel %vm2034, 0.0, %v7067
        %v7069 = vrot.slane %v7062, 4
        %v7070 = vsel %vm2034, 0.0, %v7069
        %v7071 = vrot.slane %v1974, 4
        %v7072 = vsel %vm2034, 0.0, %v7071
        %v7074 = vunpack.c.l.s4 1983009808
        %v7075 = vunpack.c.0.s8 %v7074
        %v7076 = vperm.slane %v1974, %v7075
        %v7078 = vunpack.c.l.s4 1983009808
        %v7079 = vunpack.c.0.s8 %v7078
        %v7080 = vperm.slane %v7072, %v7079
        %v7081 = vrot.slane %v7076, 4
        %v7082 = vsel %vm2034, 0.0, %v7081
        %v7084 = vunpack.c.l.s4 1934713408
        %v7085 = vunpack.c.0.s8 %v7084
        %v7086 = vperm.slane %v7076, %v7085
        %v7088 = vunpack.c.l.s4 1934713408
        %v7089 = vunpack.c.0.s8 %v7088
        %v7090 = vperm.slane %v7082, %v7089
        %v7091 = vrot.slane %v7080, 4
        %v7092 = vsel %vm2034, 0.0, %v7091
        %v7094 = vunpack.c.l.s4 1934713408
        %v7095 = vunpack.c.0.s8 %v7094
        %v7096 = vperm.slane %v7080, %v7095
        %v7098 = vunpack.c.l.s4 1934713408
        %v7099 = vunpack.c.0.s8 %v7098
        %v7100 = vperm.slane %v7092, %v7099
        %v7101 = vrot.slane %v7086, 4
        %v7102 = vsel %vm2034, 0.0, %v7101
        %v7103 = vrot.slane %v7090, 4
        %v7104 = vsel %vm2034, 0.0, %v7103
        %v7105 = vrot.slane %v7096, 4
        %v7106 = vsel %vm2034, 0.0, %v7105
        %v7107 = vrot.slane %v7100, 4
        %v7108 = vsel %vm2034, 0.0, %v7107
        %v7109 = vrot.slane %v1975, 4
        %v7110 = vsel %vm2034, 0.0, %v7109
        %v7112 = vunpack.c.l.s4 1983009808
        %v7113 = vunpack.c.0.s8 %v7112
        %v7114 = vperm.slane %v1975, %v7113
        %v7116 = vunpack.c.l.s4 1983009808
        %v7117 = vunpack.c.0.s8 %v7116
        %v7118 = vperm.slane %v7110, %v7117
        %v7119 = vrot.slane %v7114, 4
        %v7120 = vsel %vm2034, 0.0, %v7119
        %v7122 = vunpack.c.l.s4 1934713408
        %v7123 = vunpack.c.0.s8 %v7122
        %v7124 = vperm.slane %v7114, %v7123
        %v7126 = vunpack.c.l.s4 1934713408
        %v7127 = vunpack.c.0.s8 %v7126
        %v7128 = vperm.slane %v7120, %v7127
        %v7129 = vrot.slane %v7118, 4
        %v7130 = vsel %vm2034, 0.0, %v7129
        %v7132 = vunpack.c.l.s4 1934713408
        %v7133 = vunpack.c.0.s8 %v7132
        %v7134 = vperm.slane %v7118, %v7133
        %v7136 = vunpack.c.l.s4 1934713408
        %v7137 = vunpack.c.0.s8 %v7136
        %v7138 = vperm.slane %v7130, %v7137
        %v7139 = vrot.slane %v7124, 4
        %v7140 = vsel %vm2034, 0.0, %v7139
        %v7141 = vrot.slane %v7128, 4
        %v7142 = vsel %vm2034, 0.0, %v7141
        %v7143 = vrot.slane %v7134, 4
        %v7144 = vsel %vm2034, 0.0, %v7143
        %v7145 = vrot.slane %v7138, 4
        %v7146 = vsel %vm2034, 0.0, %v7145
        %v7147 = vrot.slane %v1976, 4
        %v7148 = vsel %vm2034, 0.0, %v7147
        %v7150 = vunpack.c.l.s4 1983009808
        %v7151 = vunpack.c.0.s8 %v7150
        %v7152 = vperm.slane %v1976, %v7151
        %v7154 = vunpack.c.l.s4 1983009808
        %v7155 = vunpack.c.0.s8 %v7154
        %v7156 = vperm.slane %v7148, %v7155
        %v7157 = vrot.slane %v7152, 4
        %v7158 = vsel %vm2034, 0.0, %v7157
        %v7160 = vunpack.c.l.s4 1934713408
        %v7161 = vunpack.c.0.s8 %v7160
        %v7162 = vperm.slane %v7152, %v7161
        %v7164 = vunpack.c.l.s4 1934713408
        %v7165 = vunpack.c.0.s8 %v7164
        %v7166 = vperm.slane %v7158, %v7165
        %v7167 = vrot.slane %v7156, 4
        %v7168 = vsel %vm2034, 0.0, %v7167
        %v7170 = vunpack.c.l.s4 1934713408
        %v7171 = vunpack.c.0.s8 %v7170
        %v7172 = vperm.slane %v7156, %v7171
        %v7174 = vunpack.c.l.s4 1934713408
        %v7175 = vunpack.c.0.s8 %v7174
        %v7176 = vperm.slane %v7168, %v7175
        %v7177 = vrot.slane %v7162, 4
        %v7178 = vsel %vm2034, 0.0, %v7177
        %v7179 = vrot.slane %v7166, 4
        %v7180 = vsel %vm2034, 0.0, %v7179
        %v7181 = vrot.slane %v7172, 4
        %v7182 = vsel %vm2034, 0.0, %v7181
        %v7183 = vrot.slane %v7176, 4
        %v7184 = vsel %vm2034, 0.0, %v7183
        %v7185 = vrot.slane %v1977, 4
        %v7186 = vsel %vm2034, 0.0, %v7185
        %v7188 = vunpack.c.l.s4 1983009808
        %v7189 = vunpack.c.0.s8 %v7188
        %v7190 = vperm.slane %v1977, %v7189
        %v7192 = vunpack.c.l.s4 1983009808
        %v7193 = vunpack.c.0.s8 %v7192
        %v7194 = vperm.slane %v7186, %v7193
        %v7195 = vrot.slane %v7190, 4
        %v7196 = vsel %vm2034, 0.0, %v7195
        %v7198 = vunpack.c.l.s4 1934713408
        %v7199 = vunpack.c.0.s8 %v7198
        %v7200 = vperm.slane %v7190, %v7199
        %v7202 = vunpack.c.l.s4 1934713408
        %v7203 = vunpack.c.0.s8 %v7202
        %v7204 = vperm.slane %v7196, %v7203
        %v7205 = vrot.slane %v7194, 4
        %v7206 = vsel %vm2034, 0.0, %v7205
        %v7208 = vunpack.c.l.s4 1934713408
        %v7209 = vunpack.c.0.s8 %v7208
        %v7210 = vperm.slane %v7194, %v7209
        %v7212 = vunpack.c.l.s4 1934713408
        %v7213 = vunpack.c.0.s8 %v7212
        %v7214 = vperm.slane %v7206, %v7213
        %v7215 = vrot.slane %v7200, 4
        %v7216 = vsel %vm2034, 0.0, %v7215
        %v7217 = vrot.slane %v7204, 4
        %v7218 = vsel %vm2034, 0.0, %v7217
        %v7219 = vrot.slane %v7210, 4
        %v7220 = vsel %vm2034, 0.0, %v7219
        %v7221 = vrot.slane %v7214, 4
        %v7222 = vsel %vm2034, 0.0, %v7221
        %v7223 = vrot.slane %v1978, 4
        %v7224 = vsel %vm2034, 0.0, %v7223
        %v7226 = vunpack.c.l.s4 1983009808
        %v7227 = vunpack.c.0.s8 %v7226
        %v7228 = vperm.slane %v1978, %v7227
        %v7230 = vunpack.c.l.s4 1983009808
        %v7231 = vunpack.c.0.s8 %v7230
        %v7232 = vperm.slane %v7224, %v7231
        %v7233 = vrot.slane %v7228, 4
        %v7234 = vsel %vm2034, 0.0, %v7233
        %v7236 = vunpack.c.l.s4 1934713408
        %v7237 = vunpack.c.0.s8 %v7236
        %v7238 = vperm.slane %v7228, %v7237
        %v7240 = vunpack.c.l.s4 1934713408
        %v7241 = vunpack.c.0.s8 %v7240
        %v7242 = vperm.slane %v7234, %v7241
        %v7243 = vrot.slane %v7232, 4
        %v7244 = vsel %vm2034, 0.0, %v7243
        %v7246 = vunpack.c.l.s4 1934713408
        %v7247 = vunpack.c.0.s8 %v7246
        %v7248 = vperm.slane %v7232, %v7247
        %v7250 = vunpack.c.l.s4 1934713408
        %v7251 = vunpack.c.0.s8 %v7250
        %v7252 = vperm.slane %v7244, %v7251
        %v7253 = vrot.slane %v7238, 4
        %v7254 = vsel %vm2034, 0.0, %v7253
        %v7255 = vrot.slane %v7242, 4
        %v7256 = vsel %vm2034, 0.0, %v7255
        %v7257 = vrot.slane %v7248, 4
        %v7258 = vsel %vm2034, 0.0, %v7257
        %v7259 = vrot.slane %v7252, 4
        %v7260 = vsel %vm2034, 0.0, %v7259
        %v7261 = vrot.slane %v1979, 4
        %v7262 = vsel %vm2034, 0.0, %v7261
        %v7264 = vunpack.c.l.s4 1983009808
        %v7265 = vunpack.c.0.s8 %v7264
        %v7266 = vperm.slane %v1979, %v7265
        %v7268 = vunpack.c.l.s4 1983009808
        %v7269 = vunpack.c.0.s8 %v7268
        %v7270 = vperm.slane %v7262, %v7269
        %v7271 = vrot.slane %v7266, 4
        %v7272 = vsel %vm2034, 0.0, %v7271
        %v7274 = vunpack.c.l.s4 1934713408
        %v7275 = vunpack.c.0.s8 %v7274
        %v7276 = vperm.slane %v7266, %v7275
        %v7278 = vunpack.c.l.s4 1934713408
        %v7279 = vunpack.c.0.s8 %v7278
        %v7280 = vperm.slane %v7272, %v7279
        %v7281 = vrot.slane %v7270, 4
        %v7282 = vsel %vm2034, 0.0, %v7281
        %v7284 = vunpack.c.l.s4 1934713408
        %v7285 = vunpack.c.0.s8 %v7284
        %v7286 = vperm.slane %v7270, %v7285
        %v7288 = vunpack.c.l.s4 1934713408
        %v7289 = vunpack.c.0.s8 %v7288
        %v7290 = vperm.slane %v7282, %v7289
        %v7291 = vrot.slane %v7276, 4
        %v7292 = vsel %vm2034, 0.0, %v7291
        %v7293 = vrot.slane %v7280, 4
        %v7294 = vsel %vm2034, 0.0, %v7293
        %v7295 = vrot.slane %v7286, 4
        %v7296 = vsel %vm2034, 0.0, %v7295
        %v7297 = vrot.slane %v7290, 4
        %v7298 = vsel %vm2034, 0.0, %v7297
        %v7299 = vrot.slane %v1980, 4
        %v7300 = vsel %vm2034, 0.0, %v7299
        %v7302 = vunpack.c.l.s4 1983009808
        %v7303 = vunpack.c.0.s8 %v7302
        %v7304 = vperm.slane %v1980, %v7303
        %v7306 = vunpack.c.l.s4 1983009808
        %v7307 = vunpack.c.0.s8 %v7306
        %v7308 = vperm.slane %v7300, %v7307
        %v7309 = vrot.slane %v7304, 4
        %v7310 = vsel %vm2034, 0.0, %v7309
        %v7312 = vunpack.c.l.s4 1934713408
        %v7313 = vunpack.c.0.s8 %v7312
        %v7314 = vperm.slane %v7304, %v7313
        %v7316 = vunpack.c.l.s4 1934713408
        %v7317 = vunpack.c.0.s8 %v7316
        %v7318 = vperm.slane %v7310, %v7317
        %v7319 = vrot.slane %v7308, 4
        %v7320 = vsel %vm2034, 0.0, %v7319
        %v7322 = vunpack.c.l.s4 1934713408
        %v7323 = vunpack.c.0.s8 %v7322
        %v7324 = vperm.slane %v7308, %v7323
        %v7326 = vunpack.c.l.s4 1934713408
        %v7327 = vunpack.c.0.s8 %v7326
        %v7328 = vperm.slane %v7320, %v7327
        %v7329 = vrot.slane %v7314, 4
        %v7330 = vsel %vm2034, 0.0, %v7329
        %v7331 = vrot.slane %v7318, 4
        %v7332 = vsel %vm2034, 0.0, %v7331
        %v7333 = vrot.slane %v7324, 4
        %v7334 = vsel %vm2034, 0.0, %v7333
        %v7335 = vrot.slane %v7328, 4
        %v7336 = vsel %vm2034, 0.0, %v7335
        %v7337 = vrot.slane %v1981, 4
        %v7338 = vsel %vm2034, 0.0, %v7337
        %v7340 = vunpack.c.l.s4 1983009808
        %v7341 = vunpack.c.0.s8 %v7340
        %v7342 = vperm.slane %v1981, %v7341
        %v7344 = vunpack.c.l.s4 1983009808
        %v7345 = vunpack.c.0.s8 %v7344
        %v7346 = vperm.slane %v7338, %v7345
        %v7347 = vrot.slane %v7342, 4
        %v7348 = vsel %vm2034, 0.0, %v7347
        %v7350 = vunpack.c.l.s4 1934713408
        %v7351 = vunpack.c.0.s8 %v7350
        %v7352 = vperm.slane %v7342, %v7351
        %v7354 = vunpack.c.l.s4 1934713408
        %v7355 = vunpack.c.0.s8 %v7354
        %v7356 = vperm.slane %v7348, %v7355
        %v7357 = vrot.slane %v7346, 4
        %v7358 = vsel %vm2034, 0.0, %v7357
        %v7360 = vunpack.c.l.s4 1934713408
        %v7361 = vunpack.c.0.s8 %v7360
        %v7362 = vperm.slane %v7346, %v7361
        %v7364 = vunpack.c.l.s4 1934713408
        %v7365 = vunpack.c.0.s8 %v7364
        %v7366 = vperm.slane %v7358, %v7365
        %v7367 = vrot.slane %v7352, 4
        %v7368 = vsel %vm2034, 0.0, %v7367
        %v7369 = vrot.slane %v7356, 4
        %v7370 = vsel %vm2034, 0.0, %v7369
        %v7371 = vrot.slane %v7362, 4
        %v7372 = vsel %vm2034, 0.0, %v7371
        %v7373 = vrot.slane %v7366, 4
        %v7374 = vsel %vm2034, 0.0, %v7373
        %v7375 = vrot.slane %v1982, 4
        %v7376 = vsel %vm2034, 0.0, %v7375
        %v7378 = vunpack.c.l.s4 1983009808
        %v7379 = vunpack.c.0.s8 %v7378
        %v7380 = vperm.slane %v1982, %v7379
        %v7382 = vunpack.c.l.s4 1983009808
        %v7383 = vunpack.c.0.s8 %v7382
        %v7384 = vperm.slane %v7376, %v7383
        %v7385 = vrot.slane %v7380, 4
        %v7386 = vsel %vm2034, 0.0, %v7385
        %v7388 = vunpack.c.l.s4 1934713408
        %v7389 = vunpack.c.0.s8 %v7388
        %v7390 = vperm.slane %v7380, %v7389
        %v7392 = vunpack.c.l.s4 1934713408
        %v7393 = vunpack.c.0.s8 %v7392
        %v7394 = vperm.slane %v7386, %v7393
        %v7395 = vrot.slane %v7384, 4
        %v7396 = vsel %vm2034, 0.0, %v7395
        %v7398 = vunpack.c.l.s4 1934713408
        %v7399 = vunpack.c.0.s8 %v7398
        %v7400 = vperm.slane %v7384, %v7399
        %v7402 = vunpack.c.l.s4 1934713408
        %v7403 = vunpack.c.0.s8 %v7402
        %v7404 = vperm.slane %v7396, %v7403
        %v7405 = vrot.slane %v7390, 4
        %v7406 = vsel %vm2034, 0.0, %v7405
        %v7407 = vrot.slane %v7394, 4
        %v7408 = vsel %vm2034, 0.0, %v7407
        %v7409 = vrot.slane %v7400, 4
        %v7410 = vsel %vm2034, 0.0, %v7409
        %v7411 = vrot.slane %v7404, 4
        %v7412 = vsel %vm2034, 0.0, %v7411
        %v7413 = vrot.slane %v1983, 4
        %v7414 = vsel %vm2034, 0.0, %v7413
        %v7416 = vunpack.c.l.s4 1983009808
        %v7417 = vunpack.c.0.s8 %v7416
        %v7418 = vperm.slane %v1983, %v7417
        %v7420 = vunpack.c.l.s4 1983009808
        %v7421 = vunpack.c.0.s8 %v7420
        %v7422 = vperm.slane %v7414, %v7421
        %v7423 = vrot.slane %v7418, 4
        %v7424 = vsel %vm2034, 0.0, %v7423
        %v7426 = vunpack.c.l.s4 1934713408
        %v7427 = vunpack.c.0.s8 %v7426
        %v7428 = vperm.slane %v7418, %v7427
        %v7430 = vunpack.c.l.s4 1934713408
        %v7431 = vunpack.c.0.s8 %v7430
        %v7432 = vperm.slane %v7424, %v7431
        %v7433 = vrot.slane %v7422, 4
        %v7434 = vsel %vm2034, 0.0, %v7433
        %v7436 = vunpack.c.l.s4 1934713408
        %v7437 = vunpack.c.0.s8 %v7436
        %v7438 = vperm.slane %v7422, %v7437
        %v7440 = vunpack.c.l.s4 1934713408
        %v7441 = vunpack.c.0.s8 %v7440
        %v7442 = vperm.slane %v7434, %v7441
        %v7443 = vrot.slane %v7428, 4
        %v7444 = vsel %vm2034, 0.0, %v7443
        %v7445 = vrot.slane %v7432, 4
        %v7446 = vsel %vm2034, 0.0, %v7445
        %v7447 = vrot.slane %v7438, 4
        %v7448 = vsel %vm2034, 0.0, %v7447
        %v7449 = vrot.slane %v7442, 4
        %v7450 = vsel %vm2034, 0.0, %v7449
        %v7451 = vrot.slane %v1984, 4
        %v7452 = vsel %vm2034, 0.0, %v7451
        %v7454 = vunpack.c.l.s4 1983009808
        %v7455 = vunpack.c.0.s8 %v7454
        %v7456 = vperm.slane %v1984, %v7455
        %v7458 = vunpack.c.l.s4 1983009808
        %v7459 = vunpack.c.0.s8 %v7458
        %v7460 = vperm.slane %v7452, %v7459
        %v7461 = vrot.slane %v7456, 4
        %v7462 = vsel %vm2034, 0.0, %v7461
        %v7464 = vunpack.c.l.s4 1934713408
        %v7465 = vunpack.c.0.s8 %v7464
        %v7466 = vperm.slane %v7456, %v7465
        %v7468 = vunpack.c.l.s4 1934713408
        %v7469 = vunpack.c.0.s8 %v7468
        %v7470 = vperm.slane %v7462, %v7469
        %v7471 = vrot.slane %v7460, 4
        %v7472 = vsel %vm2034, 0.0, %v7471
        %v7474 = vunpack.c.l.s4 1934713408
        %v7475 = vunpack.c.0.s8 %v7474
        %v7476 = vperm.slane %v7460, %v7475
        %v7478 = vunpack.c.l.s4 1934713408
        %v7479 = vunpack.c.0.s8 %v7478
        %v7480 = vperm.slane %v7472, %v7479
        %v7481 = vrot.slane %v7466, 4
        %v7482 = vsel %vm2034, 0.0, %v7481
        %v7483 = vrot.slane %v7470, 4
        %v7484 = vsel %vm2034, 0.0, %v7483
        %v7485 = vrot.slane %v7476, 4
        %v7486 = vsel %vm2034, 0.0, %v7485
        %v7487 = vrot.slane %v7480, 4
        %v7488 = vsel %vm2034, 0.0, %v7487
        %v7489 = vrot.slane %v1985, 4
        %v7490 = vsel %vm2034, 0.0, %v7489
        %v7492 = vunpack.c.l.s4 1983009808
        %v7493 = vunpack.c.0.s8 %v7492
        %v7494 = vperm.slane %v1985, %v7493
        %v7496 = vunpack.c.l.s4 1983009808
        %v7497 = vunpack.c.0.s8 %v7496
        %v7498 = vperm.slane %v7490, %v7497
        %v7499 = vrot.slane %v7494, 4
        %v7500 = vsel %vm2034, 0.0, %v7499
        %v7502 = vunpack.c.l.s4 1934713408
        %v7503 = vunpack.c.0.s8 %v7502
        %v7504 = vperm.slane %v7494, %v7503
        %v7506 = vunpack.c.l.s4 1934713408
        %v7507 = vunpack.c.0.s8 %v7506
        %v7508 = vperm.slane %v7500, %v7507
        %v7509 = vrot.slane %v7498, 4
        %v7510 = vsel %vm2034, 0.0, %v7509
        %v7512 = vunpack.c.l.s4 1934713408
        %v7513 = vunpack.c.0.s8 %v7512
        %v7514 = vperm.slane %v7498, %v7513
        %v7516 = vunpack.c.l.s4 1934713408
        %v7517 = vunpack.c.0.s8 %v7516
        %v7518 = vperm.slane %v7510, %v7517
        %v7519 = vrot.slane %v7504, 4
        %v7520 = vsel %vm2034, 0.0, %v7519
        %v7521 = vrot.slane %v7508, 4
        %v7522 = vsel %vm2034, 0.0, %v7521
        %v7523 = vrot.slane %v7514, 4
        %v7524 = vsel %vm2034, 0.0, %v7523
        %v7525 = vrot.slane %v7518, 4
        %v7526 = vsel %vm2034, 0.0, %v7525
        %v7527 = vrot.slane %v1986, 4
        %v7528 = vsel %vm2034, 0.0, %v7527
        %v7530 = vunpack.c.l.s4 1983009808
        %v7531 = vunpack.c.0.s8 %v7530
        %v7532 = vperm.slane %v1986, %v7531
        %v7534 = vunpack.c.l.s4 1983009808
        %v7535 = vunpack.c.0.s8 %v7534
        %v7536 = vperm.slane %v7528, %v7535
        %v7537 = vrot.slane %v7532, 4
        %v7538 = vsel %vm2034, 0.0, %v7537
        %v7540 = vunpack.c.l.s4 1934713408
        %v7541 = vunpack.c.0.s8 %v7540
        %v7542 = vperm.slane %v7532, %v7541
        %v7544 = vunpack.c.l.s4 1934713408
        %v7545 = vunpack.c.0.s8 %v7544
        %v7546 = vperm.slane %v7538, %v7545
        %v7547 = vrot.slane %v7536, 4
        %v7548 = vsel %vm2034, 0.0, %v7547
        %v7550 = vunpack.c.l.s4 1934713408
        %v7551 = vunpack.c.0.s8 %v7550
        %v7552 = vperm.slane %v7536, %v7551
        %v7554 = vunpack.c.l.s4 1934713408
        %v7555 = vunpack.c.0.s8 %v7554
        %v7556 = vperm.slane %v7548, %v7555
        %v7557 = vrot.slane %v7542, 4
        %v7558 = vsel %vm2034, 0.0, %v7557
        %v7559 = vrot.slane %v7546, 4
        %v7560 = vsel %vm2034, 0.0, %v7559
        %v7561 = vrot.slane %v7552, 4
        %v7562 = vsel %vm2034, 0.0, %v7561
        %v7563 = vrot.slane %v7556, 4
        %v7564 = vsel %vm2034, 0.0, %v7563
        %v7565 = vrot.slane %v1987, 4
        %v7566 = vsel %vm2034, 0.0, %v7565
        %v7568 = vunpack.c.l.s4 1983009808
        %v7569 = vunpack.c.0.s8 %v7568
        %v7570 = vperm.slane %v1987, %v7569
        %v7572 = vunpack.c.l.s4 1983009808
        %v7573 = vunpack.c.0.s8 %v7572
        %v7574 = vperm.slane %v7566, %v7573
        %v7575 = vrot.slane %v7570, 4
        %v7576 = vsel %vm2034, 0.0, %v7575
        %v7578 = vunpack.c.l.s4 1934713408
        %v7579 = vunpack.c.0.s8 %v7578
        %v7580 = vperm.slane %v7570, %v7579
        %v7582 = vunpack.c.l.s4 1934713408
        %v7583 = vunpack.c.0.s8 %v7582
        %v7584 = vperm.slane %v7576, %v7583
        %v7585 = vrot.slane %v7574, 4
        %v7586 = vsel %vm2034, 0.0, %v7585
        %v7588 = vunpack.c.l.s4 1934713408
        %v7589 = vunpack.c.0.s8 %v7588
        %v7590 = vperm.slane %v7574, %v7589
        %v7592 = vunpack.c.l.s4 1934713408
        %v7593 = vunpack.c.0.s8 %v7592
        %v7594 = vperm.slane %v7586, %v7593
        %v7595 = vrot.slane %v7580, 4
        %v7596 = vsel %vm2034, 0.0, %v7595
        %v7597 = vrot.slane %v7584, 4
        %v7598 = vsel %vm2034, 0.0, %v7597
        %v7599 = vrot.slane %v7590, 4
        %v7600 = vsel %vm2034, 0.0, %v7599
        %v7601 = vrot.slane %v7594, 4
        %v7602 = vsel %vm2034, 0.0, %v7601
        %v7603 = vrot.slane %v1988, 4
        %v7604 = vsel %vm2034, 0.0, %v7603
        %v7606 = vunpack.c.l.s4 1983009808
        %v7607 = vunpack.c.0.s8 %v7606
        %v7608 = vperm.slane %v1988, %v7607
        %v7610 = vunpack.c.l.s4 1983009808
        %v7611 = vunpack.c.0.s8 %v7610
        %v7612 = vperm.slane %v7604, %v7611
        %v7613 = vrot.slane %v7608, 4
        %v7614 = vsel %vm2034, 0.0, %v7613
        %v7616 = vunpack.c.l.s4 1934713408
        %v7617 = vunpack.c.0.s8 %v7616
        %v7618 = vperm.slane %v7608, %v7617
        %v7620 = vunpack.c.l.s4 1934713408
        %v7621 = vunpack.c.0.s8 %v7620
        %v7622 = vperm.slane %v7614, %v7621
        %v7623 = vrot.slane %v7612, 4
        %v7624 = vsel %vm2034, 0.0, %v7623
        %v7626 = vunpack.c.l.s4 1934713408
        %v7627 = vunpack.c.0.s8 %v7626
        %v7628 = vperm.slane %v7612, %v7627
        %v7630 = vunpack.c.l.s4 1934713408
        %v7631 = vunpack.c.0.s8 %v7630
        %v7632 = vperm.slane %v7624, %v7631
        %v7633 = vrot.slane %v7618, 4
        %v7634 = vsel %vm2034, 0.0, %v7633
        %v7635 = vrot.slane %v7622, 4
        %v7636 = vsel %vm2034, 0.0, %v7635
        %v7637 = vrot.slane %v7628, 4
        %v7638 = vsel %vm2034, 0.0, %v7637
        %v7639 = vrot.slane %v7632, 4
        %v7640 = vsel %vm2034, 0.0, %v7639
        %v7641 = vrot.slane %v1989, 4
        %v7642 = vsel %vm2034, 0.0, %v7641
        %v7644 = vunpack.c.l.s4 1983009808
        %v7645 = vunpack.c.0.s8 %v7644
        %v7646 = vperm.slane %v1989, %v7645
        %v7648 = vunpack.c.l.s4 1983009808
        %v7649 = vunpack.c.0.s8 %v7648
        %v7650 = vperm.slane %v7642, %v7649
        %v7651 = vrot.slane %v7646, 4
        %v7652 = vsel %vm2034, 0.0, %v7651
        %v7654 = vunpack.c.l.s4 1934713408
        %v7655 = vunpack.c.0.s8 %v7654
        %v7656 = vperm.slane %v7646, %v7655
        %v7658 = vunpack.c.l.s4 1934713408
        %v7659 = vunpack.c.0.s8 %v7658
        %v7660 = vperm.slane %v7652, %v7659
        %v7661 = vrot.slane %v7650, 4
        %v7662 = vsel %vm2034, 0.0, %v7661
        %v7664 = vunpack.c.l.s4 1934713408
        %v7665 = vunpack.c.0.s8 %v7664
        %v7666 = vperm.slane %v7650, %v7665
        %v7668 = vunpack.c.l.s4 1934713408
        %v7669 = vunpack.c.0.s8 %v7668
        %v7670 = vperm.slane %v7662, %v7669
        %v7671 = vrot.slane %v7656, 4
        %v7672 = vsel %vm2034, 0.0, %v7671
        %v7673 = vrot.slane %v7660, 4
        %v7674 = vsel %vm2034, 0.0, %v7673
        %v7675 = vrot.slane %v7666, 4
        %v7676 = vsel %vm2034, 0.0, %v7675
        %v7677 = vrot.slane %v7670, 4
        %v7678 = vsel %vm2034, 0.0, %v7677
        %v7679 = vrot.slane %v1990, 4
        %v7680 = vsel %vm2034, 0.0, %v7679
        %v7682 = vunpack.c.l.s4 1983009808
        %v7683 = vunpack.c.0.s8 %v7682
        %v7684 = vperm.slane %v1990, %v7683
        %v7686 = vunpack.c.l.s4 1983009808
        %v7687 = vunpack.c.0.s8 %v7686
        %v7688 = vperm.slane %v7680, %v7687
        %v7689 = vrot.slane %v7684, 4
        %v7690 = vsel %vm2034, 0.0, %v7689
        %v7692 = vunpack.c.l.s4 1934713408
        %v7693 = vunpack.c.0.s8 %v7692
        %v7694 = vperm.slane %v7684, %v7693
        %v7696 = vunpack.c.l.s4 1934713408
        %v7697 = vunpack.c.0.s8 %v7696
        %v7698 = vperm.slane %v7690, %v7697
        %v7699 = vrot.slane %v7688, 4
        %v7700 = vsel %vm2034, 0.0, %v7699
        %v7702 = vunpack.c.l.s4 1934713408
        %v7703 = vunpack.c.0.s8 %v7702
        %v7704 = vperm.slane %v7688, %v7703
        %v7706 = vunpack.c.l.s4 1934713408
        %v7707 = vunpack.c.0.s8 %v7706
        %v7708 = vperm.slane %v7700, %v7707
        %v7709 = vrot.slane %v7694, 4
        %v7710 = vsel %vm2034, 0.0, %v7709
        %v7711 = vrot.slane %v7698, 4
        %v7712 = vsel %vm2034, 0.0, %v7711
        %v7713 = vrot.slane %v7704, 4
        %v7714 = vsel %vm2034, 0.0, %v7713
        %v7715 = vrot.slane %v7708, 4
        %v7716 = vsel %vm2034, 0.0, %v7715
        %v7717 = vrot.slane %v1991, 4
        %v7718 = vsel %vm2034, 0.0, %v7717
        %v7720 = vunpack.c.l.s4 1983009808
        %v7721 = vunpack.c.0.s8 %v7720
        %v7722 = vperm.slane %v1991, %v7721
        %v7724 = vunpack.c.l.s4 1983009808
        %v7725 = vunpack.c.0.s8 %v7724
        %v7726 = vperm.slane %v7718, %v7725
        %v7727 = vrot.slane %v7722, 4
        %v7728 = vsel %vm2034, 0.0, %v7727
        %v7730 = vunpack.c.l.s4 1934713408
        %v7731 = vunpack.c.0.s8 %v7730
        %v7732 = vperm.slane %v7722, %v7731
        %v7734 = vunpack.c.l.s4 1934713408
        %v7735 = vunpack.c.0.s8 %v7734
        %v7736 = vperm.slane %v7728, %v7735
        %v7737 = vrot.slane %v7726, 4
        %v7738 = vsel %vm2034, 0.0, %v7737
        %v7740 = vunpack.c.l.s4 1934713408
        %v7741 = vunpack.c.0.s8 %v7740
        %v7742 = vperm.slane %v7726, %v7741
        %v7744 = vunpack.c.l.s4 1934713408
        %v7745 = vunpack.c.0.s8 %v7744
        %v7746 = vperm.slane %v7738, %v7745
        %v7747 = vrot.slane %v7732, 4
        %v7748 = vsel %vm2034, 0.0, %v7747
        %v7749 = vrot.slane %v7736, 4
        %v7750 = vsel %vm2034, 0.0, %v7749
        %v7751 = vrot.slane %v7742, 4
        %v7752 = vsel %vm2034, 0.0, %v7751
        %v7753 = vrot.slane %v7746, 4
        %v7754 = vsel %vm2034, 0.0, %v7753
        %v7755 = vrot.slane %v1992, 4
        %v7756 = vsel %vm2034, 0.0, %v7755
        %v7758 = vunpack.c.l.s4 1983009808
        %v7759 = vunpack.c.0.s8 %v7758
        %v7760 = vperm.slane %v1992, %v7759
        %v7762 = vunpack.c.l.s4 1983009808
        %v7763 = vunpack.c.0.s8 %v7762
        %v7764 = vperm.slane %v7756, %v7763
        %v7765 = vrot.slane %v7760, 4
        %v7766 = vsel %vm2034, 0.0, %v7765
        %v7768 = vunpack.c.l.s4 1934713408
        %v7769 = vunpack.c.0.s8 %v7768
        %v7770 = vperm.slane %v7760, %v7769
        %v7772 = vunpack.c.l.s4 1934713408
        %v7773 = vunpack.c.0.s8 %v7772
        %v7774 = vperm.slane %v7766, %v7773
        %v7775 = vrot.slane %v7764, 4
        %v7776 = vsel %vm2034, 0.0, %v7775
        %v7778 = vunpack.c.l.s4 1934713408
        %v7779 = vunpack.c.0.s8 %v7778
        %v7780 = vperm.slane %v7764, %v7779
        %v7782 = vunpack.c.l.s4 1934713408
        %v7783 = vunpack.c.0.s8 %v7782
        %v7784 = vperm.slane %v7776, %v7783
        %v7785 = vrot.slane %v7770, 4
        %v7786 = vsel %vm2034, 0.0, %v7785
        %v7787 = vrot.slane %v7774, 4
        %v7788 = vsel %vm2034, 0.0, %v7787
        %v7789 = vrot.slane %v7780, 4
        %v7790 = vsel %vm2034, 0.0, %v7789
        %v7791 = vrot.slane %v7784, 4
        %v7792 = vsel %vm2034, 0.0, %v7791
        %v7793 = vrot.slane %v1993, 4
        %v7794 = vsel %vm2034, 0.0, %v7793
        %v7796 = vunpack.c.l.s4 1983009808
        %v7797 = vunpack.c.0.s8 %v7796
        %v7798 = vperm.slane %v1993, %v7797
        %v7800 = vunpack.c.l.s4 1983009808
        %v7801 = vunpack.c.0.s8 %v7800
        %v7802 = vperm.slane %v7794, %v7801
        %v7803 = vrot.slane %v7798, 4
        %v7804 = vsel %vm2034, 0.0, %v7803
        %v7806 = vunpack.c.l.s4 1934713408
        %v7807 = vunpack.c.0.s8 %v7806
        %v7808 = vperm.slane %v7798, %v7807
        %v7810 = vunpack.c.l.s4 1934713408
        %v7811 = vunpack.c.0.s8 %v7810
        %v7812 = vperm.slane %v7804, %v7811
        %v7813 = vrot.slane %v7802, 4
        %v7814 = vsel %vm2034, 0.0, %v7813
        %v7816 = vunpack.c.l.s4 1934713408
        %v7817 = vunpack.c.0.s8 %v7816
        %v7818 = vperm.slane %v7802, %v7817
        %v7820 = vunpack.c.l.s4 1934713408
        %v7821 = vunpack.c.0.s8 %v7820
        %v7822 = vperm.slane %v7814, %v7821
        %v7823 = vrot.slane %v7808, 4
        %v7824 = vsel %vm2034, 0.0, %v7823
        %v7825 = vrot.slane %v7812, 4
        %v7826 = vsel %vm2034, 0.0, %v7825
        %v7827 = vrot.slane %v7818, 4
        %v7828 = vsel %vm2034, 0.0, %v7827
        %v7829 = vrot.slane %v7822, 4
        %v7830 = vsel %vm2034, 0.0, %v7829
        %v7831 = vrot.slane %v1994, 4
        %v7832 = vsel %vm2034, 0.0, %v7831
        %v7834 = vunpack.c.l.s4 1983009808
        %v7835 = vunpack.c.0.s8 %v7834
        %v7836 = vperm.slane %v1994, %v7835
        %v7838 = vunpack.c.l.s4 1983009808
        %v7839 = vunpack.c.0.s8 %v7838
        %v7840 = vperm.slane %v7832, %v7839
        %v7841 = vrot.slane %v7836, 4
        %v7842 = vsel %vm2034, 0.0, %v7841
        %v7844 = vunpack.c.l.s4 1934713408
        %v7845 = vunpack.c.0.s8 %v7844
        %v7846 = vperm.slane %v7836, %v7845
        %v7848 = vunpack.c.l.s4 1934713408
        %v7849 = vunpack.c.0.s8 %v7848
        %v7850 = vperm.slane %v7842, %v7849
        %v7851 = vrot.slane %v7840, 4
        %v7852 = vsel %vm2034, 0.0, %v7851
        %v7854 = vunpack.c.l.s4 1934713408
        %v7855 = vunpack.c.0.s8 %v7854
        %v7856 = vperm.slane %v7840, %v7855
        %v7858 = vunpack.c.l.s4 1934713408
        %v7859 = vunpack.c.0.s8 %v7858
        %v7860 = vperm.slane %v7852, %v7859
        %v7861 = vrot.slane %v7846, 4
        %v7862 = vsel %vm2034, 0.0, %v7861
        %v7863 = vrot.slane %v7850, 4
        %v7864 = vsel %vm2034, 0.0, %v7863
        %v7865 = vrot.slane %v7856, 4
        %v7866 = vsel %vm2034, 0.0, %v7865
        %v7867 = vrot.slane %v7860, 4
        %v7868 = vsel %vm2034, 0.0, %v7867
        %v7869 = vrot.slane %v1995, 4
        %v7870 = vsel %vm2034, 0.0, %v7869
        %v7872 = vunpack.c.l.s4 1983009808
        %v7873 = vunpack.c.0.s8 %v7872
        %v7874 = vperm.slane %v1995, %v7873
        %v7876 = vunpack.c.l.s4 1983009808
        %v7877 = vunpack.c.0.s8 %v7876
        %v7878 = vperm.slane %v7870, %v7877
        %v7879 = vrot.slane %v7874, 4
        %v7880 = vsel %vm2034, 0.0, %v7879
        %v7882 = vunpack.c.l.s4 1934713408
        %v7883 = vunpack.c.0.s8 %v7882
        %v7884 = vperm.slane %v7874, %v7883
        %v7886 = vunpack.c.l.s4 1934713408
        %v7887 = vunpack.c.0.s8 %v7886
        %v7888 = vperm.slane %v7880, %v7887
        %v7889 = vrot.slane %v7878, 4
        %v7890 = vsel %vm2034, 0.0, %v7889
        %v7892 = vunpack.c.l.s4 1934713408
        %v7893 = vunpack.c.0.s8 %v7892
        %v7894 = vperm.slane %v7878, %v7893
        %v7896 = vunpack.c.l.s4 1934713408
        %v7897 = vunpack.c.0.s8 %v7896
        %v7898 = vperm.slane %v7890, %v7897
        %v7899 = vrot.slane %v7884, 4
        %v7900 = vsel %vm2034, 0.0, %v7899
        %v7901 = vrot.slane %v7888, 4
        %v7902 = vsel %vm2034, 0.0, %v7901
        %v7903 = vrot.slane %v7894, 4
        %v7904 = vsel %vm2034, 0.0, %v7903
        %v7905 = vrot.slane %v7898, 4
        %v7906 = vsel %vm2034, 0.0, %v7905
        %v7907 = vrot.slane %v1996, 4
        %v7908 = vsel %vm2034, 0.0, %v7907
        %v7910 = vunpack.c.l.s4 1983009808
        %v7911 = vunpack.c.0.s8 %v7910
        %v7912 = vperm.slane %v1996, %v7911
        %v7914 = vunpack.c.l.s4 1983009808
        %v7915 = vunpack.c.0.s8 %v7914
        %v7916 = vperm.slane %v7908, %v7915
        %v7917 = vrot.slane %v7912, 4
        %v7918 = vsel %vm2034, 0.0, %v7917
        %v7920 = vunpack.c.l.s4 1934713408
        %v7921 = vunpack.c.0.s8 %v7920
        %v7922 = vperm.slane %v7912, %v7921
        %v7924 = vunpack.c.l.s4 1934713408
        %v7925 = vunpack.c.0.s8 %v7924
        %v7926 = vperm.slane %v7918, %v7925
        %v7927 = vrot.slane %v7916, 4
        %v7928 = vsel %vm2034, 0.0, %v7927
        %v7930 = vunpack.c.l.s4 1934713408
        %v7931 = vunpack.c.0.s8 %v7930
        %v7932 = vperm.slane %v7916, %v7931
        %v7934 = vunpack.c.l.s4 1934713408
        %v7935 = vunpack.c.0.s8 %v7934
        %v7936 = vperm.slane %v7928, %v7935
        %v7937 = vrot.slane %v7922, 4
        %v7938 = vsel %vm2034, 0.0, %v7937
        %v7939 = vrot.slane %v7926, 4
        %v7940 = vsel %vm2034, 0.0, %v7939
        %v7941 = vrot.slane %v7932, 4
        %v7942 = vsel %vm2034, 0.0, %v7941
        %v7943 = vrot.slane %v7936, 4
        %v7944 = vsel %vm2034, 0.0, %v7943
        %v7945 = vrot.slane %v1997, 4
        %v7946 = vsel %vm2034, 0.0, %v7945
        %v7948 = vunpack.c.l.s4 1983009808
        %v7949 = vunpack.c.0.s8 %v7948
        %v7950 = vperm.slane %v1997, %v7949
        %v7952 = vunpack.c.l.s4 1983009808
        %v7953 = vunpack.c.0.s8 %v7952
        %v7954 = vperm.slane %v7946, %v7953
        %v7955 = vrot.slane %v7950, 4
        %v7956 = vsel %vm2034, 0.0, %v7955
        %v7958 = vunpack.c.l.s4 1934713408
        %v7959 = vunpack.c.0.s8 %v7958
        %v7960 = vperm.slane %v7950, %v7959
        %v7962 = vunpack.c.l.s4 1934713408
        %v7963 = vunpack.c.0.s8 %v7962
        %v7964 = vperm.slane %v7956, %v7963
        %v7965 = vrot.slane %v7954, 4
        %v7966 = vsel %vm2034, 0.0, %v7965
        %v7968 = vunpack.c.l.s4 1934713408
        %v7969 = vunpack.c.0.s8 %v7968
        %v7970 = vperm.slane %v7954, %v7969
        %v7972 = vunpack.c.l.s4 1934713408
        %v7973 = vunpack.c.0.s8 %v7972
        %v7974 = vperm.slane %v7966, %v7973
        %v7975 = vrot.slane %v7960, 4
        %v7976 = vsel %vm2034, 0.0, %v7975
        %v7977 = vrot.slane %v7964, 4
        %v7978 = vsel %vm2034, 0.0, %v7977
        %v7979 = vrot.slane %v7970, 4
        %v7980 = vsel %vm2034, 0.0, %v7979
        %v7981 = vrot.slane %v7974, 4
        %v7982 = vsel %vm2034, 0.0, %v7981
        %v7983 = vrot.slane %v1998, 4
        %v7984 = vsel %vm2034, 0.0, %v7983
        %v7986 = vunpack.c.l.s4 1983009808
        %v7987 = vunpack.c.0.s8 %v7986
        %v7988 = vperm.slane %v1998, %v7987
        %v7990 = vunpack.c.l.s4 1983009808
        %v7991 = vunpack.c.0.s8 %v7990
        %v7992 = vperm.slane %v7984, %v7991
        %v7993 = vrot.slane %v7988, 4
        %v7994 = vsel %vm2034, 0.0, %v7993
        %v7996 = vunpack.c.l.s4 1934713408
        %v7997 = vunpack.c.0.s8 %v7996
        %v7998 = vperm.slane %v7988, %v7997
        %v8000 = vunpack.c.l.s4 1934713408
        %v8001 = vunpack.c.0.s8 %v8000
        %v8002 = vperm.slane %v7994, %v8001
        %v8003 = vrot.slane %v7992, 4
        %v8004 = vsel %vm2034, 0.0, %v8003
        %v8006 = vunpack.c.l.s4 1934713408
        %v8007 = vunpack.c.0.s8 %v8006
        %v8008 = vperm.slane %v7992, %v8007
        %v8010 = vunpack.c.l.s4 1934713408
        %v8011 = vunpack.c.0.s8 %v8010
        %v8012 = vperm.slane %v8004, %v8011
        %v8013 = vrot.slane %v7998, 4
        %v8014 = vsel %vm2034, 0.0, %v8013
        %v8015 = vrot.slane %v8002, 4
        %v8016 = vsel %vm2034, 0.0, %v8015
        %v8017 = vrot.slane %v8008, 4
        %v8018 = vsel %vm2034, 0.0, %v8017
        %v8019 = vrot.slane %v8012, 4
        %v8020 = vsel %vm2034, 0.0, %v8019
        %v8021 = vrot.slane %v1999, 4
        %v8022 = vsel %vm2034, 0.0, %v8021
        %v8024 = vunpack.c.l.s4 1983009808
        %v8025 = vunpack.c.0.s8 %v8024
        %v8026 = vperm.slane %v1999, %v8025
        %v8028 = vunpack.c.l.s4 1983009808
        %v8029 = vunpack.c.0.s8 %v8028
        %v8030 = vperm.slane %v8022, %v8029
        %v8031 = vrot.slane %v8026, 4
        %v8032 = vsel %vm2034, 0.0, %v8031
        %v8034 = vunpack.c.l.s4 1934713408
        %v8035 = vunpack.c.0.s8 %v8034
        %v8036 = vperm.slane %v8026, %v8035
        %v8038 = vunpack.c.l.s4 1934713408
        %v8039 = vunpack.c.0.s8 %v8038
        %v8040 = vperm.slane %v8032, %v8039
        %v8041 = vrot.slane %v8030, 4
        %v8042 = vsel %vm2034, 0.0, %v8041
        %v8044 = vunpack.c.l.s4 1934713408
        %v8045 = vunpack.c.0.s8 %v8044
        %v8046 = vperm.slane %v8030, %v8045
        %v8048 = vunpack.c.l.s4 1934713408
        %v8049 = vunpack.c.0.s8 %v8048
        %v8050 = vperm.slane %v8042, %v8049
        %v8051 = vrot.slane %v8036, 4
        %v8052 = vsel %vm2034, 0.0, %v8051
        %v8053 = vrot.slane %v8040, 4
        %v8054 = vsel %vm2034, 0.0, %v8053
        %v8055 = vrot.slane %v8046, 4
        %v8056 = vsel %vm2034, 0.0, %v8055
        %v8057 = vrot.slane %v8050, 4
        %v8058 = vsel %vm2034, 0.0, %v8057
        %v8059 = vrot.slane %v2000, 4
        %v8060 = vsel %vm2034, 0.0, %v8059
        %v8062 = vunpack.c.l.s4 1983009808
        %v8063 = vunpack.c.0.s8 %v8062
        %v8064 = vperm.slane %v2000, %v8063
        %v8066 = vunpack.c.l.s4 1983009808
        %v8067 = vunpack.c.0.s8 %v8066
        %v8068 = vperm.slane %v8060, %v8067
        %v8069 = vrot.slane %v8064, 4
        %v8070 = vsel %vm2034, 0.0, %v8069
        %v8072 = vunpack.c.l.s4 1934713408
        %v8073 = vunpack.c.0.s8 %v8072
        %v8074 = vperm.slane %v8064, %v8073
        %v8076 = vunpack.c.l.s4 1934713408
        %v8077 = vunpack.c.0.s8 %v8076
        %v8078 = vperm.slane %v8070, %v8077
        %v8079 = vrot.slane %v8068, 4
        %v8080 = vsel %vm2034, 0.0, %v8079
        %v8082 = vunpack.c.l.s4 1934713408
        %v8083 = vunpack.c.0.s8 %v8082
        %v8084 = vperm.slane %v8068, %v8083
        %v8086 = vunpack.c.l.s4 1934713408
        %v8087 = vunpack.c.0.s8 %v8086
        %v8088 = vperm.slane %v8080, %v8087
        %v8089 = vrot.slane %v8074, 4
        %v8090 = vsel %vm2034, 0.0, %v8089
        %v8091 = vrot.slane %v8078, 4
        %v8092 = vsel %vm2034, 0.0, %v8091
        %v8093 = vrot.slane %v8084, 4
        %v8094 = vsel %vm2034, 0.0, %v8093
        %v8095 = vrot.slane %v8088, 4
        %v8096 = vsel %vm2034, 0.0, %v8095
        %v8097 = vrot.slane %v2001, 4
        %v8098 = vsel %vm2034, 0.0, %v8097
        %v8100 = vunpack.c.l.s4 1983009808
        %v8101 = vunpack.c.0.s8 %v8100
        %v8102 = vperm.slane %v2001, %v8101
        %v8104 = vunpack.c.l.s4 1983009808
        %v8105 = vunpack.c.0.s8 %v8104
        %v8106 = vperm.slane %v8098, %v8105
        %v8107 = vrot.slane %v8102, 4
        %v8108 = vsel %vm2034, 0.0, %v8107
        %v8110 = vunpack.c.l.s4 1934713408
        %v8111 = vunpack.c.0.s8 %v8110
        %v8112 = vperm.slane %v8102, %v8111
        %v8114 = vunpack.c.l.s4 1934713408
        %v8115 = vunpack.c.0.s8 %v8114
        %v8116 = vperm.slane %v8108, %v8115
        %v8117 = vrot.slane %v8106, 4
        %v8118 = vsel %vm2034, 0.0, %v8117
        %v8120 = vunpack.c.l.s4 1934713408
        %v8121 = vunpack.c.0.s8 %v8120
        %v8122 = vperm.slane %v8106, %v8121
        %v8124 = vunpack.c.l.s4 1934713408
        %v8125 = vunpack.c.0.s8 %v8124
        %v8126 = vperm.slane %v8118, %v8125
        %v8127 = vrot.slane %v8112, 4
        %v8128 = vsel %vm2034, 0.0, %v8127
        %v8129 = vrot.slane %v8116, 4
        %v8130 = vsel %vm2034, 0.0, %v8129
        %v8131 = vrot.slane %v8122, 4
        %v8132 = vsel %vm2034, 0.0, %v8131
        %v8133 = vrot.slane %v8126, 4
        %v8134 = vsel %vm2034, 0.0, %v8133
        %v8135 = vrot.slane %v2002, 4
        %v8136 = vsel %vm2034, 0.0, %v8135
        %v8138 = vunpack.c.l.s4 1983009808
        %v8139 = vunpack.c.0.s8 %v8138
        %v8140 = vperm.slane %v2002, %v8139
        %v8142 = vunpack.c.l.s4 1983009808
        %v8143 = vunpack.c.0.s8 %v8142
        %v8144 = vperm.slane %v8136, %v8143
        %v8145 = vrot.slane %v8140, 4
        %v8146 = vsel %vm2034, 0.0, %v8145
        %v8148 = vunpack.c.l.s4 1934713408
        %v8149 = vunpack.c.0.s8 %v8148
        %v8150 = vperm.slane %v8140, %v8149
        %v8152 = vunpack.c.l.s4 1934713408
        %v8153 = vunpack.c.0.s8 %v8152
        %v8154 = vperm.slane %v8146, %v8153
        %v8155 = vrot.slane %v8144, 4
        %v8156 = vsel %vm2034, 0.0, %v8155
        %v8158 = vunpack.c.l.s4 1934713408
        %v8159 = vunpack.c.0.s8 %v8158
        %v8160 = vperm.slane %v8144, %v8159
        %v8162 = vunpack.c.l.s4 1934713408
        %v8163 = vunpack.c.0.s8 %v8162
        %v8164 = vperm.slane %v8156, %v8163
        %v8165 = vrot.slane %v8150, 4
        %v8166 = vsel %vm2034, 0.0, %v8165
        %v8167 = vrot.slane %v8154, 4
        %v8168 = vsel %vm2034, 0.0, %v8167
        %v8169 = vrot.slane %v8160, 4
        %v8170 = vsel %vm2034, 0.0, %v8169
        %v8171 = vrot.slane %v8164, 4
        %v8172 = vsel %vm2034, 0.0, %v8171
        %v8173 = vrot.slane %v2003, 4
        %v8174 = vsel %vm2034, 0.0, %v8173
        %v8176 = vunpack.c.l.s4 1983009808
        %v8177 = vunpack.c.0.s8 %v8176
        %v8178 = vperm.slane %v2003, %v8177
        %v8180 = vunpack.c.l.s4 1983009808
        %v8181 = vunpack.c.0.s8 %v8180
        %v8182 = vperm.slane %v8174, %v8181
        %v8183 = vrot.slane %v8178, 4
        %v8184 = vsel %vm2034, 0.0, %v8183
        %v8186 = vunpack.c.l.s4 1934713408
        %v8187 = vunpack.c.0.s8 %v8186
        %v8188 = vperm.slane %v8178, %v8187
        %v8190 = vunpack.c.l.s4 1934713408
        %v8191 = vunpack.c.0.s8 %v8190
        %v8192 = vperm.slane %v8184, %v8191
        %v8193 = vrot.slane %v8182, 4
        %v8194 = vsel %vm2034, 0.0, %v8193
        %v8196 = vunpack.c.l.s4 1934713408
        %v8197 = vunpack.c.0.s8 %v8196
        %v8198 = vperm.slane %v8182, %v8197
        %v8200 = vunpack.c.l.s4 1934713408
        %v8201 = vunpack.c.0.s8 %v8200
        %v8202 = vperm.slane %v8194, %v8201
        %v8203 = vrot.slane %v8188, 4
        %v8204 = vsel %vm2034, 0.0, %v8203
        %v8205 = vrot.slane %v8192, 4
        %v8206 = vsel %vm2034, 0.0, %v8205
        %v8207 = vrot.slane %v8198, 4
        %v8208 = vsel %vm2034, 0.0, %v8207
        %v8209 = vrot.slane %v8202, 4
        %v8210 = vsel %vm2034, 0.0, %v8209
        %v8211 = vrot.slane %v2004, 4
        %v8212 = vsel %vm2034, 0.0, %v8211
        %v8214 = vunpack.c.l.s4 1983009808
        %v8215 = vunpack.c.0.s8 %v8214
        %v8216 = vperm.slane %v2004, %v8215
        %v8218 = vunpack.c.l.s4 1983009808
        %v8219 = vunpack.c.0.s8 %v8218
        %v8220 = vperm.slane %v8212, %v8219
        %v8221 = vrot.slane %v8216, 4
        %v8222 = vsel %vm2034, 0.0, %v8221
        %v8224 = vunpack.c.l.s4 1934713408
        %v8225 = vunpack.c.0.s8 %v8224
        %v8226 = vperm.slane %v8216, %v8225
        %v8228 = vunpack.c.l.s4 1934713408
        %v8229 = vunpack.c.0.s8 %v8228
        %v8230 = vperm.slane %v8222, %v8229
        %v8231 = vrot.slane %v8220, 4
        %v8232 = vsel %vm2034, 0.0, %v8231
        %v8234 = vunpack.c.l.s4 1934713408
        %v8235 = vunpack.c.0.s8 %v8234
        %v8236 = vperm.slane %v8220, %v8235
        %v8238 = vunpack.c.l.s4 1934713408
        %v8239 = vunpack.c.0.s8 %v8238
        %v8240 = vperm.slane %v8232, %v8239
        %v8241 = vrot.slane %v8226, 4
        %v8242 = vsel %vm2034, 0.0, %v8241
        %v8243 = vrot.slane %v8230, 4
        %v8244 = vsel %vm2034, 0.0, %v8243
        %v8245 = vrot.slane %v8236, 4
        %v8246 = vsel %vm2034, 0.0, %v8245
        %v8247 = vrot.slane %v8240, 4
        %v8248 = vsel %vm2034, 0.0, %v8247
        %v8249 = vrot.slane %v2005, 4
        %v8250 = vsel %vm2034, 0.0, %v8249
        %v8252 = vunpack.c.l.s4 1983009808
        %v8253 = vunpack.c.0.s8 %v8252
        %v8254 = vperm.slane %v2005, %v8253
        %v8256 = vunpack.c.l.s4 1983009808
        %v8257 = vunpack.c.0.s8 %v8256
        %v8258 = vperm.slane %v8250, %v8257
        %v8259 = vrot.slane %v8254, 4
        %v8260 = vsel %vm2034, 0.0, %v8259
        %v8262 = vunpack.c.l.s4 1934713408
        %v8263 = vunpack.c.0.s8 %v8262
        %v8264 = vperm.slane %v8254, %v8263
        %v8266 = vunpack.c.l.s4 1934713408
        %v8267 = vunpack.c.0.s8 %v8266
        %v8268 = vperm.slane %v8260, %v8267
        %v8269 = vrot.slane %v8258, 4
        %v8270 = vsel %vm2034, 0.0, %v8269
        %v8272 = vunpack.c.l.s4 1934713408
        %v8273 = vunpack.c.0.s8 %v8272
        %v8274 = vperm.slane %v8258, %v8273
        %v8276 = vunpack.c.l.s4 1934713408
        %v8277 = vunpack.c.0.s8 %v8276
        %v8278 = vperm.slane %v8270, %v8277
        %v8279 = vrot.slane %v8264, 4
        %v8280 = vsel %vm2034, 0.0, %v8279
        %v8281 = vrot.slane %v8268, 4
        %v8282 = vsel %vm2034, 0.0, %v8281
        %v8283 = vrot.slane %v8274, 4
        %v8284 = vsel %vm2034, 0.0, %v8283
        %v8285 = vrot.slane %v8278, 4
        %v8286 = vsel %vm2034, 0.0, %v8285
        %v8287 = vrot.slane %v2006, 4
        %v8288 = vsel %vm2034, 0.0, %v8287
        %v8290 = vunpack.c.l.s4 1983009808
        %v8291 = vunpack.c.0.s8 %v8290
        %v8292 = vperm.slane %v2006, %v8291
        %v8294 = vunpack.c.l.s4 1983009808
        %v8295 = vunpack.c.0.s8 %v8294
        %v8296 = vperm.slane %v8288, %v8295
        %v8297 = vrot.slane %v8292, 4
        %v8298 = vsel %vm2034, 0.0, %v8297
        %v8300 = vunpack.c.l.s4 1934713408
        %v8301 = vunpack.c.0.s8 %v8300
        %v8302 = vperm.slane %v8292, %v8301
        %v8304 = vunpack.c.l.s4 1934713408
        %v8305 = vunpack.c.0.s8 %v8304
        %v8306 = vperm.slane %v8298, %v8305
        %v8307 = vrot.slane %v8296, 4
        %v8308 = vsel %vm2034, 0.0, %v8307
        %v8310 = vunpack.c.l.s4 1934713408
        %v8311 = vunpack.c.0.s8 %v8310
        %v8312 = vperm.slane %v8296, %v8311
        %v8314 = vunpack.c.l.s4 1934713408
        %v8315 = vunpack.c.0.s8 %v8314
        %v8316 = vperm.slane %v8308, %v8315
        %v8317 = vrot.slane %v8302, 4
        %v8318 = vsel %vm2034, 0.0, %v8317
        %v8319 = vrot.slane %v8306, 4
        %v8320 = vsel %vm2034, 0.0, %v8319
        %v8321 = vrot.slane %v8312, 4
        %v8322 = vsel %vm2034, 0.0, %v8321
        %v8323 = vrot.slane %v8316, 4
        %v8324 = vsel %vm2034, 0.0, %v8323
        %v8325 = vrot.slane %v2007, 4
        %v8326 = vsel %vm2034, 0.0, %v8325
        %v8328 = vunpack.c.l.s4 1983009808
        %v8329 = vunpack.c.0.s8 %v8328
        %v8330 = vperm.slane %v2007, %v8329
        %v8332 = vunpack.c.l.s4 1983009808
        %v8333 = vunpack.c.0.s8 %v8332
        %v8334 = vperm.slane %v8326, %v8333
        %v8335 = vrot.slane %v8330, 4
        %v8336 = vsel %vm2034, 0.0, %v8335
        %v8338 = vunpack.c.l.s4 1934713408
        %v8339 = vunpack.c.0.s8 %v8338
        %v8340 = vperm.slane %v8330, %v8339
        %v8342 = vunpack.c.l.s4 1934713408
        %v8343 = vunpack.c.0.s8 %v8342
        %v8344 = vperm.slane %v8336, %v8343
        %v8345 = vrot.slane %v8334, 4
        %v8346 = vsel %vm2034, 0.0, %v8345
        %v8348 = vunpack.c.l.s4 1934713408
        %v8349 = vunpack.c.0.s8 %v8348
        %v8350 = vperm.slane %v8334, %v8349
        %v8352 = vunpack.c.l.s4 1934713408
        %v8353 = vunpack.c.0.s8 %v8352
        %v8354 = vperm.slane %v8346, %v8353
        %v8355 = vrot.slane %v8340, 4
        %v8356 = vsel %vm2034, 0.0, %v8355
        %v8357 = vrot.slane %v8344, 4
        %v8358 = vsel %vm2034, 0.0, %v8357
        %v8359 = vrot.slane %v8350, 4
        %v8360 = vsel %vm2034, 0.0, %v8359
        %v8361 = vrot.slane %v8354, 4
        %v8362 = vsel %vm2034, 0.0, %v8361
        %v8363 = vrot.slane %v2008, 4
        %v8364 = vsel %vm2034, 0.0, %v8363
        %v8366 = vunpack.c.l.s4 1983009808
        %v8367 = vunpack.c.0.s8 %v8366
        %v8368 = vperm.slane %v2008, %v8367
        %v8370 = vunpack.c.l.s4 1983009808
        %v8371 = vunpack.c.0.s8 %v8370
        %v8372 = vperm.slane %v8364, %v8371
        %v8373 = vrot.slane %v8368, 4
        %v8374 = vsel %vm2034, 0.0, %v8373
        %v8376 = vunpack.c.l.s4 1934713408
        %v8377 = vunpack.c.0.s8 %v8376
        %v8378 = vperm.slane %v8368, %v8377
        %v8380 = vunpack.c.l.s4 1934713408
        %v8381 = vunpack.c.0.s8 %v8380
        %v8382 = vperm.slane %v8374, %v8381
        %v8383 = vrot.slane %v8372, 4
        %v8384 = vsel %vm2034, 0.0, %v8383
        %v8386 = vunpack.c.l.s4 1934713408
        %v8387 = vunpack.c.0.s8 %v8386
        %v8388 = vperm.slane %v8372, %v8387
        %v8390 = vunpack.c.l.s4 1934713408
        %v8391 = vunpack.c.0.s8 %v8390
        %v8392 = vperm.slane %v8384, %v8391
        %v8393 = vrot.slane %v8378, 4
        %v8394 = vsel %vm2034, 0.0, %v8393
        %v8395 = vrot.slane %v8382, 4
        %v8396 = vsel %vm2034, 0.0, %v8395
        %v8397 = vrot.slane %v8388, 4
        %v8398 = vsel %vm2034, 0.0, %v8397
        %v8399 = vrot.slane %v8392, 4
        %v8400 = vsel %vm2034, 0.0, %v8399
        %v8401 = vrot.slane %v2009, 4
        %v8402 = vsel %vm2034, 0.0, %v8401
        %v8404 = vunpack.c.l.s4 1983009808
        %v8405 = vunpack.c.0.s8 %v8404
        %v8406 = vperm.slane %v2009, %v8405
        %v8408 = vunpack.c.l.s4 1983009808
        %v8409 = vunpack.c.0.s8 %v8408
        %v8410 = vperm.slane %v8402, %v8409
        %v8411 = vrot.slane %v8406, 4
        %v8412 = vsel %vm2034, 0.0, %v8411
        %v8414 = vunpack.c.l.s4 1934713408
        %v8415 = vunpack.c.0.s8 %v8414
        %v8416 = vperm.slane %v8406, %v8415
        %v8418 = vunpack.c.l.s4 1934713408
        %v8419 = vunpack.c.0.s8 %v8418
        %v8420 = vperm.slane %v8412, %v8419
        %v8421 = vrot.slane %v8410, 4
        %v8422 = vsel %vm2034, 0.0, %v8421
        %v8424 = vunpack.c.l.s4 1934713408
        %v8425 = vunpack.c.0.s8 %v8424
        %v8426 = vperm.slane %v8410, %v8425
        %v8428 = vunpack.c.l.s4 1934713408
        %v8429 = vunpack.c.0.s8 %v8428
        %v8430 = vperm.slane %v8422, %v8429
        %v8431 = vrot.slane %v8416, 4
        %v8432 = vsel %vm2034, 0.0, %v8431
        %v8433 = vrot.slane %v8420, 4
        %v8434 = vsel %vm2034, 0.0, %v8433
        %v8435 = vrot.slane %v8426, 4
        %v8436 = vsel %vm2034, 0.0, %v8435
        %v8437 = vrot.slane %v8430, 4
        %v8438 = vsel %vm2034, 0.0, %v8437
        %v8439 = vrot.slane %v2010, 4
        %v8440 = vsel %vm2034, 0.0, %v8439
        %v8442 = vunpack.c.l.s4 1983009808
        %v8443 = vunpack.c.0.s8 %v8442
        %v8444 = vperm.slane %v2010, %v8443
        %v8446 = vunpack.c.l.s4 1983009808
        %v8447 = vunpack.c.0.s8 %v8446
        %v8448 = vperm.slane %v8440, %v8447
        %v8449 = vrot.slane %v8444, 4
        %v8450 = vsel %vm2034, 0.0, %v8449
        %v8452 = vunpack.c.l.s4 1934713408
        %v8453 = vunpack.c.0.s8 %v8452
        %v8454 = vperm.slane %v8444, %v8453
        %v8456 = vunpack.c.l.s4 1934713408
        %v8457 = vunpack.c.0.s8 %v8456
        %v8458 = vperm.slane %v8450, %v8457
        %v8459 = vrot.slane %v8448, 4
        %v8460 = vsel %vm2034, 0.0, %v8459
        %v8462 = vunpack.c.l.s4 1934713408
        %v8463 = vunpack.c.0.s8 %v8462
        %v8464 = vperm.slane %v8448, %v8463
        %v8466 = vunpack.c.l.s4 1934713408
        %v8467 = vunpack.c.0.s8 %v8466
        %v8468 = vperm.slane %v8460, %v8467
        %v8469 = vrot.slane %v8454, 4
        %v8470 = vsel %vm2034, 0.0, %v8469
        %v8471 = vrot.slane %v8458, 4
        %v8472 = vsel %vm2034, 0.0, %v8471
        %v8473 = vrot.slane %v8464, 4
        %v8474 = vsel %vm2034, 0.0, %v8473
        %v8475 = vrot.slane %v8468, 4
        %v8476 = vsel %vm2034, 0.0, %v8475
        %v8477 = vrot.slane %v2011, 4
        %v8478 = vsel %vm2034, 0.0, %v8477
        %v8480 = vunpack.c.l.s4 1983009808
        %v8481 = vunpack.c.0.s8 %v8480
        %v8482 = vperm.slane %v2011, %v8481
        %v8484 = vunpack.c.l.s4 1983009808
        %v8485 = vunpack.c.0.s8 %v8484
        %v8486 = vperm.slane %v8478, %v8485
        %v8487 = vrot.slane %v8482, 4
        %v8488 = vsel %vm2034, 0.0, %v8487
        %v8490 = vunpack.c.l.s4 1934713408
        %v8491 = vunpack.c.0.s8 %v8490
        %v8492 = vperm.slane %v8482, %v8491
        %v8494 = vunpack.c.l.s4 1934713408
        %v8495 = vunpack.c.0.s8 %v8494
        %v8496 = vperm.slane %v8488, %v8495
        %v8497 = vrot.slane %v8486, 4
        %v8498 = vsel %vm2034, 0.0, %v8497
        %v8500 = vunpack.c.l.s4 1934713408
        %v8501 = vunpack.c.0.s8 %v8500
        %v8502 = vperm.slane %v8486, %v8501
        %v8504 = vunpack.c.l.s4 1934713408
        %v8505 = vunpack.c.0.s8 %v8504
        %v8506 = vperm.slane %v8498, %v8505
        %v8507 = vrot.slane %v8492, 4
        %v8508 = vsel %vm2034, 0.0, %v8507
        %v8509 = vrot.slane %v8496, 4
        %v8510 = vsel %vm2034, 0.0, %v8509
        %v8511 = vrot.slane %v8502, 4
        %v8512 = vsel %vm2034, 0.0, %v8511
        %v8513 = vrot.slane %v8506, 4
        %v8514 = vsel %vm2034, 0.0, %v8513
        %v8515 = vrot.slane %v2012, 4
        %v8516 = vsel %vm2034, 0.0, %v8515
        %v8518 = vunpack.c.l.s4 1983009808
        %v8519 = vunpack.c.0.s8 %v8518
        %v8520 = vperm.slane %v2012, %v8519
        %v8522 = vunpack.c.l.s4 1983009808
        %v8523 = vunpack.c.0.s8 %v8522
        %v8524 = vperm.slane %v8516, %v8523
        %v8525 = vrot.slane %v8520, 4
        %v8526 = vsel %vm2034, 0.0, %v8525
        %v8528 = vunpack.c.l.s4 1934713408
        %v8529 = vunpack.c.0.s8 %v8528
        %v8530 = vperm.slane %v8520, %v8529
        %v8532 = vunpack.c.l.s4 1934713408
        %v8533 = vunpack.c.0.s8 %v8532
        %v8534 = vperm.slane %v8526, %v8533
        %v8535 = vrot.slane %v8524, 4
        %v8536 = vsel %vm2034, 0.0, %v8535
        %v8538 = vunpack.c.l.s4 1934713408
        %v8539 = vunpack.c.0.s8 %v8538
        %v8540 = vperm.slane %v8524, %v8539
        %v8542 = vunpack.c.l.s4 1934713408
        %v8543 = vunpack.c.0.s8 %v8542
        %v8544 = vperm.slane %v8536, %v8543
        %v8545 = vrot.slane %v8530, 4
        %v8546 = vsel %vm2034, 0.0, %v8545
        %v8547 = vrot.slane %v8534, 4
        %v8548 = vsel %vm2034, 0.0, %v8547
        %v8549 = vrot.slane %v8540, 4
        %v8550 = vsel %vm2034, 0.0, %v8549
        %v8551 = vrot.slane %v8544, 4
        %v8552 = vsel %vm2034, 0.0, %v8551
        %v8553 = vrot.slane %v2013, 4
        %v8554 = vsel %vm2034, 0.0, %v8553
        %v8556 = vunpack.c.l.s4 1983009808
        %v8557 = vunpack.c.0.s8 %v8556
        %v8558 = vperm.slane %v2013, %v8557
        %v8560 = vunpack.c.l.s4 1983009808
        %v8561 = vunpack.c.0.s8 %v8560
        %v8562 = vperm.slane %v8554, %v8561
        %v8563 = vrot.slane %v8558, 4
        %v8564 = vsel %vm2034, 0.0, %v8563
        %v8566 = vunpack.c.l.s4 1934713408
        %v8567 = vunpack.c.0.s8 %v8566
        %v8568 = vperm.slane %v8558, %v8567
        %v8570 = vunpack.c.l.s4 1934713408
        %v8571 = vunpack.c.0.s8 %v8570
        %v8572 = vperm.slane %v8564, %v8571
        %v8573 = vrot.slane %v8562, 4
        %v8574 = vsel %vm2034, 0.0, %v8573
        %v8576 = vunpack.c.l.s4 1934713408
        %v8577 = vunpack.c.0.s8 %v8576
        %v8578 = vperm.slane %v8562, %v8577
        %v8580 = vunpack.c.l.s4 1934713408
        %v8581 = vunpack.c.0.s8 %v8580
        %v8582 = vperm.slane %v8574, %v8581
        %v8583 = vrot.slane %v8568, 4
        %v8584 = vsel %vm2034, 0.0, %v8583
        %v8585 = vrot.slane %v8572, 4
        %v8586 = vsel %vm2034, 0.0, %v8585
        %v8587 = vrot.slane %v8578, 4
        %v8588 = vsel %vm2034, 0.0, %v8587
        %v8589 = vrot.slane %v8582, 4
        %v8590 = vsel %vm2034, 0.0, %v8589
        %v8591 = vrot.slane %v2014, 4
        %v8592 = vsel %vm2034, 0.0, %v8591
        %v8594 = vunpack.c.l.s4 1983009808
        %v8595 = vunpack.c.0.s8 %v8594
        %v8596 = vperm.slane %v2014, %v8595
        %v8598 = vunpack.c.l.s4 1983009808
        %v8599 = vunpack.c.0.s8 %v8598
        %v8600 = vperm.slane %v8592, %v8599
        %v8601 = vrot.slane %v8596, 4
        %v8602 = vsel %vm2034, 0.0, %v8601
        %v8604 = vunpack.c.l.s4 1934713408
        %v8605 = vunpack.c.0.s8 %v8604
        %v8606 = vperm.slane %v8596, %v8605
        %v8608 = vunpack.c.l.s4 1934713408
        %v8609 = vunpack.c.0.s8 %v8608
        %v8610 = vperm.slane %v8602, %v8609
        %v8611 = vrot.slane %v8600, 4
        %v8612 = vsel %vm2034, 0.0, %v8611
        %v8614 = vunpack.c.l.s4 1934713408
        %v8615 = vunpack.c.0.s8 %v8614
        %v8616 = vperm.slane %v8600, %v8615
        %v8618 = vunpack.c.l.s4 1934713408
        %v8619 = vunpack.c.0.s8 %v8618
        %v8620 = vperm.slane %v8612, %v8619
        %v8621 = vrot.slane %v8606, 4
        %v8622 = vsel %vm2034, 0.0, %v8621
        %v8623 = vrot.slane %v8610, 4
        %v8624 = vsel %vm2034, 0.0, %v8623
        %v8625 = vrot.slane %v8616, 4
        %v8626 = vsel %vm2034, 0.0, %v8625
        %v8627 = vrot.slane %v8620, 4
        %v8628 = vsel %vm2034, 0.0, %v8627
        %v8629 = vrot.slane %v2015, 4
        %v8630 = vsel %vm2034, 0.0, %v8629
        %v8632 = vunpack.c.l.s4 1983009808
        %v8633 = vunpack.c.0.s8 %v8632
        %v8634 = vperm.slane %v2015, %v8633
        %v8636 = vunpack.c.l.s4 1983009808
        %v8637 = vunpack.c.0.s8 %v8636
        %v8638 = vperm.slane %v8630, %v8637
        %v8639 = vrot.slane %v8634, 4
        %v8640 = vsel %vm2034, 0.0, %v8639
        %v8642 = vunpack.c.l.s4 1934713408
        %v8643 = vunpack.c.0.s8 %v8642
        %v8644 = vperm.slane %v8634, %v8643
        %v8646 = vunpack.c.l.s4 1934713408
        %v8647 = vunpack.c.0.s8 %v8646
        %v8648 = vperm.slane %v8640, %v8647
        %v8649 = vrot.slane %v8638, 4
        %v8650 = vsel %vm2034, 0.0, %v8649
        %v8652 = vunpack.c.l.s4 1934713408
        %v8653 = vunpack.c.0.s8 %v8652
        %v8654 = vperm.slane %v8638, %v8653
        %v8656 = vunpack.c.l.s4 1934713408
        %v8657 = vunpack.c.0.s8 %v8656
        %v8658 = vperm.slane %v8650, %v8657
        %v8659 = vrot.slane %v8644, 4
        %v8660 = vsel %vm2034, 0.0, %v8659
        %v8661 = vrot.slane %v8648, 4
        %v8662 = vsel %vm2034, 0.0, %v8661
        %v8663 = vrot.slane %v8654, 4
        %v8664 = vsel %vm2034, 0.0, %v8663
        %v8665 = vrot.slane %v8658, 4
        %v8666 = vsel %vm2034, 0.0, %v8665
        %v8667 = vrot.slane %v2016, 4
        %v8668 = vsel %vm2034, 0.0, %v8667
        %v8670 = vunpack.c.l.s4 1983009808
        %v8671 = vunpack.c.0.s8 %v8670
        %v8672 = vperm.slane %v2016, %v8671
        %v8674 = vunpack.c.l.s4 1983009808
        %v8675 = vunpack.c.0.s8 %v8674
        %v8676 = vperm.slane %v8668, %v8675
        %v8677 = vrot.slane %v8672, 4
        %v8678 = vsel %vm2034, 0.0, %v8677
        %v8680 = vunpack.c.l.s4 1934713408
        %v8681 = vunpack.c.0.s8 %v8680
        %v8682 = vperm.slane %v8672, %v8681
        %v8684 = vunpack.c.l.s4 1934713408
        %v8685 = vunpack.c.0.s8 %v8684
        %v8686 = vperm.slane %v8678, %v8685
        %v8687 = vrot.slane %v8676, 4
        %v8688 = vsel %vm2034, 0.0, %v8687
        %v8690 = vunpack.c.l.s4 1934713408
        %v8691 = vunpack.c.0.s8 %v8690
        %v8692 = vperm.slane %v8676, %v8691
        %v8694 = vunpack.c.l.s4 1934713408
        %v8695 = vunpack.c.0.s8 %v8694
        %v8696 = vperm.slane %v8688, %v8695
        %v8697 = vrot.slane %v8682, 4
        %v8698 = vsel %vm2034, 0.0, %v8697
        %v8699 = vrot.slane %v8686, 4
        %v8700 = vsel %vm2034, 0.0, %v8699
        %v8701 = vrot.slane %v8692, 4
        %v8702 = vsel %vm2034, 0.0, %v8701
        %v8703 = vrot.slane %v8696, 4
        %v8704 = vsel %vm2034, 0.0, %v8703
        %v8705 = vrot.slane %v2017, 4
        %v8706 = vsel %vm2034, 0.0, %v8705
        %v8708 = vunpack.c.l.s4 1983009808
        %v8709 = vunpack.c.0.s8 %v8708
        %v8710 = vperm.slane %v2017, %v8709
        %v8712 = vunpack.c.l.s4 1983009808
        %v8713 = vunpack.c.0.s8 %v8712
        %v8714 = vperm.slane %v8706, %v8713
        %v8715 = vrot.slane %v8710, 4
        %v8716 = vsel %vm2034, 0.0, %v8715
        %v8718 = vunpack.c.l.s4 1934713408
        %v8719 = vunpack.c.0.s8 %v8718
        %v8720 = vperm.slane %v8710, %v8719
        %v8722 = vunpack.c.l.s4 1934713408
        %v8723 = vunpack.c.0.s8 %v8722
        %v8724 = vperm.slane %v8716, %v8723
        %v8725 = vrot.slane %v8714, 4
        %v8726 = vsel %vm2034, 0.0, %v8725
        %v8728 = vunpack.c.l.s4 1934713408
        %v8729 = vunpack.c.0.s8 %v8728
        %v8730 = vperm.slane %v8714, %v8729
        %v8732 = vunpack.c.l.s4 1934713408
        %v8733 = vunpack.c.0.s8 %v8732
        %v8734 = vperm.slane %v8726, %v8733
        %v8735 = vrot.slane %v8720, 4
        %v8736 = vsel %vm2034, 0.0, %v8735
        %v8737 = vrot.slane %v8724, 4
        %v8738 = vsel %vm2034, 0.0, %v8737
        %v8739 = vrot.slane %v8730, 4
        %v8740 = vsel %vm2034, 0.0, %v8739
        %v8741 = vrot.slane %v8734, 4
        %v8742 = vsel %vm2034, 0.0, %v8741
        %v8743 = vrot.slane %v2018, 4
        %v8744 = vsel %vm2034, 0.0, %v8743
        %v8746 = vunpack.c.l.s4 1983009808
        %v8747 = vunpack.c.0.s8 %v8746
        %v8748 = vperm.slane %v2018, %v8747
        %v8750 = vunpack.c.l.s4 1983009808
        %v8751 = vunpack.c.0.s8 %v8750
        %v8752 = vperm.slane %v8744, %v8751
        %v8753 = vrot.slane %v8748, 4
        %v8754 = vsel %vm2034, 0.0, %v8753
        %v8756 = vunpack.c.l.s4 1934713408
        %v8757 = vunpack.c.0.s8 %v8756
        %v8758 = vperm.slane %v8748, %v8757
        %v8760 = vunpack.c.l.s4 1934713408
        %v8761 = vunpack.c.0.s8 %v8760
        %v8762 = vperm.slane %v8754, %v8761
        %v8763 = vrot.slane %v8752, 4
        %v8764 = vsel %vm2034, 0.0, %v8763
        %v8766 = vunpack.c.l.s4 1934713408
        %v8767 = vunpack.c.0.s8 %v8766
        %v8768 = vperm.slane %v8752, %v8767
        %v8770 = vunpack.c.l.s4 1934713408
        %v8771 = vunpack.c.0.s8 %v8770
        %v8772 = vperm.slane %v8764, %v8771
        %v8773 = vrot.slane %v8758, 4
        %v8774 = vsel %vm2034, 0.0, %v8773
        %v8775 = vrot.slane %v8762, 4
        %v8776 = vsel %vm2034, 0.0, %v8775
        %v8777 = vrot.slane %v8768, 4
        %v8778 = vsel %vm2034, 0.0, %v8777
        %v8779 = vrot.slane %v8772, 4
        %v8780 = vsel %vm2034, 0.0, %v8779
        %v8781 = vrot.slane %v2019, 4
        %v8782 = vsel %vm2034, 0.0, %v8781
        %v8784 = vunpack.c.l.s4 1983009808
        %v8785 = vunpack.c.0.s8 %v8784
        %v8786 = vperm.slane %v2019, %v8785
        %v8788 = vunpack.c.l.s4 1983009808
        %v8789 = vunpack.c.0.s8 %v8788
        %v8790 = vperm.slane %v8782, %v8789
        %v8791 = vrot.slane %v8786, 4
        %v8792 = vsel %vm2034, 0.0, %v8791
        %v8794 = vunpack.c.l.s4 1934713408
        %v8795 = vunpack.c.0.s8 %v8794
        %v8796 = vperm.slane %v8786, %v8795
        %v8798 = vunpack.c.l.s4 1934713408
        %v8799 = vunpack.c.0.s8 %v8798
        %v8800 = vperm.slane %v8792, %v8799
        %v8801 = vrot.slane %v8790, 4
        %v8802 = vsel %vm2034, 0.0, %v8801
        %v8804 = vunpack.c.l.s4 1934713408
        %v8805 = vunpack.c.0.s8 %v8804
        %v8806 = vperm.slane %v8790, %v8805
        %v8808 = vunpack.c.l.s4 1934713408
        %v8809 = vunpack.c.0.s8 %v8808
        %v8810 = vperm.slane %v8802, %v8809
        %v8811 = vrot.slane %v8796, 4
        %v8812 = vsel %vm2034, 0.0, %v8811
        %v8813 = vrot.slane %v8800, 4
        %v8814 = vsel %vm2034, 0.0, %v8813
        %v8815 = vrot.slane %v8806, 4
        %v8816 = vsel %vm2034, 0.0, %v8815
        %v8817 = vrot.slane %v8810, 4
        %v8818 = vsel %vm2034, 0.0, %v8817
        %v8819 = vrot.slane %v2020, 4
        %v8820 = vsel %vm2034, 0.0, %v8819
        %v8822 = vunpack.c.l.s4 1983009808
        %v8823 = vunpack.c.0.s8 %v8822
        %v8824 = vperm.slane %v2020, %v8823
        %v8826 = vunpack.c.l.s4 1983009808
        %v8827 = vunpack.c.0.s8 %v8826
        %v8828 = vperm.slane %v8820, %v8827
        %v8829 = vrot.slane %v8824, 4
        %v8830 = vsel %vm2034, 0.0, %v8829
        %v8832 = vunpack.c.l.s4 1934713408
        %v8833 = vunpack.c.0.s8 %v8832
        %v8834 = vperm.slane %v8824, %v8833
        %v8836 = vunpack.c.l.s4 1934713408
        %v8837 = vunpack.c.0.s8 %v8836
        %v8838 = vperm.slane %v8830, %v8837
        %v8839 = vrot.slane %v8828, 4
        %v8840 = vsel %vm2034, 0.0, %v8839
        %v8842 = vunpack.c.l.s4 1934713408
        %v8843 = vunpack.c.0.s8 %v8842
        %v8844 = vperm.slane %v8828, %v8843
        %v8846 = vunpack.c.l.s4 1934713408
        %v8847 = vunpack.c.0.s8 %v8846
        %v8848 = vperm.slane %v8840, %v8847
        %v8849 = vrot.slane %v8834, 4
        %v8850 = vsel %vm2034, 0.0, %v8849
        %v8851 = vrot.slane %v8838, 4
        %v8852 = vsel %vm2034, 0.0, %v8851
        %v8853 = vrot.slane %v8844, 4
        %v8854 = vsel %vm2034, 0.0, %v8853
        %v8855 = vrot.slane %v8848, 4
        %v8856 = vsel %vm2034, 0.0, %v8855
        %v8857 = vrot.slane %v2021, 4
        %v8858 = vsel %vm2034, 0.0, %v8857
        %v8860 = vunpack.c.l.s4 1983009808
        %v8861 = vunpack.c.0.s8 %v8860
        %v8862 = vperm.slane %v2021, %v8861
        %v8864 = vunpack.c.l.s4 1983009808
        %v8865 = vunpack.c.0.s8 %v8864
        %v8866 = vperm.slane %v8858, %v8865
        %v8867 = vrot.slane %v8862, 4
        %v8868 = vsel %vm2034, 0.0, %v8867
        %v8870 = vunpack.c.l.s4 1934713408
        %v8871 = vunpack.c.0.s8 %v8870
        %v8872 = vperm.slane %v8862, %v8871
        %v8874 = vunpack.c.l.s4 1934713408
        %v8875 = vunpack.c.0.s8 %v8874
        %v8876 = vperm.slane %v8868, %v8875
        %v8877 = vrot.slane %v8866, 4
        %v8878 = vsel %vm2034, 0.0, %v8877
        %v8880 = vunpack.c.l.s4 1934713408
        %v8881 = vunpack.c.0.s8 %v8880
        %v8882 = vperm.slane %v8866, %v8881
        %v8884 = vunpack.c.l.s4 1934713408
        %v8885 = vunpack.c.0.s8 %v8884
        %v8886 = vperm.slane %v8878, %v8885
        %v8887 = vrot.slane %v8872, 4
        %v8888 = vsel %vm2034, 0.0, %v8887
        %v8889 = vrot.slane %v8876, 4
        %v8890 = vsel %vm2034, 0.0, %v8889
        %v8891 = vrot.slane %v8882, 4
        %v8892 = vsel %vm2034, 0.0, %v8891
        %v8893 = vrot.slane %v8886, 4
        %v8894 = vsel %vm2034, 0.0, %v8893
        %v8895 = vrot.slane %v2022, 4
        %v8896 = vsel %vm2034, 0.0, %v8895
        %v8898 = vunpack.c.l.s4 1983009808
        %v8899 = vunpack.c.0.s8 %v8898
        %v8900 = vperm.slane %v2022, %v8899
        %v8902 = vunpack.c.l.s4 1983009808
        %v8903 = vunpack.c.0.s8 %v8902
        %v8904 = vperm.slane %v8896, %v8903
        %v8905 = vrot.slane %v8900, 4
        %v8906 = vsel %vm2034, 0.0, %v8905
        %v8908 = vunpack.c.l.s4 1934713408
        %v8909 = vunpack.c.0.s8 %v8908
        %v8910 = vperm.slane %v8900, %v8909
        %v8912 = vunpack.c.l.s4 1934713408
        %v8913 = vunpack.c.0.s8 %v8912
        %v8914 = vperm.slane %v8906, %v8913
        %v8915 = vrot.slane %v8904, 4
        %v8916 = vsel %vm2034, 0.0, %v8915
        %v8918 = vunpack.c.l.s4 1934713408
        %v8919 = vunpack.c.0.s8 %v8918
        %v8920 = vperm.slane %v8904, %v8919
        %v8922 = vunpack.c.l.s4 1934713408
        %v8923 = vunpack.c.0.s8 %v8922
        %v8924 = vperm.slane %v8916, %v8923
        %v8925 = vrot.slane %v8910, 4
        %v8926 = vsel %vm2034, 0.0, %v8925
        %v8927 = vrot.slane %v8914, 4
        %v8928 = vsel %vm2034, 0.0, %v8927
        %v8929 = vrot.slane %v8920, 4
        %v8930 = vsel %vm2034, 0.0, %v8929
        %v8931 = vrot.slane %v8924, 4
        %v8932 = vsel %vm2034, 0.0, %v8931
        %v8933 = vrot.slane %v2023, 4
        %v8934 = vsel %vm2034, 0.0, %v8933
        %v8936 = vunpack.c.l.s4 1983009808
        %v8937 = vunpack.c.0.s8 %v8936
        %v8938 = vperm.slane %v2023, %v8937
        %v8940 = vunpack.c.l.s4 1983009808
        %v8941 = vunpack.c.0.s8 %v8940
        %v8942 = vperm.slane %v8934, %v8941
        %v8943 = vrot.slane %v8938, 4
        %v8944 = vsel %vm2034, 0.0, %v8943
        %v8946 = vunpack.c.l.s4 1934713408
        %v8947 = vunpack.c.0.s8 %v8946
        %v8948 = vperm.slane %v8938, %v8947
        %v8950 = vunpack.c.l.s4 1934713408
        %v8951 = vunpack.c.0.s8 %v8950
        %v8952 = vperm.slane %v8944, %v8951
        %v8953 = vrot.slane %v8942, 4
        %v8954 = vsel %vm2034, 0.0, %v8953
        %v8956 = vunpack.c.l.s4 1934713408
        %v8957 = vunpack.c.0.s8 %v8956
        %v8958 = vperm.slane %v8942, %v8957
        %v8960 = vunpack.c.l.s4 1934713408
        %v8961 = vunpack.c.0.s8 %v8960
        %v8962 = vperm.slane %v8954, %v8961
        %v8963 = vrot.slane %v8948, 4
        %v8964 = vsel %vm2034, 0.0, %v8963
        %v8965 = vrot.slane %v8952, 4
        %v8966 = vsel %vm2034, 0.0, %v8965
        %v8967 = vrot.slane %v8958, 4
        %v8968 = vsel %vm2034, 0.0, %v8967
        %v8969 = vrot.slane %v8962, 4
        %v8970 = vsel %vm2034, 0.0, %v8969
        %v8971 = vrot.slane %v2024, 4
        %v8972 = vsel %vm2034, 0.0, %v8971
        %v8974 = vunpack.c.l.s4 1983009808
        %v8975 = vunpack.c.0.s8 %v8974
        %v8976 = vperm.slane %v2024, %v8975
        %v8978 = vunpack.c.l.s4 1983009808
        %v8979 = vunpack.c.0.s8 %v8978
        %v8980 = vperm.slane %v8972, %v8979
        %v8981 = vrot.slane %v8976, 4
        %v8982 = vsel %vm2034, 0.0, %v8981
        %v8984 = vunpack.c.l.s4 1934713408
        %v8985 = vunpack.c.0.s8 %v8984
        %v8986 = vperm.slane %v8976, %v8985
        %v8988 = vunpack.c.l.s4 1934713408
        %v8989 = vunpack.c.0.s8 %v8988
        %v8990 = vperm.slane %v8982, %v8989
        %v8991 = vrot.slane %v8980, 4
        %v8992 = vsel %vm2034, 0.0, %v8991
        %v8994 = vunpack.c.l.s4 1934713408
        %v8995 = vunpack.c.0.s8 %v8994
        %v8996 = vperm.slane %v8980, %v8995
        %v8998 = vunpack.c.l.s4 1934713408
        %v8999 = vunpack.c.0.s8 %v8998
        %v9000 = vperm.slane %v8992, %v8999
        %v9001 = vrot.slane %v8986, 4
        %v9002 = vsel %vm2034, 0.0, %v9001
        %v9003 = vrot.slane %v8990, 4
        %v9004 = vsel %vm2034, 0.0, %v9003
        %v9005 = vrot.slane %v8996, 4
        %v9006 = vsel %vm2034, 0.0, %v9005
        %v9007 = vrot.slane %v9000, 4
        %v9008 = vsel %vm2034, 0.0, %v9007
        %v9009 = vrot.slane %v2025, 4
        %v9010 = vsel %vm2034, 0.0, %v9009
        %v9012 = vunpack.c.l.s4 1983009808
        %v9013 = vunpack.c.0.s8 %v9012
        %v9014 = vperm.slane %v2025, %v9013
        %v9016 = vunpack.c.l.s4 1983009808
        %v9017 = vunpack.c.0.s8 %v9016
        %v9018 = vperm.slane %v9010, %v9017
        %v9019 = vrot.slane %v9014, 4
        %v9020 = vsel %vm2034, 0.0, %v9019
        %v9022 = vunpack.c.l.s4 1934713408
        %v9023 = vunpack.c.0.s8 %v9022
        %v9024 = vperm.slane %v9014, %v9023
        %v9026 = vunpack.c.l.s4 1934713408
        %v9027 = vunpack.c.0.s8 %v9026
        %v9028 = vperm.slane %v9020, %v9027
        %v9029 = vrot.slane %v9018, 4
        %v9030 = vsel %vm2034, 0.0, %v9029
        %v9032 = vunpack.c.l.s4 1934713408
        %v9033 = vunpack.c.0.s8 %v9032
        %v9034 = vperm.slane %v9018, %v9033
        %v9036 = vunpack.c.l.s4 1934713408
        %v9037 = vunpack.c.0.s8 %v9036
        %v9038 = vperm.slane %v9030, %v9037
        %v9039 = vrot.slane %v9024, 4
        %v9040 = vsel %vm2034, 0.0, %v9039
        %v9041 = vrot.slane %v9028, 4
        %v9042 = vsel %vm2034, 0.0, %v9041
        %v9043 = vrot.slane %v9034, 4
        %v9044 = vsel %vm2034, 0.0, %v9043
        %v9045 = vrot.slane %v9038, 4
        %v9046 = vsel %vm2034, 0.0, %v9045
        %v9047 = vrot.slane %v2026, 4
        %v9048 = vsel %vm2034, 0.0, %v9047
        %v9050 = vunpack.c.l.s4 1983009808
        %v9051 = vunpack.c.0.s8 %v9050
        %v9052 = vperm.slane %v2026, %v9051
        %v9054 = vunpack.c.l.s4 1983009808
        %v9055 = vunpack.c.0.s8 %v9054
        %v9056 = vperm.slane %v9048, %v9055
        %v9057 = vrot.slane %v9052, 4
        %v9058 = vsel %vm2034, 0.0, %v9057
        %v9060 = vunpack.c.l.s4 1934713408
        %v9061 = vunpack.c.0.s8 %v9060
        %v9062 = vperm.slane %v9052, %v9061
        %v9064 = vunpack.c.l.s4 1934713408
        %v9065 = vunpack.c.0.s8 %v9064
        %v9066 = vperm.slane %v9058, %v9065
        %v9067 = vrot.slane %v9056, 4
        %v9068 = vsel %vm2034, 0.0, %v9067
        %v9070 = vunpack.c.l.s4 1934713408
        %v9071 = vunpack.c.0.s8 %v9070
        %v9072 = vperm.slane %v9056, %v9071
        %v9074 = vunpack.c.l.s4 1934713408
        %v9075 = vunpack.c.0.s8 %v9074
        %v9076 = vperm.slane %v9068, %v9075
        %v9077 = vrot.slane %v9062, 4
        %v9078 = vsel %vm2034, 0.0, %v9077
        %v9079 = vrot.slane %v9066, 4
        %v9080 = vsel %vm2034, 0.0, %v9079
        %v9081 = vrot.slane %v9072, 4
        %v9082 = vsel %vm2034, 0.0, %v9081
        %v9083 = vrot.slane %v9076, 4
        %v9084 = vsel %vm2034, 0.0, %v9083
        %v9085 = vrot.slane %v2027, 4
        %v9086 = vsel %vm2034, 0.0, %v9085
        %v9088 = vunpack.c.l.s4 1983009808
        %v9089 = vunpack.c.0.s8 %v9088
        %v9090 = vperm.slane %v2027, %v9089
        %v9092 = vunpack.c.l.s4 1983009808
        %v9093 = vunpack.c.0.s8 %v9092
        %v9094 = vperm.slane %v9086, %v9093
        %v9095 = vrot.slane %v9090, 4
        %v9096 = vsel %vm2034, 0.0, %v9095
        %v9098 = vunpack.c.l.s4 1934713408
        %v9099 = vunpack.c.0.s8 %v9098
        %v9100 = vperm.slane %v9090, %v9099
        %v9102 = vunpack.c.l.s4 1934713408
        %v9103 = vunpack.c.0.s8 %v9102
        %v9104 = vperm.slane %v9096, %v9103
        %v9105 = vrot.slane %v9094, 4
        %v9106 = vsel %vm2034, 0.0, %v9105
        %v9108 = vunpack.c.l.s4 1934713408
        %v9109 = vunpack.c.0.s8 %v9108
        %v9110 = vperm.slane %v9094, %v9109
        %v9112 = vunpack.c.l.s4 1934713408
        %v9113 = vunpack.c.0.s8 %v9112
        %v9114 = vperm.slane %v9106, %v9113
        %v9115 = vrot.slane %v9100, 4
        %v9116 = vsel %vm2034, 0.0, %v9115
        %v9117 = vrot.slane %v9104, 4
        %v9118 = vsel %vm2034, 0.0, %v9117
        %v9119 = vrot.slane %v9110, 4
        %v9120 = vsel %vm2034, 0.0, %v9119
        %v9121 = vrot.slane %v9114, 4
        %v9122 = vsel %vm2034, 0.0, %v9121
        %v9123 = vrot.slane %v2028, 4
        %v9124 = vsel %vm2034, 0.0, %v9123
        %v9126 = vunpack.c.l.s4 1983009808
        %v9127 = vunpack.c.0.s8 %v9126
        %v9128 = vperm.slane %v2028, %v9127
        %v9130 = vunpack.c.l.s4 1983009808
        %v9131 = vunpack.c.0.s8 %v9130
        %v9132 = vperm.slane %v9124, %v9131
        %v9133 = vrot.slane %v9128, 4
        %v9134 = vsel %vm2034, 0.0, %v9133
        %v9136 = vunpack.c.l.s4 1934713408
        %v9137 = vunpack.c.0.s8 %v9136
        %v9138 = vperm.slane %v9128, %v9137
        %v9140 = vunpack.c.l.s4 1934713408
        %v9141 = vunpack.c.0.s8 %v9140
        %v9142 = vperm.slane %v9134, %v9141
        %v9143 = vrot.slane %v9132, 4
        %v9144 = vsel %vm2034, 0.0, %v9143
        %v9146 = vunpack.c.l.s4 1934713408
        %v9147 = vunpack.c.0.s8 %v9146
        %v9148 = vperm.slane %v9132, %v9147
        %v9150 = vunpack.c.l.s4 1934713408
        %v9151 = vunpack.c.0.s8 %v9150
        %v9152 = vperm.slane %v9144, %v9151
        %v9153 = vrot.slane %v9138, 4
        %v9154 = vsel %vm2034, 0.0, %v9153
        %v9155 = vrot.slane %v9142, 4
        %v9156 = vsel %vm2034, 0.0, %v9155
        %v9157 = vrot.slane %v9148, 4
        %v9158 = vsel %vm2034, 0.0, %v9157
        %v9159 = vrot.slane %v9152, 4
        %v9160 = vsel %vm2034, 0.0, %v9159
        %v9161 = vrot.slane %v2029, 4
        %v9162 = vsel %vm2034, 0.0, %v9161
        %v9164 = vunpack.c.l.s4 1983009808
        %v9165 = vunpack.c.0.s8 %v9164
        %v9166 = vperm.slane %v2029, %v9165
        %v9168 = vunpack.c.l.s4 1983009808
        %v9169 = vunpack.c.0.s8 %v9168
        %v9170 = vperm.slane %v9162, %v9169
        %v9171 = vrot.slane %v9166, 4
        %v9172 = vsel %vm2034, 0.0, %v9171
        %v9174 = vunpack.c.l.s4 1934713408
        %v9175 = vunpack.c.0.s8 %v9174
        %v9176 = vperm.slane %v9166, %v9175
        %v9178 = vunpack.c.l.s4 1934713408
        %v9179 = vunpack.c.0.s8 %v9178
        %v9180 = vperm.slane %v9172, %v9179
        %v9181 = vrot.slane %v9170, 4
        %v9182 = vsel %vm2034, 0.0, %v9181
        %v9184 = vunpack.c.l.s4 1934713408
        %v9185 = vunpack.c.0.s8 %v9184
        %v9186 = vperm.slane %v9170, %v9185
        %v9188 = vunpack.c.l.s4 1934713408
        %v9189 = vunpack.c.0.s8 %v9188
        %v9190 = vperm.slane %v9182, %v9189
        %v9191 = vrot.slane %v9176, 4
        %v9192 = vsel %vm2034, 0.0, %v9191
        %v9193 = vrot.slane %v9180, 4
        %v9194 = vsel %vm2034, 0.0, %v9193
        %v9195 = vrot.slane %v9186, 4
        %v9196 = vsel %vm2034, 0.0, %v9195
        %v9197 = vrot.slane %v9190, 4
        %v9198 = vsel %vm2034, 0.0, %v9197
        %v9199 = vrot.slane %v2030, 4
        %v9200 = vsel %vm2034, 0.0, %v9199
        %v9202 = vunpack.c.l.s4 1983009808
        %v9203 = vunpack.c.0.s8 %v9202
        %v9204 = vperm.slane %v2030, %v9203
        %v9206 = vunpack.c.l.s4 1983009808
        %v9207 = vunpack.c.0.s8 %v9206
        %v9208 = vperm.slane %v9200, %v9207
        %v9209 = vrot.slane %v9204, 4
        %v9210 = vsel %vm2034, 0.0, %v9209
        %v9212 = vunpack.c.l.s4 1934713408
        %v9213 = vunpack.c.0.s8 %v9212
        %v9214 = vperm.slane %v9204, %v9213
        %v9216 = vunpack.c.l.s4 1934713408
        %v9217 = vunpack.c.0.s8 %v9216
        %v9218 = vperm.slane %v9210, %v9217
        %v9219 = vrot.slane %v9208, 4
        %v9220 = vsel %vm2034, 0.0, %v9219
        %v9222 = vunpack.c.l.s4 1934713408
        %v9223 = vunpack.c.0.s8 %v9222
        %v9224 = vperm.slane %v9208, %v9223
        %v9226 = vunpack.c.l.s4 1934713408
        %v9227 = vunpack.c.0.s8 %v9226
        %v9228 = vperm.slane %v9220, %v9227
        %v9229 = vrot.slane %v9214, 4
        %v9230 = vsel %vm2034, 0.0, %v9229
        %v9231 = vrot.slane %v9218, 4
        %v9232 = vsel %vm2034, 0.0, %v9231
        %v9233 = vrot.slane %v9224, 4
        %v9234 = vsel %vm2034, 0.0, %v9233
        %v9235 = vrot.slane %v9228, 4
        %v9236 = vsel %vm2034, 0.0, %v9235
        %v9237 = vrot.slane %v2031, 4
        %v9238 = vsel %vm2034, 0.0, %v9237
        %v9240 = vunpack.c.l.s4 1983009808
        %v9241 = vunpack.c.0.s8 %v9240
        %v9242 = vperm.slane %v2031, %v9241
        %v9244 = vunpack.c.l.s4 1983009808
        %v9245 = vunpack.c.0.s8 %v9244
        %v9246 = vperm.slane %v9238, %v9245
        %v9247 = vrot.slane %v9242, 4
        %v9248 = vsel %vm2034, 0.0, %v9247
        %v9250 = vunpack.c.l.s4 1934713408
        %v9251 = vunpack.c.0.s8 %v9250
        %v9252 = vperm.slane %v9242, %v9251
        %v9254 = vunpack.c.l.s4 1934713408
        %v9255 = vunpack.c.0.s8 %v9254
        %v9256 = vperm.slane %v9248, %v9255
        %v9257 = vrot.slane %v9246, 4
        %v9258 = vsel %vm2034, 0.0, %v9257
        %v9260 = vunpack.c.l.s4 1934713408
        %v9261 = vunpack.c.0.s8 %v9260
        %v9262 = vperm.slane %v9246, %v9261
        %v9264 = vunpack.c.l.s4 1934713408
        %v9265 = vunpack.c.0.s8 %v9264
        %v9266 = vperm.slane %v9258, %v9265
        %v9267 = vrot.slane %v9252, 4
        %v9268 = vsel %vm2034, 0.0, %v9267
        %v9269 = vrot.slane %v9256, 4
        %v9270 = vsel %vm2034, 0.0, %v9269
        %v9271 = vrot.slane %v9262, 4
        %v9272 = vsel %vm2034, 0.0, %v9271
        %v9273 = vrot.slane %v9266, 4
        %v9274 = vsel %vm2034, 0.0, %v9273
        %v9275 = vrot.slane %v2032, 4
        %v9276 = vsel %vm2034, 0.0, %v9275
        %v9278 = vunpack.c.l.s4 1983009808
        %v9279 = vunpack.c.0.s8 %v9278
        %v9280 = vperm.slane %v2032, %v9279
        %v9282 = vunpack.c.l.s4 1983009808
        %v9283 = vunpack.c.0.s8 %v9282
        %v9284 = vperm.slane %v9276, %v9283
        %v9285 = vrot.slane %v9280, 4
        %v9286 = vsel %vm2034, 0.0, %v9285
        %v9288 = vunpack.c.l.s4 1934713408
        %v9289 = vunpack.c.0.s8 %v9288
        %v9290 = vperm.slane %v9280, %v9289
        %v9292 = vunpack.c.l.s4 1934713408
        %v9293 = vunpack.c.0.s8 %v9292
        %v9294 = vperm.slane %v9286, %v9293
        %v9295 = vrot.slane %v9284, 4
        %v9296 = vsel %vm2034, 0.0, %v9295
        %v9298 = vunpack.c.l.s4 1934713408
        %v9299 = vunpack.c.0.s8 %v9298
        %v9300 = vperm.slane %v9284, %v9299
        %v9302 = vunpack.c.l.s4 1934713408
        %v9303 = vunpack.c.0.s8 %v9302
        %v9304 = vperm.slane %v9296, %v9303
        %v9305 = vrot.slane %v9290, 4
        %v9306 = vsel %vm2034, 0.0, %v9305
        %v9307 = vrot.slane %v9294, 4
        %v9308 = vsel %vm2034, 0.0, %v9307
        %v9309 = vrot.slane %v9300, 4
        %v9310 = vsel %vm2034, 0.0, %v9309
        %v9311 = vrot.slane %v9304, 4
        %v9312 = vsel %vm2034, 0.0, %v9311
        %9345 = vrot.lane.b32.xlu0 %v6912, 2
        %v9346 = vpop.permute.xlu0 %9345
        %9347 = vrot.lane.b32.xlu0 %v6988, 2
        %v9348 = vpop.permute.xlu0 %9347
        %9349 = vrot.lane.b32.xlu0 %v7064, 2
        %v9350 = vpop.permute.xlu0 %9349
        %9351 = vrot.lane.b32.xlu0 %v7140, 2
        %v9352 = vpop.permute.xlu0 %9351
        %9353 = vrot.lane.b32.xlu0 %v7216, 2
        %v9354 = vpop.permute.xlu0 %9353
        %9355 = vrot.lane.b32.xlu0 %v7292, 2
        %v9356 = vpop.permute.xlu0 %9355
        %9357 = vrot.lane.b32.xlu0 %v7368, 2
        %v9358 = vpop.permute.xlu0 %9357
        %9359 = vrot.lane.b32.xlu0 %v7444, 2
        %v9360 = vpop.permute.xlu0 %9359
        %9361 = vrot.lane.b32.xlu0 %v7520, 2
        %v9362 = vpop.permute.xlu0 %9361
        %9363 = vrot.lane.b32.xlu0 %v7596, 2
        %v9364 = vpop.permute.xlu0 %9363
        %9365 = vrot.lane.b32.xlu0 %v7672, 2
        %v9366 = vpop.permute.xlu0 %9365
        %9367 = vrot.lane.b32.xlu0 %v7748, 2
        %v9368 = vpop.permute.xlu0 %9367
        %9369 = vrot.lane.b32.xlu0 %v7824, 2
        %v9370 = vpop.permute.xlu0 %9369
        %9371 = vrot.lane.b32.xlu0 %v7900, 2
        %v9372 = vpop.permute.xlu0 %9371
        %9373 = vrot.lane.b32.xlu0 %v7976, 2
        %v9374 = vpop.permute.xlu0 %9373
        %9375 = vrot.lane.b32.xlu0 %v8052, 2
        %v9376 = vpop.permute.xlu0 %9375
        %9377 = vrot.lane.b32.xlu0 %v8128, 2
        %v9378 = vpop.permute.xlu0 %9377
        %9379 = vrot.lane.b32.xlu0 %v8204, 2
        %v9380 = vpop.permute.xlu0 %9379
        %9381 = vrot.lane.b32.xlu0 %v8280, 2
        %v9382 = vpop.permute.xlu0 %9381
        %9383 = vrot.lane.b32.xlu0 %v8356, 2
        %v9384 = vpop.permute.xlu0 %9383
        %9385 = vrot.lane.b32.xlu0 %v8432, 2
        %v9386 = vpop.permute.xlu0 %9385
        %9387 = vrot.lane.b32.xlu0 %v8508, 2
        %v9388 = vpop.permute.xlu0 %9387
        %9389 = vrot.lane.b32.xlu0 %v8584, 2
        %v9390 = vpop.permute.xlu0 %9389
        %9391 = vrot.lane.b32.xlu0 %v8660, 2
        %v9392 = vpop.permute.xlu0 %9391
        %9393 = vrot.lane.b32.xlu0 %v8736, 2
        %v9394 = vpop.permute.xlu0 %9393
        %9395 = vrot.lane.b32.xlu0 %v8812, 2
        %v9396 = vpop.permute.xlu0 %9395
        %9397 = vrot.lane.b32.xlu0 %v8888, 2
        %v9398 = vpop.permute.xlu0 %9397
        %9399 = vrot.lane.b32.xlu0 %v8964, 2
        %v9400 = vpop.permute.xlu0 %9399
        %9401 = vrot.lane.b32.xlu0 %v9040, 2
        %v9402 = vpop.permute.xlu0 %9401
        %9403 = vrot.lane.b32.xlu0 %v9116, 2
        %v9404 = vpop.permute.xlu0 %9403
        %9405 = vrot.lane.b32.xlu0 %v9192, 2
        %v9406 = vpop.permute.xlu0 %9405
        %9407 = vrot.lane.b32.xlu0 %v9268, 2
        %v9408 = vpop.permute.xlu0 %9407
        %9473 = vrot.lane.b32.xlu0 %v6900, 4
        %v9474 = vpop.permute.xlu0 %9473
        %9475 = vrot.lane.b32.xlu0 %v6976, 4
        %v9476 = vpop.permute.xlu0 %9475
        %9477 = vrot.lane.b32.xlu0 %v7052, 4
        %v9478 = vpop.permute.xlu0 %9477
        %9479 = vrot.lane.b32.xlu0 %v7128, 4
        %v9480 = vpop.permute.xlu0 %9479
        %9481 = vrot.lane.b32.xlu0 %v7204, 4
        %v9482 = vpop.permute.xlu0 %9481
        %9483 = vrot.lane.b32.xlu0 %v7280, 4
        %v9484 = vpop.permute.xlu0 %9483
        %9485 = vrot.lane.b32.xlu0 %v7356, 4
        %v9486 = vpop.permute.xlu0 %9485
        %9487 = vrot.lane.b32.xlu0 %v7432, 4
        %v9488 = vpop.permute.xlu0 %9487
        %9489 = vrot.lane.b32.xlu0 %v7508, 4
        %v9490 = vpop.permute.xlu0 %9489
        %9491 = vrot.lane.b32.xlu0 %v7584, 4
        %v9492 = vpop.permute.xlu0 %9491
        %9493 = vrot.lane.b32.xlu0 %v7660, 4
        %v9494 = vpop.permute.xlu0 %9493
        %9495 = vrot.lane.b32.xlu0 %v7736, 4
        %v9496 = vpop.permute.xlu0 %9495
        %9497 = vrot.lane.b32.xlu0 %v7812, 4
        %v9498 = vpop.permute.xlu0 %9497
        %9499 = vrot.lane.b32.xlu0 %v7888, 4
        %v9500 = vpop.permute.xlu0 %9499
        %9501 = vrot.lane.b32.xlu0 %v7964, 4
        %v9502 = vpop.permute.xlu0 %9501
        %9503 = vrot.lane.b32.xlu0 %v8040, 4
        %v9504 = vpop.permute.xlu0 %9503
        %9505 = vrot.lane.b32.xlu0 %v8116, 4
        %v9506 = vpop.permute.xlu0 %9505
        %9507 = vrot.lane.b32.xlu0 %v8192, 4
        %v9508 = vpop.permute.xlu0 %9507
        %9509 = vrot.lane.b32.xlu0 %v8268, 4
        %v9510 = vpop.permute.xlu0 %9509
        %9511 = vrot.lane.b32.xlu0 %v8344, 4
        %v9512 = vpop.permute.xlu0 %9511
        %9513 = vrot.lane.b32.xlu0 %v8420, 4
        %v9514 = vpop.permute.xlu0 %9513
        %9515 = vrot.lane.b32.xlu0 %v8496, 4
        %v9516 = vpop.permute.xlu0 %9515
        %9517 = vrot.lane.b32.xlu0 %v8572, 4
        %v9518 = vpop.permute.xlu0 %9517
        %9519 = vrot.lane.b32.xlu0 %v8648, 4
        %v9520 = vpop.permute.xlu0 %9519
        %9521 = vrot.lane.b32.xlu0 %v8724, 4
        %v9522 = vpop.permute.xlu0 %9521
        %9523 = vrot.lane.b32.xlu0 %v8800, 4
        %v9524 = vpop.permute.xlu0 %9523
        %9525 = vrot.lane.b32.xlu0 %v8876, 4
        %v9526 = vpop.permute.xlu0 %9525
        %9527 = vrot.lane.b32.xlu0 %v8952, 4
        %v9528 = vpop.permute.xlu0 %9527
        %9529 = vrot.lane.b32.xlu0 %v9028, 4
        %v9530 = vpop.permute.xlu0 %9529
        %9531 = vrot.lane.b32.xlu0 %v9104, 4
        %v9532 = vpop.permute.xlu0 %9531
        %9533 = vrot.lane.b32.xlu0 %v9180, 4
        %v9534 = vpop.permute.xlu0 %9533
        %9535 = vrot.lane.b32.xlu0 %v9256, 4
        %v9536 = vpop.permute.xlu0 %9535
        %9601 = vrot.lane.b32.xlu0 %v6914, 6
        %v9602 = vpop.permute.xlu0 %9601
        %9603 = vrot.lane.b32.xlu0 %v6990, 6
        %v9604 = vpop.permute.xlu0 %9603
        %9605 = vrot.lane.b32.xlu0 %v7066, 6
        %v9606 = vpop.permute.xlu0 %9605
        %9607 = vrot.lane.b32.xlu0 %v7142, 6
        %v9608 = vpop.permute.xlu0 %9607
        %9609 = vrot.lane.b32.xlu0 %v7218, 6
        %v9610 = vpop.permute.xlu0 %9609
        %9611 = vrot.lane.b32.xlu0 %v7294, 6
        %v9612 = vpop.permute.xlu0 %9611
        %9613 = vrot.lane.b32.xlu0 %v7370, 6
        %v9614 = vpop.permute.xlu0 %9613
        %9615 = vrot.lane.b32.xlu0 %v7446, 6
        %v9616 = vpop.permute.xlu0 %9615
        %9617 = vrot.lane.b32.xlu0 %v7522, 6
        %v9618 = vpop.permute.xlu0 %9617
        %9619 = vrot.lane.b32.xlu0 %v7598, 6
        %v9620 = vpop.permute.xlu0 %9619
        %9621 = vrot.lane.b32.xlu0 %v7674, 6
        %v9622 = vpop.permute.xlu0 %9621
        %9623 = vrot.lane.b32.xlu0 %v7750, 6
        %v9624 = vpop.permute.xlu0 %9623
        %9625 = vrot.lane.b32.xlu0 %v7826, 6
        %v9626 = vpop.permute.xlu0 %9625
        %9627 = vrot.lane.b32.xlu0 %v7902, 6
        %v9628 = vpop.permute.xlu0 %9627
        %9629 = vrot.lane.b32.xlu0 %v7978, 6
        %v9630 = vpop.permute.xlu0 %9629
        %9631 = vrot.lane.b32.xlu0 %v8054, 6
        %v9632 = vpop.permute.xlu0 %9631
        %9633 = vrot.lane.b32.xlu0 %v8130, 6
        %v9634 = vpop.permute.xlu0 %9633
        %9635 = vrot.lane.b32.xlu0 %v8206, 6
        %v9636 = vpop.permute.xlu0 %9635
        %9637 = vrot.lane.b32.xlu0 %v8282, 6
        %v9638 = vpop.permute.xlu0 %9637
        %9639 = vrot.lane.b32.xlu0 %v8358, 6
        %v9640 = vpop.permute.xlu0 %9639
        %9641 = vrot.lane.b32.xlu0 %v8434, 6
        %v9642 = vpop.permute.xlu0 %9641
        %9643 = vrot.lane.b32.xlu0 %v8510, 6
        %v9644 = vpop.permute.xlu0 %9643
        %9645 = vrot.lane.b32.xlu0 %v8586, 6
        %v9646 = vpop.permute.xlu0 %9645
        %9647 = vrot.lane.b32.xlu0 %v8662, 6
        %v9648 = vpop.permute.xlu0 %9647
        %9649 = vrot.lane.b32.xlu0 %v8738, 6
        %v9650 = vpop.permute.xlu0 %9649
        %9651 = vrot.lane.b32.xlu0 %v8814, 6
        %v9652 = vpop.permute.xlu0 %9651
        %9653 = vrot.lane.b32.xlu0 %v8890, 6
        %v9654 = vpop.permute.xlu0 %9653
        %9655 = vrot.lane.b32.xlu0 %v8966, 6
        %v9656 = vpop.permute.xlu0 %9655
        %9657 = vrot.lane.b32.xlu0 %v9042, 6
        %v9658 = vpop.permute.xlu0 %9657
        %9659 = vrot.lane.b32.xlu0 %v9118, 6
        %v9660 = vpop.permute.xlu0 %9659
        %9661 = vrot.lane.b32.xlu0 %v9194, 6
        %v9662 = vpop.permute.xlu0 %9661
        %9663 = vrot.lane.b32.xlu0 %v9270, 6
        %v9664 = vpop.permute.xlu0 %9663
        %9729 = vrot.lane.b32.xlu0 %v6906, 8
        %v9730 = vpop.permute.xlu0 %9729
        %9731 = vrot.lane.b32.xlu0 %v6982, 8
        %v9732 = vpop.permute.xlu0 %9731
        %9733 = vrot.lane.b32.xlu0 %v7058, 8
        %v9734 = vpop.permute.xlu0 %9733
        %9735 = vrot.lane.b32.xlu0 %v7134, 8
        %v9736 = vpop.permute.xlu0 %9735
        %9737 = vrot.lane.b32.xlu0 %v7210, 8
        %v9738 = vpop.permute.xlu0 %9737
        %9739 = vrot.lane.b32.xlu0 %v7286, 8
        %v9740 = vpop.permute.xlu0 %9739
        %9741 = vrot.lane.b32.xlu0 %v7362, 8
        %v9742 = vpop.permute.xlu0 %9741
        %9743 = vrot.lane.b32.xlu0 %v7438, 8
        %v9744 = vpop.permute.xlu0 %9743
        %9745 = vrot.lane.b32.xlu0 %v7514, 8
        %v9746 = vpop.permute.xlu0 %9745
        %9747 = vrot.lane.b32.xlu0 %v7590, 8
        %v9748 = vpop.permute.xlu0 %9747
        %9749 = vrot.lane.b32.xlu0 %v7666, 8
        %v9750 = vpop.permute.xlu0 %9749
        %9751 = vrot.lane.b32.xlu0 %v7742, 8
        %v9752 = vpop.permute.xlu0 %9751
        %9753 = vrot.lane.b32.xlu0 %v7818, 8
        %v9754 = vpop.permute.xlu0 %9753
        %9755 = vrot.lane.b32.xlu0 %v7894, 8
        %v9756 = vpop.permute.xlu0 %9755
        %9757 = vrot.lane.b32.xlu0 %v7970, 8
        %v9758 = vpop.permute.xlu0 %9757
        %9759 = vrot.lane.b32.xlu0 %v8046, 8
        %v9760 = vpop.permute.xlu0 %9759
        %9761 = vrot.lane.b32.xlu0 %v8122, 8
        %v9762 = vpop.permute.xlu0 %9761
        %9763 = vrot.lane.b32.xlu0 %v8198, 8
        %v9764 = vpop.permute.xlu0 %9763
        %9765 = vrot.lane.b32.xlu0 %v8274, 8
        %v9766 = vpop.permute.xlu0 %9765
        %9767 = vrot.lane.b32.xlu0 %v8350, 8
        %v9768 = vpop.permute.xlu0 %9767
        %9769 = vrot.lane.b32.xlu0 %v8426, 8
        %v9770 = vpop.permute.xlu0 %9769
        %9771 = vrot.lane.b32.xlu0 %v8502, 8
        %v9772 = vpop.permute.xlu0 %9771
        %9773 = vrot.lane.b32.xlu0 %v8578, 8
        %v9774 = vpop.permute.xlu0 %9773
        %9775 = vrot.lane.b32.xlu0 %v8654, 8
        %v9776 = vpop.permute.xlu0 %9775
        %9777 = vrot.lane.b32.xlu0 %v8730, 8
        %v9778 = vpop.permute.xlu0 %9777
        %9779 = vrot.lane.b32.xlu0 %v8806, 8
        %v9780 = vpop.permute.xlu0 %9779
        %9781 = vrot.lane.b32.xlu0 %v8882, 8
        %v9782 = vpop.permute.xlu0 %9781
        %9783 = vrot.lane.b32.xlu0 %v8958, 8
        %v9784 = vpop.permute.xlu0 %9783
        %9785 = vrot.lane.b32.xlu0 %v9034, 8
        %v9786 = vpop.permute.xlu0 %9785
        %9787 = vrot.lane.b32.xlu0 %v9110, 8
        %v9788 = vpop.permute.xlu0 %9787
        %9789 = vrot.lane.b32.xlu0 %v9186, 8
        %v9790 = vpop.permute.xlu0 %9789
        %9791 = vrot.lane.b32.xlu0 %v9262, 8
        %v9792 = vpop.permute.xlu0 %9791
        %9857 = vrot.lane.b32.xlu0 %v6916, 10
        %v9858 = vpop.permute.xlu0 %9857
        %9859 = vrot.lane.b32.xlu0 %v6992, 10
        %v9860 = vpop.permute.xlu0 %9859
        %9861 = vrot.lane.b32.xlu0 %v7068, 10
        %v9862 = vpop.permute.xlu0 %9861
        %9863 = vrot.lane.b32.xlu0 %v7144, 10
        %v9864 = vpop.permute.xlu0 %9863
        %9865 = vrot.lane.b32.xlu0 %v7220, 10
        %v9866 = vpop.permute.xlu0 %9865
        %9867 = vrot.lane.b32.xlu0 %v7296, 10
        %v9868 = vpop.permute.xlu0 %9867
        %9869 = vrot.lane.b32.xlu0 %v7372, 10
        %v9870 = vpop.permute.xlu0 %9869
        %9871 = vrot.lane.b32.xlu0 %v7448, 10
        %v9872 = vpop.permute.xlu0 %9871
        %9873 = vrot.lane.b32.xlu0 %v7524, 10
        %v9874 = vpop.permute.xlu0 %9873
        %9875 = vrot.lane.b32.xlu0 %v7600, 10
        %v9876 = vpop.permute.xlu0 %9875
        %9877 = vrot.lane.b32.xlu0 %v7676, 10
        %v9878 = vpop.permute.xlu0 %9877
        %9879 = vrot.lane.b32.xlu0 %v7752, 10
        %v9880 = vpop.permute.xlu0 %9879
        %9881 = vrot.lane.b32.xlu0 %v7828, 10
        %v9882 = vpop.permute.xlu0 %9881
        %9883 = vrot.lane.b32.xlu0 %v7904, 10
        %v9884 = vpop.permute.xlu0 %9883
        %9885 = vrot.lane.b32.xlu0 %v7980, 10
        %v9886 = vpop.permute.xlu0 %9885
        %9887 = vrot.lane.b32.xlu0 %v8056, 10
        %v9888 = vpop.permute.xlu0 %9887
        %9889 = vrot.lane.b32.xlu0 %v8132, 10
        %v9890 = vpop.permute.xlu0 %9889
        %9891 = vrot.lane.b32.xlu0 %v8208, 10
        %v9892 = vpop.permute.xlu0 %9891
        %9893 = vrot.lane.b32.xlu0 %v8284, 10
        %v9894 = vpop.permute.xlu0 %9893
        %9895 = vrot.lane.b32.xlu0 %v8360, 10
        %v9896 = vpop.permute.xlu0 %9895
        %9897 = vrot.lane.b32.xlu0 %v8436, 10
        %v9898 = vpop.permute.xlu0 %9897
        %9899 = vrot.lane.b32.xlu0 %v8512, 10
        %v9900 = vpop.permute.xlu0 %9899
        %9901 = vrot.lane.b32.xlu0 %v8588, 10
        %v9902 = vpop.permute.xlu0 %9901
        %9903 = vrot.lane.b32.xlu0 %v8664, 10
        %v9904 = vpop.permute.xlu0 %9903
        %9905 = vrot.lane.b32.xlu0 %v8740, 10
        %v9906 = vpop.permute.xlu0 %9905
        %9907 = vrot.lane.b32.xlu0 %v8816, 10
        %v9908 = vpop.permute.xlu0 %9907
        %9909 = vrot.lane.b32.xlu0 %v8892, 10
        %v9910 = vpop.permute.xlu0 %9909
        %9911 = vrot.lane.b32.xlu0 %v8968, 10
        %v9912 = vpop.permute.xlu0 %9911
        %9913 = vrot.lane.b32.xlu0 %v9044, 10
        %v9914 = vpop.permute.xlu0 %9913
        %9915 = vrot.lane.b32.xlu0 %v9120, 10
        %v9916 = vpop.permute.xlu0 %9915
        %9917 = vrot.lane.b32.xlu0 %v9196, 10
        %v9918 = vpop.permute.xlu0 %9917
        %9919 = vrot.lane.b32.xlu0 %v9272, 10
        %v9920 = vpop.permute.xlu0 %9919
        %9985 = vrot.lane.b32.xlu0 %v6910, 12
        %v9986 = vpop.permute.xlu0 %9985
        %9987 = vrot.lane.b32.xlu0 %v6986, 12
        %v9988 = vpop.permute.xlu0 %9987
        %9989 = vrot.lane.b32.xlu0 %v7062, 12
        %v9990 = vpop.permute.xlu0 %9989
        %9991 = vrot.lane.b32.xlu0 %v7138, 12
        %v9992 = vpop.permute.xlu0 %9991
        %9993 = vrot.lane.b32.xlu0 %v7214, 12
        %v9994 = vpop.permute.xlu0 %9993
        %9995 = vrot.lane.b32.xlu0 %v7290, 12
        %v9996 = vpop.permute.xlu0 %9995
        %9997 = vrot.lane.b32.xlu0 %v7366, 12
        %v9998 = vpop.permute.xlu0 %9997
        %9999 = vrot.lane.b32.xlu0 %v7442, 12
        %v10000 = vpop.permute.xlu0 %9999
        %10001 = vrot.lane.b32.xlu0 %v7518, 12
        %v10002 = vpop.permute.xlu0 %10001
        %10003 = vrot.lane.b32.xlu0 %v7594, 12
        %v10004 = vpop.permute.xlu0 %10003
        %10005 = vrot.lane.b32.xlu0 %v7670, 12
        %v10006 = vpop.permute.xlu0 %10005
        %10007 = vrot.lane.b32.xlu0 %v7746, 12
        %v10008 = vpop.permute.xlu0 %10007
        %10009 = vrot.lane.b32.xlu0 %v7822, 12
        %v10010 = vpop.permute.xlu0 %10009
        %10011 = vrot.lane.b32.xlu0 %v7898, 12
        %v10012 = vpop.permute.xlu0 %10011
        %10013 = vrot.lane.b32.xlu0 %v7974, 12
        %v10014 = vpop.permute.xlu0 %10013
        %10015 = vrot.lane.b32.xlu0 %v8050, 12
        %v10016 = vpop.permute.xlu0 %10015
        %10017 = vrot.lane.b32.xlu0 %v8126, 12
        %v10018 = vpop.permute.xlu0 %10017
        %10019 = vrot.lane.b32.xlu0 %v8202, 12
        %v10020 = vpop.permute.xlu0 %10019
        %10021 = vrot.lane.b32.xlu0 %v8278, 12
        %v10022 = vpop.permute.xlu0 %10021
        %10023 = vrot.lane.b32.xlu0 %v8354, 12
        %v10024 = vpop.permute.xlu0 %10023
        %10025 = vrot.lane.b32.xlu0 %v8430, 12
        %v10026 = vpop.permute.xlu0 %10025
        %10027 = vrot.lane.b32.xlu0 %v8506, 12
        %v10028 = vpop.permute.xlu0 %10027
        %10029 = vrot.lane.b32.xlu0 %v8582, 12
        %v10030 = vpop.permute.xlu0 %10029
        %10031 = vrot.lane.b32.xlu0 %v8658, 12
        %v10032 = vpop.permute.xlu0 %10031
        %10033 = vrot.lane.b32.xlu0 %v8734, 12
        %v10034 = vpop.permute.xlu0 %10033
        %10035 = vrot.lane.b32.xlu0 %v8810, 12
        %v10036 = vpop.permute.xlu0 %10035
        %10037 = vrot.lane.b32.xlu0 %v8886, 12
        %v10038 = vpop.permute.xlu0 %10037
        %10039 = vrot.lane.b32.xlu0 %v8962, 12
        %v10040 = vpop.permute.xlu0 %10039
        %10041 = vrot.lane.b32.xlu0 %v9038, 12
        %v10042 = vpop.permute.xlu0 %10041
        %10043 = vrot.lane.b32.xlu0 %v9114, 12
        %v10044 = vpop.permute.xlu0 %10043
        %10045 = vrot.lane.b32.xlu0 %v9190, 12
        %v10046 = vpop.permute.xlu0 %10045
        %10047 = vrot.lane.b32.xlu0 %v9266, 12
        %v10048 = vpop.permute.xlu0 %10047
        %10113 = vrot.lane.b32.xlu0 %v6918, 14
        %v10114 = vpop.permute.xlu0 %10113
        %10115 = vrot.lane.b32.xlu0 %v6994, 14
        %v10116 = vpop.permute.xlu0 %10115
        %10117 = vrot.lane.b32.xlu0 %v7070, 14
        %v10118 = vpop.permute.xlu0 %10117
        %10119 = vrot.lane.b32.xlu0 %v7146, 14
        %v10120 = vpop.permute.xlu0 %10119
        %10121 = vrot.lane.b32.xlu0 %v7222, 14
        %v10122 = vpop.permute.xlu0 %10121
        %10123 = vrot.lane.b32.xlu0 %v7298, 14
        %v10124 = vpop.permute.xlu0 %10123
        %10125 = vrot.lane.b32.xlu0 %v7374, 14
        %v10126 = vpop.permute.xlu0 %10125
        %10127 = vrot.lane.b32.xlu0 %v7450, 14
        %v10128 = vpop.permute.xlu0 %10127
        %10129 = vrot.lane.b32.xlu0 %v7526, 14
        %v10130 = vpop.permute.xlu0 %10129
        %10131 = vrot.lane.b32.xlu0 %v7602, 14
        %v10132 = vpop.permute.xlu0 %10131
        %10133 = vrot.lane.b32.xlu0 %v7678, 14
        %v10134 = vpop.permute.xlu0 %10133
        %10135 = vrot.lane.b32.xlu0 %v7754, 14
        %v10136 = vpop.permute.xlu0 %10135
        %10137 = vrot.lane.b32.xlu0 %v7830, 14
        %v10138 = vpop.permute.xlu0 %10137
        %10139 = vrot.lane.b32.xlu0 %v7906, 14
        %v10140 = vpop.permute.xlu0 %10139
        %10141 = vrot.lane.b32.xlu0 %v7982, 14
        %v10142 = vpop.permute.xlu0 %10141
        %10143 = vrot.lane.b32.xlu0 %v8058, 14
        %v10144 = vpop.permute.xlu0 %10143
        %10145 = vrot.lane.b32.xlu0 %v8134, 14
        %v10146 = vpop.permute.xlu0 %10145
        %10147 = vrot.lane.b32.xlu0 %v8210, 14
        %v10148 = vpop.permute.xlu0 %10147
        %10149 = vrot.lane.b32.xlu0 %v8286, 14
        %v10150 = vpop.permute.xlu0 %10149
        %10151 = vrot.lane.b32.xlu0 %v8362, 14
        %v10152 = vpop.permute.xlu0 %10151
        %10153 = vrot.lane.b32.xlu0 %v8438, 14
        %v10154 = vpop.permute.xlu0 %10153
        %10155 = vrot.lane.b32.xlu0 %v8514, 14
        %v10156 = vpop.permute.xlu0 %10155
        %10157 = vrot.lane.b32.xlu0 %v8590, 14
        %v10158 = vpop.permute.xlu0 %10157
        %10159 = vrot.lane.b32.xlu0 %v8666, 14
        %v10160 = vpop.permute.xlu0 %10159
        %10161 = vrot.lane.b32.xlu0 %v8742, 14
        %v10162 = vpop.permute.xlu0 %10161
        %10163 = vrot.lane.b32.xlu0 %v8818, 14
        %v10164 = vpop.permute.xlu0 %10163
        %10165 = vrot.lane.b32.xlu0 %v8894, 14
        %v10166 = vpop.permute.xlu0 %10165
        %10167 = vrot.lane.b32.xlu0 %v8970, 14
        %v10168 = vpop.permute.xlu0 %10167
        %10169 = vrot.lane.b32.xlu0 %v9046, 14
        %v10170 = vpop.permute.xlu0 %10169
        %10171 = vrot.lane.b32.xlu0 %v9122, 14
        %v10172 = vpop.permute.xlu0 %10171
        %10173 = vrot.lane.b32.xlu0 %v9198, 14
        %v10174 = vpop.permute.xlu0 %10173
        %10175 = vrot.lane.b32.xlu0 %v9274, 14
        %v10176 = vpop.permute.xlu0 %10175
        %10241 = vrot.lane.b32.xlu0 %v6934, 16
        %v10242 = vpop.permute.xlu0 %10241
        %10243 = vrot.lane.b32.xlu0 %v7010, 16
        %v10244 = vpop.permute.xlu0 %10243
        %10245 = vrot.lane.b32.xlu0 %v7086, 16
        %v10246 = vpop.permute.xlu0 %10245
        %10247 = vrot.lane.b32.xlu0 %v7162, 16
        %v10248 = vpop.permute.xlu0 %10247
        %10249 = vrot.lane.b32.xlu0 %v7238, 16
        %v10250 = vpop.permute.xlu0 %10249
        %10251 = vrot.lane.b32.xlu0 %v7314, 16
        %v10252 = vpop.permute.xlu0 %10251
        %10253 = vrot.lane.b32.xlu0 %v7390, 16
        %v10254 = vpop.permute.xlu0 %10253
        %10255 = vrot.lane.b32.xlu0 %v7466, 16
        %v10256 = vpop.permute.xlu0 %10255
        %10257 = vrot.lane.b32.xlu0 %v7542, 16
        %v10258 = vpop.permute.xlu0 %10257
        %10259 = vrot.lane.b32.xlu0 %v7618, 16
        %v10260 = vpop.permute.xlu0 %10259
        %10261 = vrot.lane.b32.xlu0 %v7694, 16
        %v10262 = vpop.permute.xlu0 %10261
        %10263 = vrot.lane.b32.xlu0 %v7770, 16
        %v10264 = vpop.permute.xlu0 %10263
        %10265 = vrot.lane.b32.xlu0 %v7846, 16
        %v10266 = vpop.permute.xlu0 %10265
        %10267 = vrot.lane.b32.xlu0 %v7922, 16
        %v10268 = vpop.permute.xlu0 %10267
        %10269 = vrot.lane.b32.xlu0 %v7998, 16
        %v10270 = vpop.permute.xlu0 %10269
        %10271 = vrot.lane.b32.xlu0 %v8074, 16
        %v10272 = vpop.permute.xlu0 %10271
        %10273 = vrot.lane.b32.xlu0 %v8150, 16
        %v10274 = vpop.permute.xlu0 %10273
        %10275 = vrot.lane.b32.xlu0 %v8226, 16
        %v10276 = vpop.permute.xlu0 %10275
        %10277 = vrot.lane.b32.xlu0 %v8302, 16
        %v10278 = vpop.permute.xlu0 %10277
        %10279 = vrot.lane.b32.xlu0 %v8378, 16
        %v10280 = vpop.permute.xlu0 %10279
        %10281 = vrot.lane.b32.xlu0 %v8454, 16
        %v10282 = vpop.permute.xlu0 %10281
        %10283 = vrot.lane.b32.xlu0 %v8530, 16
        %v10284 = vpop.permute.xlu0 %10283
        %10285 = vrot.lane.b32.xlu0 %v8606, 16
        %v10286 = vpop.permute.xlu0 %10285
        %10287 = vrot.lane.b32.xlu0 %v8682, 16
        %v10288 = vpop.permute.xlu0 %10287
        %10289 = vrot.lane.b32.xlu0 %v8758, 16
        %v10290 = vpop.permute.xlu0 %10289
        %10291 = vrot.lane.b32.xlu0 %v8834, 16
        %v10292 = vpop.permute.xlu0 %10291
        %10293 = vrot.lane.b32.xlu0 %v8910, 16
        %v10294 = vpop.permute.xlu0 %10293
        %10295 = vrot.lane.b32.xlu0 %v8986, 16
        %v10296 = vpop.permute.xlu0 %10295
        %10297 = vrot.lane.b32.xlu0 %v9062, 16
        %v10298 = vpop.permute.xlu0 %10297
        %10299 = vrot.lane.b32.xlu0 %v9138, 16
        %v10300 = vpop.permute.xlu0 %10299
        %10301 = vrot.lane.b32.xlu0 %v9214, 16
        %v10302 = vpop.permute.xlu0 %10301
        %10303 = vrot.lane.b32.xlu0 %v9290, 16
        %v10304 = vpop.permute.xlu0 %10303
        %10369 = vrot.lane.b32.xlu0 %v6950, 18
        %v10370 = vpop.permute.xlu0 %10369
        %10371 = vrot.lane.b32.xlu0 %v7026, 18
        %v10372 = vpop.permute.xlu0 %10371
        %10373 = vrot.lane.b32.xlu0 %v7102, 18
        %v10374 = vpop.permute.xlu0 %10373
        %10375 = vrot.lane.b32.xlu0 %v7178, 18
        %v10376 = vpop.permute.xlu0 %10375
        %10377 = vrot.lane.b32.xlu0 %v7254, 18
        %v10378 = vpop.permute.xlu0 %10377
        %10379 = vrot.lane.b32.xlu0 %v7330, 18
        %v10380 = vpop.permute.xlu0 %10379
        %10381 = vrot.lane.b32.xlu0 %v7406, 18
        %v10382 = vpop.permute.xlu0 %10381
        %10383 = vrot.lane.b32.xlu0 %v7482, 18
        %v10384 = vpop.permute.xlu0 %10383
        %10385 = vrot.lane.b32.xlu0 %v7558, 18
        %v10386 = vpop.permute.xlu0 %10385
        %10387 = vrot.lane.b32.xlu0 %v7634, 18
        %v10388 = vpop.permute.xlu0 %10387
        %10389 = vrot.lane.b32.xlu0 %v7710, 18
        %v10390 = vpop.permute.xlu0 %10389
        %10391 = vrot.lane.b32.xlu0 %v7786, 18
        %v10392 = vpop.permute.xlu0 %10391
        %10393 = vrot.lane.b32.xlu0 %v7862, 18
        %v10394 = vpop.permute.xlu0 %10393
        %10395 = vrot.lane.b32.xlu0 %v7938, 18
        %v10396 = vpop.permute.xlu0 %10395
        %10397 = vrot.lane.b32.xlu0 %v8014, 18
        %v10398 = vpop.permute.xlu0 %10397
        %10399 = vrot.lane.b32.xlu0 %v8090, 18
        %v10400 = vpop.permute.xlu0 %10399
        %10401 = vrot.lane.b32.xlu0 %v8166, 18
        %v10402 = vpop.permute.xlu0 %10401
        %10403 = vrot.lane.b32.xlu0 %v8242, 18
        %v10404 = vpop.permute.xlu0 %10403
        %10405 = vrot.lane.b32.xlu0 %v8318, 18
        %v10406 = vpop.permute.xlu0 %10405
        %10407 = vrot.lane.b32.xlu0 %v8394, 18
        %v10408 = vpop.permute.xlu0 %10407
        %10409 = vrot.lane.b32.xlu0 %v8470, 18
        %v10410 = vpop.permute.xlu0 %10409
        %10411 = vrot.lane.b32.xlu0 %v8546, 18
        %v10412 = vpop.permute.xlu0 %10411
        %10413 = vrot.lane.b32.xlu0 %v8622, 18
        %v10414 = vpop.permute.xlu0 %10413
        %10415 = vrot.lane.b32.xlu0 %v8698, 18
        %v10416 = vpop.permute.xlu0 %10415
        %10417 = vrot.lane.b32.xlu0 %v8774, 18
        %v10418 = vpop.permute.xlu0 %10417
        %10419 = vrot.lane.b32.xlu0 %v8850, 18
        %v10420 = vpop.permute.xlu0 %10419
        %10421 = vrot.lane.b32.xlu0 %v8926, 18
        %v10422 = vpop.permute.xlu0 %10421
        %10423 = vrot.lane.b32.xlu0 %v9002, 18
        %v10424 = vpop.permute.xlu0 %10423
        %10425 = vrot.lane.b32.xlu0 %v9078, 18
        %v10426 = vpop.permute.xlu0 %10425
        %10427 = vrot.lane.b32.xlu0 %v9154, 18
        %v10428 = vpop.permute.xlu0 %10427
        %10429 = vrot.lane.b32.xlu0 %v9230, 18
        %v10430 = vpop.permute.xlu0 %10429
        %10431 = vrot.lane.b32.xlu0 %v9306, 18
        %v10432 = vpop.permute.xlu0 %10431
        %10497 = vrot.lane.b32.xlu0 %v6938, 20
        %v10498 = vpop.permute.xlu0 %10497
        %10499 = vrot.lane.b32.xlu0 %v7014, 20
        %v10500 = vpop.permute.xlu0 %10499
        %10501 = vrot.lane.b32.xlu0 %v7090, 20
        %v10502 = vpop.permute.xlu0 %10501
        %10503 = vrot.lane.b32.xlu0 %v7166, 20
        %v10504 = vpop.permute.xlu0 %10503
        %10505 = vrot.lane.b32.xlu0 %v7242, 20
        %v10506 = vpop.permute.xlu0 %10505
        %10507 = vrot.lane.b32.xlu0 %v7318, 20
        %v10508 = vpop.permute.xlu0 %10507
        %10509 = vrot.lane.b32.xlu0 %v7394, 20
        %v10510 = vpop.permute.xlu0 %10509
        %10511 = vrot.lane.b32.xlu0 %v7470, 20
        %v10512 = vpop.permute.xlu0 %10511
        %10513 = vrot.lane.b32.xlu0 %v7546, 20
        %v10514 = vpop.permute.xlu0 %10513
        %10515 = vrot.lane.b32.xlu0 %v7622, 20
        %v10516 = vpop.permute.xlu0 %10515
        %10517 = vrot.lane.b32.xlu0 %v7698, 20
        %v10518 = vpop.permute.xlu0 %10517
        %10519 = vrot.lane.b32.xlu0 %v7774, 20
        %v10520 = vpop.permute.xlu0 %10519
        %10521 = vrot.lane.b32.xlu0 %v7850, 20
        %v10522 = vpop.permute.xlu0 %10521
        %10523 = vrot.lane.b32.xlu0 %v7926, 20
        %v10524 = vpop.permute.xlu0 %10523
        %10525 = vrot.lane.b32.xlu0 %v8002, 20
        %v10526 = vpop.permute.xlu0 %10525
        %10527 = vrot.lane.b32.xlu0 %v8078, 20
        %v10528 = vpop.permute.xlu0 %10527
        %10529 = vrot.lane.b32.xlu0 %v8154, 20
        %v10530 = vpop.permute.xlu0 %10529
        %10531 = vrot.lane.b32.xlu0 %v8230, 20
        %v10532 = vpop.permute.xlu0 %10531
        %10533 = vrot.lane.b32.xlu0 %v8306, 20
        %v10534 = vpop.permute.xlu0 %10533
        %10535 = vrot.lane.b32.xlu0 %v8382, 20
        %v10536 = vpop.permute.xlu0 %10535
        %10537 = vrot.lane.b32.xlu0 %v8458, 20
        %v10538 = vpop.permute.xlu0 %10537
        %10539 = vrot.lane.b32.xlu0 %v8534, 20
        %v10540 = vpop.permute.xlu0 %10539
        %10541 = vrot.lane.b32.xlu0 %v8610, 20
        %v10542 = vpop.permute.xlu0 %10541
        %10543 = vrot.lane.b32.xlu0 %v8686, 20
        %v10544 = vpop.permute.xlu0 %10543
        %10545 = vrot.lane.b32.xlu0 %v8762, 20
        %v10546 = vpop.permute.xlu0 %10545
        %10547 = vrot.lane.b32.xlu0 %v8838, 20
        %v10548 = vpop.permute.xlu0 %10547
        %10549 = vrot.lane.b32.xlu0 %v8914, 20
        %v10550 = vpop.permute.xlu0 %10549
        %10551 = vrot.lane.b32.xlu0 %v8990, 20
        %v10552 = vpop.permute.xlu0 %10551
        %10553 = vrot.lane.b32.xlu0 %v9066, 20
        %v10554 = vpop.permute.xlu0 %10553
        %10555 = vrot.lane.b32.xlu0 %v9142, 20
        %v10556 = vpop.permute.xlu0 %10555
        %10557 = vrot.lane.b32.xlu0 %v9218, 20
        %v10558 = vpop.permute.xlu0 %10557
        %10559 = vrot.lane.b32.xlu0 %v9294, 20
        %v10560 = vpop.permute.xlu0 %10559
        %10625 = vrot.lane.b32.xlu0 %v6952, 22
        %v10626 = vpop.permute.xlu0 %10625
        %10627 = vrot.lane.b32.xlu0 %v7028, 22
        %v10628 = vpop.permute.xlu0 %10627
        %10629 = vrot.lane.b32.xlu0 %v7104, 22
        %v10630 = vpop.permute.xlu0 %10629
        %10631 = vrot.lane.b32.xlu0 %v7180, 22
        %v10632 = vpop.permute.xlu0 %10631
        %10633 = vrot.lane.b32.xlu0 %v7256, 22
        %v10634 = vpop.permute.xlu0 %10633
        %10635 = vrot.lane.b32.xlu0 %v7332, 22
        %v10636 = vpop.permute.xlu0 %10635
        %10637 = vrot.lane.b32.xlu0 %v7408, 22
        %v10638 = vpop.permute.xlu0 %10637
        %10639 = vrot.lane.b32.xlu0 %v7484, 22
        %v10640 = vpop.permute.xlu0 %10639
        %10641 = vrot.lane.b32.xlu0 %v7560, 22
        %v10642 = vpop.permute.xlu0 %10641
        %10643 = vrot.lane.b32.xlu0 %v7636, 22
        %v10644 = vpop.permute.xlu0 %10643
        %10645 = vrot.lane.b32.xlu0 %v7712, 22
        %v10646 = vpop.permute.xlu0 %10645
        %10647 = vrot.lane.b32.xlu0 %v7788, 22
        %v10648 = vpop.permute.xlu0 %10647
        %10649 = vrot.lane.b32.xlu0 %v7864, 22
        %v10650 = vpop.permute.xlu0 %10649
        %10651 = vrot.lane.b32.xlu0 %v7940, 22
        %v10652 = vpop.permute.xlu0 %10651
        %10653 = vrot.lane.b32.xlu0 %v8016, 22
        %v10654 = vpop.permute.xlu0 %10653
        %10655 = vrot.lane.b32.xlu0 %v8092, 22
        %v10656 = vpop.permute.xlu0 %10655
        %10657 = vrot.lane.b32.xlu0 %v8168, 22
        %v10658 = vpop.permute.xlu0 %10657
        %10659 = vrot.lane.b32.xlu0 %v8244, 22
        %v10660 = vpop.permute.xlu0 %10659
        %10661 = vrot.lane.b32.xlu0 %v8320, 22
        %v10662 = vpop.permute.xlu0 %10661
        %10663 = vrot.lane.b32.xlu0 %v8396, 22
        %v10664 = vpop.permute.xlu0 %10663
        %10665 = vrot.lane.b32.xlu0 %v8472, 22
        %v10666 = vpop.permute.xlu0 %10665
        %10667 = vrot.lane.b32.xlu0 %v8548, 22
        %v10668 = vpop.permute.xlu0 %10667
        %10669 = vrot.lane.b32.xlu0 %v8624, 22
        %v10670 = vpop.permute.xlu0 %10669
        %10671 = vrot.lane.b32.xlu0 %v8700, 22
        %v10672 = vpop.permute.xlu0 %10671
        %10673 = vrot.lane.b32.xlu0 %v8776, 22
        %v10674 = vpop.permute.xlu0 %10673
        %10675 = vrot.lane.b32.xlu0 %v8852, 22
        %v10676 = vpop.permute.xlu0 %10675
        %10677 = vrot.lane.b32.xlu0 %v8928, 22
        %v10678 = vpop.permute.xlu0 %10677
        %10679 = vrot.lane.b32.xlu0 %v9004, 22
        %v10680 = vpop.permute.xlu0 %10679
        %10681 = vrot.lane.b32.xlu0 %v9080, 22
        %v10682 = vpop.permute.xlu0 %10681
        %10683 = vrot.lane.b32.xlu0 %v9156, 22
        %v10684 = vpop.permute.xlu0 %10683
        %10685 = vrot.lane.b32.xlu0 %v9232, 22
        %v10686 = vpop.permute.xlu0 %10685
        %10687 = vrot.lane.b32.xlu0 %v9308, 22
        %v10688 = vpop.permute.xlu0 %10687
        %10753 = vrot.lane.b32.xlu0 %v6944, 24
        %v10754 = vpop.permute.xlu0 %10753
        %10755 = vrot.lane.b32.xlu0 %v7020, 24
        %v10756 = vpop.permute.xlu0 %10755
        %10757 = vrot.lane.b32.xlu0 %v7096, 24
        %v10758 = vpop.permute.xlu0 %10757
        %10759 = vrot.lane.b32.xlu0 %v7172, 24
        %v10760 = vpop.permute.xlu0 %10759
        %10761 = vrot.lane.b32.xlu0 %v7248, 24
        %v10762 = vpop.permute.xlu0 %10761
        %10763 = vrot.lane.b32.xlu0 %v7324, 24
        %v10764 = vpop.permute.xlu0 %10763
        %10765 = vrot.lane.b32.xlu0 %v7400, 24
        %v10766 = vpop.permute.xlu0 %10765
        %10767 = vrot.lane.b32.xlu0 %v7476, 24
        %v10768 = vpop.permute.xlu0 %10767
        %10769 = vrot.lane.b32.xlu0 %v7552, 24
        %v10770 = vpop.permute.xlu0 %10769
        %10771 = vrot.lane.b32.xlu0 %v7628, 24
        %v10772 = vpop.permute.xlu0 %10771
        %10773 = vrot.lane.b32.xlu0 %v7704, 24
        %v10774 = vpop.permute.xlu0 %10773
        %10775 = vrot.lane.b32.xlu0 %v7780, 24
        %v10776 = vpop.permute.xlu0 %10775
        %10777 = vrot.lane.b32.xlu0 %v7856, 24
        %v10778 = vpop.permute.xlu0 %10777
        %10779 = vrot.lane.b32.xlu0 %v7932, 24
        %v10780 = vpop.permute.xlu0 %10779
        %10781 = vrot.lane.b32.xlu0 %v8008, 24
        %v10782 = vpop.permute.xlu0 %10781
        %10783 = vrot.lane.b32.xlu0 %v8084, 24
        %v10784 = vpop.permute.xlu0 %10783
        %10785 = vrot.lane.b32.xlu0 %v8160, 24
        %v10786 = vpop.permute.xlu0 %10785
        %10787 = vrot.lane.b32.xlu0 %v8236, 24
        %v10788 = vpop.permute.xlu0 %10787
        %10789 = vrot.lane.b32.xlu0 %v8312, 24
        %v10790 = vpop.permute.xlu0 %10789
        %10791 = vrot.lane.b32.xlu0 %v8388, 24
        %v10792 = vpop.permute.xlu0 %10791
        %10793 = vrot.lane.b32.xlu0 %v8464, 24
        %v10794 = vpop.permute.xlu0 %10793
        %10795 = vrot.lane.b32.xlu0 %v8540, 24
        %v10796 = vpop.permute.xlu0 %10795
        %10797 = vrot.lane.b32.xlu0 %v8616, 24
        %v10798 = vpop.permute.xlu0 %10797
        %10799 = vrot.lane.b32.xlu0 %v8692, 24
        %v10800 = vpop.permute.xlu0 %10799
        %10801 = vrot.lane.b32.xlu0 %v8768, 24
        %v10802 = vpop.permute.xlu0 %10801
        %10803 = vrot.lane.b32.xlu0 %v8844, 24
        %v10804 = vpop.permute.xlu0 %10803
        %10805 = vrot.lane.b32.xlu0 %v8920, 24
        %v10806 = vpop.permute.xlu0 %10805
        %10807 = vrot.lane.b32.xlu0 %v8996, 24
        %v10808 = vpop.permute.xlu0 %10807
        %10809 = vrot.lane.b32.xlu0 %v9072, 24
        %v10810 = vpop.permute.xlu0 %10809
        %10811 = vrot.lane.b32.xlu0 %v9148, 24
        %v10812 = vpop.permute.xlu0 %10811
        %10813 = vrot.lane.b32.xlu0 %v9224, 24
        %v10814 = vpop.permute.xlu0 %10813
        %10815 = vrot.lane.b32.xlu0 %v9300, 24
        %v10816 = vpop.permute.xlu0 %10815
        %10881 = vrot.lane.b32.xlu0 %v6954, 26
        %v10882 = vpop.permute.xlu0 %10881
        %10883 = vrot.lane.b32.xlu0 %v7030, 26
        %v10884 = vpop.permute.xlu0 %10883
        %10885 = vrot.lane.b32.xlu0 %v7106, 26
        %v10886 = vpop.permute.xlu0 %10885
        %10887 = vrot.lane.b32.xlu0 %v7182, 26
        %v10888 = vpop.permute.xlu0 %10887
        %10889 = vrot.lane.b32.xlu0 %v7258, 26
        %v10890 = vpop.permute.xlu0 %10889
        %10891 = vrot.lane.b32.xlu0 %v7334, 26
        %v10892 = vpop.permute.xlu0 %10891
        %10893 = vrot.lane.b32.xlu0 %v7410, 26
        %v10894 = vpop.permute.xlu0 %10893
        %10895 = vrot.lane.b32.xlu0 %v7486, 26
        %v10896 = vpop.permute.xlu0 %10895
        %10897 = vrot.lane.b32.xlu0 %v7562, 26
        %v10898 = vpop.permute.xlu0 %10897
        %10899 = vrot.lane.b32.xlu0 %v7638, 26
        %v10900 = vpop.permute.xlu0 %10899
        %10901 = vrot.lane.b32.xlu0 %v7714, 26
        %v10902 = vpop.permute.xlu0 %10901
        %10903 = vrot.lane.b32.xlu0 %v7790, 26
        %v10904 = vpop.permute.xlu0 %10903
        %10905 = vrot.lane.b32.xlu0 %v7866, 26
        %v10906 = vpop.permute.xlu0 %10905
        %10907 = vrot.lane.b32.xlu0 %v7942, 26
        %v10908 = vpop.permute.xlu0 %10907
        %10909 = vrot.lane.b32.xlu0 %v8018, 26
        %v10910 = vpop.permute.xlu0 %10909
        %10911 = vrot.lane.b32.xlu0 %v8094, 26
        %v10912 = vpop.permute.xlu0 %10911
        %10913 = vrot.lane.b32.xlu0 %v8170, 26
        %v10914 = vpop.permute.xlu0 %10913
        %10915 = vrot.lane.b32.xlu0 %v8246, 26
        %v10916 = vpop.permute.xlu0 %10915
        %10917 = vrot.lane.b32.xlu0 %v8322, 26
        %v10918 = vpop.permute.xlu0 %10917
        %10919 = vrot.lane.b32.xlu0 %v8398, 26
        %v10920 = vpop.permute.xlu0 %10919
        %10921 = vrot.lane.b32.xlu0 %v8474, 26
        %v10922 = vpop.permute.xlu0 %10921
        %10923 = vrot.lane.b32.xlu0 %v8550, 26
        %v10924 = vpop.permute.xlu0 %10923
        %10925 = vrot.lane.b32.xlu0 %v8626, 26
        %v10926 = vpop.permute.xlu0 %10925
        %10927 = vrot.lane.b32.xlu0 %v8702, 26
        %v10928 = vpop.permute.xlu0 %10927
        %10929 = vrot.lane.b32.xlu0 %v8778, 26
        %v10930 = vpop.permute.xlu0 %10929
        %10931 = vrot.lane.b32.xlu0 %v8854, 26
        %v10932 = vpop.permute.xlu0 %10931
        %10933 = vrot.lane.b32.xlu0 %v8930, 26
        %v10934 = vpop.permute.xlu0 %10933
        %10935 = vrot.lane.b32.xlu0 %v9006, 26
        %v10936 = vpop.permute.xlu0 %10935
        %10937 = vrot.lane.b32.xlu0 %v9082, 26
        %v10938 = vpop.permute.xlu0 %10937
        %10939 = vrot.lane.b32.xlu0 %v9158, 26
        %v10940 = vpop.permute.xlu0 %10939
        %10941 = vrot.lane.b32.xlu0 %v9234, 26
        %v10942 = vpop.permute.xlu0 %10941
        %10943 = vrot.lane.b32.xlu0 %v9310, 26
        %v10944 = vpop.permute.xlu0 %10943
        %11009 = vrot.lane.b32.xlu0 %v6948, 28
        %v11010 = vpop.permute.xlu0 %11009
        %11011 = vrot.lane.b32.xlu0 %v7024, 28
        %v11012 = vpop.permute.xlu0 %11011
        %11013 = vrot.lane.b32.xlu0 %v7100, 28
        %v11014 = vpop.permute.xlu0 %11013
        %11015 = vrot.lane.b32.xlu0 %v7176, 28
        %v11016 = vpop.permute.xlu0 %11015
        %11017 = vrot.lane.b32.xlu0 %v7252, 28
        %v11018 = vpop.permute.xlu0 %11017
        %11019 = vrot.lane.b32.xlu0 %v7328, 28
        %v11020 = vpop.permute.xlu0 %11019
        %11021 = vrot.lane.b32.xlu0 %v7404, 28
        %v11022 = vpop.permute.xlu0 %11021
        %11023 = vrot.lane.b32.xlu0 %v7480, 28
        %v11024 = vpop.permute.xlu0 %11023
        %11025 = vrot.lane.b32.xlu0 %v7556, 28
        %v11026 = vpop.permute.xlu0 %11025
        %11027 = vrot.lane.b32.xlu0 %v7632, 28
        %v11028 = vpop.permute.xlu0 %11027
        %11029 = vrot.lane.b32.xlu0 %v7708, 28
        %v11030 = vpop.permute.xlu0 %11029
        %11031 = vrot.lane.b32.xlu0 %v7784, 28
        %v11032 = vpop.permute.xlu0 %11031
        %11033 = vrot.lane.b32.xlu0 %v7860, 28
        %v11034 = vpop.permute.xlu0 %11033
        %11035 = vrot.lane.b32.xlu0 %v7936, 28
        %v11036 = vpop.permute.xlu0 %11035
        %11037 = vrot.lane.b32.xlu0 %v8012, 28
        %v11038 = vpop.permute.xlu0 %11037
        %11039 = vrot.lane.b32.xlu0 %v8088, 28
        %v11040 = vpop.permute.xlu0 %11039
        %11041 = vrot.lane.b32.xlu0 %v8164, 28
        %v11042 = vpop.permute.xlu0 %11041
        %11043 = vrot.lane.b32.xlu0 %v8240, 28
        %v11044 = vpop.permute.xlu0 %11043
        %11045 = vrot.lane.b32.xlu0 %v8316, 28
        %v11046 = vpop.permute.xlu0 %11045
        %11047 = vrot.lane.b32.xlu0 %v8392, 28
        %v11048 = vpop.permute.xlu0 %11047
        %11049 = vrot.lane.b32.xlu0 %v8468, 28
        %v11050 = vpop.permute.xlu0 %11049
        %11051 = vrot.lane.b32.xlu0 %v8544, 28
        %v11052 = vpop.permute.xlu0 %11051
        %11053 = vrot.lane.b32.xlu0 %v8620, 28
        %v11054 = vpop.permute.xlu0 %11053
        %11055 = vrot.lane.b32.xlu0 %v8696, 28
        %v11056 = vpop.permute.xlu0 %11055
        %11057 = vrot.lane.b32.xlu0 %v8772, 28
        %v11058 = vpop.permute.xlu0 %11057
        %11059 = vrot.lane.b32.xlu0 %v8848, 28
        %v11060 = vpop.permute.xlu0 %11059
        %11061 = vrot.lane.b32.xlu0 %v8924, 28
        %v11062 = vpop.permute.xlu0 %11061
        %11063 = vrot.lane.b32.xlu0 %v9000, 28
        %v11064 = vpop.permute.xlu0 %11063
        %11065 = vrot.lane.b32.xlu0 %v9076, 28
        %v11066 = vpop.permute.xlu0 %11065
        %11067 = vrot.lane.b32.xlu0 %v9152, 28
        %v11068 = vpop.permute.xlu0 %11067
        %11069 = vrot.lane.b32.xlu0 %v9228, 28
        %v11070 = vpop.permute.xlu0 %11069
        %11071 = vrot.lane.b32.xlu0 %v9304, 28
        %v11072 = vpop.permute.xlu0 %11071
        %11137 = vrot.lane.b32.xlu0 %v6956, 30
        %v11138 = vpop.permute.xlu0 %11137
        %11139 = vrot.lane.b32.xlu0 %v7032, 30
        %v11140 = vpop.permute.xlu0 %11139
        %11141 = vrot.lane.b32.xlu0 %v7108, 30
        %v11142 = vpop.permute.xlu0 %11141
        %11143 = vrot.lane.b32.xlu0 %v7184, 30
        %v11144 = vpop.permute.xlu0 %11143
        %11145 = vrot.lane.b32.xlu0 %v7260, 30
        %v11146 = vpop.permute.xlu0 %11145
        %11147 = vrot.lane.b32.xlu0 %v7336, 30
        %v11148 = vpop.permute.xlu0 %11147
        %11149 = vrot.lane.b32.xlu0 %v7412, 30
        %v11150 = vpop.permute.xlu0 %11149
        %11151 = vrot.lane.b32.xlu0 %v7488, 30
        %v11152 = vpop.permute.xlu0 %11151
        %11153 = vrot.lane.b32.xlu0 %v7564, 30
        %v11154 = vpop.permute.xlu0 %11153
        %11155 = vrot.lane.b32.xlu0 %v7640, 30
        %v11156 = vpop.permute.xlu0 %11155
        %11157 = vrot.lane.b32.xlu0 %v7716, 30
        %v11158 = vpop.permute.xlu0 %11157
        %11159 = vrot.lane.b32.xlu0 %v7792, 30
        %v11160 = vpop.permute.xlu0 %11159
        %11161 = vrot.lane.b32.xlu0 %v7868, 30
        %v11162 = vpop.permute.xlu0 %11161
        %11163 = vrot.lane.b32.xlu0 %v7944, 30
        %v11164 = vpop.permute.xlu0 %11163
        %11165 = vrot.lane.b32.xlu0 %v8020, 30
        %v11166 = vpop.permute.xlu0 %11165
        %11167 = vrot.lane.b32.xlu0 %v8096, 30
        %v11168 = vpop.permute.xlu0 %11167
        %11169 = vrot.lane.b32.xlu0 %v8172, 30
        %v11170 = vpop.permute.xlu0 %11169
        %11171 = vrot.lane.b32.xlu0 %v8248, 30
        %v11172 = vpop.permute.xlu0 %11171
        %11173 = vrot.lane.b32.xlu0 %v8324, 30
        %v11174 = vpop.permute.xlu0 %11173
        %11175 = vrot.lane.b32.xlu0 %v8400, 30
        %v11176 = vpop.permute.xlu0 %11175
        %11177 = vrot.lane.b32.xlu0 %v8476, 30
        %v11178 = vpop.permute.xlu0 %11177
        %11179 = vrot.lane.b32.xlu0 %v8552, 30
        %v11180 = vpop.permute.xlu0 %11179
        %11181 = vrot.lane.b32.xlu0 %v8628, 30
        %v11182 = vpop.permute.xlu0 %11181
        %11183 = vrot.lane.b32.xlu0 %v8704, 30
        %v11184 = vpop.permute.xlu0 %11183
        %11185 = vrot.lane.b32.xlu0 %v8780, 30
        %v11186 = vpop.permute.xlu0 %11185
        %11187 = vrot.lane.b32.xlu0 %v8856, 30
        %v11188 = vpop.permute.xlu0 %11187
        %11189 = vrot.lane.b32.xlu0 %v8932, 30
        %v11190 = vpop.permute.xlu0 %11189
        %11191 = vrot.lane.b32.xlu0 %v9008, 30
        %v11192 = vpop.permute.xlu0 %11191
        %11193 = vrot.lane.b32.xlu0 %v9084, 30
        %v11194 = vpop.permute.xlu0 %11193
        %11195 = vrot.lane.b32.xlu0 %v9160, 30
        %v11196 = vpop.permute.xlu0 %11195
        %11197 = vrot.lane.b32.xlu0 %v9236, 30
        %v11198 = vpop.permute.xlu0 %11197
        %11199 = vrot.lane.b32.xlu0 %v9312, 30
        %v11200 = vpop.permute.xlu0 %11199
        %v11233 = vsel %vm6386, %v6896, %v9346
        %v11234 = vsel %vm6386, %v6972, %v9348
        %v11235 = vsel %vm6386, %v7048, %v9350
        %v11236 = vsel %vm6386, %v7124, %v9352
        %v11237 = vsel %vm6386, %v7200, %v9354
        %v11238 = vsel %vm6386, %v7276, %v9356
        %v11239 = vsel %vm6386, %v7352, %v9358
        %v11240 = vsel %vm6386, %v7428, %v9360
        %v11241 = vsel %vm6386, %v7504, %v9362
        %v11242 = vsel %vm6386, %v7580, %v9364
        %v11243 = vsel %vm6386, %v7656, %v9366
        %v11244 = vsel %vm6386, %v7732, %v9368
        %v11245 = vsel %vm6386, %v7808, %v9370
        %v11246 = vsel %vm6386, %v7884, %v9372
        %v11247 = vsel %vm6386, %v7960, %v9374
        %v11248 = vsel %vm6386, %v8036, %v9376
        %v11249 = vsel %vm6386, %v8112, %v9378
        %v11250 = vsel %vm6386, %v8188, %v9380
        %v11251 = vsel %vm6386, %v8264, %v9382
        %v11252 = vsel %vm6386, %v8340, %v9384
        %v11253 = vsel %vm6386, %v8416, %v9386
        %v11254 = vsel %vm6386, %v8492, %v9388
        %v11255 = vsel %vm6386, %v8568, %v9390
        %v11256 = vsel %vm6386, %v8644, %v9392
        %v11257 = vsel %vm6386, %v8720, %v9394
        %v11258 = vsel %vm6386, %v8796, %v9396
        %v11259 = vsel %vm6386, %v8872, %v9398
        %v11260 = vsel %vm6386, %v8948, %v9400
        %v11261 = vsel %vm6386, %v9024, %v9402
        %v11262 = vsel %vm6386, %v9100, %v9404
        %v11263 = vsel %vm6386, %v9176, %v9406
        %v11264 = vsel %vm6386, %v9252, %v9408
        %v11265 = vsel %vm6419, %v11233, %v9474
        %v11266 = vsel %vm6419, %v11234, %v9476
        %v11267 = vsel %vm6419, %v11235, %v9478
        %v11268 = vsel %vm6419, %v11236, %v9480
        %v11269 = vsel %vm6419, %v11237, %v9482
        %v11270 = vsel %vm6419, %v11238, %v9484
        %v11271 = vsel %vm6419, %v11239, %v9486
        %v11272 = vsel %vm6419, %v11240, %v9488
        %v11273 = vsel %vm6419, %v11241, %v9490
        %v11274 = vsel %vm6419, %v11242, %v9492
        %v11275 = vsel %vm6419, %v11243, %v9494
        %v11276 = vsel %vm6419, %v11244, %v9496
        %v11277 = vsel %vm6419, %v11245, %v9498
        %v11278 = vsel %vm6419, %v11246, %v9500
        %v11279 = vsel %vm6419, %v11247, %v9502
        %v11280 = vsel %vm6419, %v11248, %v9504
        %v11281 = vsel %vm6419, %v11249, %v9506
        %v11282 = vsel %vm6419, %v11250, %v9508
        %v11283 = vsel %vm6419, %v11251, %v9510
        %v11284 = vsel %vm6419, %v11252, %v9512
        %v11285 = vsel %vm6419, %v11253, %v9514
        %v11286 = vsel %vm6419, %v11254, %v9516
        %v11287 = vsel %vm6419, %v11255, %v9518
        %v11288 = vsel %vm6419, %v11256, %v9520
        %v11289 = vsel %vm6419, %v11257, %v9522
        %v11290 = vsel %vm6419, %v11258, %v9524
        %v11291 = vsel %vm6419, %v11259, %v9526
        %v11292 = vsel %vm6419, %v11260, %v9528
        %v11293 = vsel %vm6419, %v11261, %v9530
        %v11294 = vsel %vm6419, %v11262, %v9532
        %v11295 = vsel %vm6419, %v11263, %v9534
        %v11296 = vsel %vm6419, %v11264, %v9536
        %v11297 = vsel %vm6452, %v11265, %v9602
        %v11298 = vsel %vm6452, %v11266, %v9604
        %v11299 = vsel %vm6452, %v11267, %v9606
        %v11300 = vsel %vm6452, %v11268, %v9608
        %v11301 = vsel %vm6452, %v11269, %v9610
        %v11302 = vsel %vm6452, %v11270, %v9612
        %v11303 = vsel %vm6452, %v11271, %v9614
        %v11304 = vsel %vm6452, %v11272, %v9616
        %v11305 = vsel %vm6452, %v11273, %v9618
        %v11306 = vsel %vm6452, %v11274, %v9620
        %v11307 = vsel %vm6452, %v11275, %v9622
        %v11308 = vsel %vm6452, %v11276, %v9624
        %v11309 = vsel %vm6452, %v11277, %v9626
        %v11310 = vsel %vm6452, %v11278, %v9628
        %v11311 = vsel %vm6452, %v11279, %v9630
        %v11312 = vsel %vm6452, %v11280, %v9632
        %v11313 = vsel %vm6452, %v11281, %v9634
        %v11314 = vsel %vm6452, %v11282, %v9636
        %v11315 = vsel %vm6452, %v11283, %v9638
        %v11316 = vsel %vm6452, %v11284, %v9640
        %v11317 = vsel %vm6452, %v11285, %v9642
        %v11318 = vsel %vm6452, %v11286, %v9644
        %v11319 = vsel %vm6452, %v11287, %v9646
        %v11320 = vsel %vm6452, %v11288, %v9648
        %v11321 = vsel %vm6452, %v11289, %v9650
        %v11322 = vsel %vm6452, %v11290, %v9652
        %v11323 = vsel %vm6452, %v11291, %v9654
        %v11324 = vsel %vm6452, %v11292, %v9656
        %v11325 = vsel %vm6452, %v11293, %v9658
        %v11326 = vsel %vm6452, %v11294, %v9660
        %v11327 = vsel %vm6452, %v11295, %v9662
        %v11328 = vsel %vm6452, %v11296, %v9664
        %v11329 = vsel %vm6485, %v11297, %v9730
        %v11330 = vsel %vm6485, %v11298, %v9732
        %v11331 = vsel %vm6485, %v11299, %v9734
        %v11332 = vsel %vm6485, %v11300, %v9736
        %v11333 = vsel %vm6485, %v11301, %v9738
        %v11334 = vsel %vm6485, %v11302, %v9740
        %v11335 = vsel %vm6485, %v11303, %v9742
        %v11336 = vsel %vm6485, %v11304, %v9744
        %v11337 = vsel %vm6485, %v11305, %v9746
        %v11338 = vsel %vm6485, %v11306, %v9748
        %v11339 = vsel %vm6485, %v11307, %v9750
        %v11340 = vsel %vm6485, %v11308, %v9752
        %v11341 = vsel %vm6485, %v11309, %v9754
        %v11342 = vsel %vm6485, %v11310, %v9756
        %v11343 = vsel %vm6485, %v11311, %v9758
        %v11344 = vsel %vm6485, %v11312, %v9760
        %v11345 = vsel %vm6485, %v11313, %v9762
        %v11346 = vsel %vm6485, %v11314, %v9764
        %v11347 = vsel %vm6485, %v11315, %v9766
        %v11348 = vsel %vm6485, %v11316, %v9768
        %v11349 = vsel %vm6485, %v11317, %v9770
        %v11350 = vsel %vm6485, %v11318, %v9772
        %v11351 = vsel %vm6485, %v11319, %v9774
        %v11352 = vsel %vm6485, %v11320, %v9776
        %v11353 = vsel %vm6485, %v11321, %v9778
        %v11354 = vsel %vm6485, %v11322, %v9780
        %v11355 = vsel %vm6485, %v11323, %v9782
        %v11356 = vsel %vm6485, %v11324, %v9784
        %v11357 = vsel %vm6485, %v11325, %v9786
        %v11358 = vsel %vm6485, %v11326, %v9788
        %v11359 = vsel %vm6485, %v11327, %v9790
        %v11360 = vsel %vm6485, %v11328, %v9792
        %v11361 = vsel %vm6518, %v11329, %v9858
        %v11362 = vsel %vm6518, %v11330, %v9860
        %v11363 = vsel %vm6518, %v11331, %v9862
        %v11364 = vsel %vm6518, %v11332, %v9864
        %v11365 = vsel %vm6518, %v11333, %v9866
        %v11366 = vsel %vm6518, %v11334, %v9868
        %v11367 = vsel %vm6518, %v11335, %v9870
        %v11368 = vsel %vm6518, %v11336, %v9872
        %v11369 = vsel %vm6518, %v11337, %v9874
        %v11370 = vsel %vm6518, %v11338, %v9876
        %v11371 = vsel %vm6518, %v11339, %v9878
        %v11372 = vsel %vm6518, %v11340, %v9880
        %v11373 = vsel %vm6518, %v11341, %v9882
        %v11374 = vsel %vm6518, %v11342, %v9884
        %v11375 = vsel %vm6518, %v11343, %v9886
        %v11376 = vsel %vm6518, %v11344, %v9888
        %v11377 = vsel %vm6518, %v11345, %v9890
        %v11378 = vsel %vm6518, %v11346, %v9892
        %v11379 = vsel %vm6518, %v11347, %v9894
        %v11380 = vsel %vm6518, %v11348, %v9896
        %v11381 = vsel %vm6518, %v11349, %v9898
        %v11382 = vsel %vm6518, %v11350, %v9900
        %v11383 = vsel %vm6518, %v11351, %v9902
        %v11384 = vsel %vm6518, %v11352, %v9904
        %v11385 = vsel %vm6518, %v11353, %v9906
        %v11386 = vsel %vm6518, %v11354, %v9908
        %v11387 = vsel %vm6518, %v11355, %v9910
        %v11388 = vsel %vm6518, %v11356, %v9912
        %v11389 = vsel %vm6518, %v11357, %v9914
        %v11390 = vsel %vm6518, %v11358, %v9916
        %v11391 = vsel %vm6518, %v11359, %v9918
        %v11392 = vsel %vm6518, %v11360, %v9920
        %v11393 = vsel %vm6551, %v11361, %v9986
        %v11394 = vsel %vm6551, %v11362, %v9988
        %v11395 = vsel %vm6551, %v11363, %v9990
        %v11396 = vsel %vm6551, %v11364, %v9992
        %v11397 = vsel %vm6551, %v11365, %v9994
        %v11398 = vsel %vm6551, %v11366, %v9996
        %v11399 = vsel %vm6551, %v11367, %v9998
        %v11400 = vsel %vm6551, %v11368, %v10000
        %v11401 = vsel %vm6551, %v11369, %v10002
        %v11402 = vsel %vm6551, %v11370, %v10004
        %v11403 = vsel %vm6551, %v11371, %v10006
        %v11404 = vsel %vm6551, %v11372, %v10008
        %v11405 = vsel %vm6551, %v11373, %v10010
        %v11406 = vsel %vm6551, %v11374, %v10012
        %v11407 = vsel %vm6551, %v11375, %v10014
        %v11408 = vsel %vm6551, %v11376, %v10016
        %v11409 = vsel %vm6551, %v11377, %v10018
        %v11410 = vsel %vm6551, %v11378, %v10020
        %v11411 = vsel %vm6551, %v11379, %v10022
        %v11412 = vsel %vm6551, %v11380, %v10024
        %v11413 = vsel %vm6551, %v11381, %v10026
        %v11414 = vsel %vm6551, %v11382, %v10028
        %v11415 = vsel %vm6551, %v11383, %v10030
        %v11416 = vsel %vm6551, %v11384, %v10032
        %v11417 = vsel %vm6551, %v11385, %v10034
        %v11418 = vsel %vm6551, %v11386, %v10036
        %v11419 = vsel %vm6551, %v11387, %v10038
        %v11420 = vsel %vm6551, %v11388, %v10040
        %v11421 = vsel %vm6551, %v11389, %v10042
        %v11422 = vsel %vm6551, %v11390, %v10044
        %v11423 = vsel %vm6551, %v11391, %v10046
        %v11424 = vsel %vm6551, %v11392, %v10048
        %v11425 = vsel %vm6584, %v11393, %v10114
        %v11426 = vsel %vm6584, %v11394, %v10116
        %v11427 = vsel %vm6584, %v11395, %v10118
        %v11428 = vsel %vm6584, %v11396, %v10120
        %v11429 = vsel %vm6584, %v11397, %v10122
        %v11430 = vsel %vm6584, %v11398, %v10124
        %v11431 = vsel %vm6584, %v11399, %v10126
        %v11432 = vsel %vm6584, %v11400, %v10128
        %v11433 = vsel %vm6584, %v11401, %v10130
        %v11434 = vsel %vm6584, %v11402, %v10132
        %v11435 = vsel %vm6584, %v11403, %v10134
        %v11436 = vsel %vm6584, %v11404, %v10136
        %v11437 = vsel %vm6584, %v11405, %v10138
        %v11438 = vsel %vm6584, %v11406, %v10140
        %v11439 = vsel %vm6584, %v11407, %v10142
        %v11440 = vsel %vm6584, %v11408, %v10144
        %v11441 = vsel %vm6584, %v11409, %v10146
        %v11442 = vsel %vm6584, %v11410, %v10148
        %v11443 = vsel %vm6584, %v11411, %v10150
        %v11444 = vsel %vm6584, %v11412, %v10152
        %v11445 = vsel %vm6584, %v11413, %v10154
        %v11446 = vsel %vm6584, %v11414, %v10156
        %v11447 = vsel %vm6584, %v11415, %v10158
        %v11448 = vsel %vm6584, %v11416, %v10160
        %v11449 = vsel %vm6584, %v11417, %v10162
        %v11450 = vsel %vm6584, %v11418, %v10164
        %v11451 = vsel %vm6584, %v11419, %v10166
        %v11452 = vsel %vm6584, %v11420, %v10168
        %v11453 = vsel %vm6584, %v11421, %v10170
        %v11454 = vsel %vm6584, %v11422, %v10172
        %v11455 = vsel %vm6584, %v11423, %v10174
        %v11456 = vsel %vm6584, %v11424, %v10176
        %v11457 = vsel %vm6617, %v11425, %v10242
        %v11458 = vsel %vm6617, %v11426, %v10244
        %v11459 = vsel %vm6617, %v11427, %v10246
        %v11460 = vsel %vm6617, %v11428, %v10248
        %v11461 = vsel %vm6617, %v11429, %v10250
        %v11462 = vsel %vm6617, %v11430, %v10252
        %v11463 = vsel %vm6617, %v11431, %v10254
        %v11464 = vsel %vm6617, %v11432, %v10256
        %v11465 = vsel %vm6617, %v11433, %v10258
        %v11466 = vsel %vm6617, %v11434, %v10260
        %v11467 = vsel %vm6617, %v11435, %v10262
        %v11468 = vsel %vm6617, %v11436, %v10264
        %v11469 = vsel %vm6617, %v11437, %v10266
        %v11470 = vsel %vm6617, %v11438, %v10268
        %v11471 = vsel %vm6617, %v11439, %v10270
        %v11472 = vsel %vm6617, %v11440, %v10272
        %v11473 = vsel %vm6617, %v11441, %v10274
        %v11474 = vsel %vm6617, %v11442, %v10276
        %v11475 = vsel %vm6617, %v11443, %v10278
        %v11476 = vsel %vm6617, %v11444, %v10280
        %v11477 = vsel %vm6617, %v11445, %v10282
        %v11478 = vsel %vm6617, %v11446, %v10284
        %v11479 = vsel %vm6617, %v11447, %v10286
        %v11480 = vsel %vm6617, %v11448, %v10288
        %v11481 = vsel %vm6617, %v11449, %v10290
        %v11482 = vsel %vm6617, %v11450, %v10292
        %v11483 = vsel %vm6617, %v11451, %v10294
        %v11484 = vsel %vm6617, %v11452, %v10296
        %v11485 = vsel %vm6617, %v11453, %v10298
        %v11486 = vsel %vm6617, %v11454, %v10300
        %v11487 = vsel %vm6617, %v11455, %v10302
        %v11488 = vsel %vm6617, %v11456, %v10304
        %v11489 = vsel %vm6650, %v11457, %v10370
        %v11490 = vsel %vm6650, %v11458, %v10372
        %v11491 = vsel %vm6650, %v11459, %v10374
        %v11492 = vsel %vm6650, %v11460, %v10376
        %v11493 = vsel %vm6650, %v11461, %v10378
        %v11494 = vsel %vm6650, %v11462, %v10380
        %v11495 = vsel %vm6650, %v11463, %v10382
        %v11496 = vsel %vm6650, %v11464, %v10384
        %v11497 = vsel %vm6650, %v11465, %v10386
        %v11498 = vsel %vm6650, %v11466, %v10388
        %v11499 = vsel %vm6650, %v11467, %v10390
        %v11500 = vsel %vm6650, %v11468, %v10392
        %v11501 = vsel %vm6650, %v11469, %v10394
        %v11502 = vsel %vm6650, %v11470, %v10396
        %v11503 = vsel %vm6650, %v11471, %v10398
        %v11504 = vsel %vm6650, %v11472, %v10400
        %v11505 = vsel %vm6650, %v11473, %v10402
        %v11506 = vsel %vm6650, %v11474, %v10404
        %v11507 = vsel %vm6650, %v11475, %v10406
        %v11508 = vsel %vm6650, %v11476, %v10408
        %v11509 = vsel %vm6650, %v11477, %v10410
        %v11510 = vsel %vm6650, %v11478, %v10412
        %v11511 = vsel %vm6650, %v11479, %v10414
        %v11512 = vsel %vm6650, %v11480, %v10416
        %v11513 = vsel %vm6650, %v11481, %v10418
        %v11514 = vsel %vm6650, %v11482, %v10420
        %v11515 = vsel %vm6650, %v11483, %v10422
        %v11516 = vsel %vm6650, %v11484, %v10424
        %v11517 = vsel %vm6650, %v11485, %v10426
        %v11518 = vsel %vm6650, %v11486, %v10428
        %v11519 = vsel %vm6650, %v11487, %v10430
        %v11520 = vsel %vm6650, %v11488, %v10432
        %v11521 = vsel %vm6683, %v11489, %v10498
        %v11522 = vsel %vm6683, %v11490, %v10500
        %v11523 = vsel %vm6683, %v11491, %v10502
        %v11524 = vsel %vm6683, %v11492, %v10504
        %v11525 = vsel %vm6683, %v11493, %v10506
        %v11526 = vsel %vm6683, %v11494, %v10508
        %v11527 = vsel %vm6683, %v11495, %v10510
        %v11528 = vsel %vm6683, %v11496, %v10512
        %v11529 = vsel %vm6683, %v11497, %v10514
        %v11530 = vsel %vm6683, %v11498, %v10516
        %v11531 = vsel %vm6683, %v11499, %v10518
        %v11532 = vsel %vm6683, %v11500, %v10520
        %v11533 = vsel %vm6683, %v11501, %v10522
        %v11534 = vsel %vm6683, %v11502, %v10524
        %v11535 = vsel %vm6683, %v11503, %v10526
        %v11536 = vsel %vm6683, %v11504, %v10528
        %v11537 = vsel %vm6683, %v11505, %v10530
        %v11538 = vsel %vm6683, %v11506, %v10532
        %v11539 = vsel %vm6683, %v11507, %v10534
        %v11540 = vsel %vm6683, %v11508, %v10536
        %v11541 = vsel %vm6683, %v11509, %v10538
        %v11542 = vsel %vm6683, %v11510, %v10540
        %v11543 = vsel %vm6683, %v11511, %v10542
        %v11544 = vsel %vm6683, %v11512, %v10544
        %v11545 = vsel %vm6683, %v11513, %v10546
        %v11546 = vsel %vm6683, %v11514, %v10548
        %v11547 = vsel %vm6683, %v11515, %v10550
        %v11548 = vsel %vm6683, %v11516, %v10552
        %v11549 = vsel %vm6683, %v11517, %v10554
        %v11550 = vsel %vm6683, %v11518, %v10556
        %v11551 = vsel %vm6683, %v11519, %v10558
        %v11552 = vsel %vm6683, %v11520, %v10560
        %v11553 = vsel %vm6716, %v11521, %v10626
        %v11554 = vsel %vm6716, %v11522, %v10628
        %v11555 = vsel %vm6716, %v11523, %v10630
        %v11556 = vsel %vm6716, %v11524, %v10632
        %v11557 = vsel %vm6716, %v11525, %v10634
        %v11558 = vsel %vm6716, %v11526, %v10636
        %v11559 = vsel %vm6716, %v11527, %v10638
        %v11560 = vsel %vm6716, %v11528, %v10640
        %v11561 = vsel %vm6716, %v11529, %v10642
        %v11562 = vsel %vm6716, %v11530, %v10644
        %v11563 = vsel %vm6716, %v11531, %v10646
        %v11564 = vsel %vm6716, %v11532, %v10648
        %v11565 = vsel %vm6716, %v11533, %v10650
        %v11566 = vsel %vm6716, %v11534, %v10652
        %v11567 = vsel %vm6716, %v11535, %v10654
        %v11568 = vsel %vm6716, %v11536, %v10656
        %v11569 = vsel %vm6716, %v11537, %v10658
        %v11570 = vsel %vm6716, %v11538, %v10660
        %v11571 = vsel %vm6716, %v11539, %v10662
        %v11572 = vsel %vm6716, %v11540, %v10664
        %v11573 = vsel %vm6716, %v11541, %v10666
        %v11574 = vsel %vm6716, %v11542, %v10668
        %v11575 = vsel %vm6716, %v11543, %v10670
        %v11576 = vsel %vm6716, %v11544, %v10672
        %v11577 = vsel %vm6716, %v11545, %v10674
        %v11578 = vsel %vm6716, %v11546, %v10676
        %v11579 = vsel %vm6716, %v11547, %v10678
        %v11580 = vsel %vm6716, %v11548, %v10680
        %v11581 = vsel %vm6716, %v11549, %v10682
        %v11582 = vsel %vm6716, %v11550, %v10684
        %v11583 = vsel %vm6716, %v11551, %v10686
        %v11584 = vsel %vm6716, %v11552, %v10688
        %v11585 = vsel %vm6749, %v11553, %v10754
        %v11586 = vsel %vm6749, %v11554, %v10756
        %v11587 = vsel %vm6749, %v11555, %v10758
        %v11588 = vsel %vm6749, %v11556, %v10760
        %v11589 = vsel %vm6749, %v11557, %v10762
        %v11590 = vsel %vm6749, %v11558, %v10764
        %v11591 = vsel %vm6749, %v11559, %v10766
        %v11592 = vsel %vm6749, %v11560, %v10768
        %v11593 = vsel %vm6749, %v11561, %v10770
        %v11594 = vsel %vm6749, %v11562, %v10772
        %v11595 = vsel %vm6749, %v11563, %v10774
        %v11596 = vsel %vm6749, %v11564, %v10776
        %v11597 = vsel %vm6749, %v11565, %v10778
        %v11598 = vsel %vm6749, %v11566, %v10780
        %v11599 = vsel %vm6749, %v11567, %v10782
        %v11600 = vsel %vm6749, %v11568, %v10784
        %v11601 = vsel %vm6749, %v11569, %v10786
        %v11602 = vsel %vm6749, %v11570, %v10788
        %v11603 = vsel %vm6749, %v11571, %v10790
        %v11604 = vsel %vm6749, %v11572, %v10792
        %v11605 = vsel %vm6749, %v11573, %v10794
        %v11606 = vsel %vm6749, %v11574, %v10796
        %v11607 = vsel %vm6749, %v11575, %v10798
        %v11608 = vsel %vm6749, %v11576, %v10800
        %v11609 = vsel %vm6749, %v11577, %v10802
        %v11610 = vsel %vm6749, %v11578, %v10804
        %v11611 = vsel %vm6749, %v11579, %v10806
        %v11612 = vsel %vm6749, %v11580, %v10808
        %v11613 = vsel %vm6749, %v11581, %v10810
        %v11614 = vsel %vm6749, %v11582, %v10812
        %v11615 = vsel %vm6749, %v11583, %v10814
        %v11616 = vsel %vm6749, %v11584, %v10816
        %v11617 = vsel %vm6782, %v11585, %v10882
        %v11618 = vsel %vm6782, %v11586, %v10884
        %v11619 = vsel %vm6782, %v11587, %v10886
        %v11620 = vsel %vm6782, %v11588, %v10888
        %v11621 = vsel %vm6782, %v11589, %v10890
        %v11622 = vsel %vm6782, %v11590, %v10892
        %v11623 = vsel %vm6782, %v11591, %v10894
        %v11624 = vsel %vm6782, %v11592, %v10896
        %v11625 = vsel %vm6782, %v11593, %v10898
        %v11626 = vsel %vm6782, %v11594, %v10900
        %v11627 = vsel %vm6782, %v11595, %v10902
        %v11628 = vsel %vm6782, %v11596, %v10904
        %v11629 = vsel %vm6782, %v11597, %v10906
        %v11630 = vsel %vm6782, %v11598, %v10908
        %v11631 = vsel %vm6782, %v11599, %v10910
        %v11632 = vsel %vm6782, %v11600, %v10912
        %v11633 = vsel %vm6782, %v11601, %v10914
        %v11634 = vsel %vm6782, %v11602, %v10916
        %v11635 = vsel %vm6782, %v11603, %v10918
        %v11636 = vsel %vm6782, %v11604, %v10920
        %v11637 = vsel %vm6782, %v11605, %v10922
        %v11638 = vsel %vm6782, %v11606, %v10924
        %v11639 = vsel %vm6782, %v11607, %v10926
        %v11640 = vsel %vm6782, %v11608, %v10928
        %v11641 = vsel %vm6782, %v11609, %v10930
        %v11642 = vsel %vm6782, %v11610, %v10932
        %v11643 = vsel %vm6782, %v11611, %v10934
        %v11644 = vsel %vm6782, %v11612, %v10936
        %v11645 = vsel %vm6782, %v11613, %v10938
        %v11646 = vsel %vm6782, %v11614, %v10940
        %v11647 = vsel %vm6782, %v11615, %v10942
        %v11648 = vsel %vm6782, %v11616, %v10944
        %v11649 = vsel %vm6815, %v11617, %v11010
        %v11650 = vsel %vm6815, %v11618, %v11012
        %v11651 = vsel %vm6815, %v11619, %v11014
        %v11652 = vsel %vm6815, %v11620, %v11016
        %v11653 = vsel %vm6815, %v11621, %v11018
        %v11654 = vsel %vm6815, %v11622, %v11020
        %v11655 = vsel %vm6815, %v11623, %v11022
        %v11656 = vsel %vm6815, %v11624, %v11024
        %v11657 = vsel %vm6815, %v11625, %v11026
        %v11658 = vsel %vm6815, %v11626, %v11028
        %v11659 = vsel %vm6815, %v11627, %v11030
        %v11660 = vsel %vm6815, %v11628, %v11032
        %v11661 = vsel %vm6815, %v11629, %v11034
        %v11662 = vsel %vm6815, %v11630, %v11036
        %v11663 = vsel %vm6815, %v11631, %v11038
        %v11664 = vsel %vm6815, %v11632, %v11040
        %v11665 = vsel %vm6815, %v11633, %v11042
        %v11666 = vsel %vm6815, %v11634, %v11044
        %v11667 = vsel %vm6815, %v11635, %v11046
        %v11668 = vsel %vm6815, %v11636, %v11048
        %v11669 = vsel %vm6815, %v11637, %v11050
        %v11670 = vsel %vm6815, %v11638, %v11052
        %v11671 = vsel %vm6815, %v11639, %v11054
        %v11672 = vsel %vm6815, %v11640, %v11056
        %v11673 = vsel %vm6815, %v11641, %v11058
        %v11674 = vsel %vm6815, %v11642, %v11060
        %v11675 = vsel %vm6815, %v11643, %v11062
        %v11676 = vsel %vm6815, %v11644, %v11064
        %v11677 = vsel %vm6815, %v11645, %v11066
        %v11678 = vsel %vm6815, %v11646, %v11068
        %v11679 = vsel %vm6815, %v11647, %v11070
        %v11680 = vsel %vm6815, %v11648, %v11072
        %v11681 = vsel %vm6848, %v11649, %v11138
        %v11682 = vsel %vm6848, %v11650, %v11140
        %v11683 = vsel %vm6848, %v11651, %v11142
        %v11684 = vsel %vm6848, %v11652, %v11144
        %v11685 = vsel %vm6848, %v11653, %v11146
        %v11686 = vsel %vm6848, %v11654, %v11148
        %v11687 = vsel %vm6848, %v11655, %v11150
        %v11688 = vsel %vm6848, %v11656, %v11152
        %v11689 = vsel %vm6848, %v11657, %v11154
        %v11690 = vsel %vm6848, %v11658, %v11156
        %v11691 = vsel %vm6848, %v11659, %v11158
        %v11692 = vsel %vm6848, %v11660, %v11160
        %v11693 = vsel %vm6848, %v11661, %v11162
        %v11694 = vsel %vm6848, %v11662, %v11164
        %v11695 = vsel %vm6848, %v11663, %v11166
        %v11696 = vsel %vm6848, %v11664, %v11168
        %v11697 = vsel %vm6848, %v11665, %v11170
        %v11698 = vsel %vm6848, %v11666, %v11172
        %v11699 = vsel %vm6848, %v11667, %v11174
        %v11700 = vsel %vm6848, %v11668, %v11176
        %v11701 = vsel %vm6848, %v11669, %v11178
        %v11702 = vsel %vm6848, %v11670, %v11180
        %v11703 = vsel %vm6848, %v11671, %v11182
        %v11704 = vsel %vm6848, %v11672, %v11184
        %v11705 = vsel %vm6848, %v11673, %v11186
        %v11706 = vsel %vm6848, %v11674, %v11188
        %v11707 = vsel %vm6848, %v11675, %v11190
        %v11708 = vsel %vm6848, %v11676, %v11192
        %v11709 = vsel %vm6848, %v11677, %v11194
        %v11710 = vsel %vm6848, %v11678, %v11196
        %v11711 = vsel %vm6848, %v11679, %v11198
        %v11712 = vsel %vm6848, %v11680, %v11200
        %v11745 = vrot.slane %v11681, 7
        %v11746 = vrot.slane %v11682, 7
        %v11747 = vrot.slane %v11683, 7
        %v11748 = vrot.slane %v11684, 7
        %v11749 = vrot.slane %v11685, 7
        %v11750 = vrot.slane %v11686, 7
        %v11751 = vrot.slane %v11687, 7
        %v11752 = vrot.slane %v11688, 7
        %v11753 = vrot.slane %v11689, 7
        %v11754 = vrot.slane %v11690, 7
        %v11755 = vrot.slane %v11691, 7
        %v11756 = vrot.slane %v11692, 7
        %v11757 = vrot.slane %v11693, 7
        %v11758 = vrot.slane %v11694, 7
        %v11759 = vrot.slane %v11695, 7
        %v11760 = vrot.slane %v11696, 7
        %v11761 = vrot.slane %v11697, 7
        %v11762 = vrot.slane %v11698, 7
        %v11763 = vrot.slane %v11699, 7
        %v11764 = vrot.slane %v11700, 7
        %v11765 = vrot.slane %v11701, 7
        %v11766 = vrot.slane %v11702, 7
        %v11767 = vrot.slane %v11703, 7
        %v11768 = vrot.slane %v11704, 7
        %v11769 = vrot.slane %v11705, 7
        %v11770 = vrot.slane %v11706, 7
        %v11771 = vrot.slane %v11707, 7
        %v11772 = vrot.slane %v11708, 7
        %v11773 = vrot.slane %v11709, 7
        %v11774 = vrot.slane %v11710, 7
        %v11775 = vrot.slane %v11711, 7
        %v11776 = vrot.slane %v11712, 7
        %vm11809 = vcmask 1040384
        %v11810 = vsel %vm11809, %v6849, %v11745
        %v11811 = vsel %vm11809, %v6850, %v11746
        %v11812 = vsel %vm11809, %v6851, %v11747
        %v11813 = vsel %vm11809, %v6852, %v11748
        %v11814 = vsel %vm11809, %v6853, %v11749
        %v11815 = vsel %vm11809, %v6854, %v11750
        %v11816 = vsel %vm11809, %v6855, %v11751
        %v11817 = vsel %vm11809, %v6856, %v11752
        %v11818 = vsel %vm11809, %v6857, %v11753
        %v11819 = vsel %vm11809, %v6858, %v11754
        %v11820 = vsel %vm11809, %v6859, %v11755
        %v11821 = vsel %vm11809, %v6860, %v11756
        %v11822 = vsel %vm11809, %v6861, %v11757
        %v11823 = vsel %vm11809, %v6862, %v11758
        %v11824 = vsel %vm11809, %v6863, %v11759
        %v11825 = vsel %vm11809, %v6864, %v11760
        %v11826 = vsel %vm11809, %v6865, %v11761
        %v11827 = vsel %vm11809, %v6866, %v11762
        %v11828 = vsel %vm11809, %v6867, %v11763
        %v11829 = vsel %vm11809, %v6868, %v11764
        %v11830 = vsel %vm11809, %v6869, %v11765
        %v11831 = vsel %vm11809, %v6870, %v11766
        %v11832 = vsel %vm11809, %v6871, %v11767
        %v11833 = vsel %vm11809, %v6872, %v11768
        %v11834 = vsel %vm11809, %v6873, %v11769
        %v11835 = vsel %vm11809, %v6874, %v11770
        %v11836 = vsel %vm11809, %v6875, %v11771
        %v11837 = vsel %vm11809, %v6876, %v11772
        %v11838 = vsel %vm11809, %v6877, %v11773
        %v11839 = vsel %vm11809, %v6878, %v11774
        %v11840 = vsel %vm11809, %v6879, %v11775
        %v11841 = vsel %vm11809, %v6880, %v11776
        %11874 = vst [vmem:[#allocation1] ss:$4 sm:$0xff] %v11810
        %s11875 = scalar_lea.vmem [#allocation1], 1
        %11876 = vst [vmem:[%s11875] ss:$4 sm:$0xff] %v11811
        %s11877 = scalar_lea.vmem [#allocation1], 2
        %11878 = vst [vmem:[%s11877] ss:$4 sm:$0xff] %v11812
        %s11879 = scalar_lea.vmem [#allocation1], 3
        %11880 = vst [vmem:[%s11879] ss:$4 sm:$0xff] %v11813
        %s11881 = scalar_lea.vmem [#allocation1], 32
        %11882 = vst [vmem:[%s11881] ss:$4 sm:$0xff] %v11814
        %s11883 = scalar_lea.vmem [#allocation1], 33
        %11884 = vst [vmem:[%s11883] ss:$4 sm:$0xff] %v11815
        %s11885 = scalar_lea.vmem [#allocation1], 34
        %11886 = vst [vmem:[%s11885] ss:$4 sm:$0xff] %v11816
        %s11887 = scalar_lea.vmem [#allocation1], 35
        %11888 = vst [vmem:[%s11887] ss:$4 sm:$0xff] %v11817
        %v11889 = vld.sshfl [vmem:[#allocation1] sm:$0xff pattern:$0x73625140]
        %v11890 = vld.sshfl [vmem:[#allocation1 + $0x20] sm:$0xff pattern:$0x73625140]
        %11891 = vst [vmem:[#allocation1] ss:$4 sm:$0xff] %v11818
        %11892 = vst [vmem:[%s11875] ss:$4 sm:$0xff] %v11819
        %11893 = vst [vmem:[%s11877] ss:$4 sm:$0xff] %v11820
        %11894 = vst [vmem:[%s11879] ss:$4 sm:$0xff] %v11821
        %11895 = vst [vmem:[%s11881] ss:$4 sm:$0xff] %v11822
        %11896 = vst [vmem:[%s11883] ss:$4 sm:$0xff] %v11823
        %11897 = vst [vmem:[%s11885] ss:$4 sm:$0xff] %v11824
        %11898 = vst [vmem:[%s11887] ss:$4 sm:$0xff] %v11825
        %v11899 = vld.sshfl [vmem:[#allocation1] sm:$0xff pattern:$0x73625140]
        %v11900 = vld.sshfl [vmem:[#allocation1 + $0x20] sm:$0xff pattern:$0x73625140]
        %11901 = vst [vmem:[#allocation1] ss:$4 sm:$0xff] %v11826
        %11902 = vst [vmem:[%s11875] ss:$4 sm:$0xff] %v11827
        %11903 = vst [vmem:[%s11877] ss:$4 sm:$0xff] %v11828
        %11904 = vst [vmem:[%s11879] ss:$4 sm:$0xff] %v11829
        %11905 = vst [vmem:[%s11881] ss:$4 sm:$0xff] %v11830
        %11906 = vst [vmem:[%s11883] ss:$4 sm:$0xff] %v11831
        %11907 = vst [vmem:[%s11885] ss:$4 sm:$0xff] %v11832
        %11908 = vst [vmem:[%s11887] ss:$4 sm:$0xff] %v11833
        %v11909 = vld.sshfl [vmem:[#allocation1] sm:$0xff pattern:$0x73625140]
        %v11910 = vld.sshfl [vmem:[#allocation1 + $0x20] sm:$0xff pattern:$0x73625140]
        %11911 = vst [vmem:[#allocation1] ss:$4 sm:$0xff] %v11834
        %11912 = vst [vmem:[%s11875] ss:$4 sm:$0xff] %v11835
        %11913 = vst [vmem:[%s11877] ss:$4 sm:$0xff] %v11836
        %11914 = vst [vmem:[%s11879] ss:$4 sm:$0xff] %v11837
        %11915 = vst [vmem:[%s11881] ss:$4 sm:$0xff] %v11838
        %11916 = vst [vmem:[%s11883] ss:$4 sm:$0xff] %v11839
        %11917 = vst [vmem:[%s11885] ss:$4 sm:$0xff] %v11840
        %11918 = vst [vmem:[%s11887] ss:$4 sm:$0xff] %v11841
        %v11919 = vld.sshfl [vmem:[#allocation1] sm:$0xff pattern:$0x73625140]
        %v11920 = vld.sshfl [vmem:[#allocation1 + $0x20] sm:$0xff pattern:$0x73625140]
        %vm11929 = vcmask 261120
        %11930 = vst.msk [vmem:[%s168] sm:$0xff] %vm11929, %v11889
        %11931 = vst.msk [vmem:[%s168 + $0x8] sm:$0xff] %vm11929, %v11890
        %11932 = vst.msk [vmem:[%s168 + $0x10] sm:$0xff] %vm11929, %v11899
        %11933 = vst.msk [vmem:[%s168 + $0x18] sm:$0xff] %vm11929, %v11900
        %11934 = vst.msk [vmem:[%s168 + $0x20] sm:$0xff] %vm11929, %v11909
        %11935 = vst.msk [vmem:[%s168 + $0x28] sm:$0xff] %vm11929, %v11910
        %11936 = vst.msk [vmem:[%s168 + $0x30] sm:$0xff] %vm11929, %v11919
        %11937 = vst.msk [vmem:[%s168 + $0x38] sm:$0xff] %vm11929, %v11920
        %s11938 = sand.u32 %s79, 1
        %s11939 = scalar_lea.sflag [#allocation4], %s11938
        %s11940 = sand.u32 %s79, 1
        %s11941 = smul.addr %s11940, 64
        %s11942 = scalar_lea.vmem [#allocation5], %s11941
        // Predicated region
        $region29: #{_lambda_.1} parent=23 // pred_check
          %p11943 = pneg %p89
        $region30: #{_lambda_.1} parent=23 // pred_check_branch
          %11945 = sbr.rel (%p11943) target = $region32
        $region31: #{_lambda_.1} parent=23 // pred_region
          %s11946 = smul.u32 2, %s24
          %s11947 = smul.u32 4, %s25
          %11949 = vsyncadd %s11939, 0
          %s11950 = smul.addr %s11946, 4
          %s11951 = sadd.s32 %s11947, %s11950
          %s11952 = smul.addr %s23, 8
          %s11953 = sadd.s32 %s11951, %s11952
          %s11954 = smul.addr %s11953, 8
          %s11955 = scalar_lea.hbm %s1, %s11954
          %s11956 = sshll.u32 %s11942, 4
          %s11957 = int_to_ptr.vmem [resolvable:$true] %s11956
          %s11958 = sshll.u32 %s11955, 4
          %s11959 = int_to_ptr.hbm [resolvable:$true] %s11958
          %11964 = dma.vmem_to_hbm [thread:$0]  %s11957, 1024, %s11959, %s11939, 128, 128, 8
        $region32: #{_lambda_.1} parent=23 // pred_fallthru
          _
      $region24: #{_lambda_.1} parent=5 // pred_fallthru
        _
      %p11965 = scmp.le.s32.totalorder 2, %s13
      // Predicated region
      $region33: #{_lambda_.1} parent=5 // pred_check
        %p11966 = pneg %p11965
      $region34: #{_lambda_.1} parent=5 // pred_check_branch
        %11968 = sbr.rel (%p11966) target = $region36
      $region35: #{_lambda_.1} parent=5 // pred_region
        %s11969 = ssub.s32 %s13, 2
        // Predicated region
        $region37: #{_lambda_.1} parent=35 // pred_check
          %p11970 = pneg %p95
        $region38: #{_lambda_.1} parent=35 // pred_check_branch
          %11972 = sbr.rel (%p11970) target = $region40
        $region39: #{_lambda_.1} parent=35 // pred_region
          %s11973 = sand.u32 %s80, 1
          %s11974 = scalar_lea.sflag [#allocation4], %s11973
          %s11975 = sand.u32 %s80, 1
          %s11976 = smul.addr %s11975, 64
          %s11977 = scalar_lea.vmem [#allocation5], %s11976
          %11979 = dma.done %s11974, 1024
        $region40: #{_lambda_.1} parent=35 // pred_fallthru
          _
      $region36: #{_lambda_.1} parent=5 // pred_fallthru
        _
    $region6: #{_lambda_.1} parent=1 // loop_footer
      %s17 = sadd.s32 1, %s13
    $region7: #{_lambda_.1} parent=1 // loop_footer_branch
      %12 = sbr.rel target = $region3
    $region8: #{_lambda_.1} parent=1 // loop_exit
      _
    %11980 = vsyncpa [#allocation3], 1
    %s11981 = scalar_lea.sflag [#allocation3], 1
    %11982 = vsyncpa %s11981, 1
    %11983 = vsyncpa [#allocation4], 1
    %s11984 = scalar_lea.sflag [#allocation4], 1
    %11985 = vsyncpa %s11984, 1

// kernel: _lambda_.1
$region0: #{_lambda_.1}
  #allocation0 [shape = 'u32[]', space=smem, size = 0x4, offset = 0x4, fixed_abs, tag = 'smem constant byte address 0x4 - core index']
  #allocation1 [shape = 'u32[72,128]{1,0:T(1,128)}', space=vmem, size = 0x9000, scoped, tag = 'internal scratch']
  %s0 = inlined_call_operand.hbm [shape: f32[2,4,2,16,16], index: 0, kind: input, shape index: {}]
  %s1 = inlined_call_operand.vmem [shape: f32[2,2,2,2,16,16], index: 1, kind: output, shape index: {}]
  %s2 = sld [smem:[#allocation0]]
  $region41: #{_lambda_.1} parent=0
    _
  %s4 = ssub.s32 1, %s2
  %s5 = scalar_select 0, %s4, %s2
  $region1: #{_lambda_.1} parent=0
    #allocation2 [shape = 'u8[131072]{0}', space=vmem, size = 0x20000, scoped, tag = 'input window, operand 0']
    #allocation3 [shape = 's32[2]{0}', space=sflag, size = 0x8, scoped, tag = 'scoped memory for _lambda_.1']
    %6 = vsyncpa [#allocation3], 0
    %s7 = scalar_lea.sflag [#allocation3], 1
    %8 = vsyncpa %s7, 0
    loop: start=0, step=1, limit=4
    $region2: #{_lambda_.1} parent=1 // loop_pre_header
      _
    $region3: #{_lambda_.1} parent=1 // loop_header
      %s10 = sphi 0, %s14
      %p11 = scmp.ge.s32.totalorder %s10, 4
      %s17 = sphi 0, %s36
      %s18 = sphi 0, %s32
      %s19 = sphi 0, %s28
      %s20 = sphi 0, %s17
      %s21 = sphi 0, %s18
      %s22 = sphi 0, %s19
      %s23 = sphi 0, %s20
      %s24 = sphi 0, %s21
      %s25 = sphi 0, %s22
      %s43 = sphi 0, %s45
      %s46 = sphi 0, %s43
      %s47 = sphi 0, %s46
      %s63 = sphi 0, %s47
      %s73 = sphi 0, %s75
      %s76 = sphi 0, %s73
      %s77 = sphi 0, %s76
      %s93 = sphi 0, %s77
    $region4: #{_lambda_.1} parent=1 // loop_header_branch
      %13 = sbr.rel (%p11) target = $region8
    $region5: #{_lambda_.1} parent=1 // loop_body
      %s15 = ssub.s32 %s10, 1
      %s16 = ssub.s32 %s10, 2
      %s26 = sadd.s32 1, %s19
      %p27 = scmp.ge.s32.totalorder %s26, 1
      %s28 = scalar_select %p27, 0, %s26
      %s29 = sadd.s32 1, %s18
      %s30 = scalar_select %p27, %s29, %s18
      %p31 = scmp.ge.s32.totalorder %s30, 1
      %s32 = scalar_select %p31, 0, %s30
      %s33 = sadd.s32 1, %s17
      %s34 = scalar_select %p31, %s33, %s17
      %p35 = scmp.ge.s32.totalorder %s34, 2
      %s36 = scalar_select %p35, 0, %s34
      %s37 = ssub.s32 %s17, %s36
      %s38 = ssub.s32 %s18, %s32
      %s39 = sor.u32 %s37, %s38
      %s40 = ssub.s32 %s19, %s28
      %s41 = sor.u32 %s39, %s40
      %p42 = scmp.eq.s32.totalorder %s41, 0
      %s44 = sadd.s32 %s43, 1
      %s45 = scalar_select %p42, %s43, %s44
      %p48 = pneg %p42
      %p49 = scmp.eq.s32.totalorder %s10, 1
      %p50 = por %p48, %p49
      %p51 = scmp.ne.s32.totalorder %s43, %s46
      %p52 = scmp.eq.s32.totalorder %s10, 0
      %p53 = por %p51, %p52
      %p54 = scmp.ne.s32.totalorder %s43, %s46
      %p55 = scmp.eq.s32.totalorder %s15, 1
      %p56 = por %p54, %p55
      %p57 = scmp.ne.s32.totalorder %s46, %s47
      %p58 = scmp.eq.s32.totalorder %s15, 0
      %p59 = por %p57, %p58
      %p60 = scmp.ne.s32.totalorder %s46, %s47
      %p61 = scmp.eq.s32.totalorder %s16, 1
      %p62 = por %p60, %p61
      %p64 = scmp.ne.s32.totalorder %s47, %s63
      %p65 = scmp.eq.s32.totalorder %s16, 0
      %p66 = por %p64, %p65
      %s67 = ssub.s32 %s17, %s36
      %s68 = ssub.s32 %s18, %s32
      %s69 = sor.u32 %s67, %s68
      %s70 = ssub.s32 %s19, %s28
      %s71 = sor.u32 %s69, %s70
      %p72 = scmp.eq.s32.totalorder %s71, 0
      %s74 = sadd.s32 %s73, 1
      %s75 = scalar_select %p72, %s73, %s74
      %p78 = pneg %p72
      %p79 = scmp.eq.s32.totalorder %s10, 1
      %p80 = por %p78, %p79
      %p81 = scmp.ne.s32.totalorder %s73, %s76
      %p82 = scmp.eq.s32.totalorder %s10, 0
      %p83 = por %p81, %p82
      %p84 = scmp.ne.s32.totalorder %s73, %s76
      %p85 = scmp.eq.s32.totalorder %s15, 1
      %p86 = por %p84, %p85
      %p87 = scmp.ne.s32.totalorder %s76, %s77
      %p88 = scmp.eq.s32.totalorder %s15, 0
      %p89 = por %p87, %p88
      %p90 = scmp.ne.s32.totalorder %s76, %s77
      %p91 = scmp.eq.s32.totalorder %s16, 1
      %p92 = por %p90, %p91
      %p94 = scmp.ne.s32.totalorder %s77, %s93
      %p95 = scmp.eq.s32.totalorder %s16, 0
      %p96 = por %p94, %p95
      %p97 = scmp.le.s32.totalorder 1, %s10
      %p98 = scmp.lt.s32.totalorder %s10, 3
      %p99 = pnand %p97, %p98
      %p100 = pneg %p99
      // Predicated region
      $region9: #{_lambda_.1} parent=5 // pred_check
        _
      $region10: #{_lambda_.1} parent=5 // pred_check_branch
        %102 = sbr.rel (%p99) target = $region12
      $region11: #{_lambda_.1} parent=5 // pred_region
        %s103 = ssub.s32 %s10, 1
      $region12: #{_lambda_.1} parent=5 // pred_fallthru
        _
      %p104 = scmp.lt.s32.totalorder %s10, 2
      // Predicated region
      $region13: #{_lambda_.1} parent=5 // pred_check
        %p105 = pneg %p104
      $region14: #{_lambda_.1} parent=5 // pred_check_branch
        %107 = sbr.rel (%p105) target = $region16
      $region15: #{_lambda_.1} parent=5 // pred_region
        // Predicated region
        $region17: #{_lambda_.1} parent=15 // pred_check
          %p108 = pneg %p53
        $region18: #{_lambda_.1} parent=15 // pred_check_branch
          %110 = sbr.rel (%p108) target = $region20
        $region19: #{_lambda_.1} parent=15 // pred_region
          %s111 = sand.u32 %s43, 1
          %s112 = scalar_lea.sflag [#allocation3], %s111
          %s113 = sand.u32 %s43, 1
          %s114 = smul.addr %s113, 128
          %s115 = scalar_lea.vmem [#allocation2], %s114
          %s116 = smul.u32 2, %s18
          %s117 = smul.u32 2, %s19
          %119 = vsyncadd %s112, 0
          %s120 = smul.addr %s116, 2
          %s121 = sadd.s32 %s117, %s120
          %s122 = smul.addr %s17, 16
          %s123 = sadd.s32 %s121, %s122
          %s124 = smul.addr %s123, 8
          %s125 = scalar_lea.hbm %s0, %s124
          %s126 = sshll.u32 %s125, 4
          %s127 = int_to_ptr.hbm [resolvable:$true] %s126
          %s128 = sshll.u32 %s115, 4
          %s129 = int_to_ptr.vmem [resolvable:$true] %s128
          %134 = dma.hbm_to_vmem [thread:$0]  %s127, 2048, %s129, %s112, 128, 128, 8
        $region20: #{_lambda_.1} parent=15 // pred_fallthru
          _
      $region16: #{_lambda_.1} parent=5 // pred_fallthru
        _
      %p135 = scmp.le.s32.totalorder 1, %s10
      %p136 = scmp.lt.s32.totalorder %s10, 3
      %p137 = pnand %p135, %p136
      %p138 = pneg %p137
      // Predicated region
      $region21: #{_lambda_.1} parent=5 // pred_check
        _
      $region22: #{_lambda_.1} parent=5 // pred_check_branch
        %140 = sbr.rel (%p137) target = $region24
      $region23: #{_lambda_.1} parent=5 // pred_region
        %s141 = ssub.s32 %s10, 1
        %s142 = sand.u32 %s46, 1
        %s143 = scalar_lea.sflag [#allocation3], %s142
        %s144 = sand.u32 %s46, 1
        %s145 = smul.addr %s144, 128
        %s146 = scalar_lea.vmem [#allocation2], %s145
        // Predicated region
        $region25: #{_lambda_.1} parent=23 // pred_check
          %p147 = pneg %p59
        $region26: #{_lambda_.1} parent=23 // pred_check_branch
          %149 = sbr.rel (%p147) target = $region28
        $region27: #{_lambda_.1} parent=23 // pred_region
          %151 = dma.done %s143, 2048
        $region28: #{_lambda_.1} parent=23 // pred_fallthru
          _
        %s152 = sand.u32 %s46, 1
        %s153 = scalar_lea.sflag [#allocation3], %s152
        %s154 = sand.u32 %s46, 1
        %s155 = smul.addr %s154, 128
        %s156 = scalar_lea.vmem [#allocation2], %s155
        %p157 = pneg %p59
        %p158 = pneg %p56
        %p159 = pneg %p89
        %p160 = pneg %p86
        %s161 = smul.u32 2, %s21
        %s162 = smul.u32 2, %s22
        %p163 = scmp.lt.s32.totalorder %s20, 1
        %s164 = scalar_select %p163, %s20, 1
        %p165 = scmp.lt.s32.totalorder %s161, 1
        %s166 = scalar_select %p165, %s161, 1
        %p167 = scmp.lt.s32.totalorder %s162, 1
        %s168 = scalar_select %p167, %s162, 1
        %s169 = smul.addr %s166, 2
        %s170 = sadd.s32 %s168, %s169
        %s171 = smul.addr %s164, 16
        %s172 = sadd.s32 %s170, %s171
        %s173 = smul.addr %s172, 8
        %s174 = scalar_lea.vmem %s1, %s173
        %s175 = smul.u32 2, %s21
        %s176 = smul.u32 2, %s22
        %s177 = smul.u32 2, %s21
        %s178 = smul.u32 2, %s22
        %p179 = scmp.lt.s32.totalorder %s20, 1
        %s180 = scalar_select %p179, %s20, 1
        %p181 = scmp.lt.s32.totalorder %s177, 1
        %s182 = scalar_select %p181, %s177, 1
        %p183 = scmp.lt.s32.totalorder %s178, 1
        %s184 = scalar_select %p183, %s178, 1
        %s185 = smul.addr %s182, 2
        %s186 = sadd.s32 %s184, %s185
        %s187 = smul.addr %s180, 16
        %s188 = sadd.s32 %s186, %s187
        %s189 = smul.addr %s188, 8
        %s190 = scalar_lea.vmem %s1, %s189
        %s191 = smul.u32 2, %s21
        %s192 = smul.u32 2, %s22
        %v193 = vld [vmem:[%s146] sm:$0xff]
        %v194 = vld [vmem:[%s146 + $0x8] sm:$0xff]
        %v195 = vld [vmem:[%s146 + $0x10] sm:$0xff]
        %v196 = vld [vmem:[%s146 + $0x18] sm:$0xff]
        %s197 = scalar_lea.vmem %s146, 32 [#allocation2]
        %v198 = vld [vmem:[%s197] sm:$0xff]
        %v199 = vld [vmem:[%s197 + $0x8] sm:$0xff]
        %v200 = vld [vmem:[%s197 + $0x10] sm:$0xff]
        %v201 = vld [vmem:[%s197 + $0x18] sm:$0xff]
        %s202 = scalar_lea.vmem %s146, 64 [#allocation2]
        %v203 = vld [vmem:[%s202] sm:$0xff]
        %v204 = vld [vmem:[%s202 + $0x8] sm:$0xff]
        %v205 = vld [vmem:[%s202 + $0x10] sm:$0xff]
        %v206 = vld [vmem:[%s202 + $0x18] sm:$0xff]
        %s207 = scalar_lea.vmem %s146, 96 [#allocation2]
        %v208 = vld [vmem:[%s207] sm:$0xff]
        %v209 = vld [vmem:[%s207 + $0x8] sm:$0xff]
        %v210 = vld [vmem:[%s207 + $0x10] sm:$0xff]
        %v211 = vld [vmem:[%s207 + $0x18] sm:$0xff]
        %v212 = vadd.f32 %v193, %v198
        %v213 = vadd.f32 %v194, %v199
        %v214 = vadd.f32 %v195, %v200
        %v215 = vadd.f32 %v196, %v201
        %v216 = vsub.f32 %v193, %v198
        %v217 = vsub.f32 %v194, %v199
        %v218 = vsub.f32 %v195, %v200
        %v219 = vsub.f32 %v196, %v201
        %v220 = vadd.f32 %v203, %v208
        %v221 = vadd.f32 %v204, %v209
        %v222 = vadd.f32 %v205, %v210
        %v223 = vadd.f32 %v206, %v211
        %v224 = vsub.f32 %v203, %v208
        %v225 = vsub.f32 %v204, %v209
        %v226 = vsub.f32 %v205, %v210
        %v227 = vsub.f32 %v206, %v211
        %v228 = vadd.f32 %v212, %v220
        %v229 = vadd.f32 %v213, %v221
        %v230 = vadd.f32 %v214, %v222
        %v231 = vadd.f32 %v215, %v223
        %v232 = vmul.f32 %v228, 0.5
        %v233 = vmul.f32 %v229, 0.5
        %v234 = vmul.f32 %v230, 0.5
        %v235 = vmul.f32 %v231, 0.5
        %v236 = vsub.f32 %v212, %v220
        %v237 = vsub.f32 %v213, %v221
        %v238 = vsub.f32 %v214, %v222
        %v239 = vsub.f32 %v215, %v223
        %v240 = vmul.f32 %v236, 0.5
        %v241 = vmul.f32 %v237, 0.5
        %v242 = vmul.f32 %v238, 0.5
        %v243 = vmul.f32 %v239, 0.5
        %v244 = vadd.f32 %v216, %v224
        %v245 = vadd.f32 %v217, %v225
        %v246 = vadd.f32 %v218, %v226
        %v247 = vadd.f32 %v219, %v227
        %v248 = vmul.f32 %v244, 0.5
        %v249 = vmul.f32 %v245, 0.5
        %v250 = vmul.f32 %v246, 0.5
        %v251 = vmul.f32 %v247, 0.5
        %v252 = vsub.f32 %v216, %v224
        %v253 = vsub.f32 %v217, %v225
        %v254 = vsub.f32 %v218, %v226
        %v255 = vsub.f32 %v219, %v227
        %v256 = vmul.f32 %v252, 0.5
        %v257 = vmul.f32 %v253, 0.5
        %v258 = vmul.f32 %v254, 0.5
        %v259 = vmul.f32 %v255, 0.5
        %vm260 = vcmask 130048
        %261 = vst.msk [vmem:[%s190] sm:$0xff] %vm260, %v232
        %262 = vst.msk [vmem:[%s190 + $0x8] sm:$0xff] %vm260, %v233
        %263 = vst.msk [vmem:[%s190 + $0x10] sm:$0xff] %vm260, %v234
        %264 = vst.msk [vmem:[%s190 + $0x18] sm:$0xff] %vm260, %v235
        %s265 = scalar_lea.vmem %s190, 32
        %266 = vst.msk [vmem:[%s265] sm:$0xff] %vm260, %v240
        %267 = vst.msk [vmem:[%s265 + $0x8] sm:$0xff] %vm260, %v241
        %268 = vst.msk [vmem:[%s265 + $0x10] sm:$0xff] %vm260, %v242
        %269 = vst.msk [vmem:[%s265 + $0x18] sm:$0xff] %vm260, %v243
        %s270 = scalar_lea.vmem %s190, 64
        %271 = vst.msk [vmem:[%s270] sm:$0xff] %vm260, %v248
        %272 = vst.msk [vmem:[%s270 + $0x8] sm:$0xff] %vm260, %v249
        %273 = vst.msk [vmem:[%s270 + $0x10] sm:$0xff] %vm260, %v250
        %274 = vst.msk [vmem:[%s270 + $0x18] sm:$0xff] %vm260, %v251
        %s275 = scalar_lea.vmem %s190, 96
        %276 = vst.msk [vmem:[%s275] sm:$0xff] %vm260, %v256
        %277 = vst.msk [vmem:[%s275 + $0x8] sm:$0xff] %vm260, %v257
        %278 = vst.msk [vmem:[%s275 + $0x10] sm:$0xff] %vm260, %v258
        %279 = vst.msk [vmem:[%s275 + $0x18] sm:$0xff] %vm260, %v259
        %s280 = smul.u32 2, %s21
        %s281 = smul.u32 2, %s22
        %p282 = scmp.lt.s32.totalorder %s20, 1
        %s283 = scalar_select %p282, %s20, 1
        %p284 = scmp.lt.s32.totalorder %s280, 1
        %s285 = scalar_select %p284, %s280, 1
        %p286 = scmp.lt.s32.totalorder %s281, 1
        %s287 = scalar_select %p286, %s281, 1
        %s288 = smul.addr %s285, 2
        %s289 = sadd.s32 %s287, %s288
        %s290 = smul.addr %s283, 16
        %s291 = sadd.s32 %s289, %s290
        %s292 = smul.addr %s291, 8
        %s293 = scalar_lea.vmem %s1, %s292
        // Predicated region
        $region29: #{_lambda_.1} parent=23 // pred_check
          %p294 = pneg %p86
        $region30: #{_lambda_.1} parent=23 // pred_check_branch
          %296 = sbr.rel (%p294) target = $region32
        $region31: #{_lambda_.1} parent=23 // pred_region
          %s297 = smul.u32 2, %s21
          %s298 = smul.u32 2, %s22
        $region32: #{_lambda_.1} parent=23 // pred_fallthru
          _
      $region24: #{_lambda_.1} parent=5 // pred_fallthru
        _
      %p299 = scmp.le.s32.totalorder 2, %s10
      // Predicated region
      $region33: #{_lambda_.1} parent=5 // pred_check
        %p300 = pneg %p299
      $region34: #{_lambda_.1} parent=5 // pred_check_branch
        %302 = sbr.rel (%p300) target = $region36
      $region35: #{_lambda_.1} parent=5 // pred_region
        %s303 = ssub.s32 %s10, 2
        // Predicated region
        $region37: #{_lambda_.1} parent=35 // pred_check
          %p304 = pneg %p92
        $region38: #{_lambda_.1} parent=35 // pred_check_branch
          %306 = sbr.rel (%p304) target = $region40
        $region39: #{_lambda_.1} parent=35 // pred_region
          %s307 = smul.u32 2, %s24
          %s308 = smul.u32 2, %s25
          %p309 = scmp.lt.s32.totalorder %s23, 1
          %s310 = scalar_select %p309, %s23, 1
          %p311 = scmp.lt.s32.totalorder %s307, 1
          %s312 = scalar_select %p311, %s307, 1
          %p313 = scmp.lt.s32.totalorder %s308, 1
          %s314 = scalar_select %p313, %s308, 1
          %s315 = smul.addr %s312, 2
          %s316 = sadd.s32 %s314, %s315
          %s317 = smul.addr %s310, 16
          %s318 = sadd.s32 %s316, %s317
          %s319 = smul.addr %s318, 8
          %s320 = scalar_lea.vmem %s1, %s319
        $region40: #{_lambda_.1} parent=35 // pred_fallthru
          _
      $region36: #{_lambda_.1} parent=5 // pred_fallthru
        _
    $region6: #{_lambda_.1} parent=1 // loop_footer
      %s14 = sadd.s32 1, %s10
    $region7: #{_lambda_.1} parent=1 // loop_footer_branch
      %9 = sbr.rel target = $region3
    $region8: #{_lambda_.1} parent=1 // loop_exit
      _
    %321 = vsyncpa [#allocation3], 1
    %s322 = scalar_lea.sflag [#allocation3], 1
    %323 = vsyncpa %s322, 1

</llo_original>
